<compile_context>
chip_gen: v7x
topology: tpu7x:2x2x1
jax: 0.10.0
libtpu: 0.0.40
codegen_flags: <defaults>
</compile_context>

<pallas_src>
import functools

import jax
import jax.numpy as jnp
from jax.experimental import pallas as pl
from jax.experimental.pallas import tpu as pltpu


# ----------------------------------------------------------------------------
# Fused FC kernel:
#   grid axis k tiles the 18432-wide hidden dim.
#   per step:  h1_tile = relu((flat @ w1[:,k] + b1) * sc1 + sh1)
#              acc    += h1_tile @ w2[k,:]
#   epilogue:  h2 = relu((acc + b2) * sc2 + sh2)
#              logits = h2 @ [w3|w4|0pad] + b34
#              out[:, :A]   = log_softmax(logits[:, :A])
#              out[:,  A ]  = tanh(logits[:, A])        (pad columns -> don't-care)
# ----------------------------------------------------------------------------
def fused_fc_kernel(flat_ref, w1_ref, b1_ref, sc1_ref, sh1_ref,
                    w2_ref, b2_ref, sc2_ref, sh2_ref, w34_ref, b34_ref,
                    out_ref, acc_ref, *, action_size):
    k = pl.program_id(0)

    @pl.when(k == 0)
    def _():
        acc_ref[...] = jnp.zeros_like(acc_ref)

    # fc1 tile: (B, Kin)bf16 @ (Kin, block_k)bf16 -> f32
    h1 = jnp.dot(flat_ref[...], w1_ref[...], preferred_element_type=jnp.float32)
    h1 = jnp.maximum((h1 + b1_ref[...]) * sc1_ref[...] + sh1_ref[...], 0.0)

    # fc2 partial sum: (B, block_k)bf16 @ (block_k, 512)bf16 -> f32 accumulator
    acc_ref[...] += jnp.dot(h1.astype(jnp.bfloat16), w2_ref[...],
                            preferred_element_type=jnp.float32)

    @pl.when(k == pl.num_programs(0) - 1)
    def _():
        h2 = jnp.maximum((acc_ref[...] + b2_ref[...]) * sc2_ref[...] + sh2_ref[...],
                         0.0)
        logits = jnp.dot(h2.astype(jnp.bfloat16), w34_ref[...],
                         preferred_element_type=jnp.float32) + b34_ref[...]
        col = jax.lax.broadcasted_iota(jnp.int32, logits.shape, 1)
        is_pi = col < action_size
        pi_logits = jnp.where(is_pi, logits, jnp.float32(-1e30))
        m = jnp.max(pi_logits, axis=1, keepdims=True)
        lse = jnp.log(jnp.sum(jnp.exp(pi_logits - m), axis=1, keepdims=True)) + m
        # policy columns -> log_softmax; value (and pad) columns -> tanh(logit)
        out_ref[...] = jnp.where(is_pi, logits - lse,
                                 jnp.tanh(logits)).astype(out_ref.dtype)


def fused_fc_forward(flat, prep, action_size, *, block_k=4608):
    """flat: (B, Kin) f32; returns (pi: (B, A) f32, v: (B, 1) f32)."""
    M, Kin = flat.shape
    K, _ = prep["fc2_w"].shape            # 18432
    N2 = prep["fc2_w"].shape[1]           # 512
    A_pad = prep["w34"].shape[1]          # padded head width (multiple of 128)
    if block_k >= K:
        block_k = K
    assert K % block_k == 0
    nk = K // block_k

    kernel = functools.partial(fused_fc_kernel, action_size=action_size)
    out = pl.pallas_call(
        kernel,
        out_shape=jax.ShapeDtypeStruct((M, A_pad), jnp.float32),
        grid_spec=pltpu.PrefetchScalarGridSpec(
            num_scalar_prefetch=0,
            grid=(nk,),                                        # reduction axis only
            in_specs=[
                pl.BlockSpec((M, Kin), lambda k: (0, 0)),      # flat (bf16, resident)
                pl.BlockSpec((Kin, block_k), lambda k: (0, k)),  # w1 tile
                pl.BlockSpec((1, block_k), lambda k: (0, k)),    # b1 tile
                pl.BlockSpec((1, block_k), lambda k: (0, k)),    # bn1 scale tile
                pl.BlockSpec((1, block_k), lambda k: (0, k)),    # bn1 shift tile
                pl.BlockSpec((block_k, N2), lambda k: (k, 0)),   # w2 tile
                pl.BlockSpec((1, N2), lambda k: (0, 0)),         # b2
                pl.BlockSpec((1, N2), lambda k: (0, 0)),         # bn2 scale
                pl.BlockSpec((1, N2), lambda k: (0, 0)),         # bn2 shift
                pl.BlockSpec((N2, A_pad), lambda k: (0, 0)),     # packed head weights
                pl.BlockSpec((1, A_pad), lambda k: (0, 0)),      # packed head bias
            ],
            out_specs=pl.BlockSpec((M, A_pad), lambda k: (0, 0)),
            scratch_shapes=[pltpu.VMEM((M, N2), jnp.float32)],   # fc2 accumulator
        ),
        compiler_params=pltpu.CompilerParams(
            dimension_semantics=("arbitrary",),
        ),
    )(flat.astype(jnp.bfloat16),
      prep["fc1_w"], prep["fc1_b"], prep["fc_bn1"][0], prep["fc_bn1"][1],
      prep["fc2_w"], prep["fc2_b"], prep["fc_bn2"][0], prep["fc_bn2"][1],
      prep["w34"], prep["b34"])

    pi = out[:, :action_size]
    v = out[:, action_size:action_size + 1]
    return pi, v


# ----------------------------------------------------------------------------
# Conv stack (plain JAX glue; deliberately NOT Pallas -- see header comment)
# ----------------------------------------------------------------------------
def conv_bn_relu(x, w_dhwio, scale, shift, pad):
    y = jax.lax.conv_general_dilated(
        x, w_dhwio, window_strides=(1, 1, 1), padding=[(pad, pad)] * 3,
        dimension_numbers=("NDHWC", "DHWIO", "NDHWC"))
    return jnp.maximum(y * scale + shift, 0.0)   # conv bias already folded into shift


def bn_fold(gamma, beta, mean, var, eps=1e-5):
    scale = gamma / jnp.sqrt(var + eps)
    shift = beta - mean * scale
    return scale.reshape(1, -1), shift.reshape(1, -1)


# ----------------------------------------------------------------------------
# One-time parameter preparation (outside jit): layouts + dtypes for the TPU path
# ----------------------------------------------------------------------------
def prepare_params(params, board, num_channels):
    bx, by, bz = board
    C = num_channels
    dx, dy, dz = bx - 4, by - 4, bz - 4
    prep = {}
    for i in range(1, 5):
        w = params[f"conv{i}_w"]                                 # (Cout, Cin, kd, kh, kw)
        prep[f"conv{i}_w"] = jnp.transpose(w, (2, 3, 4, 1, 0))   # DHWIO, channels-last
        scale = params[f"bn{i}"][0].reshape(-1)
        shift = params[f"bn{i}"][1].reshape(-1)
        b = params[f"conv{i}_b"].reshape(-1)
        prep[f"conv{i}_scale"] = scale.reshape(1, 1, 1, 1, C)
        prep[f"conv{i}_shift"] = (shift + scale * b).reshape(1, 1, 1, 1, C)

    # fc1 weight rows: permute from torch channels-first flatten order (c,d,h,w)
    # to the channels-last flatten order (d,h,w,c) used by the NDHWC conv stack.
    w1 = params["fc1_w"].reshape(C, dx, dy, dz, -1)
    w1 = jnp.transpose(w1, (1, 2, 3, 0, 4)).reshape(C * dx * dy * dz, -1)
    prep["fc1_w"] = w1.astype(jnp.bfloat16)
    prep["fc1_b"] = params["fc1_b"]
    prep["fc_bn1"] = params["fc_bn1"]

    prep["fc2_w"] = params["fc2_w"].astype(jnp.bfloat16)
    prep["fc2_b"] = params["fc2_b"]
    prep["fc_bn2"] = params["fc_bn2"]

    # Pack fc3|fc4 into a single lane-dense head, zero-padded to a multiple of 128.
    N2 = params["fc2_w"].shape[1]
    A = params["fc3_w"].shape[1]
    A_pad = ((A + 1 + 127) // 128) * 128
    w34 = jnp.zeros((N2, A_pad), jnp.float32)
    w34 = w34.at[:, :A].set(params["fc3_w"]).at[:, A:A + 1].set(params["fc4_w"])
    b34 = jnp.zeros((1, A_pad), jnp.float32)
    b34 = b34.at[:, :A].set(params["fc3_b"]).at[:, A:A + 1].set(params["fc4_b"])
    prep["w34"] = w34.astype(jnp.bfloat16)
    prep["b34"] = b34
    return prep


# ----------------------------------------------------------------------------
# Full forward pass
# ----------------------------------------------------------------------------
def crazyhouse_forward(prep, s, board, action_size):
    bx, by, bz = board
    B = s.shape[0]
    x = s.reshape(B, bx, by, bz, 1)                                # NDHWC, Cin=1
    x = conv_bn_relu(x, prep["conv1_w"], prep["conv1_scale"], prep["conv1_shift"], 1)
    x = conv_bn_relu(x, prep["conv2_w"], prep["conv2_scale"], prep["conv2_shift"], 1)
    x = conv_bn_relu(x, prep["conv3_w"], prep["conv3_scale"], prep["conv3_shift"], 0)
    x = conv_bn_relu(x, prep["conv4_w"], prep["conv4_scale"], prep["conv4_shift"], 0)
    flat = x.reshape(B, -1)        # channels-last flatten; fc1_w rows permuted to match

    # fc1 + BN + ReLU + fc2 + BN + ReLU + policy/value head, in ONE Pallas kernel.
    # Dropout is the identity (eval mode).
    pi, v = fused_fc_forward(flat, prep, action_size, block_k=4608)
    return pi, v


# ----------------------------------------------------------------------------
# Pure-JAX reference with PyTorch-convention layouts (for correctness check)
# ----------------------------------------------------------------------------
def reference_forward(params, s, board):
    bx, by, bz = board
    B = s.shape[0]
    x = s.reshape(B, 1, bx, by, bz)

    def conv(x, w, b, bn, pad):
        y = jax.lax.conv_general_dilated(
            x, w, window_strides=(1, 1, 1), padding=[(pad, pad)] * 3,
            dimension_numbers=("NCDHW", "OIDHW", "NCDHW"))
        y = y + b.reshape(1, -1, 1, 1, 1)
        scale, shift = bn
        y = y * scale.reshape(1, -1, 1, 1, 1) + shift.reshape(1, -1, 1, 1, 1)
        return jnp.maximum(y, 0.0)

    x = conv(x, params["conv1_w"], params["conv1_b"], params["bn1"], 1)
    x = conv(x, params["conv2_w"], params["conv2_b"], params["bn2"], 1)
    x = conv(x, params["conv3_w"], params["conv3_b"], params["bn3"], 0)
    x = conv(x, params["conv4_w"], params["conv4_b"], params["bn4"], 0)
    flat = x.reshape(B, -1)                                   # channels-first flatten
    h1 = jnp.maximum((flat @ params["fc1_w"] + params["fc1_b"])
                     * params["fc_bn1"][0] + params["fc_bn1"][1], 0.0)
    h2 = jnp.maximum((h1 @ params["fc2_w"] + params["fc2_b"])
                     * params["fc_bn2"][0] + params["fc_bn2"][1], 0.0)
    logits = h2 @ params["fc3_w"] + params["fc3_b"]
    pi = jax.nn.log_softmax(logits, axis=1)
    v = jnp.tanh(h2 @ params["fc4_w"] + params["fc4_b"])
    return pi, v


# ----------------------------------------------------------------------------
# Deterministic parameter construction (torch-convention layouts, f32)
# ----------------------------------------------------------------------------
def make_params(key, board, num_channels, action_size):
    bx, by, bz = board
    C = num_channels
    flat_dim = C * (bx - 4) * (by - 4) * (bz - 4)
    keys = iter(jax.random.split(key, 64))

    def w(shape, s=0.05):
        return jax.random.normal(next(keys), shape, jnp.float32) * s

    def bn_params(n):
        gamma = 1.0 + 0.1 * jax.random.normal(next(keys), (n,), jnp.float32)
        beta = 0.1 * jax.random.normal(next(keys), (n,), jnp.float32)
        mean = 0.1 * jax.random.normal(next(keys), (n,), jnp.float32)
        var = 1.0 + 0.1 * jnp.abs(jax.random.normal(next(keys), (n,), jnp.float32))
        return bn_fold(gamma, beta, mean, var)

    return {
        "conv1_w": w((C, 1, 3, 3, 3)), "conv1_b": w((C,)),
        "conv2_w": w((C, C, 3, 3, 3)), "conv2_b": w((C,)),
        "conv3_w": w((C, C, 3, 3, 3)), "conv3_b": w((C,)),
        "conv4_w": w((C, C, 3, 3, 3)), "conv4_b": w((C,)),
        "bn1": bn_params(C), "bn2": bn_params(C),
        "bn3": bn_params(C), "bn4": bn_params(C),
        "fc1_w": w((flat_dim, 18 * 1024)), "fc1_b": w((1, 18 * 1024)),
        "fc_bn1": bn_params(18 * 1024),
        "fc2_w": w((18 * 1024, 512)), "fc2_b": w((1, 512)),
        "fc_bn2": bn_params(512),
        "fc3_w": w((512, action_size)), "fc3_b": w((1, action_size)),
        "fc4_w": w((512, 1)), "fc4_b": w((1, 1)),
    }


# ----------------------------------------------------------------------------
if __name__ == "__main__":
    # Small synthetic game configuration (board 6x6x6, action_size=128,
    # num_channels=4).  Board dims must be >= 5 so (dim - 4) > 0.
    board = (6, 6, 6)
    num_channels = 4
    action_size = 128
    batch = 2

    key = jax.random.PRNGKey(0)
    pkey, xkey = jax.random.split(key)
    params = make_params(pkey, board, num_channels, action_size)
    prep = prepare_params(params, board, num_channels)   # once, at load time
    x = jax.random.normal(xkey, (batch,) + board, jnp.float32)

    fwd = jax.jit(functools.partial(crazyhouse_forward, board=board,
                                    action_size=action_size))
    pi, v = fwd(prep, x)
    pi = jax.block_until_ready(pi)
    v = jax.block_until_ready(v)

    pi_ref, v_ref = reference_forward(params, x, board)
    assert pi.shape == (batch, action_size) and v.shape == (batch, 1)
    # bf16 FC weights -> loosened tolerances vs the f32 torch-convention reference.
    assert jnp.allclose(pi, pi_ref, atol=1e-1, rtol=1e-1), "policy mismatch"
    assert jnp.allclose(v, v_ref, atol=1e-1, rtol=1e-1), "value mismatch"

    print("KERNEL_OK")
</pallas_src>

<mosaic_0001>
module attributes {stable_mosaic.version = 11 : i64} {
  func.func @fused_fc_kernel(%arg0: i32, %arg1: memref<2x32xbf16, #tpu.memory_space<vmem>>, %arg2: memref<32x4608xbf16, #tpu.memory_space<vmem>>, %arg3: memref<1x4608xf32, #tpu.memory_space<vmem>>, %arg4: memref<1x4608xf32, #tpu.memory_space<vmem>>, %arg5: memref<1x4608xf32, #tpu.memory_space<vmem>>, %arg6: memref<4608x512xbf16, #tpu.memory_space<vmem>>, %arg7: memref<1x512xf32, #tpu.memory_space<vmem>>, %arg8: memref<1x512xf32, #tpu.memory_space<vmem>>, %arg9: memref<1x512xf32, #tpu.memory_space<vmem>>, %arg10: memref<512x256xbf16, #tpu.memory_space<vmem>>, %arg11: memref<1x256xf32, #tpu.memory_space<vmem>>, %arg12: memref<2x256xf32, #tpu.memory_space<vmem>>, %arg13: memref<2x512xf32, #tpu.memory_space<vmem>>) attributes {dimension_semantics = [#tpu.dimension_semantics<arbitrary>], iteration_bounds = array<i64: 4>, scalar_prefetch = 0 : i64, scratch_operands = 1 : i64, tpu.core_type = #tpu.core_type<tc>, window_params = [{pipeline_mode = #tpu.pipeline_mode<synchronous>, transform_indices = @transform_0, window_bounds = array<i64: 2, 32>}, {transform_indices = @transform_1, window_bounds = array<i64: 32, 4608>}, {transform_indices = @transform_2, window_bounds = array<i64: 1, 4608>}, {transform_indices = @transform_3, window_bounds = array<i64: 1, 4608>}, {transform_indices = @transform_4, window_bounds = array<i64: 1, 4608>}, {transform_indices = @transform_5, window_bounds = array<i64: 4608, 512>}, {pipeline_mode = #tpu.pipeline_mode<synchronous>, transform_indices = @transform_6, window_bounds = array<i64: 1, 512>}, {pipeline_mode = #tpu.pipeline_mode<synchronous>, transform_indices = @transform_7, window_bounds = array<i64: 1, 512>}, {pipeline_mode = #tpu.pipeline_mode<synchronous>, transform_indices = @transform_8, window_bounds = array<i64: 1, 512>}, {pipeline_mode = #tpu.pipeline_mode<synchronous>, transform_indices = @transform_9, window_bounds = array<i64: 512, 256>}, {pipeline_mode = #tpu.pipeline_mode<synchronous>, transform_indices = @transform_10, window_bounds = array<i64: 1, 256>}, {pipeline_mode = #tpu.pipeline_mode<synchronous>, transform_indices = @transform_11, window_bounds = array<i64: 2, 256>}]} {
    %c0_i32 = arith.constant 0 : i32
    %0 = arith.cmpi eq, %arg0, %c0_i32 : i32
    %1 = arith.extui %0 : i1 to i32
    %c0_i32_0 = arith.constant 0 : i32
    %2 = arith.cmpi ne, %1, %c0_i32_0 : i32
    scf.if %2 {
      %cst_19 = arith.constant 0.000000e+00 : f32
      %26 = vector.broadcast %cst_19 : f32 to vector<2x512xf32>
      %c0_20 = arith.constant 0 : index
      %c0_21 = arith.constant 0 : index
      %27 = vector.load %arg13[%c0_20, %c0_21] : memref<2x512xf32, #tpu.memory_space<vmem>>, vector<2x512xf32>
      tpu.vector_store %arg13[%c0_20, %c0_21], %26 {strides = array<i32>} : memref<2x512xf32, #tpu.memory_space<vmem>>, vector<2x512xf32>,
    } else {
    }
    %c0 = arith.constant 0 : index
    %c0_1 = arith.constant 0 : index
    %3 = vector.load %arg1[%c0, %c0_1] : memref<2x32xbf16, #tpu.memory_space<vmem>>, vector<2x32xbf16>
    %c0_2 = arith.constant 0 : index
    %c0_3 = arith.constant 0 : index
    %4 = vector.load %arg2[%c0_2, %c0_3] : memref<32x4608xbf16, #tpu.memory_space<vmem>>, vector<32x4608xbf16>
    %cst = arith.constant dense<0.000000e+00> : vector<2x4608xf32>
    %5 = tpu.matmul %3, %4, %cst {dimension_numbers = #tpu.dot_dimension_numbers<[1], [0], [0], [1], [0, 0, 1, 1], [], []>} : vector<2x32xbf16>, vector<32x4608xbf16>, vector<2x4608xf32> -> vector<2x4608xf32>
    %c0_4 = arith.constant 0 : index
    %c0_5 = arith.constant 0 : index
    %6 = vector.load %arg3[%c0_4, %c0_5] : memref<1x4608xf32, #tpu.memory_space<vmem>>, vector<1x4608xf32>
    %7 = vector.broadcast %6 : vector<1x4608xf32> to vector<2x4608xf32>
    %8 = arith.addf %5, %7 : vector<2x4608xf32>
    %c0_6 = arith.constant 0 : index
    %c0_7 = arith.constant 0 : index
    %9 = vector.load %arg4[%c0_6, %c0_7] : memref<1x4608xf32, #tpu.memory_space<vmem>>, vector<1x4608xf32>
    %10 = vector.broadcast %9 : vector<1x4608xf32> to vector<2x4608xf32>
    %11 = arith.mulf %8, %10 : vector<2x4608xf32>
    %c0_8 = arith.constant 0 : index
    %c0_9 = arith.constant 0 : index
    %12 = vector.load %arg5[%c0_8, %c0_9] : memref<1x4608xf32, #tpu.memory_space<vmem>>, vector<1x4608xf32>
    %13 = vector.broadcast %12 : vector<1x4608xf32> to vector<2x4608xf32>
    %14 = arith.addf %11, %13 : vector<2x4608xf32>
    %cst_10 = arith.constant 0.000000e+00 : f32
    %15 = vector.broadcast %cst_10 : f32 to vector<2x4608xf32>
    %16 = arith.maximumf %14, %15 : vector<2x4608xf32>
    %c0_11 = arith.constant 0 : index
    %c0_12 = arith.constant 0 : index
    %17 = vector.load %arg13[%c0_11, %c0_12] : memref<2x512xf32, #tpu.memory_space<vmem>>, vector<2x512xf32>
    %18 = arith.truncf %16 : vector<2x4608xf32> to vector<2x4608xbf16>
    %c0_13 = arith.constant 0 : index
    %c0_14 = arith.constant 0 : index
    %19 = vector.load %arg6[%c0_13, %c0_14] : memref<4608x512xbf16, #tpu.memory_space<vmem>>, vector<4608x512xbf16>
    %cst_15 = arith.constant dense<0.000000e+00> : vector<2x512xf32>
    %20 = tpu.matmul %18, %19, %cst_15 {dimension_numbers = #tpu.dot_dimension_numbers<[1], [0], [0], [1], [0, 0, 1, 1], [], []>} : vector<2x4608xbf16>, vector<4608x512xbf16>, vector<2x512xf32> -> vector<2x512xf32>
    %21 = arith.addf %17, %20 : vector<2x512xf32>
    %c0_16 = arith.constant 0 : index
    %c0_17 = arith.constant 0 : index
    %22 = vector.load %arg13[%c0_16, %c0_17] : memref<2x512xf32, #tpu.memory_space<vmem>>, vector<2x512xf32>
    tpu.vector_store %arg13[%c0_16, %c0_17], %21 {strides = array<i32>} : memref<2x512xf32, #tpu.memory_space<vmem>>, vector<2x512xf32>,
    %c3_i32 = arith.constant 3 : i32
    %23 = arith.cmpi eq, %arg0, %c3_i32 : i32
    %24 = arith.extui %23 : i1 to i32
    %c0_i32_18 = arith.constant 0 : i32
    %25 = arith.cmpi ne, %24, %c0_i32_18 : i32
    scf.if %25 {
      %c0_19 = arith.constant 0 : index
      %c0_20 = arith.constant 0 : index
      %26 = vector.load %arg13[%c0_19, %c0_20] : memref<2x512xf32, #tpu.memory_space<vmem>>, vector<2x512xf32>
      %c0_21 = arith.constant 0 : index
      %c0_22 = arith.constant 0 : index
      %27 = vector.load %arg7[%c0_21, %c0_22] : memref<1x512xf32, #tpu.memory_space<vmem>>, vector<1x512xf32>
      %28 = vector.broadcast %27 : vector<1x512xf32> to vector<2x512xf32>
      %29 = arith.addf %26, %28 : vector<2x512xf32>
      %c0_23 = arith.constant 0 : index
      %c0_24 = arith.constant 0 : index
      %30 = vector.load %arg8[%c0_23, %c0_24] : memref<1x512xf32, #tpu.memory_space<vmem>>, vector<1x512xf32>
      %31 = vector.broadcast %30 : vector<1x512xf32> to vector<2x512xf32>
      %32 = arith.mulf %29, %31 : vector<2x512xf32>
      %c0_25 = arith.constant 0 : index
      %c0_26 = arith.constant 0 : index
      %33 = vector.load %arg9[%c0_25, %c0_26] : memref<1x512xf32, #tpu.memory_space<vmem>>, vector<1x512xf32>
      %34 = vector.broadcast %33 : vector<1x512xf32> to vector<2x512xf32>
      %35 = arith.addf %32, %34 : vector<2x512xf32>
      %cst_27 = arith.constant 0.000000e+00 : f32
      %36 = vector.broadcast %cst_27 : f32 to vector<2x512xf32>
      %37 = arith.maximumf %35, %36 : vector<2x512xf32>
      %38 = arith.truncf %37 : vector<2x512xf32> to vector<2x512xbf16>
      %c0_28 = arith.constant 0 : index
      %c0_29 = arith.constant 0 : index
      %39 = vector.load %arg10[%c0_28, %c0_29] : memref<512x256xbf16, #tpu.memory_space<vmem>>, vector<512x256xbf16>
      %cst_30 = arith.constant dense<0.000000e+00> : vector<2x256xf32>
      %40 = tpu.matmul %38, %39, %cst_30 {dimension_numbers = #tpu.dot_dimension_numbers<[1], [0], [0], [1], [0, 0, 1, 1], [], []>} : vector<2x512xbf16>, vector<512x256xbf16>, vector<2x256xf32> -> vector<2x256xf32>
      %c0_31 = arith.constant 0 : index
      %c0_32 = arith.constant 0 : index
      %41 = vector.load %arg11[%c0_31, %c0_32] : memref<1x256xf32, #tpu.memory_space<vmem>>, vector<1x256xf32>
      %42 = vector.broadcast %41 : vector<1x256xf32> to vector<2x256xf32>
      %43 = arith.addf %40, %42 : vector<2x256xf32>
      %44 = tpu.iota {dimensions = array<i32: 1>} : vector<2x256xi32>
      %c128_i32 = arith.constant 128 : i32
      %45 = vector.broadcast %c128_i32 : i32 to vector<2x256xi32>
      %46 = arith.cmpi slt, %44, %45 : vector<2x256xi32>
      %cst_33 = arith.constant -1.000000e+30 : f32
      %47 = vector.broadcast %cst_33 : f32 to vector<2x256xf32>
      %48 = arith.select %46, %43, %47 : vector<2x256xi1>, vector<2x256xf32>
      %cst_34 = arith.constant dense<0xFF800000> : vector<2xf32>
      %49 = vector.multi_reduction <maximumf>, %48, %cst_34 [1] : vector<2x256xf32> to vector<2xf32>
      %50 = vector.shape_cast %49 : vector<2xf32> to vector<2x1xf32>
      %51 = vector.broadcast %50 : vector<2x1xf32> to vector<2x256xf32>
      %52 = arith.subf %48, %51 : vector<2x256xf32>
      %53 = math.exp %52 : vector<2x256xf32>
      %cst_35 = arith.constant dense<0.000000e+00> : vector<2xf32>
      %54 = vector.multi_reduction <add>, %53, %cst_35 [1] : vector<2x256xf32> to vector<2xf32>
      %55 = vector.shape_cast %54 : vector<2xf32> to vector<2x1xf32>
      %56 = math.log %55 : vector<2x1xf32>
      %57 = arith.addf %56, %50 : vector<2x1xf32>
      %58 = vector.broadcast %57 : vector<2x1xf32> to vector<2x256xf32>
      %59 = arith.subf %43, %58 : vector<2x256xf32>
      %60 = math.tanh %43 : vector<2x256xf32>
      %61 = arith.select %46, %59, %60 : vector<2x256xi1>, vector<2x256xf32>
      %c0_36 = arith.constant 0 : index
      %c0_37 = arith.constant 0 : index
      %62 = vector.load %arg12[%c0_36, %c0_37] : memref<2x256xf32, #tpu.memory_space<vmem>>, vector<2x256xf32>
      tpu.vector_store %arg12[%c0_36, %c0_37], %61 {strides = array<i32>} : memref<2x256xf32, #tpu.memory_space<vmem>>, vector<2x256xf32>,
    } else {
    }
    return
  }
  func.func @transform_0(%arg0: i32) -> (i32, i32) {
    %c0_i32 = arith.constant 0 : i32
    %c0_i32_0 = arith.constant 0 : i32
    %c0_i32_1 = arith.constant 0 : i32
    return %c0_i32, %c0_i32_0 : i32, i32
  }
  func.func @transform_1(%arg0: i32) -> (i32, i32) {
    %c0_i32 = arith.constant 0 : i32
    %c0_i32_0 = arith.constant 0 : i32
    return %c0_i32, %arg0 : i32, i32
  }
  func.func @transform_2(%arg0: i32) -> (i32, i32) {
    %c0_i32 = arith.constant 0 : i32
    %c0_i32_0 = arith.constant 0 : i32
    return %c0_i32, %arg0 : i32, i32
  }
  func.func @transform_3(%arg0: i32) -> (i32, i32) {
    %c0_i32 = arith.constant 0 : i32
    %c0_i32_0 = arith.constant 0 : i32
    return %c0_i32, %arg0 : i32, i32
  }
  func.func @transform_4(%arg0: i32) -> (i32, i32) {
    %c0_i32 = arith.constant 0 : i32
    %c0_i32_0 = arith.constant 0 : i32
    return %c0_i32, %arg0 : i32, i32
  }
  func.func @transform_5(%arg0: i32) -> (i32, i32) {
    %c0_i32 = arith.constant 0 : i32
    %c0_i32_0 = arith.constant 0 : i32
    return %arg0, %c0_i32 : i32, i32
  }
  func.func @transform_6(%arg0: i32) -> (i32, i32) {
    %c0_i32 = arith.constant 0 : i32
    %c0_i32_0 = arith.constant 0 : i32
    %c0_i32_1 = arith.constant 0 : i32
    return %c0_i32, %c0_i32_0 : i32, i32
  }
  func.func @transform_7(%arg0: i32) -> (i32, i32) {
    %c0_i32 = arith.constant 0 : i32
    %c0_i32_0 = arith.constant 0 : i32
    %c0_i32_1 = arith.constant 0 : i32
    return %c0_i32, %c0_i32_0 : i32, i32
  }
  func.func @transform_8(%arg0: i32) -> (i32, i32) {
    %c0_i32 = arith.constant 0 : i32
    %c0_i32_0 = arith.constant 0 : i32
    %c0_i32_1 = arith.constant 0 : i32
    return %c0_i32, %c0_i32_0 : i32, i32
  }
  func.func @transform_9(%arg0: i32) -> (i32, i32) {
    %c0_i32 = arith.constant 0 : i32
    %c0_i32_0 = arith.constant 0 : i32
    %c0_i32_1 = arith.constant 0 : i32
    return %c0_i32, %c0_i32_0 : i32, i32
  }
  func.func @transform_10(%arg0: i32) -> (i32, i32) {
    %c0_i32 = arith.constant 0 : i32
    %c0_i32_0 = arith.constant 0 : i32
    %c0_i32_1 = arith.constant 0 : i32
    return %c0_i32, %c0_i32_0 : i32, i32
  }
  func.func @transform_11(%arg0: i32) -> (i32, i32) {
    %c0_i32 = arith.constant 0 : i32
    %c0_i32_0 = arith.constant 0 : i32
    %c0_i32_1 = arith.constant 0 : i32
    return %c0_i32, %c0_i32_0 : i32, i32
  }
}

</mosaic_0001>

<llo_original>
// kernel: crazyhouse_forward.1
$region0: #{crazyhouse_forward.1}
  #allocation0 [shape = 'u32[]', space=smem, size = 0x4, offset = 0x4, fixed_abs, tag = 'smem constant byte address 0x4 - core index']
  #allocation1 [shape = 'u32[144,128]{1,0:T(1,128)}', space=vmem, size = 0x12000, scoped, tag = 'internal scratch']
  #allocation2 [shape = 'f32[2,512]{1,0:T(2,128)}', space=vmem, size = 0x1000, scoped, tag = 'scratch operand']
  %s0 = inlined_call_operand.vmem [shape: bf16[2,32], index: 0, kind: input, shape index: {}]
  %s1 = inlined_call_operand.hbm [shape: bf16[32,18432], index: 1, kind: input, shape index: {}]
  %s2 = inlined_call_operand.hbm [shape: f32[1,18432], index: 2, kind: input, shape index: {}]
  %s3 = inlined_call_operand.hbm [shape: f32[1,18432], index: 3, kind: input, shape index: {}]
  %s4 = inlined_call_operand.hbm [shape: f32[1,18432], index: 4, kind: input, shape index: {}]
  %s5 = inlined_call_operand.hbm [shape: bf16[18432,512], index: 5, kind: input, shape index: {}]
  %s6 = inlined_call_operand.hbm [shape: f32[1,512], index: 6, kind: input, shape index: {}]
  %s7 = inlined_call_operand.hbm [shape: f32[1,512], index: 7, kind: input, shape index: {}]
  %s8 = inlined_call_operand.hbm [shape: f32[1,512], index: 8, kind: input, shape index: {}]
  %s9 = inlined_call_operand.hbm [shape: bf16[512,256], index: 9, kind: input, shape index: {}]
  %s10 = inlined_call_operand.hbm [shape: f32[1,256], index: 10, kind: input, shape index: {}]
  %s11 = inlined_call_operand.vmem [shape: f32[2,256], index: 11, kind: output, shape index: {}]
  %s12 = sld [smem:[#allocation0]]
  $region125: #{crazyhouse_forward.1} parent=0
    _
  %s14 = ssub.s32 1, %s12
  %s15 = scalar_select 0, %s14, %s12
  $region1: #{crazyhouse_forward.1} parent=0
    #allocation3 [shape = 'u8[589824]{0}', space=vmem, size = 0x90000, scoped, tag = 'input window, operand 1']
    #allocation4 [shape = 's32[2]{0}', space=sflag, size = 0x8, scoped, tag = 'scoped memory for crazyhouse_forward.1']
    #allocation5 [shape = 'u8[36864]{0}', space=vmem, size = 0x9000, scoped, tag = 'input window, operand 2']
    #allocation6 [shape = 's32[2]{0}', space=sflag, size = 0x8, scoped, tag = 'scoped memory for crazyhouse_forward.1']
    #allocation7 [shape = 'u8[36864]{0}', space=vmem, size = 0x9000, scoped, tag = 'input window, operand 3']
    #allocation8 [shape = 'u8[36864]{0}', space=vmem, size = 0x9000, scoped, tag = 'input window, operand 4']
    #allocation9 [shape = 's32[2]{0}', space=sflag, size = 0x8, scoped, tag = 'scoped memory for crazyhouse_forward.1']
    #allocation10 [shape = 'u8[9437184]{0}', space=vmem, size = 0x900000, scoped, tag = 'input window, operand 5']
    #allocation11 [shape = 'u8[2048]{0}', space=vmem, size = 0x800, scoped, tag = 'input window, operand 6, single buffered']
    #allocation12 [shape = 's32[1]{0}', space=sflag, size = 0x4, scoped, tag = 'scoped memory for crazyhouse_forward.1']
    #allocation13 [shape = 'u8[2048]{0}', space=vmem, size = 0x800, scoped, tag = 'input window, operand 7, single buffered']
    #allocation14 [shape = 'u8[2048]{0}', space=vmem, size = 0x800, scoped, tag = 'input window, operand 8, single buffered']
    #allocation15 [shape = 's32[1]{0}', space=sflag, size = 0x4, scoped, tag = 'scoped memory for crazyhouse_forward.1']
    #allocation16 [shape = 'u8[262144]{0}', space=vmem, size = 0x40000, scoped, tag = 'input window, operand 9, single buffered']
    #allocation17 [shape = 'u8[1024]{0}', space=vmem, size = 0x400, scoped, tag = 'input window, operand 10, single buffered']
    #allocation18 [shape = 's32[1]{0}', space=sflag, size = 0x4, scoped, tag = 'scoped memory for crazyhouse_forward.1']
    %16 = vsyncpa [#allocation4], 0
    %s17 = scalar_lea.sflag [#allocation4], 1
    %18 = vsyncpa %s17, 0
    %19 = vsyncpa [#allocation6], 0
    %s20 = scalar_lea.sflag [#allocation6], 1
    %21 = vsyncpa %s20, 0
    %22 = vsyncpa [#allocation9], 0
    %s23 = scalar_lea.sflag [#allocation9], 1
    %24 = vsyncpa %s23, 0
    %25 = vsyncpa [#allocation12], 0
    %26 = vsyncpa [#allocation15], 0
    %27 = vsyncpa [#allocation18], 0
    loop: start=0, step=1, limit=6
    $region2: #{crazyhouse_forward.1} parent=1 // loop_pre_header
      _
    $region3: #{crazyhouse_forward.1} parent=1 // loop_header
      %s29 = sphi 0, %s33
      %p30 = scmp.ge.s32.totalorder %s29, 6
      %s37 = sphi 0, %s37
      %s39 = sphi 0, %s37
      %s40 = sphi 0, %s39
      %s54 = sphi 0, %s40
      %s60 = sphi 0, %s62
      %s63 = sphi 0, %s60
      %s64 = sphi 0, %s63
      %s80 = sphi 0, %s64
      %s86 = sphi 0, %s88
      %s89 = sphi 0, %s86
      %s90 = sphi 0, %s89
      %s106 = sphi 0, %s90
      %s112 = sphi 0, %s114
      %s115 = sphi 0, %s112
      %s116 = sphi 0, %s115
      %s132 = sphi 0, %s116
      %s138 = sphi 0, %s140
      %s141 = sphi 0, %s138
      %s142 = sphi 0, %s141
      %s158 = sphi 0, %s142
      %s164 = sphi 0, %s166
      %s167 = sphi 0, %s164
      %s168 = sphi 0, %s167
      %s184 = sphi 0, %s168
      %s188 = sphi 0, %s188
      %s190 = sphi 0, %s188
      %s191 = sphi 0, %s190
      %s205 = sphi 0, %s191
      %s209 = sphi 0, %s209
      %s211 = sphi 0, %s209
      %s212 = sphi 0, %s211
      %s226 = sphi 0, %s212
      %s230 = sphi 0, %s230
      %s232 = sphi 0, %s230
      %s233 = sphi 0, %s232
      %s247 = sphi 0, %s233
      %s251 = sphi 0, %s251
      %s253 = sphi 0, %s251
      %s254 = sphi 0, %s253
      %s268 = sphi 0, %s254
      %s272 = sphi 0, %s272
      %s274 = sphi 0, %s272
      %s275 = sphi 0, %s274
      %s289 = sphi 0, %s275
      %s293 = sphi 0, %s293
      %s295 = sphi 0, %s293
      %s296 = sphi 0, %s295
      %s310 = sphi 0, %s296
    $region4: #{crazyhouse_forward.1} parent=1 // loop_header_branch
      %32 = sbr.rel (%p30) target = $region8
    $region5: #{crazyhouse_forward.1} parent=1 // loop_body
      %s34 = ssub.s32 %s29, 1
      %s35 = ssub.s32 %s29, 2
      %s36 = sadd.s32 %s29, 1
      %s38 = sadd.s32 %s37, 1
      %p41 = scmp.eq.s32.totalorder %s29, 3
      %p42 = scmp.ne.s32.totalorder %s37, %s39
      %p43 = scmp.eq.s32.totalorder %s29, 0
      %p44 = por %p42, %p43
      %p45 = scmp.ne.s32.totalorder %s37, %s39
      %p46 = scmp.eq.s32.totalorder %s34, 3
      %p47 = por %p45, %p46
      %p48 = scmp.ne.s32.totalorder %s39, %s40
      %p49 = scmp.eq.s32.totalorder %s34, 0
      %p50 = por %p48, %p49
      %p51 = scmp.ne.s32.totalorder %s39, %s40
      %p52 = scmp.eq.s32.totalorder %s35, 3
      %p53 = por %p51, %p52
      %p55 = scmp.ne.s32.totalorder %s40, %s54
      %p56 = scmp.eq.s32.totalorder %s35, 0
      %p57 = por %p55, %p56
      %s58 = ssub.s32 %s29, %s36
      %p59 = scmp.eq.s32.totalorder %s58, 0
      %s61 = sadd.s32 %s60, 1
      %s62 = scalar_select %p59, %s60, %s61
      %p65 = pneg %p59
      %p66 = scmp.eq.s32.totalorder %s29, 3
      %p67 = por %p65, %p66
      %p68 = scmp.ne.s32.totalorder %s60, %s63
      %p69 = scmp.eq.s32.totalorder %s29, 0
      %p70 = por %p68, %p69
      %p71 = scmp.ne.s32.totalorder %s60, %s63
      %p72 = scmp.eq.s32.totalorder %s34, 3
      %p73 = por %p71, %p72
      %p74 = scmp.ne.s32.totalorder %s63, %s64
      %p75 = scmp.eq.s32.totalorder %s34, 0
      %p76 = por %p74, %p75
      %p77 = scmp.ne.s32.totalorder %s63, %s64
      %p78 = scmp.eq.s32.totalorder %s35, 3
      %p79 = por %p77, %p78
      %p81 = scmp.ne.s32.totalorder %s64, %s80
      %p82 = scmp.eq.s32.totalorder %s35, 0
      %p83 = por %p81, %p82
      %s84 = ssub.s32 %s29, %s36
      %p85 = scmp.eq.s32.totalorder %s84, 0
      %s87 = sadd.s32 %s86, 1
      %s88 = scalar_select %p85, %s86, %s87
      %p91 = pneg %p85
      %p92 = scmp.eq.s32.totalorder %s29, 3
      %p93 = por %p91, %p92
      %p94 = scmp.ne.s32.totalorder %s86, %s89
      %p95 = scmp.eq.s32.totalorder %s29, 0
      %p96 = por %p94, %p95
      %p97 = scmp.ne.s32.totalorder %s86, %s89
      %p98 = scmp.eq.s32.totalorder %s34, 3
      %p99 = por %p97, %p98
      %p100 = scmp.ne.s32.totalorder %s89, %s90
      %p101 = scmp.eq.s32.totalorder %s34, 0
      %p102 = por %p100, %p101
      %p103 = scmp.ne.s32.totalorder %s89, %s90
      %p104 = scmp.eq.s32.totalorder %s35, 3
      %p105 = por %p103, %p104
      %p107 = scmp.ne.s32.totalorder %s90, %s106
      %p108 = scmp.eq.s32.totalorder %s35, 0
      %p109 = por %p107, %p108
      %s110 = ssub.s32 %s29, %s36
      %p111 = scmp.eq.s32.totalorder %s110, 0
      %s113 = sadd.s32 %s112, 1
      %s114 = scalar_select %p111, %s112, %s113
      %p117 = pneg %p111
      %p118 = scmp.eq.s32.totalorder %s29, 3
      %p119 = por %p117, %p118
      %p120 = scmp.ne.s32.totalorder %s112, %s115
      %p121 = scmp.eq.s32.totalorder %s29, 0
      %p122 = por %p120, %p121
      %p123 = scmp.ne.s32.totalorder %s112, %s115
      %p124 = scmp.eq.s32.totalorder %s34, 3
      %p125 = por %p123, %p124
      %p126 = scmp.ne.s32.totalorder %s115, %s116
      %p127 = scmp.eq.s32.totalorder %s34, 0
      %p128 = por %p126, %p127
      %p129 = scmp.ne.s32.totalorder %s115, %s116
      %p130 = scmp.eq.s32.totalorder %s35, 3
      %p131 = por %p129, %p130
      %p133 = scmp.ne.s32.totalorder %s116, %s132
      %p134 = scmp.eq.s32.totalorder %s35, 0
      %p135 = por %p133, %p134
      %s136 = ssub.s32 %s29, %s36
      %p137 = scmp.eq.s32.totalorder %s136, 0
      %s139 = sadd.s32 %s138, 1
      %s140 = scalar_select %p137, %s138, %s139
      %p143 = pneg %p137
      %p144 = scmp.eq.s32.totalorder %s29, 3
      %p145 = por %p143, %p144
      %p146 = scmp.ne.s32.totalorder %s138, %s141
      %p147 = scmp.eq.s32.totalorder %s29, 0
      %p148 = por %p146, %p147
      %p149 = scmp.ne.s32.totalorder %s138, %s141
      %p150 = scmp.eq.s32.totalorder %s34, 3
      %p151 = por %p149, %p150
      %p152 = scmp.ne.s32.totalorder %s141, %s142
      %p153 = scmp.eq.s32.totalorder %s34, 0
      %p154 = por %p152, %p153
      %p155 = scmp.ne.s32.totalorder %s141, %s142
      %p156 = scmp.eq.s32.totalorder %s35, 3
      %p157 = por %p155, %p156
      %p159 = scmp.ne.s32.totalorder %s142, %s158
      %p160 = scmp.eq.s32.totalorder %s35, 0
      %p161 = por %p159, %p160
      %s162 = ssub.s32 %s29, %s36
      %p163 = scmp.eq.s32.totalorder %s162, 0
      %s165 = sadd.s32 %s164, 1
      %s166 = scalar_select %p163, %s164, %s165
      %p169 = pneg %p163
      %p170 = scmp.eq.s32.totalorder %s29, 3
      %p171 = por %p169, %p170
      %p172 = scmp.ne.s32.totalorder %s164, %s167
      %p173 = scmp.eq.s32.totalorder %s29, 0
      %p174 = por %p172, %p173
      %p175 = scmp.ne.s32.totalorder %s164, %s167
      %p176 = scmp.eq.s32.totalorder %s34, 3
      %p177 = por %p175, %p176
      %p178 = scmp.ne.s32.totalorder %s167, %s168
      %p179 = scmp.eq.s32.totalorder %s34, 0
      %p180 = por %p178, %p179
      %p181 = scmp.ne.s32.totalorder %s167, %s168
      %p182 = scmp.eq.s32.totalorder %s35, 3
      %p183 = por %p181, %p182
      %p185 = scmp.ne.s32.totalorder %s168, %s184
      %p186 = scmp.eq.s32.totalorder %s35, 0
      %p187 = por %p185, %p186
      %s189 = sadd.s32 %s188, 1
      %p192 = scmp.eq.s32.totalorder %s29, 3
      %p193 = scmp.ne.s32.totalorder %s188, %s190
      %p194 = scmp.eq.s32.totalorder %s29, 0
      %p195 = por %p193, %p194
      %p196 = scmp.ne.s32.totalorder %s188, %s190
      %p197 = scmp.eq.s32.totalorder %s34, 3
      %p198 = por %p196, %p197
      %p199 = scmp.ne.s32.totalorder %s190, %s191
      %p200 = scmp.eq.s32.totalorder %s34, 0
      %p201 = por %p199, %p200
      %p202 = scmp.ne.s32.totalorder %s190, %s191
      %p203 = scmp.eq.s32.totalorder %s35, 3
      %p204 = por %p202, %p203
      %p206 = scmp.ne.s32.totalorder %s191, %s205
      %p207 = scmp.eq.s32.totalorder %s35, 0
      %p208 = por %p206, %p207
      %s210 = sadd.s32 %s209, 1
      %p213 = scmp.eq.s32.totalorder %s29, 3
      %p214 = scmp.ne.s32.totalorder %s209, %s211
      %p215 = scmp.eq.s32.totalorder %s29, 0
      %p216 = por %p214, %p215
      %p217 = scmp.ne.s32.totalorder %s209, %s211
      %p218 = scmp.eq.s32.totalorder %s34, 3
      %p219 = por %p217, %p218
      %p220 = scmp.ne.s32.totalorder %s211, %s212
      %p221 = scmp.eq.s32.totalorder %s34, 0
      %p222 = por %p220, %p221
      %p223 = scmp.ne.s32.totalorder %s211, %s212
      %p224 = scmp.eq.s32.totalorder %s35, 3
      %p225 = por %p223, %p224
      %p227 = scmp.ne.s32.totalorder %s212, %s226
      %p228 = scmp.eq.s32.totalorder %s35, 0
      %p229 = por %p227, %p228
      %s231 = sadd.s32 %s230, 1
      %p234 = scmp.eq.s32.totalorder %s29, 3
      %p235 = scmp.ne.s32.totalorder %s230, %s232
      %p236 = scmp.eq.s32.totalorder %s29, 0
      %p237 = por %p235, %p236
      %p238 = scmp.ne.s32.totalorder %s230, %s232
      %p239 = scmp.eq.s32.totalorder %s34, 3
      %p240 = por %p238, %p239
      %p241 = scmp.ne.s32.totalorder %s232, %s233
      %p242 = scmp.eq.s32.totalorder %s34, 0
      %p243 = por %p241, %p242
      %p244 = scmp.ne.s32.totalorder %s232, %s233
      %p245 = scmp.eq.s32.totalorder %s35, 3
      %p246 = por %p244, %p245
      %p248 = scmp.ne.s32.totalorder %s233, %s247
      %p249 = scmp.eq.s32.totalorder %s35, 0
      %p250 = por %p248, %p249
      %s252 = sadd.s32 %s251, 1
      %p255 = scmp.eq.s32.totalorder %s29, 3
      %p256 = scmp.ne.s32.totalorder %s251, %s253
      %p257 = scmp.eq.s32.totalorder %s29, 0
      %p258 = por %p256, %p257
      %p259 = scmp.ne.s32.totalorder %s251, %s253
      %p260 = scmp.eq.s32.totalorder %s34, 3
      %p261 = por %p259, %p260
      %p262 = scmp.ne.s32.totalorder %s253, %s254
      %p263 = scmp.eq.s32.totalorder %s34, 0
      %p264 = por %p262, %p263
      %p265 = scmp.ne.s32.totalorder %s253, %s254
      %p266 = scmp.eq.s32.totalorder %s35, 3
      %p267 = por %p265, %p266
      %p269 = scmp.ne.s32.totalorder %s254, %s268
      %p270 = scmp.eq.s32.totalorder %s35, 0
      %p271 = por %p269, %p270
      %s273 = sadd.s32 %s272, 1
      %p276 = scmp.eq.s32.totalorder %s29, 3
      %p277 = scmp.ne.s32.totalorder %s272, %s274
      %p278 = scmp.eq.s32.totalorder %s29, 0
      %p279 = por %p277, %p278
      %p280 = scmp.ne.s32.totalorder %s272, %s274
      %p281 = scmp.eq.s32.totalorder %s34, 3
      %p282 = por %p280, %p281
      %p283 = scmp.ne.s32.totalorder %s274, %s275
      %p284 = scmp.eq.s32.totalorder %s34, 0
      %p285 = por %p283, %p284
      %p286 = scmp.ne.s32.totalorder %s274, %s275
      %p287 = scmp.eq.s32.totalorder %s35, 3
      %p288 = por %p286, %p287
      %p290 = scmp.ne.s32.totalorder %s275, %s289
      %p291 = scmp.eq.s32.totalorder %s35, 0
      %p292 = por %p290, %p291
      %s294 = sadd.s32 %s293, 1
      %p297 = scmp.eq.s32.totalorder %s29, 3
      %p298 = scmp.ne.s32.totalorder %s293, %s295
      %p299 = scmp.eq.s32.totalorder %s29, 0
      %p300 = por %p298, %p299
      %p301 = scmp.ne.s32.totalorder %s293, %s295
      %p302 = scmp.eq.s32.totalorder %s34, 3
      %p303 = por %p301, %p302
      %p304 = scmp.ne.s32.totalorder %s295, %s296
      %p305 = scmp.eq.s32.totalorder %s34, 0
      %p306 = por %p304, %p305
      %p307 = scmp.ne.s32.totalorder %s295, %s296
      %p308 = scmp.eq.s32.totalorder %s35, 3
      %p309 = por %p307, %p308
      %p311 = scmp.ne.s32.totalorder %s296, %s310
      %p312 = scmp.eq.s32.totalorder %s35, 0
      %p313 = por %p311, %p312
      %p314 = scmp.le.s32.totalorder 1, %s29
      %p315 = scmp.lt.s32.totalorder %s29, 5
      %p316 = pnand %p314, %p315
      %p317 = pneg %p316
      // Predicated region
      $region9: #{crazyhouse_forward.1} parent=5 // pred_check
        _
      $region10: #{crazyhouse_forward.1} parent=5 // pred_check_branch
        %319 = sbr.rel (%p316) target = $region12
      $region11: #{crazyhouse_forward.1} parent=5 // pred_region
        %s320 = ssub.s32 %s29, 1
        // Predicated region
        $region13: #{crazyhouse_forward.1} parent=11 // pred_check
          %p321 = pneg %p50
        $region14: #{crazyhouse_forward.1} parent=11 // pred_check_branch
          %323 = sbr.rel (%p321) target = $region16
        $region15: #{crazyhouse_forward.1} parent=11 // pred_region
          _
        $region16: #{crazyhouse_forward.1} parent=11 // pred_fallthru
          _
        // Predicated region
        $region17: #{crazyhouse_forward.1} parent=11 // pred_check
          %p324 = pneg %p201
        $region18: #{crazyhouse_forward.1} parent=11 // pred_check_branch
          %326 = sbr.rel (%p324) target = $region20
        $region19: #{crazyhouse_forward.1} parent=11 // pred_region
          %s328 = ssub.s32 64, 64
          %329 = vsyncadd [#allocation12], %s328
          %s331 = sshll.u32 [#allocation11], 4
          %s332 = int_to_ptr.vmem [resolvable:$true] %s331
          %334 = dma.hbm_to_vmem [thread:$0]  %s6, 64, %s332, [#allocation12]
        $region20: #{crazyhouse_forward.1} parent=11 // pred_fallthru
          _
        // Predicated region
        $region21: #{crazyhouse_forward.1} parent=11 // pred_check
          %p335 = pneg %p222
        $region22: #{crazyhouse_forward.1} parent=11 // pred_check_branch
          %337 = sbr.rel (%p335) target = $region24
        $region23: #{crazyhouse_forward.1} parent=11 // pred_region
          %s339 = ssub.s32 64, 64
          %340 = vsyncadd [#allocation12], %s339
          %s342 = sshll.u32 [#allocation13], 4
          %s343 = int_to_ptr.vmem [resolvable:$true] %s342
          %345 = dma.hbm_to_vmem [thread:$0]  %s7, 64, %s343, [#allocation12]
        $region24: #{crazyhouse_forward.1} parent=11 // pred_fallthru
          _
        // Predicated region
        $region25: #{crazyhouse_forward.1} parent=11 // pred_check
          %p346 = pneg %p243
        $region26: #{crazyhouse_forward.1} parent=11 // pred_check_branch
          %348 = sbr.rel (%p346) target = $region28
        $region27: #{crazyhouse_forward.1} parent=11 // pred_region
          %s350 = ssub.s32 64, 64
          %351 = vsyncadd [#allocation15], %s350
          %s353 = sshll.u32 [#allocation14], 4
          %s354 = int_to_ptr.vmem [resolvable:$true] %s353
          %356 = dma.hbm_to_vmem [thread:$0]  %s8, 64, %s354, [#allocation15]
        $region28: #{crazyhouse_forward.1} parent=11 // pred_fallthru
          _
        // Predicated region
        $region29: #{crazyhouse_forward.1} parent=11 // pred_check
          %p357 = pneg %p264
        $region30: #{crazyhouse_forward.1} parent=11 // pred_check_branch
          %359 = sbr.rel (%p357) target = $region32
        $region31: #{crazyhouse_forward.1} parent=11 // pred_region
          %s361 = ssub.s32 8192, 8192
          %362 = vsyncadd [#allocation15], %s361
          %s363 = sshll.u32 [#allocation16], 4
          %s364 = int_to_ptr.vmem [resolvable:$true] %s363
          %369 = dma.hbm_to_vmem [thread:$0]  %s9, 8192, %s364, [#allocation15], 128, 128, 8
        $region32: #{crazyhouse_forward.1} parent=11 // pred_fallthru
          _
        // Predicated region
        $region33: #{crazyhouse_forward.1} parent=11 // pred_check
          %p370 = pneg %p285
        $region34: #{crazyhouse_forward.1} parent=11 // pred_check_branch
          %372 = sbr.rel (%p370) target = $region36
        $region35: #{crazyhouse_forward.1} parent=11 // pred_region
          %s374 = ssub.s32 32, 32
          %375 = vsyncadd [#allocation18], %s374
          %s377 = sshll.u32 [#allocation17], 4
          %s378 = int_to_ptr.vmem [resolvable:$true] %s377
          %380 = dma.hbm_to_vmem [thread:$0]  %s10, 32, %s378, [#allocation18]
        $region36: #{crazyhouse_forward.1} parent=11 // pred_fallthru
          _
      $region12: #{crazyhouse_forward.1} parent=5 // pred_fallthru
        _
      %p381 = scmp.lt.s32.totalorder %s29, 4
      // Predicated region
      $region37: #{crazyhouse_forward.1} parent=5 // pred_check
        %p382 = pneg %p381
      $region38: #{crazyhouse_forward.1} parent=5 // pred_check_branch
        %384 = sbr.rel (%p382) target = $region40
      $region39: #{crazyhouse_forward.1} parent=5 // pred_region
        // Predicated region
        $region41: #{crazyhouse_forward.1} parent=39 // pred_check
          %p385 = pneg %p70
        $region42: #{crazyhouse_forward.1} parent=39 // pred_check_branch
          %387 = sbr.rel (%p385) target = $region44
        $region43: #{crazyhouse_forward.1} parent=39 // pred_region
          %s388 = sand.u32 %s60, 1
          %s389 = scalar_lea.sflag [#allocation4], %s388
          %s390 = sand.u32 %s60, 1
          %s391 = smul.addr %s390, 576
          %s392 = scalar_lea.vmem [#allocation3], %s391
          %s393 = smul.u32 36, %s29
          %s395 = ssub.s32 9216, 9216
          %396 = vsyncadd %s389, %s395
          %s397 = smul.addr %s393, 64
          %s398 = scalar_lea.hbm %s1, %s397
          %s399 = sshll.u32 %s392, 4
          %s400 = int_to_ptr.vmem [resolvable:$true] %s399
          %405 = dma.hbm_to_vmem [thread:$0]  %s398, 9216, %s400, %s389, 9216, 2304, 144
        $region44: #{crazyhouse_forward.1} parent=39 // pred_fallthru
          _
        // Predicated region
        $region45: #{crazyhouse_forward.1} parent=39 // pred_check
          %p406 = pneg %p96
        $region46: #{crazyhouse_forward.1} parent=39 // pred_check_branch
          %408 = sbr.rel (%p406) target = $region48
        $region47: #{crazyhouse_forward.1} parent=39 // pred_region
          %s409 = sand.u32 %s29, 1
          %s410 = scalar_lea.sflag [#allocation6], %s409
          %s411 = sand.u32 %s86, 1
          %s412 = smul.addr %s411, 36
          %s413 = scalar_lea.vmem [#allocation5], %s412
          %s414 = smul.u32 36, %s29
          %s416 = ssub.s32 576, 576
          %417 = vsyncadd %s410, %s416
          %s418 = smul.addr %s414, 16
          %s419 = scalar_lea.hbm %s2, %s418
          %s421 = sshll.u32 %s413, 4
          %s422 = int_to_ptr.vmem [resolvable:$true] %s421
          %424 = dma.hbm_to_vmem [thread:$0]  %s419, 576, %s422, %s410
        $region48: #{crazyhouse_forward.1} parent=39 // pred_fallthru
          _
        // Predicated region
        $region49: #{crazyhouse_forward.1} parent=39 // pred_check
          %p425 = pneg %p122
        $region50: #{crazyhouse_forward.1} parent=39 // pred_check_branch
          %427 = sbr.rel (%p425) target = $region52
        $region51: #{crazyhouse_forward.1} parent=39 // pred_region
          %s428 = sand.u32 %s29, 1
          %s429 = scalar_lea.sflag [#allocation6], %s428
          %s430 = sand.u32 %s112, 1
          %s431 = smul.addr %s430, 36
          %s432 = scalar_lea.vmem [#allocation7], %s431
          %s433 = smul.u32 36, %s29
          %s435 = ssub.s32 576, 576
          %436 = vsyncadd %s429, %s435
          %s437 = smul.addr %s433, 16
          %s438 = scalar_lea.hbm %s3, %s437
          %s440 = sshll.u32 %s432, 4
          %s441 = int_to_ptr.vmem [resolvable:$true] %s440
          %443 = dma.hbm_to_vmem [thread:$0]  %s438, 576, %s441, %s429
        $region52: #{crazyhouse_forward.1} parent=39 // pred_fallthru
          _
        // Predicated region
        $region53: #{crazyhouse_forward.1} parent=39 // pred_check
          %p444 = pneg %p148
        $region54: #{crazyhouse_forward.1} parent=39 // pred_check_branch
          %446 = sbr.rel (%p444) target = $region56
        $region55: #{crazyhouse_forward.1} parent=39 // pred_region
          %s447 = sand.u32 %s29, 1
          %s448 = scalar_lea.sflag [#allocation9], %s447
          %s449 = sand.u32 %s138, 1
          %s450 = smul.addr %s449, 36
          %s451 = scalar_lea.vmem [#allocation8], %s450
          %s452 = smul.u32 36, %s29
          %s454 = ssub.s32 576, 576
          %455 = vsyncadd %s448, %s454
          %s456 = smul.addr %s452, 16
          %s457 = scalar_lea.hbm %s4, %s456
          %s459 = sshll.u32 %s451, 4
          %s460 = int_to_ptr.vmem [resolvable:$true] %s459
          %462 = dma.hbm_to_vmem [thread:$0]  %s457, 576, %s460, %s448
        $region56: #{crazyhouse_forward.1} parent=39 // pred_fallthru
          _
        // Predicated region
        $region57: #{crazyhouse_forward.1} parent=39 // pred_check
          %p463 = pneg %p174
        $region58: #{crazyhouse_forward.1} parent=39 // pred_check_branch
          %465 = sbr.rel (%p463) target = $region60
        $region59: #{crazyhouse_forward.1} parent=39 // pred_region
          %s466 = sand.u32 %s29, 1
          %s467 = scalar_lea.sflag [#allocation9], %s466
          %s468 = sand.u32 %s164, 1
          %s469 = smul.addr %s468, 9216
          %s470 = scalar_lea.vmem [#allocation10], %s469
          %s471 = smul.u32 576, %s29
          %s473 = ssub.s32 147456, 147456
          %474 = vsyncadd %s467, %s473
          %s475 = smul.addr %s471, 4
          %s476 = smul.addr %s475, 64
          %s477 = scalar_lea.hbm %s5, %s476
          %s478 = sshll.u32 %s470, 4
          %s479 = int_to_ptr.vmem [resolvable:$true] %s478
          %484 = dma.hbm_to_vmem [thread:$0]  %s477, 147456, %s479, %s467, 256, 256, 16
        $region60: #{crazyhouse_forward.1} parent=39 // pred_fallthru
          _
      $region40: #{crazyhouse_forward.1} parent=5 // pred_fallthru
        _
      %p485 = scmp.le.s32.totalorder 1, %s29
      %p486 = scmp.lt.s32.totalorder %s29, 5
      %p487 = pnand %p485, %p486
      %p488 = pneg %p487
      // Predicated region
      $region61: #{crazyhouse_forward.1} parent=5 // pred_check
        _
      $region62: #{crazyhouse_forward.1} parent=5 // pred_check_branch
        %490 = sbr.rel (%p487) target = $region64
      $region63: #{crazyhouse_forward.1} parent=5 // pred_region
        %s491 = ssub.s32 %s29, 1
        %s492 = sand.u32 %s63, 1
        %s493 = scalar_lea.sflag [#allocation4], %s492
        %s494 = sand.u32 %s63, 1
        %s495 = smul.addr %s494, 576
        %s496 = scalar_lea.vmem [#allocation3], %s495
        // Predicated region
        $region65: #{crazyhouse_forward.1} parent=63 // pred_check
          %p497 = pneg %p76
        $region66: #{crazyhouse_forward.1} parent=63 // pred_check_branch
          %499 = sbr.rel (%p497) target = $region68
        $region67: #{crazyhouse_forward.1} parent=63 // pred_region
          %500 = dma.done %s493, 9216
        $region68: #{crazyhouse_forward.1} parent=63 // pred_fallthru
          _
        %s501 = sand.u32 %s34, 1
        %s502 = scalar_lea.sflag [#allocation6], %s501
        %s503 = sand.u32 %s89, 1
        %s504 = smul.addr %s503, 36
        %s505 = scalar_lea.vmem [#allocation5], %s504
        // Predicated region
        $region69: #{crazyhouse_forward.1} parent=63 // pred_check
          %p506 = pneg %p102
        $region70: #{crazyhouse_forward.1} parent=63 // pred_check_branch
          %508 = sbr.rel (%p506) target = $region72
        $region71: #{crazyhouse_forward.1} parent=63 // pred_region
          %509 = dma.done %s502, 576
        $region72: #{crazyhouse_forward.1} parent=63 // pred_fallthru
          _
        %s510 = sand.u32 %s34, 1
        %s511 = scalar_lea.sflag [#allocation6], %s510
        %s512 = sand.u32 %s115, 1
        %s513 = smul.addr %s512, 36
        %s514 = scalar_lea.vmem [#allocation7], %s513
        // Predicated region
        $region73: #{crazyhouse_forward.1} parent=63 // pred_check
          %p515 = pneg %p128
        $region74: #{crazyhouse_forward.1} parent=63 // pred_check_branch
          %517 = sbr.rel (%p515) target = $region76
        $region75: #{crazyhouse_forward.1} parent=63 // pred_region
          %518 = dma.done %s511, 576
        $region76: #{crazyhouse_forward.1} parent=63 // pred_fallthru
          _
        %s519 = sand.u32 %s34, 1
        %s520 = scalar_lea.sflag [#allocation9], %s519
        %s521 = sand.u32 %s141, 1
        %s522 = smul.addr %s521, 36
        %s523 = scalar_lea.vmem [#allocation8], %s522
        // Predicated region
        $region77: #{crazyhouse_forward.1} parent=63 // pred_check
          %p524 = pneg %p154
        $region78: #{crazyhouse_forward.1} parent=63 // pred_check_branch
          %526 = sbr.rel (%p524) target = $region80
        $region79: #{crazyhouse_forward.1} parent=63 // pred_region
          %527 = dma.done %s520, 576
        $region80: #{crazyhouse_forward.1} parent=63 // pred_fallthru
          _
        %s528 = sand.u32 %s34, 1
        %s529 = scalar_lea.sflag [#allocation9], %s528
        %s530 = sand.u32 %s167, 1
        %s531 = smul.addr %s530, 9216
        %s532 = scalar_lea.vmem [#allocation10], %s531
        // Predicated region
        $region81: #{crazyhouse_forward.1} parent=63 // pred_check
          %p533 = pneg %p180
        $region82: #{crazyhouse_forward.1} parent=63 // pred_check_branch
          %535 = sbr.rel (%p533) target = $region84
        $region83: #{crazyhouse_forward.1} parent=63 // pred_region
          %536 = dma.done %s529, 147456
        $region84: #{crazyhouse_forward.1} parent=63 // pred_fallthru
          _
        // Predicated region
        $region85: #{crazyhouse_forward.1} parent=63 // pred_check
          %p537 = pneg %p201
        $region86: #{crazyhouse_forward.1} parent=63 // pred_check_branch
          %539 = sbr.rel (%p537) target = $region88
        $region87: #{crazyhouse_forward.1} parent=63 // pred_region
          %540 = dma.done [#allocation12], 64
        $region88: #{crazyhouse_forward.1} parent=63 // pred_fallthru
          _
        // Predicated region
        $region89: #{crazyhouse_forward.1} parent=63 // pred_check
          %p541 = pneg %p222
        $region90: #{crazyhouse_forward.1} parent=63 // pred_check_branch
          %543 = sbr.rel (%p541) target = $region92
        $region91: #{crazyhouse_forward.1} parent=63 // pred_region
          %544 = dma.done [#allocation12], 64
        $region92: #{crazyhouse_forward.1} parent=63 // pred_fallthru
          _
        // Predicated region
        $region93: #{crazyhouse_forward.1} parent=63 // pred_check
          %p545 = pneg %p243
        $region94: #{crazyhouse_forward.1} parent=63 // pred_check_branch
          %547 = sbr.rel (%p545) target = $region96
        $region95: #{crazyhouse_forward.1} parent=63 // pred_region
          %548 = dma.done [#allocation15], 64
        $region96: #{crazyhouse_forward.1} parent=63 // pred_fallthru
          _
        // Predicated region
        $region97: #{crazyhouse_forward.1} parent=63 // pred_check
          %p549 = pneg %p264
        $region98: #{crazyhouse_forward.1} parent=63 // pred_check_branch
          %551 = sbr.rel (%p549) target = $region100
        $region99: #{crazyhouse_forward.1} parent=63 // pred_region
          %552 = dma.done [#allocation15], 8192
        $region100: #{crazyhouse_forward.1} parent=63 // pred_fallthru
          _
        // Predicated region
        $region101: #{crazyhouse_forward.1} parent=63 // pred_check
          %p553 = pneg %p285
        $region102: #{crazyhouse_forward.1} parent=63 // pred_check_branch
          %555 = sbr.rel (%p553) target = $region104
        $region103: #{crazyhouse_forward.1} parent=63 // pred_region
          %556 = dma.done [#allocation18], 32
        $region104: #{crazyhouse_forward.1} parent=63 // pred_fallthru
          _
        %p557 = pneg %p50
        %p558 = pneg %p47
        %s559 = sand.u32 %s63, 1
        %s560 = scalar_lea.sflag [#allocation4], %s559
        %s561 = sand.u32 %s63, 1
        %s562 = smul.addr %s561, 576
        %s563 = scalar_lea.vmem [#allocation3], %s562
        %p564 = pneg %p76
        %p565 = pneg %p73
        %s566 = sand.u32 %s34, 1
        %s567 = scalar_lea.sflag [#allocation6], %s566
        %s568 = sand.u32 %s89, 1
        %s569 = smul.addr %s568, 36
        %s570 = scalar_lea.vmem [#allocation5], %s569
        %p571 = pneg %p102
        %p572 = pneg %p99
        %s573 = sand.u32 %s34, 1
        %s574 = scalar_lea.sflag [#allocation6], %s573
        %s575 = sand.u32 %s115, 1
        %s576 = smul.addr %s575, 36
        %s577 = scalar_lea.vmem [#allocation7], %s576
        %p578 = pneg %p128
        %p579 = pneg %p125
        %s580 = sand.u32 %s34, 1
        %s581 = scalar_lea.sflag [#allocation9], %s580
        %s582 = sand.u32 %s141, 1
        %s583 = smul.addr %s582, 36
        %s584 = scalar_lea.vmem [#allocation8], %s583
        %p585 = pneg %p154
        %p586 = pneg %p151
        %s587 = sand.u32 %s34, 1
        %s588 = scalar_lea.sflag [#allocation9], %s587
        %s589 = sand.u32 %s167, 1
        %s590 = smul.addr %s589, 9216
        %s591 = scalar_lea.vmem [#allocation10], %s590
        %p592 = pneg %p180
        %p593 = pneg %p177
        %p594 = pneg %p201
        %p595 = pneg %p198
        %p596 = pneg %p222
        %p597 = pneg %p219
        %p598 = pneg %p243
        %p599 = pneg %p240
        %p600 = pneg %p264
        %p601 = pneg %p261
        %p602 = pneg %p285
        %p603 = pneg %p282
        %p604 = pneg %p306
        %p605 = pneg %p303
        %s606 = smul.u32 36, %s34
        %s607 = smul.u32 36, %s34
        %s608 = smul.u32 36, %s34
        %s609 = smul.u32 36, %s34
        %s610 = smul.u32 576, %s34
        %p612 = scmp.eq.s32.totalorder %s34, 0
        // Predicated region
        $region105: #{crazyhouse_forward.1} parent=63 // pred_check
          %p613 = pneg %p612
        $region106: #{crazyhouse_forward.1} parent=63 // pred_check_branch
          %615 = sbr.rel (%p613) target = $region108
        $region107: #{crazyhouse_forward.1} parent=63 // pred_region
          %616 = vst [vmem:[#allocation2] sm:$0xff] 0.0
        $region108: #{crazyhouse_forward.1} parent=63 // pred_fallthru
          _
        %v617 = vld [vmem:[%s0] sm:$0x1]
        %v618 = vld [vmem:[%s496] sm:$0xff]
        %v619 = vld [vmem:[%s496 + $0x8] sm:$0xff]
        %v620 = vld [vmem:[%s496 + $0x10] sm:$0xff]
        %v621 = vld [vmem:[%s496 + $0x18] sm:$0xff]
        %v622 = vld [vmem:[%s496 + $0x20] sm:$0xff]
        %v623 = vld [vmem:[%s496 + $0x28] sm:$0xff]
        %v624 = vld [vmem:[%s496 + $0x30] sm:$0xff]
        %v625 = vld [vmem:[%s496 + $0x38] sm:$0xff]
        %v626 = vld [vmem:[%s496 + $0x40] sm:$0xff]
        %v627 = vld [vmem:[%s496 + $0x48] sm:$0xff]
        %v628 = vld [vmem:[%s496 + $0x50] sm:$0xff]
        %v629 = vld [vmem:[%s496 + $0x58] sm:$0xff]
        %v630 = vld [vmem:[%s496 + $0x60] sm:$0xff]
        %v631 = vld [vmem:[%s496 + $0x68] sm:$0xff]
        %v632 = vld [vmem:[%s496 + $0x70] sm:$0xff]
        %v633 = vld [vmem:[%s496 + $0x78] sm:$0xff]
        %v634 = vld [vmem:[%s496 + $0x80] sm:$0xff]
        %v635 = vld [vmem:[%s496 + $0x88] sm:$0xff]
        %v636 = vld [vmem:[%s496 + $0x90] sm:$0xff]
        %v637 = vld [vmem:[%s496 + $0x98] sm:$0xff]
        %v638 = vld [vmem:[%s496 + $0xa0] sm:$0xff]
        %v639 = vld [vmem:[%s496 + $0xa8] sm:$0xff]
        %v640 = vld [vmem:[%s496 + $0xb0] sm:$0xff]
        %v641 = vld [vmem:[%s496 + $0xb8] sm:$0xff]
        %v642 = vld [vmem:[%s496 + $0xc0] sm:$0xff]
        %v643 = vld [vmem:[%s496 + $0xc8] sm:$0xff]
        %v644 = vld [vmem:[%s496 + $0xd0] sm:$0xff]
        %v645 = vld [vmem:[%s496 + $0xd8] sm:$0xff]
        %v646 = vld [vmem:[%s496 + $0xe0] sm:$0xff]
        %v647 = vld [vmem:[%s496 + $0xe8] sm:$0xff]
        %v648 = vld [vmem:[%s496 + $0xf0] sm:$0xff]
        %v649 = vld [vmem:[%s496 + $0xf8] sm:$0xff]
        %v650 = vld [vmem:[%s496 + $0x100] sm:$0xff]
        %v651 = vld [vmem:[%s496 + $0x108] sm:$0xff]
        %v652 = vld [vmem:[%s496 + $0x110] sm:$0xff]
        %v653 = vld [vmem:[%s496 + $0x118] sm:$0xff]
        %v654 = vld [vmem:[%s496 + $0x120] sm:$0xff]
        %v655 = vld [vmem:[%s496 + $0x128] sm:$0xff]
        %v656 = vld [vmem:[%s496 + $0x130] sm:$0xff]
        %v657 = vld [vmem:[%s496 + $0x138] sm:$0xff]
        %v658 = vld [vmem:[%s496 + $0x140] sm:$0xff]
        %v659 = vld [vmem:[%s496 + $0x148] sm:$0xff]
        %v660 = vld [vmem:[%s496 + $0x150] sm:$0xff]
        %v661 = vld [vmem:[%s496 + $0x158] sm:$0xff]
        %v662 = vld [vmem:[%s496 + $0x160] sm:$0xff]
        %v663 = vld [vmem:[%s496 + $0x168] sm:$0xff]
        %v664 = vld [vmem:[%s496 + $0x170] sm:$0xff]
        %v665 = vld [vmem:[%s496 + $0x178] sm:$0xff]
        %v666 = vld [vmem:[%s496 + $0x180] sm:$0xff]
        %v667 = vld [vmem:[%s496 + $0x188] sm:$0xff]
        %v668 = vld [vmem:[%s496 + $0x190] sm:$0xff]
        %v669 = vld [vmem:[%s496 + $0x198] sm:$0xff]
        %v670 = vld [vmem:[%s496 + $0x1a0] sm:$0xff]
        %v671 = vld [vmem:[%s496 + $0x1a8] sm:$0xff]
        %v672 = vld [vmem:[%s496 + $0x1b0] sm:$0xff]
        %v673 = vld [vmem:[%s496 + $0x1b8] sm:$0xff]
        %v674 = vld [vmem:[%s496 + $0x1c0] sm:$0xff]
        %v675 = vld [vmem:[%s496 + $0x1c8] sm:$0xff]
        %v676 = vld [vmem:[%s496 + $0x1d0] sm:$0xff]
        %v677 = vld [vmem:[%s496 + $0x1d8] sm:$0xff]
        %v678 = vld [vmem:[%s496 + $0x1e0] sm:$0xff]
        %v679 = vld [vmem:[%s496 + $0x1e8] sm:$0xff]
        %v680 = vld [vmem:[%s496 + $0x1f0] sm:$0xff]
        %v681 = vld [vmem:[%s496 + $0x1f8] sm:$0xff]
        %v682 = vld [vmem:[%s496 + $0x200] sm:$0xff]
        %v683 = vld [vmem:[%s496 + $0x208] sm:$0xff]
        %v684 = vld [vmem:[%s496 + $0x210] sm:$0xff]
        %v685 = vld [vmem:[%s496 + $0x218] sm:$0xff]
        %v686 = vld [vmem:[%s496 + $0x220] sm:$0xff]
        %v687 = vld [vmem:[%s496 + $0x228] sm:$0xff]
        %v688 = vld [vmem:[%s496 + $0x230] sm:$0xff]
        %v689 = vld [vmem:[%s496 + $0x238] sm:$0xff]
        %v690 = vld [vmem:[%s505] sm:$0xff]
        %v691 = vld [vmem:[%s505 + $0x8] sm:$0xff]
        %v692 = vld [vmem:[%s505 + $0x10] sm:$0xff]
        %v693 = vld [vmem:[%s505 + $0x18] sm:$0xff]
        %v694 = vld [vmem:[%s505 + $0x20] sm:$0xf]
        %v700 = vlaneseq
        %v701 = vshrl.u32 %v700, 7
        %v702 = vsub.s32 0, %v701
        %v703 = vrot.slane %v690, %v702
        %v704 = vlaneseq
        %v705 = vshrl.u32 %v704, 7
        %v706 = vsub.s32 1, %v705
        %v707 = vrot.slane %v690, %v706
        %v708 = vlaneseq
        %v709 = vshrl.u32 %v708, 7
        %v710 = vsub.s32 2, %v709
        %v711 = vrot.slane %v690, %v710
        %v712 = vlaneseq
        %v713 = vshrl.u32 %v712, 7
        %v714 = vsub.s32 3, %v713
        %v715 = vrot.slane %v690, %v714
        %v716 = vlaneseq
        %v717 = vshrl.u32 %v716, 7
        %v718 = vsub.s32 4, %v717
        %v719 = vrot.slane %v690, %v718
        %v720 = vlaneseq
        %v721 = vshrl.u32 %v720, 7
        %v722 = vsub.s32 5, %v721
        %v723 = vrot.slane %v690, %v722
        %v724 = vlaneseq
        %v725 = vshrl.u32 %v724, 7
        %v726 = vsub.s32 6, %v725
        %v727 = vrot.slane %v690, %v726
        %v728 = vlaneseq
        %v729 = vshrl.u32 %v728, 7
        %v730 = vsub.s32 7, %v729
        %v731 = vrot.slane %v690, %v730
        %v732 = vlaneseq
        %v733 = vshrl.u32 %v732, 7
        %v734 = vsub.s32 0, %v733
        %v735 = vrot.slane %v691, %v734
        %v736 = vlaneseq
        %v737 = vshrl.u32 %v736, 7
        %v738 = vsub.s32 1, %v737
        %v739 = vrot.slane %v691, %v738
        %v740 = vlaneseq
        %v741 = vshrl.u32 %v740, 7
        %v742 = vsub.s32 2, %v741
        %v743 = vrot.slane %v691, %v742
        %v744 = vlaneseq
        %v745 = vshrl.u32 %v744, 7
        %v746 = vsub.s32 3, %v745
        %v747 = vrot.slane %v691, %v746
        %v748 = vlaneseq
        %v749 = vshrl.u32 %v748, 7
        %v750 = vsub.s32 4, %v749
        %v751 = vrot.slane %v691, %v750
        %v752 = vlaneseq
        %v753 = vshrl.u32 %v752, 7
        %v754 = vsub.s32 5, %v753
        %v755 = vrot.slane %v691, %v754
        %v756 = vlaneseq
        %v757 = vshrl.u32 %v756, 7
        %v758 = vsub.s32 6, %v757
        %v759 = vrot.slane %v691, %v758
        %v760 = vlaneseq
        %v761 = vshrl.u32 %v760, 7
        %v762 = vsub.s32 7, %v761
        %v763 = vrot.slane %v691, %v762
        %v764 = vlaneseq
        %v765 = vshrl.u32 %v764, 7
        %v766 = vsub.s32 0, %v765
        %v767 = vrot.slane %v692, %v766
        %v768 = vlaneseq
        %v769 = vshrl.u32 %v768, 7
        %v770 = vsub.s32 1, %v769
        %v771 = vrot.slane %v692, %v770
        %v772 = vlaneseq
        %v773 = vshrl.u32 %v772, 7
        %v774 = vsub.s32 2, %v773
        %v775 = vrot.slane %v692, %v774
        %v776 = vlaneseq
        %v777 = vshrl.u32 %v776, 7
        %v778 = vsub.s32 3, %v777
        %v779 = vrot.slane %v692, %v778
        %v780 = vlaneseq
        %v781 = vshrl.u32 %v780, 7
        %v782 = vsub.s32 4, %v781
        %v783 = vrot.slane %v692, %v782
        %v784 = vlaneseq
        %v785 = vshrl.u32 %v784, 7
        %v786 = vsub.s32 5, %v785
        %v787 = vrot.slane %v692, %v786
        %v788 = vlaneseq
        %v789 = vshrl.u32 %v788, 7
        %v790 = vsub.s32 6, %v789
        %v791 = vrot.slane %v692, %v790
        %v792 = vlaneseq
        %v793 = vshrl.u32 %v792, 7
        %v794 = vsub.s32 7, %v793
        %v795 = vrot.slane %v692, %v794
        %v796 = vlaneseq
        %v797 = vshrl.u32 %v796, 7
        %v798 = vsub.s32 0, %v797
        %v799 = vrot.slane %v693, %v798
        %v800 = vlaneseq
        %v801 = vshrl.u32 %v800, 7
        %v802 = vsub.s32 1, %v801
        %v803 = vrot.slane %v693, %v802
        %v804 = vlaneseq
        %v805 = vshrl.u32 %v804, 7
        %v806 = vsub.s32 2, %v805
        %v807 = vrot.slane %v693, %v806
        %v808 = vlaneseq
        %v809 = vshrl.u32 %v808, 7
        %v810 = vsub.s32 3, %v809
        %v811 = vrot.slane %v693, %v810
        %v812 = vlaneseq
        %v813 = vshrl.u32 %v812, 7
        %v814 = vsub.s32 4, %v813
        %v815 = vrot.slane %v693, %v814
        %v816 = vlaneseq
        %v817 = vshrl.u32 %v816, 7
        %v818 = vsub.s32 5, %v817
        %v819 = vrot.slane %v693, %v818
        %v820 = vlaneseq
        %v821 = vshrl.u32 %v820, 7
        %v822 = vsub.s32 6, %v821
        %v823 = vrot.slane %v693, %v822
        %v824 = vlaneseq
        %v825 = vshrl.u32 %v824, 7
        %v826 = vsub.s32 7, %v825
        %v827 = vrot.slane %v693, %v826
        %v828 = vlaneseq
        %v829 = vshrl.u32 %v828, 7
        %v830 = vsub.s32 0, %v829
        %v831 = vrot.slane %v694, %v830
        %v832 = vlaneseq
        %v833 = vshrl.u32 %v832, 7
        %v834 = vsub.s32 1, %v833
        %v835 = vrot.slane %v694, %v834
        %v836 = vlaneseq
        %v837 = vshrl.u32 %v836, 7
        %v838 = vsub.s32 2, %v837
        %v839 = vrot.slane %v694, %v838
        %v840 = vlaneseq
        %v841 = vshrl.u32 %v840, 7
        %v842 = vsub.s32 3, %v841
        %v843 = vrot.slane %v694, %v842
        %v952 = vunpack.c.l.b16 %v618
        %v953 = vunpack.c.h.b16 %v618
        %v954 = vunpack.c.l.b16 %v619
        %v955 = vunpack.c.h.b16 %v619
        %v956 = vunpack.c.l.b16 %v620
        %v957 = vunpack.c.h.b16 %v620
        %v958 = vunpack.c.l.b16 %v621
        %v959 = vunpack.c.h.b16 %v621
        %v960 = vunpack.c.l.b16 %v622
        %v961 = vunpack.c.h.b16 %v622
        %v962 = vunpack.c.l.b16 %v623
        %v963 = vunpack.c.h.b16 %v623
        %v964 = vunpack.c.l.b16 %v624
        %v965 = vunpack.c.h.b16 %v624
        %v966 = vunpack.c.l.b16 %v625
        %v967 = vunpack.c.h.b16 %v625
        %v968 = vunpack.c.l.b16 %v626
        %v969 = vunpack.c.h.b16 %v626
        %v970 = vunpack.c.l.b16 %v627
        %v971 = vunpack.c.h.b16 %v627
        %v972 = vunpack.c.l.b16 %v628
        %v973 = vunpack.c.h.b16 %v628
        %v974 = vunpack.c.l.b16 %v629
        %v975 = vunpack.c.h.b16 %v629
        %v976 = vunpack.c.l.b16 %v630
        %v977 = vunpack.c.h.b16 %v630
        %v978 = vunpack.c.l.b16 %v631
        %v979 = vunpack.c.h.b16 %v631
        %v980 = vunpack.c.l.b16 %v632
        %v981 = vunpack.c.h.b16 %v632
        %v982 = vunpack.c.l.b16 %v633
        %v983 = vunpack.c.h.b16 %v633
        %v984 = vunpack.c.l.b16 %v634
        %v985 = vunpack.c.h.b16 %v634
        %v986 = vunpack.c.l.b16 %v635
        %v987 = vunpack.c.h.b16 %v635
        %v988 = vunpack.c.l.b16 %v636
        %v989 = vunpack.c.h.b16 %v636
        %v990 = vunpack.c.l.b16 %v637
        %v991 = vunpack.c.h.b16 %v637
        %v992 = vunpack.c.l.b16 %v638
        %v993 = vunpack.c.h.b16 %v638
        %v994 = vunpack.c.l.b16 %v639
        %v995 = vunpack.c.h.b16 %v639
        %v996 = vunpack.c.l.b16 %v640
        %v997 = vunpack.c.h.b16 %v640
        %v998 = vunpack.c.l.b16 %v641
        %v999 = vunpack.c.h.b16 %v641
        %v1000 = vunpack.c.l.b16 %v642
        %v1001 = vunpack.c.h.b16 %v642
        %v1002 = vunpack.c.l.b16 %v643
        %v1003 = vunpack.c.h.b16 %v643
        %v1004 = vunpack.c.l.b16 %v644
        %v1005 = vunpack.c.h.b16 %v644
        %v1006 = vunpack.c.l.b16 %v645
        %v1007 = vunpack.c.h.b16 %v645
        %v1008 = vunpack.c.l.b16 %v646
        %v1009 = vunpack.c.h.b16 %v646
        %v1010 = vunpack.c.l.b16 %v647
        %v1011 = vunpack.c.h.b16 %v647
        %v1012 = vunpack.c.l.b16 %v648
        %v1013 = vunpack.c.h.b16 %v648
        %v1014 = vunpack.c.l.b16 %v649
        %v1015 = vunpack.c.h.b16 %v649
        %v1016 = vunpack.c.l.b16 %v650
        %v1017 = vunpack.c.h.b16 %v650
        %v1018 = vunpack.c.l.b16 %v651
        %v1019 = vunpack.c.h.b16 %v651
        %v1020 = vunpack.c.l.b16 %v652
        %v1021 = vunpack.c.h.b16 %v652
        %v1022 = vunpack.c.l.b16 %v653
        %v1023 = vunpack.c.h.b16 %v653
        %v1024 = vunpack.c.l.b16 %v654
        %v1025 = vunpack.c.h.b16 %v654
        %v1026 = vunpack.c.l.b16 %v655
        %v1027 = vunpack.c.h.b16 %v655
        %v1028 = vunpack.c.l.b16 %v656
        %v1029 = vunpack.c.h.b16 %v656
        %v1030 = vunpack.c.l.b16 %v657
        %v1031 = vunpack.c.h.b16 %v657
        %v1032 = vunpack.c.l.b16 %v658
        %v1033 = vunpack.c.h.b16 %v658
        %v1034 = vunpack.c.l.b16 %v659
        %v1035 = vunpack.c.h.b16 %v659
        %v1036 = vunpack.c.l.b16 %v660
        %v1037 = vunpack.c.h.b16 %v660
        %v1038 = vunpack.c.l.b16 %v661
        %v1039 = vunpack.c.h.b16 %v661
        %v1040 = vunpack.c.l.b16 %v662
        %v1041 = vunpack.c.h.b16 %v662
        %v1042 = vunpack.c.l.b16 %v663
        %v1043 = vunpack.c.h.b16 %v663
        %v1044 = vunpack.c.l.b16 %v664
        %v1045 = vunpack.c.h.b16 %v664
        %v1046 = vunpack.c.l.b16 %v665
        %v1047 = vunpack.c.h.b16 %v665
        %v1048 = vunpack.c.l.b16 %v666
        %v1049 = vunpack.c.h.b16 %v666
        %v1050 = vunpack.c.l.b16 %v667
        %v1051 = vunpack.c.h.b16 %v667
        %v1052 = vunpack.c.l.b16 %v668
        %v1053 = vunpack.c.h.b16 %v668
        %v1054 = vunpack.c.l.b16 %v669
        %v1055 = vunpack.c.h.b16 %v669
        %v1056 = vunpack.c.l.b16 %v670
        %v1057 = vunpack.c.h.b16 %v670
        %v1058 = vunpack.c.l.b16 %v671
        %v1059 = vunpack.c.h.b16 %v671
        %v1060 = vunpack.c.l.b16 %v672
        %v1061 = vunpack.c.h.b16 %v672
        %v1062 = vunpack.c.l.b16 %v673
        %v1063 = vunpack.c.h.b16 %v673
        %v1064 = vunpack.c.l.b16 %v674
        %v1065 = vunpack.c.h.b16 %v674
        %v1066 = vunpack.c.l.b16 %v675
        %v1067 = vunpack.c.h.b16 %v675
        %v1068 = vunpack.c.l.b16 %v676
        %v1069 = vunpack.c.h.b16 %v676
        %v1070 = vunpack.c.l.b16 %v677
        %v1071 = vunpack.c.h.b16 %v677
        %v1072 = vunpack.c.l.b16 %v678
        %v1073 = vunpack.c.h.b16 %v678
        %v1074 = vunpack.c.l.b16 %v679
        %v1075 = vunpack.c.h.b16 %v679
        %v1076 = vunpack.c.l.b16 %v680
        %v1077 = vunpack.c.h.b16 %v680
        %v1078 = vunpack.c.l.b16 %v681
        %v1079 = vunpack.c.h.b16 %v681
        %v1080 = vunpack.c.l.b16 %v682
        %v1081 = vunpack.c.h.b16 %v682
        %v1082 = vunpack.c.l.b16 %v683
        %v1083 = vunpack.c.h.b16 %v683
        %v1084 = vunpack.c.l.b16 %v684
        %v1085 = vunpack.c.h.b16 %v684
        %v1086 = vunpack.c.l.b16 %v685
        %v1087 = vunpack.c.h.b16 %v685
        %v1088 = vunpack.c.l.b16 %v686
        %v1089 = vunpack.c.h.b16 %v686
        %v1090 = vunpack.c.l.b16 %v687
        %v1091 = vunpack.c.h.b16 %v687
        %v1092 = vunpack.c.l.b16 %v688
        %v1093 = vunpack.c.h.b16 %v688
        %v1094 = vunpack.c.l.b16 %v689
        %v1095 = vunpack.c.h.b16 %v689
        %v1096 = vpack.c.b16 %v988, %v952
        %v1097 = vpack.c.b16 %v989, %v953
        %v1098 = vpack.c.b16 %v990, %v954
        %v1099 = vpack.c.b16 %v991, %v955
        %v1100 = vpack.c.b16 %v992, %v956
        %v1101 = vpack.c.b16 %v993, %v957
        %v1102 = vpack.c.b16 %v994, %v958
        %v1103 = vpack.c.b16 %v995, %v959
        %v1104 = vpack.c.b16 %v996, %v960
        %v1105 = vpack.c.b16 %v997, %v961
        %v1106 = vpack.c.b16 %v998, %v962
        %v1107 = vpack.c.b16 %v999, %v963
        %v1108 = vpack.c.b16 %v1000, %v964
        %v1109 = vpack.c.b16 %v1001, %v965
        %v1110 = vpack.c.b16 %v1002, %v966
        %v1111 = vpack.c.b16 %v1003, %v967
        %v1112 = vpack.c.b16 %v1004, %v968
        %v1113 = vpack.c.b16 %v1005, %v969
        %v1114 = vpack.c.b16 %v1006, %v970
        %v1115 = vpack.c.b16 %v1007, %v971
        %v1116 = vpack.c.b16 %v1008, %v972
        %v1117 = vpack.c.b16 %v1009, %v973
        %v1118 = vpack.c.b16 %v1010, %v974
        %v1119 = vpack.c.b16 %v1011, %v975
        %v1120 = vpack.c.b16 %v1012, %v976
        %v1121 = vpack.c.b16 %v1013, %v977
        %v1122 = vpack.c.b16 %v1014, %v978
        %v1123 = vpack.c.b16 %v1015, %v979
        %v1124 = vpack.c.b16 %v1016, %v980
        %v1125 = vpack.c.b16 %v1017, %v981
        %v1126 = vpack.c.b16 %v1018, %v982
        %v1127 = vpack.c.b16 %v1019, %v983
        %v1128 = vpack.c.b16 %v1020, %v984
        %v1129 = vpack.c.b16 %v1021, %v985
        %v1130 = vpack.c.b16 %v1022, %v986
        %v1131 = vpack.c.b16 %v1023, %v987
        %v1132 = vpack.c.b16 %v1060, %v1024
        %v1133 = vpack.c.b16 %v1061, %v1025
        %v1134 = vpack.c.b16 %v1062, %v1026
        %v1135 = vpack.c.b16 %v1063, %v1027
        %v1136 = vpack.c.b16 %v1064, %v1028
        %v1137 = vpack.c.b16 %v1065, %v1029
        %v1138 = vpack.c.b16 %v1066, %v1030
        %v1139 = vpack.c.b16 %v1067, %v1031
        %v1140 = vpack.c.b16 %v1068, %v1032
        %v1141 = vpack.c.b16 %v1069, %v1033
        %v1142 = vpack.c.b16 %v1070, %v1034
        %v1143 = vpack.c.b16 %v1071, %v1035
        %v1144 = vpack.c.b16 %v1072, %v1036
        %v1145 = vpack.c.b16 %v1073, %v1037
        %v1146 = vpack.c.b16 %v1074, %v1038
        %v1147 = vpack.c.b16 %v1075, %v1039
        %v1148 = vpack.c.b16 %v1076, %v1040
        %v1149 = vpack.c.b16 %v1077, %v1041
        %v1150 = vpack.c.b16 %v1078, %v1042
        %v1151 = vpack.c.b16 %v1079, %v1043
        %v1152 = vpack.c.b16 %v1080, %v1044
        %v1153 = vpack.c.b16 %v1081, %v1045
        %v1154 = vpack.c.b16 %v1082, %v1046
        %v1155 = vpack.c.b16 %v1083, %v1047
        %v1156 = vpack.c.b16 %v1084, %v1048
        %v1157 = vpack.c.b16 %v1085, %v1049
        %v1158 = vpack.c.b16 %v1086, %v1050
        %v1159 = vpack.c.b16 %v1087, %v1051
        %v1160 = vpack.c.b16 %v1088, %v1052
        %v1161 = vpack.c.b16 %v1089, %v1053
        %v1162 = vpack.c.b16 %v1090, %v1054
        %v1163 = vpack.c.b16 %v1091, %v1055
        %v1164 = vpack.c.b16 %v1092, %v1056
        %v1165 = vpack.c.b16 %v1093, %v1057
        %v1166 = vpack.c.b16 %v1094, %v1058
        %v1167 = vpack.c.b16 %v1095, %v1059
        %vm1240 = vcmask 261120
        %v1242 = vsel %vm1240, %v617, 0
        %1244 = vmatprep.subr.bf16.mxu0 %v1097
        %1245 = vmatpush1.bf16.msra.mxu0 %v1096
        %1246 = vmatprep.subr.bf16.mxu0 %v1133
        %1247 = vmatpush1.bf16.msra.mxu0 %v1132
        %1248 = vmatprep.subr.bf16.mxu0 0
        %1249 = vmatpush1.bf16.msra.mxu0 0
        %1250 = vmatprep.subr.bf16.mxu0 0
        %1251 = vmatpush1.bf16.msra.mxu0 0
        %1252 = vmatprep.subr.bf16.mxu0 0
        %1253 = vmatpush1.bf16.msra.mxu0 0
        %1254 = vmatprep.subr.bf16.mxu0 0
        %1255 = vmatpush1.bf16.msra.mxu0 0
        %1256 = vmatprep.subr.bf16.mxu0 0
        %1257 = vmatpush1.bf16.msra.mxu0 0
        %1258 = vmatprep.subr.bf16.mxu0 0
        %1259 = vmatpush1.bf16.msra.mxu0 0
        %1260 = vmatprep.subr.bf16.mxu0 0
        %1261 = vmatpush1.bf16.msra.mxu0 0
        %1262 = vmatprep.subr.bf16.mxu0 0
        %1263 = vmatpush1.bf16.msra.mxu0 0
        %1264 = vmatprep.subr.bf16.mxu0 0
        %1265 = vmatpush1.bf16.msra.mxu0 0
        %1266 = vmatprep.subr.bf16.mxu0 0
        %1267 = vmatpush1.bf16.msra.mxu0 0
        %1268 = vmatprep.subr.bf16.mxu0 0
        %1269 = vmatpush1.bf16.msra.mxu0 0
        %1270 = vmatprep.subr.bf16.mxu0 0
        %1271 = vmatpush1.bf16.msra.mxu0 0
        %1272 = vmatprep.subr.bf16.mxu0 0
        %1273 = vmatpush1.bf16.msra.mxu0 0
        %1274 = vmatprep.subr.bf16.mxu0 0
        %1275 = vmatpush1.bf16.msra.mxu0 0
        %1276 = vmatprep.mubr.bf16.mxu0 0
        %1277 = vmatmul.mubr.bf16.gmra.mrb[0].mxu0 %v1242
        %v1278 = vpop.f32.mrb[0].mxu0
        %v1279 = vadd.f32 %v703, %v1278
        %v1280 = vpop.f32.mrb[0].mxu0
        %v1281 = vadd.f32 %v707, %v1280
        %v1282 = vpop.f32.mrb[0].mxu0
        %v1283 = vpop.f32.mrb[0].mxu0
        %1284 = vdwg.mxu0
        %1285 = vmatprep.subr.bf16.mxu0 %v1099
        %1286 = vmatpush1.bf16.msra.mxu0 %v1098
        %1287 = vmatprep.subr.bf16.mxu0 %v1135
        %1288 = vmatpush1.bf16.msra.mxu0 %v1134
        %1289 = vmatprep.subr.bf16.mxu0 0
        %1290 = vmatpush1.bf16.msra.mxu0 0
        %1291 = vmatprep.subr.bf16.mxu0 0
        %1292 = vmatpush1.bf16.msra.mxu0 0
        %1293 = vmatprep.subr.bf16.mxu0 0
        %1294 = vmatpush1.bf16.msra.mxu0 0
        %1295 = vmatprep.subr.bf16.mxu0 0
        %1296 = vmatpush1.bf16.msra.mxu0 0
        %1297 = vmatprep.subr.bf16.mxu0 0
        %1298 = vmatpush1.bf16.msra.mxu0 0
        %1299 = vmatprep.subr.bf16.mxu0 0
        %1300 = vmatpush1.bf16.msra.mxu0 0
        %1301 = vmatprep.subr.bf16.mxu0 0
        %1302 = vmatpush1.bf16.msra.mxu0 0
        %1303 = vmatprep.subr.bf16.mxu0 0
        %1304 = vmatpush1.bf16.msra.mxu0 0
        %1305 = vmatprep.subr.bf16.mxu0 0
        %1306 = vmatpush1.bf16.msra.mxu0 0
        %1307 = vmatprep.subr.bf16.mxu0 0
        %1308 = vmatpush1.bf16.msra.mxu0 0
        %1309 = vmatprep.subr.bf16.mxu0 0
        %1310 = vmatpush1.bf16.msra.mxu0 0
        %1311 = vmatprep.subr.bf16.mxu0 0
        %1312 = vmatpush1.bf16.msra.mxu0 0
        %1313 = vmatprep.subr.bf16.mxu0 0
        %1314 = vmatpush1.bf16.msra.mxu0 0
        %1315 = vmatprep.subr.bf16.mxu0 0
        %1316 = vmatpush1.bf16.msra.mxu0 0
        %1317 = vmatprep.mubr.bf16.mxu0 0
        %1318 = vmatmul.mubr.bf16.gmra.mrb[0].mxu0 %v1242
        %v1319 = vpop.f32.mrb[0].mxu0
        %v1320 = vadd.f32 %v711, %v1319
        %v1321 = vpop.f32.mrb[0].mxu0
        %v1322 = vadd.f32 %v715, %v1321
        %v1323 = vpop.f32.mrb[0].mxu0
        %v1324 = vpop.f32.mrb[0].mxu0
        %1325 = vdwg.mxu0
        %1326 = vmatprep.subr.bf16.mxu0 %v1101
        %1327 = vmatpush1.bf16.msra.mxu0 %v1100
        %1328 = vmatprep.subr.bf16.mxu0 %v1137
        %1329 = vmatpush1.bf16.msra.mxu0 %v1136
        %1330 = vmatprep.subr.bf16.mxu0 0
        %1331 = vmatpush1.bf16.msra.mxu0 0
        %1332 = vmatprep.subr.bf16.mxu0 0
        %1333 = vmatpush1.bf16.msra.mxu0 0
        %1334 = vmatprep.subr.bf16.mxu0 0
        %1335 = vmatpush1.bf16.msra.mxu0 0
        %1336 = vmatprep.subr.bf16.mxu0 0
        %1337 = vmatpush1.bf16.msra.mxu0 0
        %1338 = vmatprep.subr.bf16.mxu0 0
        %1339 = vmatpush1.bf16.msra.mxu0 0
        %1340 = vmatprep.subr.bf16.mxu0 0
        %1341 = vmatpush1.bf16.msra.mxu0 0
        %1342 = vmatprep.subr.bf16.mxu0 0
        %1343 = vmatpush1.bf16.msra.mxu0 0
        %1344 = vmatprep.subr.bf16.mxu0 0
        %1345 = vmatpush1.bf16.msra.mxu0 0
        %1346 = vmatprep.subr.bf16.mxu0 0
        %1347 = vmatpush1.bf16.msra.mxu0 0
        %1348 = vmatprep.subr.bf16.mxu0 0
        %1349 = vmatpush1.bf16.msra.mxu0 0
        %1350 = vmatprep.subr.bf16.mxu0 0
        %1351 = vmatpush1.bf16.msra.mxu0 0
        %1352 = vmatprep.subr.bf16.mxu0 0
        %1353 = vmatpush1.bf16.msra.mxu0 0
        %1354 = vmatprep.subr.bf16.mxu0 0
        %1355 = vmatpush1.bf16.msra.mxu0 0
        %1356 = vmatprep.subr.bf16.mxu0 0
        %1357 = vmatpush1.bf16.msra.mxu0 0
        %1358 = vmatprep.mubr.bf16.mxu0 0
        %1359 = vmatmul.mubr.bf16.gmra.mrb[0].mxu0 %v1242
        %v1360 = vpop.f32.mrb[0].mxu0
        %v1361 = vadd.f32 %v719, %v1360
        %v1362 = vpop.f32.mrb[0].mxu0
        %v1363 = vadd.f32 %v723, %v1362
        %v1364 = vpop.f32.mrb[0].mxu0
        %v1365 = vpop.f32.mrb[0].mxu0
        %1366 = vdwg.mxu0
        %1367 = vmatprep.subr.bf16.mxu0 %v1103
        %1368 = vmatpush1.bf16.msra.mxu0 %v1102
        %1369 = vmatprep.subr.bf16.mxu0 %v1139
        %1370 = vmatpush1.bf16.msra.mxu0 %v1138
        %1371 = vmatprep.subr.bf16.mxu0 0
        %1372 = vmatpush1.bf16.msra.mxu0 0
        %1373 = vmatprep.subr.bf16.mxu0 0
        %1374 = vmatpush1.bf16.msra.mxu0 0
        %1375 = vmatprep.subr.bf16.mxu0 0
        %1376 = vmatpush1.bf16.msra.mxu0 0
        %1377 = vmatprep.subr.bf16.mxu0 0
        %1378 = vmatpush1.bf16.msra.mxu0 0
        %1379 = vmatprep.subr.bf16.mxu0 0
        %1380 = vmatpush1.bf16.msra.mxu0 0
        %1381 = vmatprep.subr.bf16.mxu0 0
        %1382 = vmatpush1.bf16.msra.mxu0 0
        %1383 = vmatprep.subr.bf16.mxu0 0
        %1384 = vmatpush1.bf16.msra.mxu0 0
        %1385 = vmatprep.subr.bf16.mxu0 0
        %1386 = vmatpush1.bf16.msra.mxu0 0
        %1387 = vmatprep.subr.bf16.mxu0 0
        %1388 = vmatpush1.bf16.msra.mxu0 0
        %1389 = vmatprep.subr.bf16.mxu0 0
        %1390 = vmatpush1.bf16.msra.mxu0 0
        %1391 = vmatprep.subr.bf16.mxu0 0
        %1392 = vmatpush1.bf16.msra.mxu0 0
        %1393 = vmatprep.subr.bf16.mxu0 0
        %1394 = vmatpush1.bf16.msra.mxu0 0
        %1395 = vmatprep.subr.bf16.mxu0 0
        %1396 = vmatpush1.bf16.msra.mxu0 0
        %1397 = vmatprep.subr.bf16.mxu0 0
        %1398 = vmatpush1.bf16.msra.mxu0 0
        %1399 = vmatprep.mubr.bf16.mxu0 0
        %1400 = vmatmul.mubr.bf16.gmra.mrb[0].mxu0 %v1242
        %v1401 = vpop.f32.mrb[0].mxu0
        %v1402 = vadd.f32 %v727, %v1401
        %v1403 = vpop.f32.mrb[0].mxu0
        %v1404 = vadd.f32 %v731, %v1403
        %v1405 = vpop.f32.mrb[0].mxu0
        %v1406 = vpop.f32.mrb[0].mxu0
        %1407 = vdwg.mxu0
        %1408 = vmatprep.subr.bf16.mxu0 %v1105
        %1409 = vmatpush1.bf16.msra.mxu0 %v1104
        %1410 = vmatprep.subr.bf16.mxu0 %v1141
        %1411 = vmatpush1.bf16.msra.mxu0 %v1140
        %1412 = vmatprep.subr.bf16.mxu0 0
        %1413 = vmatpush1.bf16.msra.mxu0 0
        %1414 = vmatprep.subr.bf16.mxu0 0
        %1415 = vmatpush1.bf16.msra.mxu0 0
        %1416 = vmatprep.subr.bf16.mxu0 0
        %1417 = vmatpush1.bf16.msra.mxu0 0
        %1418 = vmatprep.subr.bf16.mxu0 0
        %1419 = vmatpush1.bf16.msra.mxu0 0
        %1420 = vmatprep.subr.bf16.mxu0 0
        %1421 = vmatpush1.bf16.msra.mxu0 0
        %1422 = vmatprep.subr.bf16.mxu0 0
        %1423 = vmatpush1.bf16.msra.mxu0 0
        %1424 = vmatprep.subr.bf16.mxu0 0
        %1425 = vmatpush1.bf16.msra.mxu0 0
        %1426 = vmatprep.subr.bf16.mxu0 0
        %1427 = vmatpush1.bf16.msra.mxu0 0
        %1428 = vmatprep.subr.bf16.mxu0 0
        %1429 = vmatpush1.bf16.msra.mxu0 0
        %1430 = vmatprep.subr.bf16.mxu0 0
        %1431 = vmatpush1.bf16.msra.mxu0 0
        %1432 = vmatprep.subr.bf16.mxu0 0
        %1433 = vmatpush1.bf16.msra.mxu0 0
        %1434 = vmatprep.subr.bf16.mxu0 0
        %1435 = vmatpush1.bf16.msra.mxu0 0
        %1436 = vmatprep.subr.bf16.mxu0 0
        %1437 = vmatpush1.bf16.msra.mxu0 0
        %1438 = vmatprep.subr.bf16.mxu0 0
        %1439 = vmatpush1.bf16.msra.mxu0 0
        %1440 = vmatprep.mubr.bf16.mxu0 0
        %1441 = vmatmul.mubr.bf16.gmra.mrb[0].mxu0 %v1242
        %v1442 = vpop.f32.mrb[0].mxu0
        %v1443 = vadd.f32 %v735, %v1442
        %v1444 = vpop.f32.mrb[0].mxu0
        %v1445 = vadd.f32 %v739, %v1444
        %v1446 = vpop.f32.mrb[0].mxu0
        %v1447 = vpop.f32.mrb[0].mxu0
        %1448 = vdwg.mxu0
        %1449 = vmatprep.subr.bf16.mxu0 %v1107
        %1450 = vmatpush1.bf16.msra.mxu0 %v1106
        %1451 = vmatprep.subr.bf16.mxu0 %v1143
        %1452 = vmatpush1.bf16.msra.mxu0 %v1142
        %1453 = vmatprep.subr.bf16.mxu0 0
        %1454 = vmatpush1.bf16.msra.mxu0 0
        %1455 = vmatprep.subr.bf16.mxu0 0
        %1456 = vmatpush1.bf16.msra.mxu0 0
        %1457 = vmatprep.subr.bf16.mxu0 0
        %1458 = vmatpush1.bf16.msra.mxu0 0
        %1459 = vmatprep.subr.bf16.mxu0 0
        %1460 = vmatpush1.bf16.msra.mxu0 0
        %1461 = vmatprep.subr.bf16.mxu0 0
        %1462 = vmatpush1.bf16.msra.mxu0 0
        %1463 = vmatprep.subr.bf16.mxu0 0
        %1464 = vmatpush1.bf16.msra.mxu0 0
        %1465 = vmatprep.subr.bf16.mxu0 0
        %1466 = vmatpush1.bf16.msra.mxu0 0
        %1467 = vmatprep.subr.bf16.mxu0 0
        %1468 = vmatpush1.bf16.msra.mxu0 0
        %1469 = vmatprep.subr.bf16.mxu0 0
        %1470 = vmatpush1.bf16.msra.mxu0 0
        %1471 = vmatprep.subr.bf16.mxu0 0
        %1472 = vmatpush1.bf16.msra.mxu0 0
        %1473 = vmatprep.subr.bf16.mxu0 0
        %1474 = vmatpush1.bf16.msra.mxu0 0
        %1475 = vmatprep.subr.bf16.mxu0 0
        %1476 = vmatpush1.bf16.msra.mxu0 0
        %1477 = vmatprep.subr.bf16.mxu0 0
        %1478 = vmatpush1.bf16.msra.mxu0 0
        %1479 = vmatprep.subr.bf16.mxu0 0
        %1480 = vmatpush1.bf16.msra.mxu0 0
        %1481 = vmatprep.mubr.bf16.mxu0 0
        %1482 = vmatmul.mubr.bf16.gmra.mrb[0].mxu0 %v1242
        %v1483 = vpop.f32.mrb[0].mxu0
        %v1484 = vadd.f32 %v743, %v1483
        %v1485 = vpop.f32.mrb[0].mxu0
        %v1486 = vadd.f32 %v747, %v1485
        %v1487 = vpop.f32.mrb[0].mxu0
        %v1488 = vpop.f32.mrb[0].mxu0
        %1489 = vdwg.mxu0
        %1490 = vmatprep.subr.bf16.mxu0 %v1109
        %1491 = vmatpush1.bf16.msra.mxu0 %v1108
        %1492 = vmatprep.subr.bf16.mxu0 %v1145
        %1493 = vmatpush1.bf16.msra.mxu0 %v1144
        %1494 = vmatprep.subr.bf16.mxu0 0
        %1495 = vmatpush1.bf16.msra.mxu0 0
        %1496 = vmatprep.subr.bf16.mxu0 0
        %1497 = vmatpush1.bf16.msra.mxu0 0
        %1498 = vmatprep.subr.bf16.mxu0 0
        %1499 = vmatpush1.bf16.msra.mxu0 0
        %1500 = vmatprep.subr.bf16.mxu0 0
        %1501 = vmatpush1.bf16.msra.mxu0 0
        %1502 = vmatprep.subr.bf16.mxu0 0
        %1503 = vmatpush1.bf16.msra.mxu0 0
        %1504 = vmatprep.subr.bf16.mxu0 0
        %1505 = vmatpush1.bf16.msra.mxu0 0
        %1506 = vmatprep.subr.bf16.mxu0 0
        %1507 = vmatpush1.bf16.msra.mxu0 0
        %1508 = vmatprep.subr.bf16.mxu0 0
        %1509 = vmatpush1.bf16.msra.mxu0 0
        %1510 = vmatprep.subr.bf16.mxu0 0
        %1511 = vmatpush1.bf16.msra.mxu0 0
        %1512 = vmatprep.subr.bf16.mxu0 0
        %1513 = vmatpush1.bf16.msra.mxu0 0
        %1514 = vmatprep.subr.bf16.mxu0 0
        %1515 = vmatpush1.bf16.msra.mxu0 0
        %1516 = vmatprep.subr.bf16.mxu0 0
        %1517 = vmatpush1.bf16.msra.mxu0 0
        %1518 = vmatprep.subr.bf16.mxu0 0
        %1519 = vmatpush1.bf16.msra.mxu0 0
        %1520 = vmatprep.subr.bf16.mxu0 0
        %1521 = vmatpush1.bf16.msra.mxu0 0
        %1522 = vmatprep.mubr.bf16.mxu0 0
        %1523 = vmatmul.mubr.bf16.gmra.mrb[0].mxu0 %v1242
        %v1524 = vpop.f32.mrb[0].mxu0
        %v1525 = vadd.f32 %v751, %v1524
        %v1526 = vpop.f32.mrb[0].mxu0
        %v1527 = vadd.f32 %v755, %v1526
        %v1528 = vpop.f32.mrb[0].mxu0
        %v1529 = vpop.f32.mrb[0].mxu0
        %1530 = vdwg.mxu0
        %1531 = vmatprep.subr.bf16.mxu0 %v1111
        %1532 = vmatpush1.bf16.msra.mxu0 %v1110
        %1533 = vmatprep.subr.bf16.mxu0 %v1147
        %1534 = vmatpush1.bf16.msra.mxu0 %v1146
        %1535 = vmatprep.subr.bf16.mxu0 0
        %1536 = vmatpush1.bf16.msra.mxu0 0
        %1537 = vmatprep.subr.bf16.mxu0 0
        %1538 = vmatpush1.bf16.msra.mxu0 0
        %1539 = vmatprep.subr.bf16.mxu0 0
        %1540 = vmatpush1.bf16.msra.mxu0 0
        %1541 = vmatprep.subr.bf16.mxu0 0
        %1542 = vmatpush1.bf16.msra.mxu0 0
        %1543 = vmatprep.subr.bf16.mxu0 0
        %1544 = vmatpush1.bf16.msra.mxu0 0
        %1545 = vmatprep.subr.bf16.mxu0 0
        %1546 = vmatpush1.bf16.msra.mxu0 0
        %1547 = vmatprep.subr.bf16.mxu0 0
        %1548 = vmatpush1.bf16.msra.mxu0 0
        %1549 = vmatprep.subr.bf16.mxu0 0
        %1550 = vmatpush1.bf16.msra.mxu0 0
        %1551 = vmatprep.subr.bf16.mxu0 0
        %1552 = vmatpush1.bf16.msra.mxu0 0
        %1553 = vmatprep.subr.bf16.mxu0 0
        %1554 = vmatpush1.bf16.msra.mxu0 0
        %1555 = vmatprep.subr.bf16.mxu0 0
        %1556 = vmatpush1.bf16.msra.mxu0 0
        %1557 = vmatprep.subr.bf16.mxu0 0
        %1558 = vmatpush1.bf16.msra.mxu0 0
        %1559 = vmatprep.subr.bf16.mxu0 0
        %1560 = vmatpush1.bf16.msra.mxu0 0
        %1561 = vmatprep.subr.bf16.mxu0 0
        %1562 = vmatpush1.bf16.msra.mxu0 0
        %1563 = vmatprep.mubr.bf16.mxu0 0
        %1564 = vmatmul.mubr.bf16.gmra.mrb[0].mxu0 %v1242
        %v1565 = vpop.f32.mrb[0].mxu0
        %v1566 = vadd.f32 %v759, %v1565
        %v1567 = vpop.f32.mrb[0].mxu0
        %v1568 = vadd.f32 %v763, %v1567
        %v1569 = vpop.f32.mrb[0].mxu0
        %v1570 = vpop.f32.mrb[0].mxu0
        %1571 = vdwg.mxu0
        %1572 = vmatprep.subr.bf16.mxu0 %v1113
        %1573 = vmatpush1.bf16.msra.mxu0 %v1112
        %1574 = vmatprep.subr.bf16.mxu0 %v1149
        %1575 = vmatpush1.bf16.msra.mxu0 %v1148
        %1576 = vmatprep.subr.bf16.mxu0 0
        %1577 = vmatpush1.bf16.msra.mxu0 0
        %1578 = vmatprep.subr.bf16.mxu0 0
        %1579 = vmatpush1.bf16.msra.mxu0 0
        %1580 = vmatprep.subr.bf16.mxu0 0
        %1581 = vmatpush1.bf16.msra.mxu0 0
        %1582 = vmatprep.subr.bf16.mxu0 0
        %1583 = vmatpush1.bf16.msra.mxu0 0
        %1584 = vmatprep.subr.bf16.mxu0 0
        %1585 = vmatpush1.bf16.msra.mxu0 0
        %1586 = vmatprep.subr.bf16.mxu0 0
        %1587 = vmatpush1.bf16.msra.mxu0 0
        %1588 = vmatprep.subr.bf16.mxu0 0
        %1589 = vmatpush1.bf16.msra.mxu0 0
        %1590 = vmatprep.subr.bf16.mxu0 0
        %1591 = vmatpush1.bf16.msra.mxu0 0
        %1592 = vmatprep.subr.bf16.mxu0 0
        %1593 = vmatpush1.bf16.msra.mxu0 0
        %1594 = vmatprep.subr.bf16.mxu0 0
        %1595 = vmatpush1.bf16.msra.mxu0 0
        %1596 = vmatprep.subr.bf16.mxu0 0
        %1597 = vmatpush1.bf16.msra.mxu0 0
        %1598 = vmatprep.subr.bf16.mxu0 0
        %1599 = vmatpush1.bf16.msra.mxu0 0
        %1600 = vmatprep.subr.bf16.mxu0 0
        %1601 = vmatpush1.bf16.msra.mxu0 0
        %1602 = vmatprep.subr.bf16.mxu0 0
        %1603 = vmatpush1.bf16.msra.mxu0 0
        %1604 = vmatprep.mubr.bf16.mxu0 0
        %1605 = vmatmul.mubr.bf16.gmra.mrb[0].mxu0 %v1242
        %v1606 = vpop.f32.mrb[0].mxu0
        %v1607 = vadd.f32 %v767, %v1606
        %v1608 = vpop.f32.mrb[0].mxu0
        %v1609 = vadd.f32 %v771, %v1608
        %v1610 = vpop.f32.mrb[0].mxu0
        %v1611 = vpop.f32.mrb[0].mxu0
        %1612 = vdwg.mxu0
        %1613 = vmatprep.subr.bf16.mxu0 %v1115
        %1614 = vmatpush1.bf16.msra.mxu0 %v1114
        %1615 = vmatprep.subr.bf16.mxu0 %v1151
        %1616 = vmatpush1.bf16.msra.mxu0 %v1150
        %1617 = vmatprep.subr.bf16.mxu0 0
        %1618 = vmatpush1.bf16.msra.mxu0 0
        %1619 = vmatprep.subr.bf16.mxu0 0
        %1620 = vmatpush1.bf16.msra.mxu0 0
        %1621 = vmatprep.subr.bf16.mxu0 0
        %1622 = vmatpush1.bf16.msra.mxu0 0
        %1623 = vmatprep.subr.bf16.mxu0 0
        %1624 = vmatpush1.bf16.msra.mxu0 0
        %1625 = vmatprep.subr.bf16.mxu0 0
        %1626 = vmatpush1.bf16.msra.mxu0 0
        %1627 = vmatprep.subr.bf16.mxu0 0
        %1628 = vmatpush1.bf16.msra.mxu0 0
        %1629 = vmatprep.subr.bf16.mxu0 0
        %1630 = vmatpush1.bf16.msra.mxu0 0
        %1631 = vmatprep.subr.bf16.mxu0 0
        %1632 = vmatpush1.bf16.msra.mxu0 0
        %1633 = vmatprep.subr.bf16.mxu0 0
        %1634 = vmatpush1.bf16.msra.mxu0 0
        %1635 = vmatprep.subr.bf16.mxu0 0
        %1636 = vmatpush1.bf16.msra.mxu0 0
        %1637 = vmatprep.subr.bf16.mxu0 0
        %1638 = vmatpush1.bf16.msra.mxu0 0
        %1639 = vmatprep.subr.bf16.mxu0 0
        %1640 = vmatpush1.bf16.msra.mxu0 0
        %1641 = vmatprep.subr.bf16.mxu0 0
        %1642 = vmatpush1.bf16.msra.mxu0 0
        %1643 = vmatprep.subr.bf16.mxu0 0
        %1644 = vmatpush1.bf16.msra.mxu0 0
        %1645 = vmatprep.mubr.bf16.mxu0 0
        %1646 = vmatmul.mubr.bf16.gmra.mrb[0].mxu0 %v1242
        %v1647 = vpop.f32.mrb[0].mxu0
        %v1648 = vadd.f32 %v775, %v1647
        %v1649 = vpop.f32.mrb[0].mxu0
        %v1650 = vadd.f32 %v779, %v1649
        %v1651 = vpop.f32.mrb[0].mxu0
        %v1652 = vpop.f32.mrb[0].mxu0
        %1653 = vdwg.mxu0
        %1654 = vmatprep.subr.bf16.mxu0 %v1117
        %1655 = vmatpush1.bf16.msra.mxu0 %v1116
        %1656 = vmatprep.subr.bf16.mxu0 %v1153
        %1657 = vmatpush1.bf16.msra.mxu0 %v1152
        %1658 = vmatprep.subr.bf16.mxu0 0
        %1659 = vmatpush1.bf16.msra.mxu0 0
        %1660 = vmatprep.subr.bf16.mxu0 0
        %1661 = vmatpush1.bf16.msra.mxu0 0
        %1662 = vmatprep.subr.bf16.mxu0 0
        %1663 = vmatpush1.bf16.msra.mxu0 0
        %1664 = vmatprep.subr.bf16.mxu0 0
        %1665 = vmatpush1.bf16.msra.mxu0 0
        %1666 = vmatprep.subr.bf16.mxu0 0
        %1667 = vmatpush1.bf16.msra.mxu0 0
        %1668 = vmatprep.subr.bf16.mxu0 0
        %1669 = vmatpush1.bf16.msra.mxu0 0
        %1670 = vmatprep.subr.bf16.mxu0 0
        %1671 = vmatpush1.bf16.msra.mxu0 0
        %1672 = vmatprep.subr.bf16.mxu0 0
        %1673 = vmatpush1.bf16.msra.mxu0 0
        %1674 = vmatprep.subr.bf16.mxu0 0
        %1675 = vmatpush1.bf16.msra.mxu0 0
        %1676 = vmatprep.subr.bf16.mxu0 0
        %1677 = vmatpush1.bf16.msra.mxu0 0
        %1678 = vmatprep.subr.bf16.mxu0 0
        %1679 = vmatpush1.bf16.msra.mxu0 0
        %1680 = vmatprep.subr.bf16.mxu0 0
        %1681 = vmatpush1.bf16.msra.mxu0 0
        %1682 = vmatprep.subr.bf16.mxu0 0
        %1683 = vmatpush1.bf16.msra.mxu0 0
        %1684 = vmatprep.subr.bf16.mxu0 0
        %1685 = vmatpush1.bf16.msra.mxu0 0
        %1686 = vmatprep.mubr.bf16.mxu0 0
        %1687 = vmatmul.mubr.bf16.gmra.mrb[0].mxu0 %v1242
        %v1688 = vpop.f32.mrb[0].mxu0
        %v1689 = vadd.f32 %v783, %v1688
        %v1690 = vpop.f32.mrb[0].mxu0
        %v1691 = vadd.f32 %v787, %v1690
        %v1692 = vpop.f32.mrb[0].mxu0
        %v1693 = vpop.f32.mrb[0].mxu0
        %1694 = vdwg.mxu0
        %1695 = vmatprep.subr.bf16.mxu0 %v1119
        %1696 = vmatpush1.bf16.msra.mxu0 %v1118
        %1697 = vmatprep.subr.bf16.mxu0 %v1155
        %1698 = vmatpush1.bf16.msra.mxu0 %v1154
        %1699 = vmatprep.subr.bf16.mxu0 0
        %1700 = vmatpush1.bf16.msra.mxu0 0
        %1701 = vmatprep.subr.bf16.mxu0 0
        %1702 = vmatpush1.bf16.msra.mxu0 0
        %1703 = vmatprep.subr.bf16.mxu0 0
        %1704 = vmatpush1.bf16.msra.mxu0 0
        %1705 = vmatprep.subr.bf16.mxu0 0
        %1706 = vmatpush1.bf16.msra.mxu0 0
        %1707 = vmatprep.subr.bf16.mxu0 0
        %1708 = vmatpush1.bf16.msra.mxu0 0
        %1709 = vmatprep.subr.bf16.mxu0 0
        %1710 = vmatpush1.bf16.msra.mxu0 0
        %1711 = vmatprep.subr.bf16.mxu0 0
        %1712 = vmatpush1.bf16.msra.mxu0 0
        %1713 = vmatprep.subr.bf16.mxu0 0
        %1714 = vmatpush1.bf16.msra.mxu0 0
        %1715 = vmatprep.subr.bf16.mxu0 0
        %1716 = vmatpush1.bf16.msra.mxu0 0
        %1717 = vmatprep.subr.bf16.mxu0 0
        %1718 = vmatpush1.bf16.msra.mxu0 0
        %1719 = vmatprep.subr.bf16.mxu0 0
        %1720 = vmatpush1.bf16.msra.mxu0 0
        %1721 = vmatprep.subr.bf16.mxu0 0
        %1722 = vmatpush1.bf16.msra.mxu0 0
        %1723 = vmatprep.subr.bf16.mxu0 0
        %1724 = vmatpush1.bf16.msra.mxu0 0
        %1725 = vmatprep.subr.bf16.mxu0 0
        %1726 = vmatpush1.bf16.msra.mxu0 0
        %1727 = vmatprep.mubr.bf16.mxu0 0
        %1728 = vmatmul.mubr.bf16.gmra.mrb[0].mxu0 %v1242
        %v1729 = vpop.f32.mrb[0].mxu0
        %v1730 = vadd.f32 %v791, %v1729
        %v1731 = vpop.f32.mrb[0].mxu0
        %v1732 = vadd.f32 %v795, %v1731
        %v1733 = vpop.f32.mrb[0].mxu0
        %v1734 = vpop.f32.mrb[0].mxu0
        %1735 = vdwg.mxu0
        %1736 = vmatprep.subr.bf16.mxu0 %v1121
        %1737 = vmatpush1.bf16.msra.mxu0 %v1120
        %1738 = vmatprep.subr.bf16.mxu0 %v1157
        %1739 = vmatpush1.bf16.msra.mxu0 %v1156
        %1740 = vmatprep.subr.bf16.mxu0 0
        %1741 = vmatpush1.bf16.msra.mxu0 0
        %1742 = vmatprep.subr.bf16.mxu0 0
        %1743 = vmatpush1.bf16.msra.mxu0 0
        %1744 = vmatprep.subr.bf16.mxu0 0
        %1745 = vmatpush1.bf16.msra.mxu0 0
        %1746 = vmatprep.subr.bf16.mxu0 0
        %1747 = vmatpush1.bf16.msra.mxu0 0
        %1748 = vmatprep.subr.bf16.mxu0 0
        %1749 = vmatpush1.bf16.msra.mxu0 0
        %1750 = vmatprep.subr.bf16.mxu0 0
        %1751 = vmatpush1.bf16.msra.mxu0 0
        %1752 = vmatprep.subr.bf16.mxu0 0
        %1753 = vmatpush1.bf16.msra.mxu0 0
        %1754 = vmatprep.subr.bf16.mxu0 0
        %1755 = vmatpush1.bf16.msra.mxu0 0
        %1756 = vmatprep.subr.bf16.mxu0 0
        %1757 = vmatpush1.bf16.msra.mxu0 0
        %1758 = vmatprep.subr.bf16.mxu0 0
        %1759 = vmatpush1.bf16.msra.mxu0 0
        %1760 = vmatprep.subr.bf16.mxu0 0
        %1761 = vmatpush1.bf16.msra.mxu0 0
        %1762 = vmatprep.subr.bf16.mxu0 0
        %1763 = vmatpush1.bf16.msra.mxu0 0
        %1764 = vmatprep.subr.bf16.mxu0 0
        %1765 = vmatpush1.bf16.msra.mxu0 0
        %1766 = vmatprep.subr.bf16.mxu0 0
        %1767 = vmatpush1.bf16.msra.mxu0 0
        %1768 = vmatprep.mubr.bf16.mxu0 0
        %1769 = vmatmul.mubr.bf16.gmra.mrb[0].mxu0 %v1242
        %v1770 = vpop.f32.mrb[0].mxu0
        %v1771 = vadd.f32 %v799, %v1770
        %v1772 = vpop.f32.mrb[0].mxu0
        %v1773 = vadd.f32 %v803, %v1772
        %v1774 = vpop.f32.mrb[0].mxu0
        %v1775 = vpop.f32.mrb[0].mxu0
        %1776 = vdwg.mxu0
        %1777 = vmatprep.subr.bf16.mxu0 %v1123
        %1778 = vmatpush1.bf16.msra.mxu0 %v1122
        %1779 = vmatprep.subr.bf16.mxu0 %v1159
        %1780 = vmatpush1.bf16.msra.mxu0 %v1158
        %1781 = vmatprep.subr.bf16.mxu0 0
        %1782 = vmatpush1.bf16.msra.mxu0 0
        %1783 = vmatprep.subr.bf16.mxu0 0
        %1784 = vmatpush1.bf16.msra.mxu0 0
        %1785 = vmatprep.subr.bf16.mxu0 0
        %1786 = vmatpush1.bf16.msra.mxu0 0
        %1787 = vmatprep.subr.bf16.mxu0 0
        %1788 = vmatpush1.bf16.msra.mxu0 0
        %1789 = vmatprep.subr.bf16.mxu0 0
        %1790 = vmatpush1.bf16.msra.mxu0 0
        %1791 = vmatprep.subr.bf16.mxu0 0
        %1792 = vmatpush1.bf16.msra.mxu0 0
        %1793 = vmatprep.subr.bf16.mxu0 0
        %1794 = vmatpush1.bf16.msra.mxu0 0
        %1795 = vmatprep.subr.bf16.mxu0 0
        %1796 = vmatpush1.bf16.msra.mxu0 0
        %1797 = vmatprep.subr.bf16.mxu0 0
        %1798 = vmatpush1.bf16.msra.mxu0 0
        %1799 = vmatprep.subr.bf16.mxu0 0
        %1800 = vmatpush1.bf16.msra.mxu0 0
        %1801 = vmatprep.subr.bf16.mxu0 0
        %1802 = vmatpush1.bf16.msra.mxu0 0
        %1803 = vmatprep.subr.bf16.mxu0 0
        %1804 = vmatpush1.bf16.msra.mxu0 0
        %1805 = vmatprep.subr.bf16.mxu0 0
        %1806 = vmatpush1.bf16.msra.mxu0 0
        %1807 = vmatprep.subr.bf16.mxu0 0
        %1808 = vmatpush1.bf16.msra.mxu0 0
        %1809 = vmatprep.mubr.bf16.mxu0 0
        %1810 = vmatmul.mubr.bf16.gmra.mrb[0].mxu0 %v1242
        %v1811 = vpop.f32.mrb[0].mxu0
        %v1812 = vadd.f32 %v807, %v1811
        %v1813 = vpop.f32.mrb[0].mxu0
        %v1814 = vadd.f32 %v811, %v1813
        %v1815 = vpop.f32.mrb[0].mxu0
        %v1816 = vpop.f32.mrb[0].mxu0
        %1817 = vdwg.mxu0
        %1818 = vmatprep.subr.bf16.mxu0 %v1125
        %1819 = vmatpush1.bf16.msra.mxu0 %v1124
        %1820 = vmatprep.subr.bf16.mxu0 %v1161
        %1821 = vmatpush1.bf16.msra.mxu0 %v1160
        %1822 = vmatprep.subr.bf16.mxu0 0
        %1823 = vmatpush1.bf16.msra.mxu0 0
        %1824 = vmatprep.subr.bf16.mxu0 0
        %1825 = vmatpush1.bf16.msra.mxu0 0
        %1826 = vmatprep.subr.bf16.mxu0 0
        %1827 = vmatpush1.bf16.msra.mxu0 0
        %1828 = vmatprep.subr.bf16.mxu0 0
        %1829 = vmatpush1.bf16.msra.mxu0 0
        %1830 = vmatprep.subr.bf16.mxu0 0
        %1831 = vmatpush1.bf16.msra.mxu0 0
        %1832 = vmatprep.subr.bf16.mxu0 0
        %1833 = vmatpush1.bf16.msra.mxu0 0
        %1834 = vmatprep.subr.bf16.mxu0 0
        %1835 = vmatpush1.bf16.msra.mxu0 0
        %1836 = vmatprep.subr.bf16.mxu0 0
        %1837 = vmatpush1.bf16.msra.mxu0 0
        %1838 = vmatprep.subr.bf16.mxu0 0
        %1839 = vmatpush1.bf16.msra.mxu0 0
        %1840 = vmatprep.subr.bf16.mxu0 0
        %1841 = vmatpush1.bf16.msra.mxu0 0
        %1842 = vmatprep.subr.bf16.mxu0 0
        %1843 = vmatpush1.bf16.msra.mxu0 0
        %1844 = vmatprep.subr.bf16.mxu0 0
        %1845 = vmatpush1.bf16.msra.mxu0 0
        %1846 = vmatprep.subr.bf16.mxu0 0
        %1847 = vmatpush1.bf16.msra.mxu0 0
        %1848 = vmatprep.subr.bf16.mxu0 0
        %1849 = vmatpush1.bf16.msra.mxu0 0
        %1850 = vmatprep.mubr.bf16.mxu0 0
        %1851 = vmatmul.mubr.bf16.gmra.mrb[0].mxu0 %v1242
        %v1852 = vpop.f32.mrb[0].mxu0
        %v1853 = vadd.f32 %v815, %v1852
        %v1854 = vpop.f32.mrb[0].mxu0
        %v1855 = vadd.f32 %v819, %v1854
        %v1856 = vpop.f32.mrb[0].mxu0
        %v1857 = vpop.f32.mrb[0].mxu0
        %1858 = vdwg.mxu0
        %1859 = vmatprep.subr.bf16.mxu0 %v1127
        %1860 = vmatpush1.bf16.msra.mxu0 %v1126
        %1861 = vmatprep.subr.bf16.mxu0 %v1163
        %1862 = vmatpush1.bf16.msra.mxu0 %v1162
        %1863 = vmatprep.subr.bf16.mxu0 0
        %1864 = vmatpush1.bf16.msra.mxu0 0
        %1865 = vmatprep.subr.bf16.mxu0 0
        %1866 = vmatpush1.bf16.msra.mxu0 0
        %1867 = vmatprep.subr.bf16.mxu0 0
        %1868 = vmatpush1.bf16.msra.mxu0 0
        %1869 = vmatprep.subr.bf16.mxu0 0
        %1870 = vmatpush1.bf16.msra.mxu0 0
        %1871 = vmatprep.subr.bf16.mxu0 0
        %1872 = vmatpush1.bf16.msra.mxu0 0
        %1873 = vmatprep.subr.bf16.mxu0 0
        %1874 = vmatpush1.bf16.msra.mxu0 0
        %1875 = vmatprep.subr.bf16.mxu0 0
        %1876 = vmatpush1.bf16.msra.mxu0 0
        %1877 = vmatprep.subr.bf16.mxu0 0
        %1878 = vmatpush1.bf16.msra.mxu0 0
        %1879 = vmatprep.subr.bf16.mxu0 0
        %1880 = vmatpush1.bf16.msra.mxu0 0
        %1881 = vmatprep.subr.bf16.mxu0 0
        %1882 = vmatpush1.bf16.msra.mxu0 0
        %1883 = vmatprep.subr.bf16.mxu0 0
        %1884 = vmatpush1.bf16.msra.mxu0 0
        %1885 = vmatprep.subr.bf16.mxu0 0
        %1886 = vmatpush1.bf16.msra.mxu0 0
        %1887 = vmatprep.subr.bf16.mxu0 0
        %1888 = vmatpush1.bf16.msra.mxu0 0
        %1889 = vmatprep.subr.bf16.mxu0 0
        %1890 = vmatpush1.bf16.msra.mxu0 0
        %1891 = vmatprep.mubr.bf16.mxu0 0
        %1892 = vmatmul.mubr.bf16.gmra.mrb[0].mxu0 %v1242
        %v1893 = vpop.f32.mrb[0].mxu0
        %v1894 = vadd.f32 %v823, %v1893
        %v1895 = vpop.f32.mrb[0].mxu0
        %v1896 = vadd.f32 %v827, %v1895
        %v1897 = vpop.f32.mrb[0].mxu0
        %v1898 = vpop.f32.mrb[0].mxu0
        %1899 = vdwg.mxu0
        %1900 = vmatprep.subr.bf16.mxu0 %v1129
        %1901 = vmatpush1.bf16.msra.mxu0 %v1128
        %1902 = vmatprep.subr.bf16.mxu0 %v1165
        %1903 = vmatpush1.bf16.msra.mxu0 %v1164
        %1904 = vmatprep.subr.bf16.mxu0 0
        %1905 = vmatpush1.bf16.msra.mxu0 0
        %1906 = vmatprep.subr.bf16.mxu0 0
        %1907 = vmatpush1.bf16.msra.mxu0 0
        %1908 = vmatprep.subr.bf16.mxu0 0
        %1909 = vmatpush1.bf16.msra.mxu0 0
        %1910 = vmatprep.subr.bf16.mxu0 0
        %1911 = vmatpush1.bf16.msra.mxu0 0
        %1912 = vmatprep.subr.bf16.mxu0 0
        %1913 = vmatpush1.bf16.msra.mxu0 0
        %1914 = vmatprep.subr.bf16.mxu0 0
        %1915 = vmatpush1.bf16.msra.mxu0 0
        %1916 = vmatprep.subr.bf16.mxu0 0
        %1917 = vmatpush1.bf16.msra.mxu0 0
        %1918 = vmatprep.subr.bf16.mxu0 0
        %1919 = vmatpush1.bf16.msra.mxu0 0
        %1920 = vmatprep.subr.bf16.mxu0 0
        %1921 = vmatpush1.bf16.msra.mxu0 0
        %1922 = vmatprep.subr.bf16.mxu0 0
        %1923 = vmatpush1.bf16.msra.mxu0 0
        %1924 = vmatprep.subr.bf16.mxu0 0
        %1925 = vmatpush1.bf16.msra.mxu0 0
        %1926 = vmatprep.subr.bf16.mxu0 0
        %1927 = vmatpush1.bf16.msra.mxu0 0
        %1928 = vmatprep.subr.bf16.mxu0 0
        %1929 = vmatpush1.bf16.msra.mxu0 0
        %1930 = vmatprep.subr.bf16.mxu0 0
        %1931 = vmatpush1.bf16.msra.mxu0 0
        %1932 = vmatprep.mubr.bf16.mxu0 0
        %1933 = vmatmul.mubr.bf16.gmra.mrb[0].mxu0 %v1242
        %v1934 = vpop.f32.mrb[0].mxu0
        %v1935 = vadd.f32 %v831, %v1934
        %v1936 = vpop.f32.mrb[0].mxu0
        %v1937 = vadd.f32 %v835, %v1936
        %v1938 = vpop.f32.mrb[0].mxu0
        %v1939 = vpop.f32.mrb[0].mxu0
        %1940 = vdwg.mxu0
        %1941 = vmatprep.subr.bf16.mxu0 %v1131
        %1942 = vmatpush1.bf16.msra.mxu0 %v1130
        %1943 = vmatprep.subr.bf16.mxu0 %v1167
        %1944 = vmatpush1.bf16.msra.mxu0 %v1166
        %1945 = vmatprep.subr.bf16.mxu0 0
        %1946 = vmatpush1.bf16.msra.mxu0 0
        %1947 = vmatprep.subr.bf16.mxu0 0
        %1948 = vmatpush1.bf16.msra.mxu0 0
        %1949 = vmatprep.subr.bf16.mxu0 0
        %1950 = vmatpush1.bf16.msra.mxu0 0
        %1951 = vmatprep.subr.bf16.mxu0 0
        %1952 = vmatpush1.bf16.msra.mxu0 0
        %1953 = vmatprep.subr.bf16.mxu0 0
        %1954 = vmatpush1.bf16.msra.mxu0 0
        %1955 = vmatprep.subr.bf16.mxu0 0
        %1956 = vmatpush1.bf16.msra.mxu0 0
        %1957 = vmatprep.subr.bf16.mxu0 0
        %1958 = vmatpush1.bf16.msra.mxu0 0
        %1959 = vmatprep.subr.bf16.mxu0 0
        %1960 = vmatpush1.bf16.msra.mxu0 0
        %1961 = vmatprep.subr.bf16.mxu0 0
        %1962 = vmatpush1.bf16.msra.mxu0 0
        %1963 = vmatprep.subr.bf16.mxu0 0
        %1964 = vmatpush1.bf16.msra.mxu0 0
        %1965 = vmatprep.subr.bf16.mxu0 0
        %1966 = vmatpush1.bf16.msra.mxu0 0
        %1967 = vmatprep.subr.bf16.mxu0 0
        %1968 = vmatpush1.bf16.msra.mxu0 0
        %1969 = vmatprep.subr.bf16.mxu0 0
        %1970 = vmatpush1.bf16.msra.mxu0 0
        %1971 = vmatprep.subr.bf16.mxu0 0
        %1972 = vmatpush1.bf16.msra.mxu0 0
        %1973 = vmatprep.mubr.bf16.mxu0 0
        %1974 = vmatmul.mubr.bf16.gmra.mrb[0].mxu0 %v1242
        %v1975 = vpop.f32.mrb[0].mxu0
        %v1976 = vadd.f32 %v839, %v1975
        %v1977 = vpop.f32.mrb[0].mxu0
        %v1978 = vadd.f32 %v843, %v1977
        %v1979 = vpop.f32.mrb[0].mxu0
        %v1980 = vpop.f32.mrb[0].mxu0
        %1981 = vdwg.mxu0
        %v1982 = vld [vmem:[%s514] sm:$0xff]
        %v1983 = vld [vmem:[%s514 + $0x8] sm:$0xff]
        %v1984 = vld [vmem:[%s514 + $0x10] sm:$0xff]
        %v1985 = vld [vmem:[%s514 + $0x18] sm:$0xff]
        %v1986 = vld [vmem:[%s514 + $0x20] sm:$0xf]
        %v1992 = vlaneseq
        %v1993 = vshrl.u32 %v1992, 7
        %v1994 = vsub.s32 0, %v1993
        %v1995 = vrot.slane %v1982, %v1994
        %v1996 = vlaneseq
        %v1997 = vshrl.u32 %v1996, 7
        %v1998 = vsub.s32 1, %v1997
        %v1999 = vrot.slane %v1982, %v1998
        %v2000 = vlaneseq
        %v2001 = vshrl.u32 %v2000, 7
        %v2002 = vsub.s32 2, %v2001
        %v2003 = vrot.slane %v1982, %v2002
        %v2004 = vlaneseq
        %v2005 = vshrl.u32 %v2004, 7
        %v2006 = vsub.s32 3, %v2005
        %v2007 = vrot.slane %v1982, %v2006
        %v2008 = vlaneseq
        %v2009 = vshrl.u32 %v2008, 7
        %v2010 = vsub.s32 4, %v2009
        %v2011 = vrot.slane %v1982, %v2010
        %v2012 = vlaneseq
        %v2013 = vshrl.u32 %v2012, 7
        %v2014 = vsub.s32 5, %v2013
        %v2015 = vrot.slane %v1982, %v2014
        %v2016 = vlaneseq
        %v2017 = vshrl.u32 %v2016, 7
        %v2018 = vsub.s32 6, %v2017
        %v2019 = vrot.slane %v1982, %v2018
        %v2020 = vlaneseq
        %v2021 = vshrl.u32 %v2020, 7
        %v2022 = vsub.s32 7, %v2021
        %v2023 = vrot.slane %v1982, %v2022
        %v2024 = vlaneseq
        %v2025 = vshrl.u32 %v2024, 7
        %v2026 = vsub.s32 0, %v2025
        %v2027 = vrot.slane %v1983, %v2026
        %v2028 = vlaneseq
        %v2029 = vshrl.u32 %v2028, 7
        %v2030 = vsub.s32 1, %v2029
        %v2031 = vrot.slane %v1983, %v2030
        %v2032 = vlaneseq
        %v2033 = vshrl.u32 %v2032, 7
        %v2034 = vsub.s32 2, %v2033
        %v2035 = vrot.slane %v1983, %v2034
        %v2036 = vlaneseq
        %v2037 = vshrl.u32 %v2036, 7
        %v2038 = vsub.s32 3, %v2037
        %v2039 = vrot.slane %v1983, %v2038
        %v2040 = vlaneseq
        %v2041 = vshrl.u32 %v2040, 7
        %v2042 = vsub.s32 4, %v2041
        %v2043 = vrot.slane %v1983, %v2042
        %v2044 = vlaneseq
        %v2045 = vshrl.u32 %v2044, 7
        %v2046 = vsub.s32 5, %v2045
        %v2047 = vrot.slane %v1983, %v2046
        %v2048 = vlaneseq
        %v2049 = vshrl.u32 %v2048, 7
        %v2050 = vsub.s32 6, %v2049
        %v2051 = vrot.slane %v1983, %v2050
        %v2052 = vlaneseq
        %v2053 = vshrl.u32 %v2052, 7
        %v2054 = vsub.s32 7, %v2053
        %v2055 = vrot.slane %v1983, %v2054
        %v2056 = vlaneseq
        %v2057 = vshrl.u32 %v2056, 7
        %v2058 = vsub.s32 0, %v2057
        %v2059 = vrot.slane %v1984, %v2058
        %v2060 = vlaneseq
        %v2061 = vshrl.u32 %v2060, 7
        %v2062 = vsub.s32 1, %v2061
        %v2063 = vrot.slane %v1984, %v2062
        %v2064 = vlaneseq
        %v2065 = vshrl.u32 %v2064, 7
        %v2066 = vsub.s32 2, %v2065
        %v2067 = vrot.slane %v1984, %v2066
        %v2068 = vlaneseq
        %v2069 = vshrl.u32 %v2068, 7
        %v2070 = vsub.s32 3, %v2069
        %v2071 = vrot.slane %v1984, %v2070
        %v2072 = vlaneseq
        %v2073 = vshrl.u32 %v2072, 7
        %v2074 = vsub.s32 4, %v2073
        %v2075 = vrot.slane %v1984, %v2074
        %v2076 = vlaneseq
        %v2077 = vshrl.u32 %v2076, 7
        %v2078 = vsub.s32 5, %v2077
        %v2079 = vrot.slane %v1984, %v2078
        %v2080 = vlaneseq
        %v2081 = vshrl.u32 %v2080, 7
        %v2082 = vsub.s32 6, %v2081
        %v2083 = vrot.slane %v1984, %v2082
        %v2084 = vlaneseq
        %v2085 = vshrl.u32 %v2084, 7
        %v2086 = vsub.s32 7, %v2085
        %v2087 = vrot.slane %v1984, %v2086
        %v2088 = vlaneseq
        %v2089 = vshrl.u32 %v2088, 7
        %v2090 = vsub.s32 0, %v2089
        %v2091 = vrot.slane %v1985, %v2090
        %v2092 = vlaneseq
        %v2093 = vshrl.u32 %v2092, 7
        %v2094 = vsub.s32 1, %v2093
        %v2095 = vrot.slane %v1985, %v2094
        %v2096 = vlaneseq
        %v2097 = vshrl.u32 %v2096, 7
        %v2098 = vsub.s32 2, %v2097
        %v2099 = vrot.slane %v1985, %v2098
        %v2100 = vlaneseq
        %v2101 = vshrl.u32 %v2100, 7
        %v2102 = vsub.s32 3, %v2101
        %v2103 = vrot.slane %v1985, %v2102
        %v2104 = vlaneseq
        %v2105 = vshrl.u32 %v2104, 7
        %v2106 = vsub.s32 4, %v2105
        %v2107 = vrot.slane %v1985, %v2106
        %v2108 = vlaneseq
        %v2109 = vshrl.u32 %v2108, 7
        %v2110 = vsub.s32 5, %v2109
        %v2111 = vrot.slane %v1985, %v2110
        %v2112 = vlaneseq
        %v2113 = vshrl.u32 %v2112, 7
        %v2114 = vsub.s32 6, %v2113
        %v2115 = vrot.slane %v1985, %v2114
        %v2116 = vlaneseq
        %v2117 = vshrl.u32 %v2116, 7
        %v2118 = vsub.s32 7, %v2117
        %v2119 = vrot.slane %v1985, %v2118
        %v2120 = vlaneseq
        %v2121 = vshrl.u32 %v2120, 7
        %v2122 = vsub.s32 0, %v2121
        %v2123 = vrot.slane %v1986, %v2122
        %v2124 = vlaneseq
        %v2125 = vshrl.u32 %v2124, 7
        %v2126 = vsub.s32 1, %v2125
        %v2127 = vrot.slane %v1986, %v2126
        %v2128 = vlaneseq
        %v2129 = vshrl.u32 %v2128, 7
        %v2130 = vsub.s32 2, %v2129
        %v2131 = vrot.slane %v1986, %v2130
        %v2132 = vlaneseq
        %v2133 = vshrl.u32 %v2132, 7
        %v2134 = vsub.s32 3, %v2133
        %v2135 = vrot.slane %v1986, %v2134
        %v2172 = vmul.f32 %v1279, %v1995
        %v2173 = vmul.f32 %v1281, %v1999
        %v2174 = vmul.f32 %v1320, %v2003
        %v2175 = vmul.f32 %v1322, %v2007
        %v2176 = vmul.f32 %v1361, %v2011
        %v2177 = vmul.f32 %v1363, %v2015
        %v2178 = vmul.f32 %v1402, %v2019
        %v2179 = vmul.f32 %v1404, %v2023
        %v2180 = vmul.f32 %v1443, %v2027
        %v2181 = vmul.f32 %v1445, %v2031
        %v2182 = vmul.f32 %v1484, %v2035
        %v2183 = vmul.f32 %v1486, %v2039
        %v2184 = vmul.f32 %v1525, %v2043
        %v2185 = vmul.f32 %v1527, %v2047
        %v2186 = vmul.f32 %v1566, %v2051
        %v2187 = vmul.f32 %v1568, %v2055
        %v2188 = vmul.f32 %v1607, %v2059
        %v2189 = vmul.f32 %v1609, %v2063
        %v2190 = vmul.f32 %v1648, %v2067
        %v2191 = vmul.f32 %v1650, %v2071
        %v2192 = vmul.f32 %v1689, %v2075
        %v2193 = vmul.f32 %v1691, %v2079
        %v2194 = vmul.f32 %v1730, %v2083
        %v2195 = vmul.f32 %v1732, %v2087
        %v2196 = vmul.f32 %v1771, %v2091
        %v2197 = vmul.f32 %v1773, %v2095
        %v2198 = vmul.f32 %v1812, %v2099
        %v2199 = vmul.f32 %v1814, %v2103
        %v2200 = vmul.f32 %v1853, %v2107
        %v2201 = vmul.f32 %v1855, %v2111
        %v2202 = vmul.f32 %v1894, %v2115
        %v2203 = vmul.f32 %v1896, %v2119
        %v2204 = vmul.f32 %v1935, %v2123
        %v2205 = vmul.f32 %v1937, %v2127
        %v2206 = vmul.f32 %v1976, %v2131
        %v2207 = vmul.f32 %v1978, %v2135
        %v2208 = vld [vmem:[%s523] sm:$0xff]
        %v2209 = vld [vmem:[%s523 + $0x8] sm:$0xff]
        %v2210 = vld [vmem:[%s523 + $0x10] sm:$0xff]
        %v2211 = vld [vmem:[%s523 + $0x18] sm:$0xff]
        %v2212 = vld [vmem:[%s523 + $0x20] sm:$0xf]
        %v2218 = vlaneseq
        %v2219 = vshrl.u32 %v2218, 7
        %v2220 = vsub.s32 0, %v2219
        %v2221 = vrot.slane %v2208, %v2220
        %v2222 = vlaneseq
        %v2223 = vshrl.u32 %v2222, 7
        %v2224 = vsub.s32 1, %v2223
        %v2225 = vrot.slane %v2208, %v2224
        %v2226 = vlaneseq
        %v2227 = vshrl.u32 %v2226, 7
        %v2228 = vsub.s32 2, %v2227
        %v2229 = vrot.slane %v2208, %v2228
        %v2230 = vlaneseq
        %v2231 = vshrl.u32 %v2230, 7
        %v2232 = vsub.s32 3, %v2231
        %v2233 = vrot.slane %v2208, %v2232
        %v2234 = vlaneseq
        %v2235 = vshrl.u32 %v2234, 7
        %v2236 = vsub.s32 4, %v2235
        %v2237 = vrot.slane %v2208, %v2236
        %v2238 = vlaneseq
        %v2239 = vshrl.u32 %v2238, 7
        %v2240 = vsub.s32 5, %v2239
        %v2241 = vrot.slane %v2208, %v2240
        %v2242 = vlaneseq
        %v2243 = vshrl.u32 %v2242, 7
        %v2244 = vsub.s32 6, %v2243
        %v2245 = vrot.slane %v2208, %v2244
        %v2246 = vlaneseq
        %v2247 = vshrl.u32 %v2246, 7
        %v2248 = vsub.s32 7, %v2247
        %v2249 = vrot.slane %v2208, %v2248
        %v2250 = vlaneseq
        %v2251 = vshrl.u32 %v2250, 7
        %v2252 = vsub.s32 0, %v2251
        %v2253 = vrot.slane %v2209, %v2252
        %v2254 = vlaneseq
        %v2255 = vshrl.u32 %v2254, 7
        %v2256 = vsub.s32 1, %v2255
        %v2257 = vrot.slane %v2209, %v2256
        %v2258 = vlaneseq
        %v2259 = vshrl.u32 %v2258, 7
        %v2260 = vsub.s32 2, %v2259
        %v2261 = vrot.slane %v2209, %v2260
        %v2262 = vlaneseq
        %v2263 = vshrl.u32 %v2262, 7
        %v2264 = vsub.s32 3, %v2263
        %v2265 = vrot.slane %v2209, %v2264
        %v2266 = vlaneseq
        %v2267 = vshrl.u32 %v2266, 7
        %v2268 = vsub.s32 4, %v2267
        %v2269 = vrot.slane %v2209, %v2268
        %v2270 = vlaneseq
        %v2271 = vshrl.u32 %v2270, 7
        %v2272 = vsub.s32 5, %v2271
        %v2273 = vrot.slane %v2209, %v2272
        %v2274 = vlaneseq
        %v2275 = vshrl.u32 %v2274, 7
        %v2276 = vsub.s32 6, %v2275
        %v2277 = vrot.slane %v2209, %v2276
        %v2278 = vlaneseq
        %v2279 = vshrl.u32 %v2278, 7
        %v2280 = vsub.s32 7, %v2279
        %v2281 = vrot.slane %v2209, %v2280
        %v2282 = vlaneseq
        %v2283 = vshrl.u32 %v2282, 7
        %v2284 = vsub.s32 0, %v2283
        %v2285 = vrot.slane %v2210, %v2284
        %v2286 = vlaneseq
        %v2287 = vshrl.u32 %v2286, 7
        %v2288 = vsub.s32 1, %v2287
        %v2289 = vrot.slane %v2210, %v2288
        %v2290 = vlaneseq
        %v2291 = vshrl.u32 %v2290, 7
        %v2292 = vsub.s32 2, %v2291
        %v2293 = vrot.slane %v2210, %v2292
        %v2294 = vlaneseq
        %v2295 = vshrl.u32 %v2294, 7
        %v2296 = vsub.s32 3, %v2295
        %v2297 = vrot.slane %v2210, %v2296
        %v2298 = vlaneseq
        %v2299 = vshrl.u32 %v2298, 7
        %v2300 = vsub.s32 4, %v2299
        %v2301 = vrot.slane %v2210, %v2300
        %v2302 = vlaneseq
        %v2303 = vshrl.u32 %v2302, 7
        %v2304 = vsub.s32 5, %v2303
        %v2305 = vrot.slane %v2210, %v2304
        %v2306 = vlaneseq
        %v2307 = vshrl.u32 %v2306, 7
        %v2308 = vsub.s32 6, %v2307
        %v2309 = vrot.slane %v2210, %v2308
        %v2310 = vlaneseq
        %v2311 = vshrl.u32 %v2310, 7
        %v2312 = vsub.s32 7, %v2311
        %v2313 = vrot.slane %v2210, %v2312
        %v2314 = vlaneseq
        %v2315 = vshrl.u32 %v2314, 7
        %v2316 = vsub.s32 0, %v2315
        %v2317 = vrot.slane %v2211, %v2316
        %v2318 = vlaneseq
        %v2319 = vshrl.u32 %v2318, 7
        %v2320 = vsub.s32 1, %v2319
        %v2321 = vrot.slane %v2211, %v2320
        %v2322 = vlaneseq
        %v2323 = vshrl.u32 %v2322, 7
        %v2324 = vsub.s32 2, %v2323
        %v2325 = vrot.slane %v2211, %v2324
        %v2326 = vlaneseq
        %v2327 = vshrl.u32 %v2326, 7
        %v2328 = vsub.s32 3, %v2327
        %v2329 = vrot.slane %v2211, %v2328
        %v2330 = vlaneseq
        %v2331 = vshrl.u32 %v2330, 7
        %v2332 = vsub.s32 4, %v2331
        %v2333 = vrot.slane %v2211, %v2332
        %v2334 = vlaneseq
        %v2335 = vshrl.u32 %v2334, 7
        %v2336 = vsub.s32 5, %v2335
        %v2337 = vrot.slane %v2211, %v2336
        %v2338 = vlaneseq
        %v2339 = vshrl.u32 %v2338, 7
        %v2340 = vsub.s32 6, %v2339
        %v2341 = vrot.slane %v2211, %v2340
        %v2342 = vlaneseq
        %v2343 = vshrl.u32 %v2342, 7
        %v2344 = vsub.s32 7, %v2343
        %v2345 = vrot.slane %v2211, %v2344
        %v2346 = vlaneseq
        %v2347 = vshrl.u32 %v2346, 7
        %v2348 = vsub.s32 0, %v2347
        %v2349 = vrot.slane %v2212, %v2348
        %v2350 = vlaneseq
        %v2351 = vshrl.u32 %v2350, 7
        %v2352 = vsub.s32 1, %v2351
        %v2353 = vrot.slane %v2212, %v2352
        %v2354 = vlaneseq
        %v2355 = vshrl.u32 %v2354, 7
        %v2356 = vsub.s32 2, %v2355
        %v2357 = vrot.slane %v2212, %v2356
        %v2358 = vlaneseq
        %v2359 = vshrl.u32 %v2358, 7
        %v2360 = vsub.s32 3, %v2359
        %v2361 = vrot.slane %v2212, %v2360
        %v2398 = vadd.f32 %v2172, %v2221
        %v2399 = vadd.f32 %v2173, %v2225
        %v2400 = vadd.f32 %v2174, %v2229
        %v2401 = vadd.f32 %v2175, %v2233
        %v2402 = vadd.f32 %v2176, %v2237
        %v2403 = vadd.f32 %v2177, %v2241
        %v2404 = vadd.f32 %v2178, %v2245
        %v2405 = vadd.f32 %v2179, %v2249
        %v2406 = vadd.f32 %v2180, %v2253
        %v2407 = vadd.f32 %v2181, %v2257
        %v2408 = vadd.f32 %v2182, %v2261
        %v2409 = vadd.f32 %v2183, %v2265
        %v2410 = vadd.f32 %v2184, %v2269
        %v2411 = vadd.f32 %v2185, %v2273
        %v2412 = vadd.f32 %v2186, %v2277
        %v2413 = vadd.f32 %v2187, %v2281
        %v2414 = vadd.f32 %v2188, %v2285
        %v2415 = vadd.f32 %v2189, %v2289
        %v2416 = vadd.f32 %v2190, %v2293
        %v2417 = vadd.f32 %v2191, %v2297
        %v2418 = vadd.f32 %v2192, %v2301
        %v2419 = vadd.f32 %v2193, %v2305
        %v2420 = vadd.f32 %v2194, %v2309
        %v2421 = vadd.f32 %v2195, %v2313
        %v2422 = vadd.f32 %v2196, %v2317
        %v2423 = vadd.f32 %v2197, %v2321
        %v2424 = vadd.f32 %v2198, %v2325
        %v2425 = vadd.f32 %v2199, %v2329
        %v2426 = vadd.f32 %v2200, %v2333
        %v2427 = vadd.f32 %v2201, %v2337
        %v2428 = vadd.f32 %v2202, %v2341
        %v2429 = vadd.f32 %v2203, %v2345
        %v2430 = vadd.f32 %v2204, %v2349
        %v2431 = vadd.f32 %v2205, %v2353
        %v2432 = vadd.f32 %v2206, %v2357
        %v2433 = vadd.f32 %v2207, %v2361
        %v2434 = vmax.f32 %v2398, 0.0
        %v2435 = vmax.f32 %v2399, 0.0
        %v2436 = vmax.f32 %v2400, 0.0
        %v2437 = vmax.f32 %v2401, 0.0
        %v2438 = vmax.f32 %v2402, 0.0
        %v2439 = vmax.f32 %v2403, 0.0
        %v2440 = vmax.f32 %v2404, 0.0
        %v2441 = vmax.f32 %v2405, 0.0
        %v2442 = vmax.f32 %v2406, 0.0
        %v2443 = vmax.f32 %v2407, 0.0
        %v2444 = vmax.f32 %v2408, 0.0
        %v2445 = vmax.f32 %v2409, 0.0
        %v2446 = vmax.f32 %v2410, 0.0
        %v2447 = vmax.f32 %v2411, 0.0
        %v2448 = vmax.f32 %v2412, 0.0
        %v2449 = vmax.f32 %v2413, 0.0
        %v2450 = vmax.f32 %v2414, 0.0
        %v2451 = vmax.f32 %v2415, 0.0
        %v2452 = vmax.f32 %v2416, 0.0
        %v2453 = vmax.f32 %v2417, 0.0
        %v2454 = vmax.f32 %v2418, 0.0
        %v2455 = vmax.f32 %v2419, 0.0
        %v2456 = vmax.f32 %v2420, 0.0
        %v2457 = vmax.f32 %v2421, 0.0
        %v2458 = vmax.f32 %v2422, 0.0
        %v2459 = vmax.f32 %v2423, 0.0
        %v2460 = vmax.f32 %v2424, 0.0
        %v2461 = vmax.f32 %v2425, 0.0
        %v2462 = vmax.f32 %v2426, 0.0
        %v2463 = vmax.f32 %v2427, 0.0
        %v2464 = vmax.f32 %v2428, 0.0
        %v2465 = vmax.f32 %v2429, 0.0
        %v2466 = vmax.f32 %v2430, 0.0
        %v2467 = vmax.f32 %v2431, 0.0
        %v2468 = vmax.f32 %v2432, 0.0
        %v2469 = vmax.f32 %v2433, 0.0
        %v2470 = vld [vmem:[#allocation2] sm:$0xff]
        %v2471 = vpack.c.bf16 %v2434, %v2434
        %v2472 = vpack.c.bf16 %v2435, %v2435
        %v2473 = vpack.c.bf16 %v2436, %v2436
        %v2474 = vpack.c.bf16 %v2437, %v2437
        %v2475 = vpack.c.bf16 %v2438, %v2438
        %v2476 = vpack.c.bf16 %v2439, %v2439
        %v2477 = vpack.c.bf16 %v2440, %v2440
        %v2478 = vpack.c.bf16 %v2441, %v2441
        %v2479 = vpack.c.bf16 %v2442, %v2442
        %v2480 = vpack.c.bf16 %v2443, %v2443
        %v2481 = vpack.c.bf16 %v2444, %v2444
        %v2482 = vpack.c.bf16 %v2445, %v2445
        %v2483 = vpack.c.bf16 %v2446, %v2446
        %v2484 = vpack.c.bf16 %v2447, %v2447
        %v2485 = vpack.c.bf16 %v2448, %v2448
        %v2486 = vpack.c.bf16 %v2449, %v2449
        %v2487 = vpack.c.bf16 %v2450, %v2450
        %v2488 = vpack.c.bf16 %v2451, %v2451
        %v2489 = vpack.c.bf16 %v2452, %v2452
        %v2490 = vpack.c.bf16 %v2453, %v2453
        %v2491 = vpack.c.bf16 %v2454, %v2454
        %v2492 = vpack.c.bf16 %v2455, %v2455
        %v2493 = vpack.c.bf16 %v2456, %v2456
        %v2494 = vpack.c.bf16 %v2457, %v2457
        %v2495 = vpack.c.bf16 %v2458, %v2458
        %v2496 = vpack.c.bf16 %v2459, %v2459
        %v2497 = vpack.c.bf16 %v2460, %v2460
        %v2498 = vpack.c.bf16 %v2461, %v2461
        %v2499 = vpack.c.bf16 %v2462, %v2462
        %v2500 = vpack.c.bf16 %v2463, %v2463
        %v2501 = vpack.c.bf16 %v2464, %v2464
        %v2502 = vpack.c.bf16 %v2465, %v2465
        %v2503 = vpack.c.bf16 %v2466, %v2466
        %v2504 = vpack.c.bf16 %v2467, %v2467
        %v2505 = vpack.c.bf16 %v2468, %v2468
        %v2506 = vpack.c.bf16 %v2469, %v2469
        %v2507 = vld [vmem:[%s532] sm:$0xff]
        %v2508 = vld [vmem:[%s532 + $0x8] sm:$0xff]
        %v2509 = vld [vmem:[%s532 + $0x10] sm:$0xff]
        %v2510 = vld [vmem:[%s532 + $0x18] sm:$0xff]
        %v2511 = vld [vmem:[%s532 + $0x20] sm:$0xff]
        %v2512 = vld [vmem:[%s532 + $0x28] sm:$0xff]
        %v2513 = vld [vmem:[%s532 + $0x30] sm:$0xff]
        %v2514 = vld [vmem:[%s532 + $0x38] sm:$0xff]
        %v2515 = vld [vmem:[%s532 + $0x40] sm:$0xff]
        %v2516 = vld [vmem:[%s532 + $0x48] sm:$0xff]
        %v2517 = vld [vmem:[%s532 + $0x50] sm:$0xff]
        %v2518 = vld [vmem:[%s532 + $0x58] sm:$0xff]
        %v2519 = vld [vmem:[%s532 + $0x60] sm:$0xff]
        %v2520 = vld [vmem:[%s532 + $0x68] sm:$0xff]
        %v2521 = vld [vmem:[%s532 + $0x70] sm:$0xff]
        %v2522 = vld [vmem:[%s532 + $0x78] sm:$0xff]
        %v2523 = vld [vmem:[%s532 + $0x80] sm:$0xff]
        %v2524 = vld [vmem:[%s532 + $0x88] sm:$0xff]
        %v2525 = vld [vmem:[%s532 + $0x90] sm:$0xff]
        %v2526 = vld [vmem:[%s532 + $0x98] sm:$0xff]
        %v2527 = vld [vmem:[%s532 + $0xa0] sm:$0xff]
        %v2528 = vld [vmem:[%s532 + $0xa8] sm:$0xff]
        %v2529 = vld [vmem:[%s532 + $0xb0] sm:$0xff]
        %v2530 = vld [vmem:[%s532 + $0xb8] sm:$0xff]
        %v2531 = vld [vmem:[%s532 + $0xc0] sm:$0xff]
        %v2532 = vld [vmem:[%s532 + $0xc8] sm:$0xff]
        %v2533 = vld [vmem:[%s532 + $0xd0] sm:$0xff]
        %v2534 = vld [vmem:[%s532 + $0xd8] sm:$0xff]
        %v2535 = vld [vmem:[%s532 + $0xe0] sm:$0xff]
        %v2536 = vld [vmem:[%s532 + $0xe8] sm:$0xff]
        %v2537 = vld [vmem:[%s532 + $0xf0] sm:$0xff]
        %v2538 = vld [vmem:[%s532 + $0xf8] sm:$0xff]
        %v2539 = vld [vmem:[%s532 + $0x100] sm:$0xff]
        %v2540 = vld [vmem:[%s532 + $0x108] sm:$0xff]
        %v2541 = vld [vmem:[%s532 + $0x110] sm:$0xff]
        %v2542 = vld [vmem:[%s532 + $0x118] sm:$0xff]
        %v2543 = vld [vmem:[%s532 + $0x120] sm:$0xff]
        %v2544 = vld [vmem:[%s532 + $0x128] sm:$0xff]
        %v2545 = vld [vmem:[%s532 + $0x130] sm:$0xff]
        %v2546 = vld [vmem:[%s532 + $0x138] sm:$0xff]
        %v2547 = vld [vmem:[%s532 + $0x140] sm:$0xff]
        %v2548 = vld [vmem:[%s532 + $0x148] sm:$0xff]
        %v2549 = vld [vmem:[%s532 + $0x150] sm:$0xff]
        %v2550 = vld [vmem:[%s532 + $0x158] sm:$0xff]
        %v2551 = vld [vmem:[%s532 + $0x160] sm:$0xff]
        %v2552 = vld [vmem:[%s532 + $0x168] sm:$0xff]
        %v2553 = vld [vmem:[%s532 + $0x170] sm:$0xff]
        %v2554 = vld [vmem:[%s532 + $0x178] sm:$0xff]
        %v2555 = vld [vmem:[%s532 + $0x180] sm:$0xff]
        %v2556 = vld [vmem:[%s532 + $0x188] sm:$0xff]
        %v2557 = vld [vmem:[%s532 + $0x190] sm:$0xff]
        %v2558 = vld [vmem:[%s532 + $0x198] sm:$0xff]
        %v2559 = vld [vmem:[%s532 + $0x1a0] sm:$0xff]
        %v2560 = vld [vmem:[%s532 + $0x1a8] sm:$0xff]
        %v2561 = vld [vmem:[%s532 + $0x1b0] sm:$0xff]
        %v2562 = vld [vmem:[%s532 + $0x1b8] sm:$0xff]
        %v2563 = vld [vmem:[%s532 + $0x1c0] sm:$0xff]
        %v2564 = vld [vmem:[%s532 + $0x1c8] sm:$0xff]
        %v2565 = vld [vmem:[%s532 + $0x1d0] sm:$0xff]
        %v2566 = vld [vmem:[%s532 + $0x1d8] sm:$0xff]
        %v2567 = vld [vmem:[%s532 + $0x1e0] sm:$0xff]
        %v2568 = vld [vmem:[%s532 + $0x1e8] sm:$0xff]
        %v2569 = vld [vmem:[%s532 + $0x1f0] sm:$0xff]
        %v2570 = vld [vmem:[%s532 + $0x1f8] sm:$0xff]
        %v2571 = vld [vmem:[%s532 + $0x200] sm:$0xff]
        %v2572 = vld [vmem:[%s532 + $0x208] sm:$0xff]
        %v2573 = vld [vmem:[%s532 + $0x210] sm:$0xff]
        %v2574 = vld [vmem:[%s532 + $0x218] sm:$0xff]
        %v2575 = vld [vmem:[%s532 + $0x220] sm:$0xff]
        %v2576 = vld [vmem:[%s532 + $0x228] sm:$0xff]
        %v2577 = vld [vmem:[%s532 + $0x230] sm:$0xff]
        %v2578 = vld [vmem:[%s532 + $0x238] sm:$0xff]
        %v2579 = vld [vmem:[%s532 + $0x240] sm:$0xff]
        %v2580 = vld [vmem:[%s532 + $0x248] sm:$0xff]
        %v2581 = vld [vmem:[%s532 + $0x250] sm:$0xff]
        %v2582 = vld [vmem:[%s532 + $0x258] sm:$0xff]
        %v2583 = vld [vmem:[%s532 + $0x260] sm:$0xff]
        %v2584 = vld [vmem:[%s532 + $0x268] sm:$0xff]
        %v2585 = vld [vmem:[%s532 + $0x270] sm:$0xff]
        %v2586 = vld [vmem:[%s532 + $0x278] sm:$0xff]
        %v2587 = vld [vmem:[%s532 + $0x280] sm:$0xff]
        %v2588 = vld [vmem:[%s532 + $0x288] sm:$0xff]
        %v2589 = vld [vmem:[%s532 + $0x290] sm:$0xff]
        %v2590 = vld [vmem:[%s532 + $0x298] sm:$0xff]
        %v2591 = vld [vmem:[%s532 + $0x2a0] sm:$0xff]
        %v2592 = vld [vmem:[%s532 + $0x2a8] sm:$0xff]
        %v2593 = vld [vmem:[%s532 + $0x2b0] sm:$0xff]
        %v2594 = vld [vmem:[%s532 + $0x2b8] sm:$0xff]
        %v2595 = vld [vmem:[%s532 + $0x2c0] sm:$0xff]
        %v2596 = vld [vmem:[%s532 + $0x2c8] sm:$0xff]
        %v2597 = vld [vmem:[%s532 + $0x2d0] sm:$0xff]
        %v2598 = vld [vmem:[%s532 + $0x2d8] sm:$0xff]
        %v2599 = vld [vmem:[%s532 + $0x2e0] sm:$0xff]
        %v2600 = vld [vmem:[%s532 + $0x2e8] sm:$0xff]
        %v2601 = vld [vmem:[%s532 + $0x2f0] sm:$0xff]
        %v2602 = vld [vmem:[%s532 + $0x2f8] sm:$0xff]
        %v2603 = vld [vmem:[%s532 + $0x300] sm:$0xff]
        %v2604 = vld [vmem:[%s532 + $0x308] sm:$0xff]
        %v2605 = vld [vmem:[%s532 + $0x310] sm:$0xff]
        %v2606 = vld [vmem:[%s532 + $0x318] sm:$0xff]
        %v2607 = vld [vmem:[%s532 + $0x320] sm:$0xff]
        %v2608 = vld [vmem:[%s532 + $0x328] sm:$0xff]
        %v2609 = vld [vmem:[%s532 + $0x330] sm:$0xff]
        %v2610 = vld [vmem:[%s532 + $0x338] sm:$0xff]
        %v2611 = vld [vmem:[%s532 + $0x340] sm:$0xff]
        %v2612 = vld [vmem:[%s532 + $0x348] sm:$0xff]
        %v2613 = vld [vmem:[%s532 + $0x350] sm:$0xff]
        %v2614 = vld [vmem:[%s532 + $0x358] sm:$0xff]
        %v2615 = vld [vmem:[%s532 + $0x360] sm:$0xff]
        %v2616 = vld [vmem:[%s532 + $0x368] sm:$0xff]
        %v2617 = vld [vmem:[%s532 + $0x370] sm:$0xff]
        %v2618 = vld [vmem:[%s532 + $0x378] sm:$0xff]
        %v2619 = vld [vmem:[%s532 + $0x380] sm:$0xff]
        %v2620 = vld [vmem:[%s532 + $0x388] sm:$0xff]
        %v2621 = vld [vmem:[%s532 + $0x390] sm:$0xff]
        %v2622 = vld [vmem:[%s532 + $0x398] sm:$0xff]
        %v2623 = vld [vmem:[%s532 + $0x3a0] sm:$0xff]
        %v2624 = vld [vmem:[%s532 + $0x3a8] sm:$0xff]
        %v2625 = vld [vmem:[%s532 + $0x3b0] sm:$0xff]
        %v2626 = vld [vmem:[%s532 + $0x3b8] sm:$0xff]
        %v2627 = vld [vmem:[%s532 + $0x3c0] sm:$0xff]
        %v2628 = vld [vmem:[%s532 + $0x3c8] sm:$0xff]
        %v2629 = vld [vmem:[%s532 + $0x3d0] sm:$0xff]
        %v2630 = vld [vmem:[%s532 + $0x3d8] sm:$0xff]
        %v2631 = vld [vmem:[%s532 + $0x3e0] sm:$0xff]
        %v2632 = vld [vmem:[%s532 + $0x3e8] sm:$0xff]
        %v2633 = vld [vmem:[%s532 + $0x3f0] sm:$0xff]
        %v2634 = vld [vmem:[%s532 + $0x3f8] sm:$0xff]
        %v2635 = vld [vmem:[%s532 + $0x400] sm:$0xff]
        %v2636 = vld [vmem:[%s532 + $0x408] sm:$0xff]
        %v2637 = vld [vmem:[%s532 + $0x410] sm:$0xff]
        %v2638 = vld [vmem:[%s532 + $0x418] sm:$0xff]
        %v2639 = vld [vmem:[%s532 + $0x420] sm:$0xff]
        %v2640 = vld [vmem:[%s532 + $0x428] sm:$0xff]
        %v2641 = vld [vmem:[%s532 + $0x430] sm:$0xff]
        %v2642 = vld [vmem:[%s532 + $0x438] sm:$0xff]
        %v2643 = vld [vmem:[%s532 + $0x440] sm:$0xff]
        %v2644 = vld [vmem:[%s532 + $0x448] sm:$0xff]
        %v2645 = vld [vmem:[%s532 + $0x450] sm:$0xff]
        %v2646 = vld [vmem:[%s532 + $0x458] sm:$0xff]
        %v2647 = vld [vmem:[%s532 + $0x460] sm:$0xff]
        %v2648 = vld [vmem:[%s532 + $0x468] sm:$0xff]
        %v2649 = vld [vmem:[%s532 + $0x470] sm:$0xff]
        %v2650 = vld [vmem:[%s532 + $0x478] sm:$0xff]
        %v2651 = vld [vmem:[%s532 + $0x480] sm:$0xff]
        %v2652 = vld [vmem:[%s532 + $0x488] sm:$0xff]
        %v2653 = vld [vmem:[%s532 + $0x490] sm:$0xff]
        %v2654 = vld [vmem:[%s532 + $0x498] sm:$0xff]
        %v2655 = vld [vmem:[%s532 + $0x4a0] sm:$0xff]
        %v2656 = vld [vmem:[%s532 + $0x4a8] sm:$0xff]
        %v2657 = vld [vmem:[%s532 + $0x4b0] sm:$0xff]
        %v2658 = vld [vmem:[%s532 + $0x4b8] sm:$0xff]
        %v2659 = vld [vmem:[%s532 + $0x4c0] sm:$0xff]
        %v2660 = vld [vmem:[%s532 + $0x4c8] sm:$0xff]
        %v2661 = vld [vmem:[%s532 + $0x4d0] sm:$0xff]
        %v2662 = vld [vmem:[%s532 + $0x4d8] sm:$0xff]
        %v2663 = vld [vmem:[%s532 + $0x4e0] sm:$0xff]
        %v2664 = vld [vmem:[%s532 + $0x4e8] sm:$0xff]
        %v2665 = vld [vmem:[%s532 + $0x4f0] sm:$0xff]
        %v2666 = vld [vmem:[%s532 + $0x4f8] sm:$0xff]
        %v2667 = vld [vmem:[%s532 + $0x500] sm:$0xff]
        %v2668 = vld [vmem:[%s532 + $0x508] sm:$0xff]
        %v2669 = vld [vmem:[%s532 + $0x510] sm:$0xff]
        %v2670 = vld [vmem:[%s532 + $0x518] sm:$0xff]
        %v2671 = vld [vmem:[%s532 + $0x520] sm:$0xff]
        %v2672 = vld [vmem:[%s532 + $0x528] sm:$0xff]
        %v2673 = vld [vmem:[%s532 + $0x530] sm:$0xff]
        %v2674 = vld [vmem:[%s532 + $0x538] sm:$0xff]
        %v2675 = vld [vmem:[%s532 + $0x540] sm:$0xff]
        %v2676 = vld [vmem:[%s532 + $0x548] sm:$0xff]
        %v2677 = vld [vmem:[%s532 + $0x550] sm:$0xff]
        %v2678 = vld [vmem:[%s532 + $0x558] sm:$0xff]
        %v2679 = vld [vmem:[%s532 + $0x560] sm:$0xff]
        %v2680 = vld [vmem:[%s532 + $0x568] sm:$0xff]
        %v2681 = vld [vmem:[%s532 + $0x570] sm:$0xff]
        %v2682 = vld [vmem:[%s532 + $0x578] sm:$0xff]
        %v2683 = vld [vmem:[%s532 + $0x580] sm:$0xff]
        %v2684 = vld [vmem:[%s532 + $0x588] sm:$0xff]
        %v2685 = vld [vmem:[%s532 + $0x590] sm:$0xff]
        %v2686 = vld [vmem:[%s532 + $0x598] sm:$0xff]
        %v2687 = vld [vmem:[%s532 + $0x5a0] sm:$0xff]
        %v2688 = vld [vmem:[%s532 + $0x5a8] sm:$0xff]
        %v2689 = vld [vmem:[%s532 + $0x5b0] sm:$0xff]
        %v2690 = vld [vmem:[%s532 + $0x5b8] sm:$0xff]
        %v2691 = vld [vmem:[%s532 + $0x5c0] sm:$0xff]
        %v2692 = vld [vmem:[%s532 + $0x5c8] sm:$0xff]
        %v2693 = vld [vmem:[%s532 + $0x5d0] sm:$0xff]
        %v2694 = vld [vmem:[%s532 + $0x5d8] sm:$0xff]
        %v2695 = vld [vmem:[%s532 + $0x5e0] sm:$0xff]
        %v2696 = vld [vmem:[%s532 + $0x5e8] sm:$0xff]
        %v2697 = vld [vmem:[%s532 + $0x5f0] sm:$0xff]
        %v2698 = vld [vmem:[%s532 + $0x5f8] sm:$0xff]
        %v2699 = vld [vmem:[%s532 + $0x600] sm:$0xff]
        %v2700 = vld [vmem:[%s532 + $0x608] sm:$0xff]
        %v2701 = vld [vmem:[%s532 + $0x610] sm:$0xff]
        %v2702 = vld [vmem:[%s532 + $0x618] sm:$0xff]
        %v2703 = vld [vmem:[%s532 + $0x620] sm:$0xff]
        %v2704 = vld [vmem:[%s532 + $0x628] sm:$0xff]
        %v2705 = vld [vmem:[%s532 + $0x630] sm:$0xff]
        %v2706 = vld [vmem:[%s532 + $0x638] sm:$0xff]
        %v2707 = vld [vmem:[%s532 + $0x640] sm:$0xff]
        %v2708 = vld [vmem:[%s532 + $0x648] sm:$0xff]
        %v2709 = vld [vmem:[%s532 + $0x650] sm:$0xff]
        %v2710 = vld [vmem:[%s532 + $0x658] sm:$0xff]
        %v2711 = vld [vmem:[%s532 + $0x660] sm:$0xff]
        %v2712 = vld [vmem:[%s532 + $0x668] sm:$0xff]
        %v2713 = vld [vmem:[%s532 + $0x670] sm:$0xff]
        %v2714 = vld [vmem:[%s532 + $0x678] sm:$0xff]
        %v2715 = vld [vmem:[%s532 + $0x680] sm:$0xff]
        %v2716 = vld [vmem:[%s532 + $0x688] sm:$0xff]
        %v2717 = vld [vmem:[%s532 + $0x690] sm:$0xff]
        %v2718 = vld [vmem:[%s532 + $0x698] sm:$0xff]
        %v2719 = vld [vmem:[%s532 + $0x6a0] sm:$0xff]
        %v2720 = vld [vmem:[%s532 + $0x6a8] sm:$0xff]
        %v2721 = vld [vmem:[%s532 + $0x6b0] sm:$0xff]
        %v2722 = vld [vmem:[%s532 + $0x6b8] sm:$0xff]
        %v2723 = vld [vmem:[%s532 + $0x6c0] sm:$0xff]
        %v2724 = vld [vmem:[%s532 + $0x6c8] sm:$0xff]
        %v2725 = vld [vmem:[%s532 + $0x6d0] sm:$0xff]
        %v2726 = vld [vmem:[%s532 + $0x6d8] sm:$0xff]
        %v2727 = vld [vmem:[%s532 + $0x6e0] sm:$0xff]
        %v2728 = vld [vmem:[%s532 + $0x6e8] sm:$0xff]
        %v2729 = vld [vmem:[%s532 + $0x6f0] sm:$0xff]
        %v2730 = vld [vmem:[%s532 + $0x6f8] sm:$0xff]
        %v2731 = vld [vmem:[%s532 + $0x700] sm:$0xff]
        %v2732 = vld [vmem:[%s532 + $0x708] sm:$0xff]
        %v2733 = vld [vmem:[%s532 + $0x710] sm:$0xff]
        %v2734 = vld [vmem:[%s532 + $0x718] sm:$0xff]
        %v2735 = vld [vmem:[%s532 + $0x720] sm:$0xff]
        %v2736 = vld [vmem:[%s532 + $0x728] sm:$0xff]
        %v2737 = vld [vmem:[%s532 + $0x730] sm:$0xff]
        %v2738 = vld [vmem:[%s532 + $0x738] sm:$0xff]
        %v2739 = vld [vmem:[%s532 + $0x740] sm:$0xff]
        %v2740 = vld [vmem:[%s532 + $0x748] sm:$0xff]
        %v2741 = vld [vmem:[%s532 + $0x750] sm:$0xff]
        %v2742 = vld [vmem:[%s532 + $0x758] sm:$0xff]
        %v2743 = vld [vmem:[%s532 + $0x760] sm:$0xff]
        %v2744 = vld [vmem:[%s532 + $0x768] sm:$0xff]
        %v2745 = vld [vmem:[%s532 + $0x770] sm:$0xff]
        %v2746 = vld [vmem:[%s532 + $0x778] sm:$0xff]
        %v2747 = vld [vmem:[%s532 + $0x780] sm:$0xff]
        %v2748 = vld [vmem:[%s532 + $0x788] sm:$0xff]
        %v2749 = vld [vmem:[%s532 + $0x790] sm:$0xff]
        %v2750 = vld [vmem:[%s532 + $0x798] sm:$0xff]
        %v2751 = vld [vmem:[%s532 + $0x7a0] sm:$0xff]
        %v2752 = vld [vmem:[%s532 + $0x7a8] sm:$0xff]
        %v2753 = vld [vmem:[%s532 + $0x7b0] sm:$0xff]
        %v2754 = vld [vmem:[%s532 + $0x7b8] sm:$0xff]
        %v2755 = vld [vmem:[%s532 + $0x7c0] sm:$0xff]
        %v2756 = vld [vmem:[%s532 + $0x7c8] sm:$0xff]
        %v2757 = vld [vmem:[%s532 + $0x7d0] sm:$0xff]
        %v2758 = vld [vmem:[%s532 + $0x7d8] sm:$0xff]
        %v2759 = vld [vmem:[%s532 + $0x7e0] sm:$0xff]
        %v2760 = vld [vmem:[%s532 + $0x7e8] sm:$0xff]
        %v2761 = vld [vmem:[%s532 + $0x7f0] sm:$0xff]
        %v2762 = vld [vmem:[%s532 + $0x7f8] sm:$0xff]
        %v2763 = vld [vmem:[%s532 + $0x800] sm:$0xff]
        %v2764 = vld [vmem:[%s532 + $0x808] sm:$0xff]
        %v2765 = vld [vmem:[%s532 + $0x810] sm:$0xff]
        %v2766 = vld [vmem:[%s532 + $0x818] sm:$0xff]
        %v2767 = vld [vmem:[%s532 + $0x820] sm:$0xff]
        %v2768 = vld [vmem:[%s532 + $0x828] sm:$0xff]
        %v2769 = vld [vmem:[%s532 + $0x830] sm:$0xff]
        %v2770 = vld [vmem:[%s532 + $0x838] sm:$0xff]
        %v2771 = vld [vmem:[%s532 + $0x840] sm:$0xff]
        %v2772 = vld [vmem:[%s532 + $0x848] sm:$0xff]
        %v2773 = vld [vmem:[%s532 + $0x850] sm:$0xff]
        %v2774 = vld [vmem:[%s532 + $0x858] sm:$0xff]
        %v2775 = vld [vmem:[%s532 + $0x860] sm:$0xff]
        %v2776 = vld [vmem:[%s532 + $0x868] sm:$0xff]
        %v2777 = vld [vmem:[%s532 + $0x870] sm:$0xff]
        %v2778 = vld [vmem:[%s532 + $0x878] sm:$0xff]
        %v2779 = vld [vmem:[%s532 + $0x880] sm:$0xff]
        %v2780 = vld [vmem:[%s532 + $0x888] sm:$0xff]
        %v2781 = vld [vmem:[%s532 + $0x890] sm:$0xff]
        %v2782 = vld [vmem:[%s532 + $0x898] sm:$0xff]
        %v2783 = vld [vmem:[%s532 + $0x8a0] sm:$0xff]
        %v2784 = vld [vmem:[%s532 + $0x8a8] sm:$0xff]
        %v2785 = vld [vmem:[%s532 + $0x8b0] sm:$0xff]
        %v2786 = vld [vmem:[%s532 + $0x8b8] sm:$0xff]
        %v2787 = vld [vmem:[%s532 + $0x8c0] sm:$0xff]
        %v2788 = vld [vmem:[%s532 + $0x8c8] sm:$0xff]
        %v2789 = vld [vmem:[%s532 + $0x8d0] sm:$0xff]
        %v2790 = vld [vmem:[%s532 + $0x8d8] sm:$0xff]
        %v2791 = vld [vmem:[%s532 + $0x8e0] sm:$0xff]
        %v2792 = vld [vmem:[%s532 + $0x8e8] sm:$0xff]
        %v2793 = vld [vmem:[%s532 + $0x8f0] sm:$0xff]
        %v2794 = vld [vmem:[%s532 + $0x8f8] sm:$0xff]
        %v2795 = vld [vmem:[%s532 + $0x900] sm:$0xff]
        %v2796 = vld [vmem:[%s532 + $0x908] sm:$0xff]
        %v2797 = vld [vmem:[%s532 + $0x910] sm:$0xff]
        %v2798 = vld [vmem:[%s532 + $0x918] sm:$0xff]
        %v2799 = vld [vmem:[%s532 + $0x920] sm:$0xff]
        %v2800 = vld [vmem:[%s532 + $0x928] sm:$0xff]
        %v2801 = vld [vmem:[%s532 + $0x930] sm:$0xff]
        %v2802 = vld [vmem:[%s532 + $0x938] sm:$0xff]
        %v2803 = vld [vmem:[%s532 + $0x940] sm:$0xff]
        %v2804 = vld [vmem:[%s532 + $0x948] sm:$0xff]
        %v2805 = vld [vmem:[%s532 + $0x950] sm:$0xff]
        %v2806 = vld [vmem:[%s532 + $0x958] sm:$0xff]
        %v2807 = vld [vmem:[%s532 + $0x960] sm:$0xff]
        %v2808 = vld [vmem:[%s532 + $0x968] sm:$0xff]
        %v2809 = vld [vmem:[%s532 + $0x970] sm:$0xff]
        %v2810 = vld [vmem:[%s532 + $0x978] sm:$0xff]
        %v2811 = vld [vmem:[%s532 + $0x980] sm:$0xff]
        %v2812 = vld [vmem:[%s532 + $0x988] sm:$0xff]
        %v2813 = vld [vmem:[%s532 + $0x990] sm:$0xff]
        %v2814 = vld [vmem:[%s532 + $0x998] sm:$0xff]
        %v2815 = vld [vmem:[%s532 + $0x9a0] sm:$0xff]
        %v2816 = vld [vmem:[%s532 + $0x9a8] sm:$0xff]
        %v2817 = vld [vmem:[%s532 + $0x9b0] sm:$0xff]
        %v2818 = vld [vmem:[%s532 + $0x9b8] sm:$0xff]
        %v2819 = vld [vmem:[%s532 + $0x9c0] sm:$0xff]
        %v2820 = vld [vmem:[%s532 + $0x9c8] sm:$0xff]
        %v2821 = vld [vmem:[%s532 + $0x9d0] sm:$0xff]
        %v2822 = vld [vmem:[%s532 + $0x9d8] sm:$0xff]
        %v2823 = vld [vmem:[%s532 + $0x9e0] sm:$0xff]
        %v2824 = vld [vmem:[%s532 + $0x9e8] sm:$0xff]
        %v2825 = vld [vmem:[%s532 + $0x9f0] sm:$0xff]
        %v2826 = vld [vmem:[%s532 + $0x9f8] sm:$0xff]
        %v2827 = vld [vmem:[%s532 + $0xa00] sm:$0xff]
        %v2828 = vld [vmem:[%s532 + $0xa08] sm:$0xff]
        %v2829 = vld [vmem:[%s532 + $0xa10] sm:$0xff]
        %v2830 = vld [vmem:[%s532 + $0xa18] sm:$0xff]
        %v2831 = vld [vmem:[%s532 + $0xa20] sm:$0xff]
        %v2832 = vld [vmem:[%s532 + $0xa28] sm:$0xff]
        %v2833 = vld [vmem:[%s532 + $0xa30] sm:$0xff]
        %v2834 = vld [vmem:[%s532 + $0xa38] sm:$0xff]
        %v2835 = vld [vmem:[%s532 + $0xa40] sm:$0xff]
        %v2836 = vld [vmem:[%s532 + $0xa48] sm:$0xff]
        %v2837 = vld [vmem:[%s532 + $0xa50] sm:$0xff]
        %v2838 = vld [vmem:[%s532 + $0xa58] sm:$0xff]
        %v2839 = vld [vmem:[%s532 + $0xa60] sm:$0xff]
        %v2840 = vld [vmem:[%s532 + $0xa68] sm:$0xff]
        %v2841 = vld [vmem:[%s532 + $0xa70] sm:$0xff]
        %v2842 = vld [vmem:[%s532 + $0xa78] sm:$0xff]
        %v2843 = vld [vmem:[%s532 + $0xa80] sm:$0xff]
        %v2844 = vld [vmem:[%s532 + $0xa88] sm:$0xff]
        %v2845 = vld [vmem:[%s532 + $0xa90] sm:$0xff]
        %v2846 = vld [vmem:[%s532 + $0xa98] sm:$0xff]
        %v2847 = vld [vmem:[%s532 + $0xaa0] sm:$0xff]
        %v2848 = vld [vmem:[%s532 + $0xaa8] sm:$0xff]
        %v2849 = vld [vmem:[%s532 + $0xab0] sm:$0xff]
        %v2850 = vld [vmem:[%s532 + $0xab8] sm:$0xff]
        %v2851 = vld [vmem:[%s532 + $0xac0] sm:$0xff]
        %v2852 = vld [vmem:[%s532 + $0xac8] sm:$0xff]
        %v2853 = vld [vmem:[%s532 + $0xad0] sm:$0xff]
        %v2854 = vld [vmem:[%s532 + $0xad8] sm:$0xff]
        %v2855 = vld [vmem:[%s532 + $0xae0] sm:$0xff]
        %v2856 = vld [vmem:[%s532 + $0xae8] sm:$0xff]
        %v2857 = vld [vmem:[%s532 + $0xaf0] sm:$0xff]
        %v2858 = vld [vmem:[%s532 + $0xaf8] sm:$0xff]
        %v2859 = vld [vmem:[%s532 + $0xb00] sm:$0xff]
        %v2860 = vld [vmem:[%s532 + $0xb08] sm:$0xff]
        %v2861 = vld [vmem:[%s532 + $0xb10] sm:$0xff]
        %v2862 = vld [vmem:[%s532 + $0xb18] sm:$0xff]
        %v2863 = vld [vmem:[%s532 + $0xb20] sm:$0xff]
        %v2864 = vld [vmem:[%s532 + $0xb28] sm:$0xff]
        %v2865 = vld [vmem:[%s532 + $0xb30] sm:$0xff]
        %v2866 = vld [vmem:[%s532 + $0xb38] sm:$0xff]
        %v2867 = vld [vmem:[%s532 + $0xb40] sm:$0xff]
        %v2868 = vld [vmem:[%s532 + $0xb48] sm:$0xff]
        %v2869 = vld [vmem:[%s532 + $0xb50] sm:$0xff]
        %v2870 = vld [vmem:[%s532 + $0xb58] sm:$0xff]
        %v2871 = vld [vmem:[%s532 + $0xb60] sm:$0xff]
        %v2872 = vld [vmem:[%s532 + $0xb68] sm:$0xff]
        %v2873 = vld [vmem:[%s532 + $0xb70] sm:$0xff]
        %v2874 = vld [vmem:[%s532 + $0xb78] sm:$0xff]
        %v2875 = vld [vmem:[%s532 + $0xb80] sm:$0xff]
        %v2876 = vld [vmem:[%s532 + $0xb88] sm:$0xff]
        %v2877 = vld [vmem:[%s532 + $0xb90] sm:$0xff]
        %v2878 = vld [vmem:[%s532 + $0xb98] sm:$0xff]
        %v2879 = vld [vmem:[%s532 + $0xba0] sm:$0xff]
        %v2880 = vld [vmem:[%s532 + $0xba8] sm:$0xff]
        %v2881 = vld [vmem:[%s532 + $0xbb0] sm:$0xff]
        %v2882 = vld [vmem:[%s532 + $0xbb8] sm:$0xff]
        %v2883 = vld [vmem:[%s532 + $0xbc0] sm:$0xff]
        %v2884 = vld [vmem:[%s532 + $0xbc8] sm:$0xff]
        %v2885 = vld [vmem:[%s532 + $0xbd0] sm:$0xff]
        %v2886 = vld [vmem:[%s532 + $0xbd8] sm:$0xff]
        %v2887 = vld [vmem:[%s532 + $0xbe0] sm:$0xff]
        %v2888 = vld [vmem:[%s532 + $0xbe8] sm:$0xff]
        %v2889 = vld [vmem:[%s532 + $0xbf0] sm:$0xff]
        %v2890 = vld [vmem:[%s532 + $0xbf8] sm:$0xff]
        %v2891 = vld [vmem:[%s532 + $0xc00] sm:$0xff]
        %v2892 = vld [vmem:[%s532 + $0xc08] sm:$0xff]
        %v2893 = vld [vmem:[%s532 + $0xc10] sm:$0xff]
        %v2894 = vld [vmem:[%s532 + $0xc18] sm:$0xff]
        %v2895 = vld [vmem:[%s532 + $0xc20] sm:$0xff]
        %v2896 = vld [vmem:[%s532 + $0xc28] sm:$0xff]
        %v2897 = vld [vmem:[%s532 + $0xc30] sm:$0xff]
        %v2898 = vld [vmem:[%s532 + $0xc38] sm:$0xff]
        %v2899 = vld [vmem:[%s532 + $0xc40] sm:$0xff]
        %v2900 = vld [vmem:[%s532 + $0xc48] sm:$0xff]
        %v2901 = vld [vmem:[%s532 + $0xc50] sm:$0xff]
        %v2902 = vld [vmem:[%s532 + $0xc58] sm:$0xff]
        %v2903 = vld [vmem:[%s532 + $0xc60] sm:$0xff]
        %v2904 = vld [vmem:[%s532 + $0xc68] sm:$0xff]
        %v2905 = vld [vmem:[%s532 + $0xc70] sm:$0xff]
        %v2906 = vld [vmem:[%s532 + $0xc78] sm:$0xff]
        %v2907 = vld [vmem:[%s532 + $0xc80] sm:$0xff]
        %v2908 = vld [vmem:[%s532 + $0xc88] sm:$0xff]
        %v2909 = vld [vmem:[%s532 + $0xc90] sm:$0xff]
        %v2910 = vld [vmem:[%s532 + $0xc98] sm:$0xff]
        %v2911 = vld [vmem:[%s532 + $0xca0] sm:$0xff]
        %v2912 = vld [vmem:[%s532 + $0xca8] sm:$0xff]
        %v2913 = vld [vmem:[%s532 + $0xcb0] sm:$0xff]
        %v2914 = vld [vmem:[%s532 + $0xcb8] sm:$0xff]
        %v2915 = vld [vmem:[%s532 + $0xcc0] sm:$0xff]
        %v2916 = vld [vmem:[%s532 + $0xcc8] sm:$0xff]
        %v2917 = vld [vmem:[%s532 + $0xcd0] sm:$0xff]
        %v2918 = vld [vmem:[%s532 + $0xcd8] sm:$0xff]
        %v2919 = vld [vmem:[%s532 + $0xce0] sm:$0xff]
        %v2920 = vld [vmem:[%s532 + $0xce8] sm:$0xff]
        %v2921 = vld [vmem:[%s532 + $0xcf0] sm:$0xff]
        %v2922 = vld [vmem:[%s532 + $0xcf8] sm:$0xff]
        %v2923 = vld [vmem:[%s532 + $0xd00] sm:$0xff]
        %v2924 = vld [vmem:[%s532 + $0xd08] sm:$0xff]
        %v2925 = vld [vmem:[%s532 + $0xd10] sm:$0xff]
        %v2926 = vld [vmem:[%s532 + $0xd18] sm:$0xff]
        %v2927 = vld [vmem:[%s532 + $0xd20] sm:$0xff]
        %v2928 = vld [vmem:[%s532 + $0xd28] sm:$0xff]
        %v2929 = vld [vmem:[%s532 + $0xd30] sm:$0xff]
        %v2930 = vld [vmem:[%s532 + $0xd38] sm:$0xff]
        %v2931 = vld [vmem:[%s532 + $0xd40] sm:$0xff]
        %v2932 = vld [vmem:[%s532 + $0xd48] sm:$0xff]
        %v2933 = vld [vmem:[%s532 + $0xd50] sm:$0xff]
        %v2934 = vld [vmem:[%s532 + $0xd58] sm:$0xff]
        %v2935 = vld [vmem:[%s532 + $0xd60] sm:$0xff]
        %v2936 = vld [vmem:[%s532 + $0xd68] sm:$0xff]
        %v2937 = vld [vmem:[%s532 + $0xd70] sm:$0xff]
        %v2938 = vld [vmem:[%s532 + $0xd78] sm:$0xff]
        %v2939 = vld [vmem:[%s532 + $0xd80] sm:$0xff]
        %v2940 = vld [vmem:[%s532 + $0xd88] sm:$0xff]
        %v2941 = vld [vmem:[%s532 + $0xd90] sm:$0xff]
        %v2942 = vld [vmem:[%s532 + $0xd98] sm:$0xff]
        %v2943 = vld [vmem:[%s532 + $0xda0] sm:$0xff]
        %v2944 = vld [vmem:[%s532 + $0xda8] sm:$0xff]
        %v2945 = vld [vmem:[%s532 + $0xdb0] sm:$0xff]
        %v2946 = vld [vmem:[%s532 + $0xdb8] sm:$0xff]
        %v2947 = vld [vmem:[%s532 + $0xdc0] sm:$0xff]
        %v2948 = vld [vmem:[%s532 + $0xdc8] sm:$0xff]
        %v2949 = vld [vmem:[%s532 + $0xdd0] sm:$0xff]
        %v2950 = vld [vmem:[%s532 + $0xdd8] sm:$0xff]
        %v2951 = vld [vmem:[%s532 + $0xde0] sm:$0xff]
        %v2952 = vld [vmem:[%s532 + $0xde8] sm:$0xff]
        %v2953 = vld [vmem:[%s532 + $0xdf0] sm:$0xff]
        %v2954 = vld [vmem:[%s532 + $0xdf8] sm:$0xff]
        %v2955 = vld [vmem:[%s532 + $0xe00] sm:$0xff]
        %v2956 = vld [vmem:[%s532 + $0xe08] sm:$0xff]
        %v2957 = vld [vmem:[%s532 + $0xe10] sm:$0xff]
        %v2958 = vld [vmem:[%s532 + $0xe18] sm:$0xff]
        %v2959 = vld [vmem:[%s532 + $0xe20] sm:$0xff]
        %v2960 = vld [vmem:[%s532 + $0xe28] sm:$0xff]
        %v2961 = vld [vmem:[%s532 + $0xe30] sm:$0xff]
        %v2962 = vld [vmem:[%s532 + $0xe38] sm:$0xff]
        %v2963 = vld [vmem:[%s532 + $0xe40] sm:$0xff]
        %v2964 = vld [vmem:[%s532 + $0xe48] sm:$0xff]
        %v2965 = vld [vmem:[%s532 + $0xe50] sm:$0xff]
        %v2966 = vld [vmem:[%s532 + $0xe58] sm:$0xff]
        %v2967 = vld [vmem:[%s532 + $0xe60] sm:$0xff]
        %v2968 = vld [vmem:[%s532 + $0xe68] sm:$0xff]
        %v2969 = vld [vmem:[%s532 + $0xe70] sm:$0xff]
        %v2970 = vld [vmem:[%s532 + $0xe78] sm:$0xff]
        %v2971 = vld [vmem:[%s532 + $0xe80] sm:$0xff]
        %v2972 = vld [vmem:[%s532 + $0xe88] sm:$0xff]
        %v2973 = vld [vmem:[%s532 + $0xe90] sm:$0xff]
        %v2974 = vld [vmem:[%s532 + $0xe98] sm:$0xff]
        %v2975 = vld [vmem:[%s532 + $0xea0] sm:$0xff]
        %v2976 = vld [vmem:[%s532 + $0xea8] sm:$0xff]
        %v2977 = vld [vmem:[%s532 + $0xeb0] sm:$0xff]
        %v2978 = vld [vmem:[%s532 + $0xeb8] sm:$0xff]
        %v2979 = vld [vmem:[%s532 + $0xec0] sm:$0xff]
        %v2980 = vld [vmem:[%s532 + $0xec8] sm:$0xff]
        %v2981 = vld [vmem:[%s532 + $0xed0] sm:$0xff]
        %v2982 = vld [vmem:[%s532 + $0xed8] sm:$0xff]
        %v2983 = vld [vmem:[%s532 + $0xee0] sm:$0xff]
        %v2984 = vld [vmem:[%s532 + $0xee8] sm:$0xff]
        %v2985 = vld [vmem:[%s532 + $0xef0] sm:$0xff]
        %v2986 = vld [vmem:[%s532 + $0xef8] sm:$0xff]
        %v2987 = vld [vmem:[%s532 + $0xf00] sm:$0xff]
        %v2988 = vld [vmem:[%s532 + $0xf08] sm:$0xff]
        %v2989 = vld [vmem:[%s532 + $0xf10] sm:$0xff]
        %v2990 = vld [vmem:[%s532 + $0xf18] sm:$0xff]
        %v2991 = vld [vmem:[%s532 + $0xf20] sm:$0xff]
        %v2992 = vld [vmem:[%s532 + $0xf28] sm:$0xff]
        %v2993 = vld [vmem:[%s532 + $0xf30] sm:$0xff]
        %v2994 = vld [vmem:[%s532 + $0xf38] sm:$0xff]
        %v2995 = vld [vmem:[%s532 + $0xf40] sm:$0xff]
        %v2996 = vld [vmem:[%s532 + $0xf48] sm:$0xff]
        %v2997 = vld [vmem:[%s532 + $0xf50] sm:$0xff]
        %v2998 = vld [vmem:[%s532 + $0xf58] sm:$0xff]
        %v2999 = vld [vmem:[%s532 + $0xf60] sm:$0xff]
        %v3000 = vld [vmem:[%s532 + $0xf68] sm:$0xff]
        %v3001 = vld [vmem:[%s532 + $0xf70] sm:$0xff]
        %v3002 = vld [vmem:[%s532 + $0xf78] sm:$0xff]
        %v3003 = vld [vmem:[%s532 + $0xf80] sm:$0xff]
        %v3004 = vld [vmem:[%s532 + $0xf88] sm:$0xff]
        %v3005 = vld [vmem:[%s532 + $0xf90] sm:$0xff]
        %v3006 = vld [vmem:[%s532 + $0xf98] sm:$0xff]
        %v3007 = vld [vmem:[%s532 + $0xfa0] sm:$0xff]
        %v3008 = vld [vmem:[%s532 + $0xfa8] sm:$0xff]
        %v3009 = vld [vmem:[%s532 + $0xfb0] sm:$0xff]
        %v3010 = vld [vmem:[%s532 + $0xfb8] sm:$0xff]
        %v3011 = vld [vmem:[%s532 + $0xfc0] sm:$0xff]
        %v3012 = vld [vmem:[%s532 + $0xfc8] sm:$0xff]
        %v3013 = vld [vmem:[%s532 + $0xfd0] sm:$0xff]
        %v3014 = vld [vmem:[%s532 + $0xfd8] sm:$0xff]
        %v3015 = vld [vmem:[%s532 + $0xfe0] sm:$0xff]
        %v3016 = vld [vmem:[%s532 + $0xfe8] sm:$0xff]
        %v3017 = vld [vmem:[%s532 + $0xff0] sm:$0xff]
        %v3018 = vld [vmem:[%s532 + $0xff8] sm:$0xff]
        %v3019 = vld [vmem:[%s532 + $0x1000] sm:$0xff]
        %v3020 = vld [vmem:[%s532 + $0x1008] sm:$0xff]
        %v3021 = vld [vmem:[%s532 + $0x1010] sm:$0xff]
        %v3022 = vld [vmem:[%s532 + $0x1018] sm:$0xff]
        %v3023 = vld [vmem:[%s532 + $0x1020] sm:$0xff]
        %v3024 = vld [vmem:[%s532 + $0x1028] sm:$0xff]
        %v3025 = vld [vmem:[%s532 + $0x1030] sm:$0xff]
        %v3026 = vld [vmem:[%s532 + $0x1038] sm:$0xff]
        %v3027 = vld [vmem:[%s532 + $0x1040] sm:$0xff]
        %v3028 = vld [vmem:[%s532 + $0x1048] sm:$0xff]
        %v3029 = vld [vmem:[%s532 + $0x1050] sm:$0xff]
        %v3030 = vld [vmem:[%s532 + $0x1058] sm:$0xff]
        %v3031 = vld [vmem:[%s532 + $0x1060] sm:$0xff]
        %v3032 = vld [vmem:[%s532 + $0x1068] sm:$0xff]
        %v3033 = vld [vmem:[%s532 + $0x1070] sm:$0xff]
        %v3034 = vld [vmem:[%s532 + $0x1078] sm:$0xff]
        %v3035 = vld [vmem:[%s532 + $0x1080] sm:$0xff]
        %v3036 = vld [vmem:[%s532 + $0x1088] sm:$0xff]
        %v3037 = vld [vmem:[%s532 + $0x1090] sm:$0xff]
        %v3038 = vld [vmem:[%s532 + $0x1098] sm:$0xff]
        %v3039 = vld [vmem:[%s532 + $0x10a0] sm:$0xff]
        %v3040 = vld [vmem:[%s532 + $0x10a8] sm:$0xff]
        %v3041 = vld [vmem:[%s532 + $0x10b0] sm:$0xff]
        %v3042 = vld [vmem:[%s532 + $0x10b8] sm:$0xff]
        %v3043 = vld [vmem:[%s532 + $0x10c0] sm:$0xff]
        %v3044 = vld [vmem:[%s532 + $0x10c8] sm:$0xff]
        %v3045 = vld [vmem:[%s532 + $0x10d0] sm:$0xff]
        %v3046 = vld [vmem:[%s532 + $0x10d8] sm:$0xff]
        %v3047 = vld [vmem:[%s532 + $0x10e0] sm:$0xff]
        %v3048 = vld [vmem:[%s532 + $0x10e8] sm:$0xff]
        %v3049 = vld [vmem:[%s532 + $0x10f0] sm:$0xff]
        %v3050 = vld [vmem:[%s532 + $0x10f8] sm:$0xff]
        %v3051 = vld [vmem:[%s532 + $0x1100] sm:$0xff]
        %v3052 = vld [vmem:[%s532 + $0x1108] sm:$0xff]
        %v3053 = vld [vmem:[%s532 + $0x1110] sm:$0xff]
        %v3054 = vld [vmem:[%s532 + $0x1118] sm:$0xff]
        %v3055 = vld [vmem:[%s532 + $0x1120] sm:$0xff]
        %v3056 = vld [vmem:[%s532 + $0x1128] sm:$0xff]
        %v3057 = vld [vmem:[%s532 + $0x1130] sm:$0xff]
        %v3058 = vld [vmem:[%s532 + $0x1138] sm:$0xff]
        %v3059 = vld [vmem:[%s532 + $0x1140] sm:$0xff]
        %v3060 = vld [vmem:[%s532 + $0x1148] sm:$0xff]
        %v3061 = vld [vmem:[%s532 + $0x1150] sm:$0xff]
        %v3062 = vld [vmem:[%s532 + $0x1158] sm:$0xff]
        %v3063 = vld [vmem:[%s532 + $0x1160] sm:$0xff]
        %v3064 = vld [vmem:[%s532 + $0x1168] sm:$0xff]
        %v3065 = vld [vmem:[%s532 + $0x1170] sm:$0xff]
        %v3066 = vld [vmem:[%s532 + $0x1178] sm:$0xff]
        %v3067 = vld [vmem:[%s532 + $0x1180] sm:$0xff]
        %v3068 = vld [vmem:[%s532 + $0x1188] sm:$0xff]
        %v3069 = vld [vmem:[%s532 + $0x1190] sm:$0xff]
        %v3070 = vld [vmem:[%s532 + $0x1198] sm:$0xff]
        %v3071 = vld [vmem:[%s532 + $0x11a0] sm:$0xff]
        %v3072 = vld [vmem:[%s532 + $0x11a8] sm:$0xff]
        %v3073 = vld [vmem:[%s532 + $0x11b0] sm:$0xff]
        %v3074 = vld [vmem:[%s532 + $0x11b8] sm:$0xff]
        %v3075 = vld [vmem:[%s532 + $0x11c0] sm:$0xff]
        %v3076 = vld [vmem:[%s532 + $0x11c8] sm:$0xff]
        %v3077 = vld [vmem:[%s532 + $0x11d0] sm:$0xff]
        %v3078 = vld [vmem:[%s532 + $0x11d8] sm:$0xff]
        %v3079 = vld [vmem:[%s532 + $0x11e0] sm:$0xff]
        %v3080 = vld [vmem:[%s532 + $0x11e8] sm:$0xff]
        %v3081 = vld [vmem:[%s532 + $0x11f0] sm:$0xff]
        %v3082 = vld [vmem:[%s532 + $0x11f8] sm:$0xff]
        %v3083 = vld [vmem:[%s532 + $0x1200] sm:$0xff]
        %v3084 = vld [vmem:[%s532 + $0x1208] sm:$0xff]
        %v3085 = vld [vmem:[%s532 + $0x1210] sm:$0xff]
        %v3086 = vld [vmem:[%s532 + $0x1218] sm:$0xff]
        %v3087 = vld [vmem:[%s532 + $0x1220] sm:$0xff]
        %v3088 = vld [vmem:[%s532 + $0x1228] sm:$0xff]
        %v3089 = vld [vmem:[%s532 + $0x1230] sm:$0xff]
        %v3090 = vld [vmem:[%s532 + $0x1238] sm:$0xff]
        %v3091 = vld [vmem:[%s532 + $0x1240] sm:$0xff]
        %v3092 = vld [vmem:[%s532 + $0x1248] sm:$0xff]
        %v3093 = vld [vmem:[%s532 + $0x1250] sm:$0xff]
        %v3094 = vld [vmem:[%s532 + $0x1258] sm:$0xff]
        %v3095 = vld [vmem:[%s532 + $0x1260] sm:$0xff]
        %v3096 = vld [vmem:[%s532 + $0x1268] sm:$0xff]
        %v3097 = vld [vmem:[%s532 + $0x1270] sm:$0xff]
        %v3098 = vld [vmem:[%s532 + $0x1278] sm:$0xff]
        %v3099 = vld [vmem:[%s532 + $0x1280] sm:$0xff]
        %v3100 = vld [vmem:[%s532 + $0x1288] sm:$0xff]
        %v3101 = vld [vmem:[%s532 + $0x1290] sm:$0xff]
        %v3102 = vld [vmem:[%s532 + $0x1298] sm:$0xff]
        %v3103 = vld [vmem:[%s532 + $0x12a0] sm:$0xff]
        %v3104 = vld [vmem:[%s532 + $0x12a8] sm:$0xff]
        %v3105 = vld [vmem:[%s532 + $0x12b0] sm:$0xff]
        %v3106 = vld [vmem:[%s532 + $0x12b8] sm:$0xff]
        %v3107 = vld [vmem:[%s532 + $0x12c0] sm:$0xff]
        %v3108 = vld [vmem:[%s532 + $0x12c8] sm:$0xff]
        %v3109 = vld [vmem:[%s532 + $0x12d0] sm:$0xff]
        %v3110 = vld [vmem:[%s532 + $0x12d8] sm:$0xff]
        %v3111 = vld [vmem:[%s532 + $0x12e0] sm:$0xff]
        %v3112 = vld [vmem:[%s532 + $0x12e8] sm:$0xff]
        %v3113 = vld [vmem:[%s532 + $0x12f0] sm:$0xff]
        %v3114 = vld [vmem:[%s532 + $0x12f8] sm:$0xff]
        %v3115 = vld [vmem:[%s532 + $0x1300] sm:$0xff]
        %v3116 = vld [vmem:[%s532 + $0x1308] sm:$0xff]
        %v3117 = vld [vmem:[%s532 + $0x1310] sm:$0xff]
        %v3118 = vld [vmem:[%s532 + $0x1318] sm:$0xff]
        %v3119 = vld [vmem:[%s532 + $0x1320] sm:$0xff]
        %v3120 = vld [vmem:[%s532 + $0x1328] sm:$0xff]
        %v3121 = vld [vmem:[%s532 + $0x1330] sm:$0xff]
        %v3122 = vld [vmem:[%s532 + $0x1338] sm:$0xff]
        %v3123 = vld [vmem:[%s532 + $0x1340] sm:$0xff]
        %v3124 = vld [vmem:[%s532 + $0x1348] sm:$0xff]
        %v3125 = vld [vmem:[%s532 + $0x1350] sm:$0xff]
        %v3126 = vld [vmem:[%s532 + $0x1358] sm:$0xff]
        %v3127 = vld [vmem:[%s532 + $0x1360] sm:$0xff]
        %v3128 = vld [vmem:[%s532 + $0x1368] sm:$0xff]
        %v3129 = vld [vmem:[%s532 + $0x1370] sm:$0xff]
        %v3130 = vld [vmem:[%s532 + $0x1378] sm:$0xff]
        %v3131 = vld [vmem:[%s532 + $0x1380] sm:$0xff]
        %v3132 = vld [vmem:[%s532 + $0x1388] sm:$0xff]
        %v3133 = vld [vmem:[%s532 + $0x1390] sm:$0xff]
        %v3134 = vld [vmem:[%s532 + $0x1398] sm:$0xff]
        %v3135 = vld [vmem:[%s532 + $0x13a0] sm:$0xff]
        %v3136 = vld [vmem:[%s532 + $0x13a8] sm:$0xff]
        %v3137 = vld [vmem:[%s532 + $0x13b0] sm:$0xff]
        %v3138 = vld [vmem:[%s532 + $0x13b8] sm:$0xff]
        %v3139 = vld [vmem:[%s532 + $0x13c0] sm:$0xff]
        %v3140 = vld [vmem:[%s532 + $0x13c8] sm:$0xff]
        %v3141 = vld [vmem:[%s532 + $0x13d0] sm:$0xff]
        %v3142 = vld [vmem:[%s532 + $0x13d8] sm:$0xff]
        %v3143 = vld [vmem:[%s532 + $0x13e0] sm:$0xff]
        %v3144 = vld [vmem:[%s532 + $0x13e8] sm:$0xff]
        %v3145 = vld [vmem:[%s532 + $0x13f0] sm:$0xff]
        %v3146 = vld [vmem:[%s532 + $0x13f8] sm:$0xff]
        %v3147 = vld [vmem:[%s532 + $0x1400] sm:$0xff]
        %v3148 = vld [vmem:[%s532 + $0x1408] sm:$0xff]
        %v3149 = vld [vmem:[%s532 + $0x1410] sm:$0xff]
        %v3150 = vld [vmem:[%s532 + $0x1418] sm:$0xff]
        %v3151 = vld [vmem:[%s532 + $0x1420] sm:$0xff]
        %v3152 = vld [vmem:[%s532 + $0x1428] sm:$0xff]
        %v3153 = vld [vmem:[%s532 + $0x1430] sm:$0xff]
        %v3154 = vld [vmem:[%s532 + $0x1438] sm:$0xff]
        %v3155 = vld [vmem:[%s532 + $0x1440] sm:$0xff]
        %v3156 = vld [vmem:[%s532 + $0x1448] sm:$0xff]
        %v3157 = vld [vmem:[%s532 + $0x1450] sm:$0xff]
        %v3158 = vld [vmem:[%s532 + $0x1458] sm:$0xff]
        %v3159 = vld [vmem:[%s532 + $0x1460] sm:$0xff]
        %v3160 = vld [vmem:[%s532 + $0x1468] sm:$0xff]
        %v3161 = vld [vmem:[%s532 + $0x1470] sm:$0xff]
        %v3162 = vld [vmem:[%s532 + $0x1478] sm:$0xff]
        %v3163 = vld [vmem:[%s532 + $0x1480] sm:$0xff]
        %v3164 = vld [vmem:[%s532 + $0x1488] sm:$0xff]
        %v3165 = vld [vmem:[%s532 + $0x1490] sm:$0xff]
        %v3166 = vld [vmem:[%s532 + $0x1498] sm:$0xff]
        %v3167 = vld [vmem:[%s532 + $0x14a0] sm:$0xff]
        %v3168 = vld [vmem:[%s532 + $0x14a8] sm:$0xff]
        %v3169 = vld [vmem:[%s532 + $0x14b0] sm:$0xff]
        %v3170 = vld [vmem:[%s532 + $0x14b8] sm:$0xff]
        %v3171 = vld [vmem:[%s532 + $0x14c0] sm:$0xff]
        %v3172 = vld [vmem:[%s532 + $0x14c8] sm:$0xff]
        %v3173 = vld [vmem:[%s532 + $0x14d0] sm:$0xff]
        %v3174 = vld [vmem:[%s532 + $0x14d8] sm:$0xff]
        %v3175 = vld [vmem:[%s532 + $0x14e0] sm:$0xff]
        %v3176 = vld [vmem:[%s532 + $0x14e8] sm:$0xff]
        %v3177 = vld [vmem:[%s532 + $0x14f0] sm:$0xff]
        %v3178 = vld [vmem:[%s532 + $0x14f8] sm:$0xff]
        %v3179 = vld [vmem:[%s532 + $0x1500] sm:$0xff]
        %v3180 = vld [vmem:[%s532 + $0x1508] sm:$0xff]
        %v3181 = vld [vmem:[%s532 + $0x1510] sm:$0xff]
        %v3182 = vld [vmem:[%s532 + $0x1518] sm:$0xff]
        %v3183 = vld [vmem:[%s532 + $0x1520] sm:$0xff]
        %v3184 = vld [vmem:[%s532 + $0x1528] sm:$0xff]
        %v3185 = vld [vmem:[%s532 + $0x1530] sm:$0xff]
        %v3186 = vld [vmem:[%s532 + $0x1538] sm:$0xff]
        %v3187 = vld [vmem:[%s532 + $0x1540] sm:$0xff]
        %v3188 = vld [vmem:[%s532 + $0x1548] sm:$0xff]
        %v3189 = vld [vmem:[%s532 + $0x1550] sm:$0xff]
        %v3190 = vld [vmem:[%s532 + $0x1558] sm:$0xff]
        %v3191 = vld [vmem:[%s532 + $0x1560] sm:$0xff]
        %v3192 = vld [vmem:[%s532 + $0x1568] sm:$0xff]
        %v3193 = vld [vmem:[%s532 + $0x1570] sm:$0xff]
        %v3194 = vld [vmem:[%s532 + $0x1578] sm:$0xff]
        %v3195 = vld [vmem:[%s532 + $0x1580] sm:$0xff]
        %v3196 = vld [vmem:[%s532 + $0x1588] sm:$0xff]
        %v3197 = vld [vmem:[%s532 + $0x1590] sm:$0xff]
        %v3198 = vld [vmem:[%s532 + $0x1598] sm:$0xff]
        %v3199 = vld [vmem:[%s532 + $0x15a0] sm:$0xff]
        %v3200 = vld [vmem:[%s532 + $0x15a8] sm:$0xff]
        %v3201 = vld [vmem:[%s532 + $0x15b0] sm:$0xff]
        %v3202 = vld [vmem:[%s532 + $0x15b8] sm:$0xff]
        %v3203 = vld [vmem:[%s532 + $0x15c0] sm:$0xff]
        %v3204 = vld [vmem:[%s532 + $0x15c8] sm:$0xff]
        %v3205 = vld [vmem:[%s532 + $0x15d0] sm:$0xff]
        %v3206 = vld [vmem:[%s532 + $0x15d8] sm:$0xff]
        %v3207 = vld [vmem:[%s532 + $0x15e0] sm:$0xff]
        %v3208 = vld [vmem:[%s532 + $0x15e8] sm:$0xff]
        %v3209 = vld [vmem:[%s532 + $0x15f0] sm:$0xff]
        %v3210 = vld [vmem:[%s532 + $0x15f8] sm:$0xff]
        %v3211 = vld [vmem:[%s532 + $0x1600] sm:$0xff]
        %v3212 = vld [vmem:[%s532 + $0x1608] sm:$0xff]
        %v3213 = vld [vmem:[%s532 + $0x1610] sm:$0xff]
        %v3214 = vld [vmem:[%s532 + $0x1618] sm:$0xff]
        %v3215 = vld [vmem:[%s532 + $0x1620] sm:$0xff]
        %v3216 = vld [vmem:[%s532 + $0x1628] sm:$0xff]
        %v3217 = vld [vmem:[%s532 + $0x1630] sm:$0xff]
        %v3218 = vld [vmem:[%s532 + $0x1638] sm:$0xff]
        %v3219 = vld [vmem:[%s532 + $0x1640] sm:$0xff]
        %v3220 = vld [vmem:[%s532 + $0x1648] sm:$0xff]
        %v3221 = vld [vmem:[%s532 + $0x1650] sm:$0xff]
        %v3222 = vld [vmem:[%s532 + $0x1658] sm:$0xff]
        %v3223 = vld [vmem:[%s532 + $0x1660] sm:$0xff]
        %v3224 = vld [vmem:[%s532 + $0x1668] sm:$0xff]
        %v3225 = vld [vmem:[%s532 + $0x1670] sm:$0xff]
        %v3226 = vld [vmem:[%s532 + $0x1678] sm:$0xff]
        %v3227 = vld [vmem:[%s532 + $0x1680] sm:$0xff]
        %v3228 = vld [vmem:[%s532 + $0x1688] sm:$0xff]
        %v3229 = vld [vmem:[%s532 + $0x1690] sm:$0xff]
        %v3230 = vld [vmem:[%s532 + $0x1698] sm:$0xff]
        %v3231 = vld [vmem:[%s532 + $0x16a0] sm:$0xff]
        %v3232 = vld [vmem:[%s532 + $0x16a8] sm:$0xff]
        %v3233 = vld [vmem:[%s532 + $0x16b0] sm:$0xff]
        %v3234 = vld [vmem:[%s532 + $0x16b8] sm:$0xff]
        %v3235 = vld [vmem:[%s532 + $0x16c0] sm:$0xff]
        %v3236 = vld [vmem:[%s532 + $0x16c8] sm:$0xff]
        %v3237 = vld [vmem:[%s532 + $0x16d0] sm:$0xff]
        %v3238 = vld [vmem:[%s532 + $0x16d8] sm:$0xff]
        %v3239 = vld [vmem:[%s532 + $0x16e0] sm:$0xff]
        %v3240 = vld [vmem:[%s532 + $0x16e8] sm:$0xff]
        %v3241 = vld [vmem:[%s532 + $0x16f0] sm:$0xff]
        %v3242 = vld [vmem:[%s532 + $0x16f8] sm:$0xff]
        %v3243 = vld [vmem:[%s532 + $0x1700] sm:$0xff]
        %v3244 = vld [vmem:[%s532 + $0x1708] sm:$0xff]
        %v3245 = vld [vmem:[%s532 + $0x1710] sm:$0xff]
        %v3246 = vld [vmem:[%s532 + $0x1718] sm:$0xff]
        %v3247 = vld [vmem:[%s532 + $0x1720] sm:$0xff]
        %v3248 = vld [vmem:[%s532 + $0x1728] sm:$0xff]
        %v3249 = vld [vmem:[%s532 + $0x1730] sm:$0xff]
        %v3250 = vld [vmem:[%s532 + $0x1738] sm:$0xff]
        %v3251 = vld [vmem:[%s532 + $0x1740] sm:$0xff]
        %v3252 = vld [vmem:[%s532 + $0x1748] sm:$0xff]
        %v3253 = vld [vmem:[%s532 + $0x1750] sm:$0xff]
        %v3254 = vld [vmem:[%s532 + $0x1758] sm:$0xff]
        %v3255 = vld [vmem:[%s532 + $0x1760] sm:$0xff]
        %v3256 = vld [vmem:[%s532 + $0x1768] sm:$0xff]
        %v3257 = vld [vmem:[%s532 + $0x1770] sm:$0xff]
        %v3258 = vld [vmem:[%s532 + $0x1778] sm:$0xff]
        %v3259 = vld [vmem:[%s532 + $0x1780] sm:$0xff]
        %v3260 = vld [vmem:[%s532 + $0x1788] sm:$0xff]
        %v3261 = vld [vmem:[%s532 + $0x1790] sm:$0xff]
        %v3262 = vld [vmem:[%s532 + $0x1798] sm:$0xff]
        %v3263 = vld [vmem:[%s532 + $0x17a0] sm:$0xff]
        %v3264 = vld [vmem:[%s532 + $0x17a8] sm:$0xff]
        %v3265 = vld [vmem:[%s532 + $0x17b0] sm:$0xff]
        %v3266 = vld [vmem:[%s532 + $0x17b8] sm:$0xff]
        %v3267 = vld [vmem:[%s532 + $0x17c0] sm:$0xff]
        %v3268 = vld [vmem:[%s532 + $0x17c8] sm:$0xff]
        %v3269 = vld [vmem:[%s532 + $0x17d0] sm:$0xff]
        %v3270 = vld [vmem:[%s532 + $0x17d8] sm:$0xff]
        %v3271 = vld [vmem:[%s532 + $0x17e0] sm:$0xff]
        %v3272 = vld [vmem:[%s532 + $0x17e8] sm:$0xff]
        %v3273 = vld [vmem:[%s532 + $0x17f0] sm:$0xff]
        %v3274 = vld [vmem:[%s532 + $0x17f8] sm:$0xff]
        %v3275 = vld [vmem:[%s532 + $0x1800] sm:$0xff]
        %v3276 = vld [vmem:[%s532 + $0x1808] sm:$0xff]
        %v3277 = vld [vmem:[%s532 + $0x1810] sm:$0xff]
        %v3278 = vld [vmem:[%s532 + $0x1818] sm:$0xff]
        %v3279 = vld [vmem:[%s532 + $0x1820] sm:$0xff]
        %v3280 = vld [vmem:[%s532 + $0x1828] sm:$0xff]
        %v3281 = vld [vmem:[%s532 + $0x1830] sm:$0xff]
        %v3282 = vld [vmem:[%s532 + $0x1838] sm:$0xff]
        %v3283 = vld [vmem:[%s532 + $0x1840] sm:$0xff]
        %v3284 = vld [vmem:[%s532 + $0x1848] sm:$0xff]
        %v3285 = vld [vmem:[%s532 + $0x1850] sm:$0xff]
        %v3286 = vld [vmem:[%s532 + $0x1858] sm:$0xff]
        %v3287 = vld [vmem:[%s532 + $0x1860] sm:$0xff]
        %v3288 = vld [vmem:[%s532 + $0x1868] sm:$0xff]
        %v3289 = vld [vmem:[%s532 + $0x1870] sm:$0xff]
        %v3290 = vld [vmem:[%s532 + $0x1878] sm:$0xff]
        %v3291 = vld [vmem:[%s532 + $0x1880] sm:$0xff]
        %v3292 = vld [vmem:[%s532 + $0x1888] sm:$0xff]
        %v3293 = vld [vmem:[%s532 + $0x1890] sm:$0xff]
        %v3294 = vld [vmem:[%s532 + $0x1898] sm:$0xff]
        %v3295 = vld [vmem:[%s532 + $0x18a0] sm:$0xff]
        %v3296 = vld [vmem:[%s532 + $0x18a8] sm:$0xff]
        %v3297 = vld [vmem:[%s532 + $0x18b0] sm:$0xff]
        %v3298 = vld [vmem:[%s532 + $0x18b8] sm:$0xff]
        %v3299 = vld [vmem:[%s532 + $0x18c0] sm:$0xff]
        %v3300 = vld [vmem:[%s532 + $0x18c8] sm:$0xff]
        %v3301 = vld [vmem:[%s532 + $0x18d0] sm:$0xff]
        %v3302 = vld [vmem:[%s532 + $0x18d8] sm:$0xff]
        %v3303 = vld [vmem:[%s532 + $0x18e0] sm:$0xff]
        %v3304 = vld [vmem:[%s532 + $0x18e8] sm:$0xff]
        %v3305 = vld [vmem:[%s532 + $0x18f0] sm:$0xff]
        %v3306 = vld [vmem:[%s532 + $0x18f8] sm:$0xff]
        %v3307 = vld [vmem:[%s532 + $0x1900] sm:$0xff]
        %v3308 = vld [vmem:[%s532 + $0x1908] sm:$0xff]
        %v3309 = vld [vmem:[%s532 + $0x1910] sm:$0xff]
        %v3310 = vld [vmem:[%s532 + $0x1918] sm:$0xff]
        %v3311 = vld [vmem:[%s532 + $0x1920] sm:$0xff]
        %v3312 = vld [vmem:[%s532 + $0x1928] sm:$0xff]
        %v3313 = vld [vmem:[%s532 + $0x1930] sm:$0xff]
        %v3314 = vld [vmem:[%s532 + $0x1938] sm:$0xff]
        %v3315 = vld [vmem:[%s532 + $0x1940] sm:$0xff]
        %v3316 = vld [vmem:[%s532 + $0x1948] sm:$0xff]
        %v3317 = vld [vmem:[%s532 + $0x1950] sm:$0xff]
        %v3318 = vld [vmem:[%s532 + $0x1958] sm:$0xff]
        %v3319 = vld [vmem:[%s532 + $0x1960] sm:$0xff]
        %v3320 = vld [vmem:[%s532 + $0x1968] sm:$0xff]
        %v3321 = vld [vmem:[%s532 + $0x1970] sm:$0xff]
        %v3322 = vld [vmem:[%s532 + $0x1978] sm:$0xff]
        %v3323 = vld [vmem:[%s532 + $0x1980] sm:$0xff]
        %v3324 = vld [vmem:[%s532 + $0x1988] sm:$0xff]
        %v3325 = vld [vmem:[%s532 + $0x1990] sm:$0xff]
        %v3326 = vld [vmem:[%s532 + $0x1998] sm:$0xff]
        %v3327 = vld [vmem:[%s532 + $0x19a0] sm:$0xff]
        %v3328 = vld [vmem:[%s532 + $0x19a8] sm:$0xff]
        %v3329 = vld [vmem:[%s532 + $0x19b0] sm:$0xff]
        %v3330 = vld [vmem:[%s532 + $0x19b8] sm:$0xff]
        %v3331 = vld [vmem:[%s532 + $0x19c0] sm:$0xff]
        %v3332 = vld [vmem:[%s532 + $0x19c8] sm:$0xff]
        %v3333 = vld [vmem:[%s532 + $0x19d0] sm:$0xff]
        %v3334 = vld [vmem:[%s532 + $0x19d8] sm:$0xff]
        %v3335 = vld [vmem:[%s532 + $0x19e0] sm:$0xff]
        %v3336 = vld [vmem:[%s532 + $0x19e8] sm:$0xff]
        %v3337 = vld [vmem:[%s532 + $0x19f0] sm:$0xff]
        %v3338 = vld [vmem:[%s532 + $0x19f8] sm:$0xff]
        %v3339 = vld [vmem:[%s532 + $0x1a00] sm:$0xff]
        %v3340 = vld [vmem:[%s532 + $0x1a08] sm:$0xff]
        %v3341 = vld [vmem:[%s532 + $0x1a10] sm:$0xff]
        %v3342 = vld [vmem:[%s532 + $0x1a18] sm:$0xff]
        %v3343 = vld [vmem:[%s532 + $0x1a20] sm:$0xff]
        %v3344 = vld [vmem:[%s532 + $0x1a28] sm:$0xff]
        %v3345 = vld [vmem:[%s532 + $0x1a30] sm:$0xff]
        %v3346 = vld [vmem:[%s532 + $0x1a38] sm:$0xff]
        %v3347 = vld [vmem:[%s532 + $0x1a40] sm:$0xff]
        %v3348 = vld [vmem:[%s532 + $0x1a48] sm:$0xff]
        %v3349 = vld [vmem:[%s532 + $0x1a50] sm:$0xff]
        %v3350 = vld [vmem:[%s532 + $0x1a58] sm:$0xff]
        %v3351 = vld [vmem:[%s532 + $0x1a60] sm:$0xff]
        %v3352 = vld [vmem:[%s532 + $0x1a68] sm:$0xff]
        %v3353 = vld [vmem:[%s532 + $0x1a70] sm:$0xff]
        %v3354 = vld [vmem:[%s532 + $0x1a78] sm:$0xff]
        %v3355 = vld [vmem:[%s532 + $0x1a80] sm:$0xff]
        %v3356 = vld [vmem:[%s532 + $0x1a88] sm:$0xff]
        %v3357 = vld [vmem:[%s532 + $0x1a90] sm:$0xff]
        %v3358 = vld [vmem:[%s532 + $0x1a98] sm:$0xff]
        %v3359 = vld [vmem:[%s532 + $0x1aa0] sm:$0xff]
        %v3360 = vld [vmem:[%s532 + $0x1aa8] sm:$0xff]
        %v3361 = vld [vmem:[%s532 + $0x1ab0] sm:$0xff]
        %v3362 = vld [vmem:[%s532 + $0x1ab8] sm:$0xff]
        %v3363 = vld [vmem:[%s532 + $0x1ac0] sm:$0xff]
        %v3364 = vld [vmem:[%s532 + $0x1ac8] sm:$0xff]
        %v3365 = vld [vmem:[%s532 + $0x1ad0] sm:$0xff]
        %v3366 = vld [vmem:[%s532 + $0x1ad8] sm:$0xff]
        %v3367 = vld [vmem:[%s532 + $0x1ae0] sm:$0xff]
        %v3368 = vld [vmem:[%s532 + $0x1ae8] sm:$0xff]
        %v3369 = vld [vmem:[%s532 + $0x1af0] sm:$0xff]
        %v3370 = vld [vmem:[%s532 + $0x1af8] sm:$0xff]
        %v3371 = vld [vmem:[%s532 + $0x1b00] sm:$0xff]
        %v3372 = vld [vmem:[%s532 + $0x1b08] sm:$0xff]
        %v3373 = vld [vmem:[%s532 + $0x1b10] sm:$0xff]
        %v3374 = vld [vmem:[%s532 + $0x1b18] sm:$0xff]
        %v3375 = vld [vmem:[%s532 + $0x1b20] sm:$0xff]
        %v3376 = vld [vmem:[%s532 + $0x1b28] sm:$0xff]
        %v3377 = vld [vmem:[%s532 + $0x1b30] sm:$0xff]
        %v3378 = vld [vmem:[%s532 + $0x1b38] sm:$0xff]
        %v3379 = vld [vmem:[%s532 + $0x1b40] sm:$0xff]
        %v3380 = vld [vmem:[%s532 + $0x1b48] sm:$0xff]
        %v3381 = vld [vmem:[%s532 + $0x1b50] sm:$0xff]
        %v3382 = vld [vmem:[%s532 + $0x1b58] sm:$0xff]
        %v3383 = vld [vmem:[%s532 + $0x1b60] sm:$0xff]
        %v3384 = vld [vmem:[%s532 + $0x1b68] sm:$0xff]
        %v3385 = vld [vmem:[%s532 + $0x1b70] sm:$0xff]
        %v3386 = vld [vmem:[%s532 + $0x1b78] sm:$0xff]
        %v3387 = vld [vmem:[%s532 + $0x1b80] sm:$0xff]
        %v3388 = vld [vmem:[%s532 + $0x1b88] sm:$0xff]
        %v3389 = vld [vmem:[%s532 + $0x1b90] sm:$0xff]
        %v3390 = vld [vmem:[%s532 + $0x1b98] sm:$0xff]
        %v3391 = vld [vmem:[%s532 + $0x1ba0] sm:$0xff]
        %v3392 = vld [vmem:[%s532 + $0x1ba8] sm:$0xff]
        %v3393 = vld [vmem:[%s532 + $0x1bb0] sm:$0xff]
        %v3394 = vld [vmem:[%s532 + $0x1bb8] sm:$0xff]
        %v3395 = vld [vmem:[%s532 + $0x1bc0] sm:$0xff]
        %v3396 = vld [vmem:[%s532 + $0x1bc8] sm:$0xff]
        %v3397 = vld [vmem:[%s532 + $0x1bd0] sm:$0xff]
        %v3398 = vld [vmem:[%s532 + $0x1bd8] sm:$0xff]
        %v3399 = vld [vmem:[%s532 + $0x1be0] sm:$0xff]
        %v3400 = vld [vmem:[%s532 + $0x1be8] sm:$0xff]
        %v3401 = vld [vmem:[%s532 + $0x1bf0] sm:$0xff]
        %v3402 = vld [vmem:[%s532 + $0x1bf8] sm:$0xff]
        %v3403 = vld [vmem:[%s532 + $0x1c00] sm:$0xff]
        %v3404 = vld [vmem:[%s532 + $0x1c08] sm:$0xff]
        %v3405 = vld [vmem:[%s532 + $0x1c10] sm:$0xff]
        %v3406 = vld [vmem:[%s532 + $0x1c18] sm:$0xff]
        %v3407 = vld [vmem:[%s532 + $0x1c20] sm:$0xff]
        %v3408 = vld [vmem:[%s532 + $0x1c28] sm:$0xff]
        %v3409 = vld [vmem:[%s532 + $0x1c30] sm:$0xff]
        %v3410 = vld [vmem:[%s532 + $0x1c38] sm:$0xff]
        %v3411 = vld [vmem:[%s532 + $0x1c40] sm:$0xff]
        %v3412 = vld [vmem:[%s532 + $0x1c48] sm:$0xff]
        %v3413 = vld [vmem:[%s532 + $0x1c50] sm:$0xff]
        %v3414 = vld [vmem:[%s532 + $0x1c58] sm:$0xff]
        %v3415 = vld [vmem:[%s532 + $0x1c60] sm:$0xff]
        %v3416 = vld [vmem:[%s532 + $0x1c68] sm:$0xff]
        %v3417 = vld [vmem:[%s532 + $0x1c70] sm:$0xff]
        %v3418 = vld [vmem:[%s532 + $0x1c78] sm:$0xff]
        %v3419 = vld [vmem:[%s532 + $0x1c80] sm:$0xff]
        %v3420 = vld [vmem:[%s532 + $0x1c88] sm:$0xff]
        %v3421 = vld [vmem:[%s532 + $0x1c90] sm:$0xff]
        %v3422 = vld [vmem:[%s532 + $0x1c98] sm:$0xff]
        %v3423 = vld [vmem:[%s532 + $0x1ca0] sm:$0xff]
        %v3424 = vld [vmem:[%s532 + $0x1ca8] sm:$0xff]
        %v3425 = vld [vmem:[%s532 + $0x1cb0] sm:$0xff]
        %v3426 = vld [vmem:[%s532 + $0x1cb8] sm:$0xff]
        %v3427 = vld [vmem:[%s532 + $0x1cc0] sm:$0xff]
        %v3428 = vld [vmem:[%s532 + $0x1cc8] sm:$0xff]
        %v3429 = vld [vmem:[%s532 + $0x1cd0] sm:$0xff]
        %v3430 = vld [vmem:[%s532 + $0x1cd8] sm:$0xff]
        %v3431 = vld [vmem:[%s532 + $0x1ce0] sm:$0xff]
        %v3432 = vld [vmem:[%s532 + $0x1ce8] sm:$0xff]
        %v3433 = vld [vmem:[%s532 + $0x1cf0] sm:$0xff]
        %v3434 = vld [vmem:[%s532 + $0x1cf8] sm:$0xff]
        %v3435 = vld [vmem:[%s532 + $0x1d00] sm:$0xff]
        %v3436 = vld [vmem:[%s532 + $0x1d08] sm:$0xff]
        %v3437 = vld [vmem:[%s532 + $0x1d10] sm:$0xff]
        %v3438 = vld [vmem:[%s532 + $0x1d18] sm:$0xff]
        %v3439 = vld [vmem:[%s532 + $0x1d20] sm:$0xff]
        %v3440 = vld [vmem:[%s532 + $0x1d28] sm:$0xff]
        %v3441 = vld [vmem:[%s532 + $0x1d30] sm:$0xff]
        %v3442 = vld [vmem:[%s532 + $0x1d38] sm:$0xff]
        %v3443 = vld [vmem:[%s532 + $0x1d40] sm:$0xff]
        %v3444 = vld [vmem:[%s532 + $0x1d48] sm:$0xff]
        %v3445 = vld [vmem:[%s532 + $0x1d50] sm:$0xff]
        %v3446 = vld [vmem:[%s532 + $0x1d58] sm:$0xff]
        %v3447 = vld [vmem:[%s532 + $0x1d60] sm:$0xff]
        %v3448 = vld [vmem:[%s532 + $0x1d68] sm:$0xff]
        %v3449 = vld [vmem:[%s532 + $0x1d70] sm:$0xff]
        %v3450 = vld [vmem:[%s532 + $0x1d78] sm:$0xff]
        %v3451 = vld [vmem:[%s532 + $0x1d80] sm:$0xff]
        %v3452 = vld [vmem:[%s532 + $0x1d88] sm:$0xff]
        %v3453 = vld [vmem:[%s532 + $0x1d90] sm:$0xff]
        %v3454 = vld [vmem:[%s532 + $0x1d98] sm:$0xff]
        %v3455 = vld [vmem:[%s532 + $0x1da0] sm:$0xff]
        %v3456 = vld [vmem:[%s532 + $0x1da8] sm:$0xff]
        %v3457 = vld [vmem:[%s532 + $0x1db0] sm:$0xff]
        %v3458 = vld [vmem:[%s532 + $0x1db8] sm:$0xff]
        %v3459 = vld [vmem:[%s532 + $0x1dc0] sm:$0xff]
        %v3460 = vld [vmem:[%s532 + $0x1dc8] sm:$0xff]
        %v3461 = vld [vmem:[%s532 + $0x1dd0] sm:$0xff]
        %v3462 = vld [vmem:[%s532 + $0x1dd8] sm:$0xff]
        %v3463 = vld [vmem:[%s532 + $0x1de0] sm:$0xff]
        %v3464 = vld [vmem:[%s532 + $0x1de8] sm:$0xff]
        %v3465 = vld [vmem:[%s532 + $0x1df0] sm:$0xff]
        %v3466 = vld [vmem:[%s532 + $0x1df8] sm:$0xff]
        %v3467 = vld [vmem:[%s532 + $0x1e00] sm:$0xff]
        %v3468 = vld [vmem:[%s532 + $0x1e08] sm:$0xff]
        %v3469 = vld [vmem:[%s532 + $0x1e10] sm:$0xff]
        %v3470 = vld [vmem:[%s532 + $0x1e18] sm:$0xff]
        %v3471 = vld [vmem:[%s532 + $0x1e20] sm:$0xff]
        %v3472 = vld [vmem:[%s532 + $0x1e28] sm:$0xff]
        %v3473 = vld [vmem:[%s532 + $0x1e30] sm:$0xff]
        %v3474 = vld [vmem:[%s532 + $0x1e38] sm:$0xff]
        %v3475 = vld [vmem:[%s532 + $0x1e40] sm:$0xff]
        %v3476 = vld [vmem:[%s532 + $0x1e48] sm:$0xff]
        %v3477 = vld [vmem:[%s532 + $0x1e50] sm:$0xff]
        %v3478 = vld [vmem:[%s532 + $0x1e58] sm:$0xff]
        %v3479 = vld [vmem:[%s532 + $0x1e60] sm:$0xff]
        %v3480 = vld [vmem:[%s532 + $0x1e68] sm:$0xff]
        %v3481 = vld [vmem:[%s532 + $0x1e70] sm:$0xff]
        %v3482 = vld [vmem:[%s532 + $0x1e78] sm:$0xff]
        %v3483 = vld [vmem:[%s532 + $0x1e80] sm:$0xff]
        %v3484 = vld [vmem:[%s532 + $0x1e88] sm:$0xff]
        %v3485 = vld [vmem:[%s532 + $0x1e90] sm:$0xff]
        %v3486 = vld [vmem:[%s532 + $0x1e98] sm:$0xff]
        %v3487 = vld [vmem:[%s532 + $0x1ea0] sm:$0xff]
        %v3488 = vld [vmem:[%s532 + $0x1ea8] sm:$0xff]
        %v3489 = vld [vmem:[%s532 + $0x1eb0] sm:$0xff]
        %v3490 = vld [vmem:[%s532 + $0x1eb8] sm:$0xff]
        %v3491 = vld [vmem:[%s532 + $0x1ec0] sm:$0xff]
        %v3492 = vld [vmem:[%s532 + $0x1ec8] sm:$0xff]
        %v3493 = vld [vmem:[%s532 + $0x1ed0] sm:$0xff]
        %v3494 = vld [vmem:[%s532 + $0x1ed8] sm:$0xff]
        %v3495 = vld [vmem:[%s532 + $0x1ee0] sm:$0xff]
        %v3496 = vld [vmem:[%s532 + $0x1ee8] sm:$0xff]
        %v3497 = vld [vmem:[%s532 + $0x1ef0] sm:$0xff]
        %v3498 = vld [vmem:[%s532 + $0x1ef8] sm:$0xff]
        %v3499 = vld [vmem:[%s532 + $0x1f00] sm:$0xff]
        %v3500 = vld [vmem:[%s532 + $0x1f08] sm:$0xff]
        %v3501 = vld [vmem:[%s532 + $0x1f10] sm:$0xff]
        %v3502 = vld [vmem:[%s532 + $0x1f18] sm:$0xff]
        %v3503 = vld [vmem:[%s532 + $0x1f20] sm:$0xff]
        %v3504 = vld [vmem:[%s532 + $0x1f28] sm:$0xff]
        %v3505 = vld [vmem:[%s532 + $0x1f30] sm:$0xff]
        %v3506 = vld [vmem:[%s532 + $0x1f38] sm:$0xff]
        %v3507 = vld [vmem:[%s532 + $0x1f40] sm:$0xff]
        %v3508 = vld [vmem:[%s532 + $0x1f48] sm:$0xff]
        %v3509 = vld [vmem:[%s532 + $0x1f50] sm:$0xff]
        %v3510 = vld [vmem:[%s532 + $0x1f58] sm:$0xff]
        %v3511 = vld [vmem:[%s532 + $0x1f60] sm:$0xff]
        %v3512 = vld [vmem:[%s532 + $0x1f68] sm:$0xff]
        %v3513 = vld [vmem:[%s532 + $0x1f70] sm:$0xff]
        %v3514 = vld [vmem:[%s532 + $0x1f78] sm:$0xff]
        %v3515 = vld [vmem:[%s532 + $0x1f80] sm:$0xff]
        %v3516 = vld [vmem:[%s532 + $0x1f88] sm:$0xff]
        %v3517 = vld [vmem:[%s532 + $0x1f90] sm:$0xff]
        %v3518 = vld [vmem:[%s532 + $0x1f98] sm:$0xff]
        %v3519 = vld [vmem:[%s532 + $0x1fa0] sm:$0xff]
        %v3520 = vld [vmem:[%s532 + $0x1fa8] sm:$0xff]
        %v3521 = vld [vmem:[%s532 + $0x1fb0] sm:$0xff]
        %v3522 = vld [vmem:[%s532 + $0x1fb8] sm:$0xff]
        %v3523 = vld [vmem:[%s532 + $0x1fc0] sm:$0xff]
        %v3524 = vld [vmem:[%s532 + $0x1fc8] sm:$0xff]
        %v3525 = vld [vmem:[%s532 + $0x1fd0] sm:$0xff]
        %v3526 = vld [vmem:[%s532 + $0x1fd8] sm:$0xff]
        %v3527 = vld [vmem:[%s532 + $0x1fe0] sm:$0xff]
        %v3528 = vld [vmem:[%s532 + $0x1fe8] sm:$0xff]
        %v3529 = vld [vmem:[%s532 + $0x1ff0] sm:$0xff]
        %v3530 = vld [vmem:[%s532 + $0x1ff8] sm:$0xff]
        %v3531 = vld [vmem:[%s532 + $0x2000] sm:$0xff]
        %v3532 = vld [vmem:[%s532 + $0x2008] sm:$0xff]
        %v3533 = vld [vmem:[%s532 + $0x2010] sm:$0xff]
        %v3534 = vld [vmem:[%s532 + $0x2018] sm:$0xff]
        %v3535 = vld [vmem:[%s532 + $0x2020] sm:$0xff]
        %v3536 = vld [vmem:[%s532 + $0x2028] sm:$0xff]
        %v3537 = vld [vmem:[%s532 + $0x2030] sm:$0xff]
        %v3538 = vld [vmem:[%s532 + $0x2038] sm:$0xff]
        %v3539 = vld [vmem:[%s532 + $0x2040] sm:$0xff]
        %v3540 = vld [vmem:[%s532 + $0x2048] sm:$0xff]
        %v3541 = vld [vmem:[%s532 + $0x2050] sm:$0xff]
        %v3542 = vld [vmem:[%s532 + $0x2058] sm:$0xff]
        %v3543 = vld [vmem:[%s532 + $0x2060] sm:$0xff]
        %v3544 = vld [vmem:[%s532 + $0x2068] sm:$0xff]
        %v3545 = vld [vmem:[%s532 + $0x2070] sm:$0xff]
        %v3546 = vld [vmem:[%s532 + $0x2078] sm:$0xff]
        %v3547 = vld [vmem:[%s532 + $0x2080] sm:$0xff]
        %v3548 = vld [vmem:[%s532 + $0x2088] sm:$0xff]
        %v3549 = vld [vmem:[%s532 + $0x2090] sm:$0xff]
        %v3550 = vld [vmem:[%s532 + $0x2098] sm:$0xff]
        %v3551 = vld [vmem:[%s532 + $0x20a0] sm:$0xff]
        %v3552 = vld [vmem:[%s532 + $0x20a8] sm:$0xff]
        %v3553 = vld [vmem:[%s532 + $0x20b0] sm:$0xff]
        %v3554 = vld [vmem:[%s532 + $0x20b8] sm:$0xff]
        %v3555 = vld [vmem:[%s532 + $0x20c0] sm:$0xff]
        %v3556 = vld [vmem:[%s532 + $0x20c8] sm:$0xff]
        %v3557 = vld [vmem:[%s532 + $0x20d0] sm:$0xff]
        %v3558 = vld [vmem:[%s532 + $0x20d8] sm:$0xff]
        %v3559 = vld [vmem:[%s532 + $0x20e0] sm:$0xff]
        %v3560 = vld [vmem:[%s532 + $0x20e8] sm:$0xff]
        %v3561 = vld [vmem:[%s532 + $0x20f0] sm:$0xff]
        %v3562 = vld [vmem:[%s532 + $0x20f8] sm:$0xff]
        %v3563 = vld [vmem:[%s532 + $0x2100] sm:$0xff]
        %v3564 = vld [vmem:[%s532 + $0x2108] sm:$0xff]
        %v3565 = vld [vmem:[%s532 + $0x2110] sm:$0xff]
        %v3566 = vld [vmem:[%s532 + $0x2118] sm:$0xff]
        %v3567 = vld [vmem:[%s532 + $0x2120] sm:$0xff]
        %v3568 = vld [vmem:[%s532 + $0x2128] sm:$0xff]
        %v3569 = vld [vmem:[%s532 + $0x2130] sm:$0xff]
        %v3570 = vld [vmem:[%s532 + $0x2138] sm:$0xff]
        %v3571 = vld [vmem:[%s532 + $0x2140] sm:$0xff]
        %v3572 = vld [vmem:[%s532 + $0x2148] sm:$0xff]
        %v3573 = vld [vmem:[%s532 + $0x2150] sm:$0xff]
        %v3574 = vld [vmem:[%s532 + $0x2158] sm:$0xff]
        %v3575 = vld [vmem:[%s532 + $0x2160] sm:$0xff]
        %v3576 = vld [vmem:[%s532 + $0x2168] sm:$0xff]
        %v3577 = vld [vmem:[%s532 + $0x2170] sm:$0xff]
        %v3578 = vld [vmem:[%s532 + $0x2178] sm:$0xff]
        %v3579 = vld [vmem:[%s532 + $0x2180] sm:$0xff]
        %v3580 = vld [vmem:[%s532 + $0x2188] sm:$0xff]
        %v3581 = vld [vmem:[%s532 + $0x2190] sm:$0xff]
        %v3582 = vld [vmem:[%s532 + $0x2198] sm:$0xff]
        %v3583 = vld [vmem:[%s532 + $0x21a0] sm:$0xff]
        %v3584 = vld [vmem:[%s532 + $0x21a8] sm:$0xff]
        %v3585 = vld [vmem:[%s532 + $0x21b0] sm:$0xff]
        %v3586 = vld [vmem:[%s532 + $0x21b8] sm:$0xff]
        %v3587 = vld [vmem:[%s532 + $0x21c0] sm:$0xff]
        %v3588 = vld [vmem:[%s532 + $0x21c8] sm:$0xff]
        %v3589 = vld [vmem:[%s532 + $0x21d0] sm:$0xff]
        %v3590 = vld [vmem:[%s532 + $0x21d8] sm:$0xff]
        %v3591 = vld [vmem:[%s532 + $0x21e0] sm:$0xff]
        %v3592 = vld [vmem:[%s532 + $0x21e8] sm:$0xff]
        %v3593 = vld [vmem:[%s532 + $0x21f0] sm:$0xff]
        %v3594 = vld [vmem:[%s532 + $0x21f8] sm:$0xff]
        %v3595 = vld [vmem:[%s532 + $0x2200] sm:$0xff]
        %v3596 = vld [vmem:[%s532 + $0x2208] sm:$0xff]
        %v3597 = vld [vmem:[%s532 + $0x2210] sm:$0xff]
        %v3598 = vld [vmem:[%s532 + $0x2218] sm:$0xff]
        %v3599 = vld [vmem:[%s532 + $0x2220] sm:$0xff]
        %v3600 = vld [vmem:[%s532 + $0x2228] sm:$0xff]
        %v3601 = vld [vmem:[%s532 + $0x2230] sm:$0xff]
        %v3602 = vld [vmem:[%s532 + $0x2238] sm:$0xff]
        %v3603 = vld [vmem:[%s532 + $0x2240] sm:$0xff]
        %v3604 = vld [vmem:[%s532 + $0x2248] sm:$0xff]
        %v3605 = vld [vmem:[%s532 + $0x2250] sm:$0xff]
        %v3606 = vld [vmem:[%s532 + $0x2258] sm:$0xff]
        %v3607 = vld [vmem:[%s532 + $0x2260] sm:$0xff]
        %v3608 = vld [vmem:[%s532 + $0x2268] sm:$0xff]
        %v3609 = vld [vmem:[%s532 + $0x2270] sm:$0xff]
        %v3610 = vld [vmem:[%s532 + $0x2278] sm:$0xff]
        %v3611 = vld [vmem:[%s532 + $0x2280] sm:$0xff]
        %v3612 = vld [vmem:[%s532 + $0x2288] sm:$0xff]
        %v3613 = vld [vmem:[%s532 + $0x2290] sm:$0xff]
        %v3614 = vld [vmem:[%s532 + $0x2298] sm:$0xff]
        %v3615 = vld [vmem:[%s532 + $0x22a0] sm:$0xff]
        %v3616 = vld [vmem:[%s532 + $0x22a8] sm:$0xff]
        %v3617 = vld [vmem:[%s532 + $0x22b0] sm:$0xff]
        %v3618 = vld [vmem:[%s532 + $0x22b8] sm:$0xff]
        %v3619 = vld [vmem:[%s532 + $0x22c0] sm:$0xff]
        %v3620 = vld [vmem:[%s532 + $0x22c8] sm:$0xff]
        %v3621 = vld [vmem:[%s532 + $0x22d0] sm:$0xff]
        %v3622 = vld [vmem:[%s532 + $0x22d8] sm:$0xff]
        %v3623 = vld [vmem:[%s532 + $0x22e0] sm:$0xff]
        %v3624 = vld [vmem:[%s532 + $0x22e8] sm:$0xff]
        %v3625 = vld [vmem:[%s532 + $0x22f0] sm:$0xff]
        %v3626 = vld [vmem:[%s532 + $0x22f8] sm:$0xff]
        %v3627 = vld [vmem:[%s532 + $0x2300] sm:$0xff]
        %v3628 = vld [vmem:[%s532 + $0x2308] sm:$0xff]
        %v3629 = vld [vmem:[%s532 + $0x2310] sm:$0xff]
        %v3630 = vld [vmem:[%s532 + $0x2318] sm:$0xff]
        %v3631 = vld [vmem:[%s532 + $0x2320] sm:$0xff]
        %v3632 = vld [vmem:[%s532 + $0x2328] sm:$0xff]
        %v3633 = vld [vmem:[%s532 + $0x2330] sm:$0xff]
        %v3634 = vld [vmem:[%s532 + $0x2338] sm:$0xff]
        %v3635 = vld [vmem:[%s532 + $0x2340] sm:$0xff]
        %v3636 = vld [vmem:[%s532 + $0x2348] sm:$0xff]
        %v3637 = vld [vmem:[%s532 + $0x2350] sm:$0xff]
        %v3638 = vld [vmem:[%s532 + $0x2358] sm:$0xff]
        %v3639 = vld [vmem:[%s532 + $0x2360] sm:$0xff]
        %v3640 = vld [vmem:[%s532 + $0x2368] sm:$0xff]
        %v3641 = vld [vmem:[%s532 + $0x2370] sm:$0xff]
        %v3642 = vld [vmem:[%s532 + $0x2378] sm:$0xff]
        %v3643 = vld [vmem:[%s532 + $0x2380] sm:$0xff]
        %v3644 = vld [vmem:[%s532 + $0x2388] sm:$0xff]
        %v3645 = vld [vmem:[%s532 + $0x2390] sm:$0xff]
        %v3646 = vld [vmem:[%s532 + $0x2398] sm:$0xff]
        %v3647 = vld [vmem:[%s532 + $0x23a0] sm:$0xff]
        %v3648 = vld [vmem:[%s532 + $0x23a8] sm:$0xff]
        %v3649 = vld [vmem:[%s532 + $0x23b0] sm:$0xff]
        %v3650 = vld [vmem:[%s532 + $0x23b8] sm:$0xff]
        %v3651 = vld [vmem:[%s532 + $0x23c0] sm:$0xff]
        %v3652 = vld [vmem:[%s532 + $0x23c8] sm:$0xff]
        %v3653 = vld [vmem:[%s532 + $0x23d0] sm:$0xff]
        %v3654 = vld [vmem:[%s532 + $0x23d8] sm:$0xff]
        %v3655 = vld [vmem:[%s532 + $0x23e0] sm:$0xff]
        %v3656 = vld [vmem:[%s532 + $0x23e8] sm:$0xff]
        %v3657 = vld [vmem:[%s532 + $0x23f0] sm:$0xff]
        %v3658 = vld [vmem:[%s532 + $0x23f8] sm:$0xff]
        %v4811 = vunpack.c.l.b16 %v2507
        %v4812 = vunpack.c.h.b16 %v2507
        %v4813 = vunpack.c.l.b16 %v2508
        %v4814 = vunpack.c.h.b16 %v2508
        %v4815 = vunpack.c.l.b16 %v2509
        %v4816 = vunpack.c.h.b16 %v2509
        %v4817 = vunpack.c.l.b16 %v2510
        %v4818 = vunpack.c.h.b16 %v2510
        %v4819 = vunpack.c.l.b16 %v2511
        %v4820 = vunpack.c.h.b16 %v2511
        %v4821 = vunpack.c.l.b16 %v2512
        %v4822 = vunpack.c.h.b16 %v2512
        %v4823 = vunpack.c.l.b16 %v2513
        %v4824 = vunpack.c.h.b16 %v2513
        %v4825 = vunpack.c.l.b16 %v2514
        %v4826 = vunpack.c.h.b16 %v2514
        %v4827 = vunpack.c.l.b16 %v2515
        %v4828 = vunpack.c.h.b16 %v2515
        %v4829 = vunpack.c.l.b16 %v2516
        %v4830 = vunpack.c.h.b16 %v2516
        %v4831 = vunpack.c.l.b16 %v2517
        %v4832 = vunpack.c.h.b16 %v2517
        %v4833 = vunpack.c.l.b16 %v2518
        %v4834 = vunpack.c.h.b16 %v2518
        %v4835 = vunpack.c.l.b16 %v2519
        %v4836 = vunpack.c.h.b16 %v2519
        %v4837 = vunpack.c.l.b16 %v2520
        %v4838 = vunpack.c.h.b16 %v2520
        %v4839 = vunpack.c.l.b16 %v2521
        %v4840 = vunpack.c.h.b16 %v2521
        %v4841 = vunpack.c.l.b16 %v2522
        %v4842 = vunpack.c.h.b16 %v2522
        %v4843 = vunpack.c.l.b16 %v2523
        %v4844 = vunpack.c.h.b16 %v2523
        %v4845 = vunpack.c.l.b16 %v2524
        %v4846 = vunpack.c.h.b16 %v2524
        %v4847 = vunpack.c.l.b16 %v2525
        %v4848 = vunpack.c.h.b16 %v2525
        %v4849 = vunpack.c.l.b16 %v2526
        %v4850 = vunpack.c.h.b16 %v2526
        %v4851 = vunpack.c.l.b16 %v2527
        %v4852 = vunpack.c.h.b16 %v2527
        %v4853 = vunpack.c.l.b16 %v2528
        %v4854 = vunpack.c.h.b16 %v2528
        %v4855 = vunpack.c.l.b16 %v2529
        %v4856 = vunpack.c.h.b16 %v2529
        %v4857 = vunpack.c.l.b16 %v2530
        %v4858 = vunpack.c.h.b16 %v2530
        %v4859 = vunpack.c.l.b16 %v2531
        %v4860 = vunpack.c.h.b16 %v2531
        %v4861 = vunpack.c.l.b16 %v2532
        %v4862 = vunpack.c.h.b16 %v2532
        %v4863 = vunpack.c.l.b16 %v2533
        %v4864 = vunpack.c.h.b16 %v2533
        %v4865 = vunpack.c.l.b16 %v2534
        %v4866 = vunpack.c.h.b16 %v2534
        %v4867 = vunpack.c.l.b16 %v2535
        %v4868 = vunpack.c.h.b16 %v2535
        %v4869 = vunpack.c.l.b16 %v2536
        %v4870 = vunpack.c.h.b16 %v2536
        %v4871 = vunpack.c.l.b16 %v2537
        %v4872 = vunpack.c.h.b16 %v2537
        %v4873 = vunpack.c.l.b16 %v2538
        %v4874 = vunpack.c.h.b16 %v2538
        %v4875 = vunpack.c.l.b16 %v2539
        %v4876 = vunpack.c.h.b16 %v2539
        %v4877 = vunpack.c.l.b16 %v2540
        %v4878 = vunpack.c.h.b16 %v2540
        %v4879 = vunpack.c.l.b16 %v2541
        %v4880 = vunpack.c.h.b16 %v2541
        %v4881 = vunpack.c.l.b16 %v2542
        %v4882 = vunpack.c.h.b16 %v2542
        %v4883 = vunpack.c.l.b16 %v2543
        %v4884 = vunpack.c.h.b16 %v2543
        %v4885 = vunpack.c.l.b16 %v2544
        %v4886 = vunpack.c.h.b16 %v2544
        %v4887 = vunpack.c.l.b16 %v2545
        %v4888 = vunpack.c.h.b16 %v2545
        %v4889 = vunpack.c.l.b16 %v2546
        %v4890 = vunpack.c.h.b16 %v2546
        %v4891 = vunpack.c.l.b16 %v2547
        %v4892 = vunpack.c.h.b16 %v2547
        %v4893 = vunpack.c.l.b16 %v2548
        %v4894 = vunpack.c.h.b16 %v2548
        %v4895 = vunpack.c.l.b16 %v2549
        %v4896 = vunpack.c.h.b16 %v2549
        %v4897 = vunpack.c.l.b16 %v2550
        %v4898 = vunpack.c.h.b16 %v2550
        %v4899 = vunpack.c.l.b16 %v2551
        %v4900 = vunpack.c.h.b16 %v2551
        %v4901 = vunpack.c.l.b16 %v2552
        %v4902 = vunpack.c.h.b16 %v2552
        %v4903 = vunpack.c.l.b16 %v2553
        %v4904 = vunpack.c.h.b16 %v2553
        %v4905 = vunpack.c.l.b16 %v2554
        %v4906 = vunpack.c.h.b16 %v2554
        %v4907 = vunpack.c.l.b16 %v2555
        %v4908 = vunpack.c.h.b16 %v2555
        %v4909 = vunpack.c.l.b16 %v2556
        %v4910 = vunpack.c.h.b16 %v2556
        %v4911 = vunpack.c.l.b16 %v2557
        %v4912 = vunpack.c.h.b16 %v2557
        %v4913 = vunpack.c.l.b16 %v2558
        %v4914 = vunpack.c.h.b16 %v2558
        %v4915 = vunpack.c.l.b16 %v2559
        %v4916 = vunpack.c.h.b16 %v2559
        %v4917 = vunpack.c.l.b16 %v2560
        %v4918 = vunpack.c.h.b16 %v2560
        %v4919 = vunpack.c.l.b16 %v2561
        %v4920 = vunpack.c.h.b16 %v2561
        %v4921 = vunpack.c.l.b16 %v2562
        %v4922 = vunpack.c.h.b16 %v2562
        %v4923 = vunpack.c.l.b16 %v2563
        %v4924 = vunpack.c.h.b16 %v2563
        %v4925 = vunpack.c.l.b16 %v2564
        %v4926 = vunpack.c.h.b16 %v2564
        %v4927 = vunpack.c.l.b16 %v2565
        %v4928 = vunpack.c.h.b16 %v2565
        %v4929 = vunpack.c.l.b16 %v2566
        %v4930 = vunpack.c.h.b16 %v2566
        %v4931 = vunpack.c.l.b16 %v2567
        %v4932 = vunpack.c.h.b16 %v2567
        %v4933 = vunpack.c.l.b16 %v2568
        %v4934 = vunpack.c.h.b16 %v2568
        %v4935 = vunpack.c.l.b16 %v2569
        %v4936 = vunpack.c.h.b16 %v2569
        %v4937 = vunpack.c.l.b16 %v2570
        %v4938 = vunpack.c.h.b16 %v2570
        %v4939 = vunpack.c.l.b16 %v2571
        %v4940 = vunpack.c.h.b16 %v2571
        %v4941 = vunpack.c.l.b16 %v2572
        %v4942 = vunpack.c.h.b16 %v2572
        %v4943 = vunpack.c.l.b16 %v2573
        %v4944 = vunpack.c.h.b16 %v2573
        %v4945 = vunpack.c.l.b16 %v2574
        %v4946 = vunpack.c.h.b16 %v2574
        %v4947 = vunpack.c.l.b16 %v2575
        %v4948 = vunpack.c.h.b16 %v2575
        %v4949 = vunpack.c.l.b16 %v2576
        %v4950 = vunpack.c.h.b16 %v2576
        %v4951 = vunpack.c.l.b16 %v2577
        %v4952 = vunpack.c.h.b16 %v2577
        %v4953 = vunpack.c.l.b16 %v2578
        %v4954 = vunpack.c.h.b16 %v2578
        %v4955 = vunpack.c.l.b16 %v2579
        %v4956 = vunpack.c.h.b16 %v2579
        %v4957 = vunpack.c.l.b16 %v2580
        %v4958 = vunpack.c.h.b16 %v2580
        %v4959 = vunpack.c.l.b16 %v2581
        %v4960 = vunpack.c.h.b16 %v2581
        %v4961 = vunpack.c.l.b16 %v2582
        %v4962 = vunpack.c.h.b16 %v2582
        %v4963 = vunpack.c.l.b16 %v2583
        %v4964 = vunpack.c.h.b16 %v2583
        %v4965 = vunpack.c.l.b16 %v2584
        %v4966 = vunpack.c.h.b16 %v2584
        %v4967 = vunpack.c.l.b16 %v2585
        %v4968 = vunpack.c.h.b16 %v2585
        %v4969 = vunpack.c.l.b16 %v2586
        %v4970 = vunpack.c.h.b16 %v2586
        %v4971 = vunpack.c.l.b16 %v2587
        %v4972 = vunpack.c.h.b16 %v2587
        %v4973 = vunpack.c.l.b16 %v2588
        %v4974 = vunpack.c.h.b16 %v2588
        %v4975 = vunpack.c.l.b16 %v2589
        %v4976 = vunpack.c.h.b16 %v2589
        %v4977 = vunpack.c.l.b16 %v2590
        %v4978 = vunpack.c.h.b16 %v2590
        %v4979 = vunpack.c.l.b16 %v2591
        %v4980 = vunpack.c.h.b16 %v2591
        %v4981 = vunpack.c.l.b16 %v2592
        %v4982 = vunpack.c.h.b16 %v2592
        %v4983 = vunpack.c.l.b16 %v2593
        %v4984 = vunpack.c.h.b16 %v2593
        %v4985 = vunpack.c.l.b16 %v2594
        %v4986 = vunpack.c.h.b16 %v2594
        %v4987 = vunpack.c.l.b16 %v2595
        %v4988 = vunpack.c.h.b16 %v2595
        %v4989 = vunpack.c.l.b16 %v2596
        %v4990 = vunpack.c.h.b16 %v2596
        %v4991 = vunpack.c.l.b16 %v2597
        %v4992 = vunpack.c.h.b16 %v2597
        %v4993 = vunpack.c.l.b16 %v2598
        %v4994 = vunpack.c.h.b16 %v2598
        %v4995 = vunpack.c.l.b16 %v2599
        %v4996 = vunpack.c.h.b16 %v2599
        %v4997 = vunpack.c.l.b16 %v2600
        %v4998 = vunpack.c.h.b16 %v2600
        %v4999 = vunpack.c.l.b16 %v2601
        %v5000 = vunpack.c.h.b16 %v2601
        %v5001 = vunpack.c.l.b16 %v2602
        %v5002 = vunpack.c.h.b16 %v2602
        %v5003 = vunpack.c.l.b16 %v2603
        %v5004 = vunpack.c.h.b16 %v2603
        %v5005 = vunpack.c.l.b16 %v2604
        %v5006 = vunpack.c.h.b16 %v2604
        %v5007 = vunpack.c.l.b16 %v2605
        %v5008 = vunpack.c.h.b16 %v2605
        %v5009 = vunpack.c.l.b16 %v2606
        %v5010 = vunpack.c.h.b16 %v2606
        %v5011 = vunpack.c.l.b16 %v2607
        %v5012 = vunpack.c.h.b16 %v2607
        %v5013 = vunpack.c.l.b16 %v2608
        %v5014 = vunpack.c.h.b16 %v2608
        %v5015 = vunpack.c.l.b16 %v2609
        %v5016 = vunpack.c.h.b16 %v2609
        %v5017 = vunpack.c.l.b16 %v2610
        %v5018 = vunpack.c.h.b16 %v2610
        %v5019 = vunpack.c.l.b16 %v2611
        %v5020 = vunpack.c.h.b16 %v2611
        %v5021 = vunpack.c.l.b16 %v2612
        %v5022 = vunpack.c.h.b16 %v2612
        %v5023 = vunpack.c.l.b16 %v2613
        %v5024 = vunpack.c.h.b16 %v2613
        %v5025 = vunpack.c.l.b16 %v2614
        %v5026 = vunpack.c.h.b16 %v2614
        %v5027 = vunpack.c.l.b16 %v2615
        %v5028 = vunpack.c.h.b16 %v2615
        %v5029 = vunpack.c.l.b16 %v2616
        %v5030 = vunpack.c.h.b16 %v2616
        %v5031 = vunpack.c.l.b16 %v2617
        %v5032 = vunpack.c.h.b16 %v2617
        %v5033 = vunpack.c.l.b16 %v2618
        %v5034 = vunpack.c.h.b16 %v2618
        %v5035 = vunpack.c.l.b16 %v2619
        %v5036 = vunpack.c.h.b16 %v2619
        %v5037 = vunpack.c.l.b16 %v2620
        %v5038 = vunpack.c.h.b16 %v2620
        %v5039 = vunpack.c.l.b16 %v2621
        %v5040 = vunpack.c.h.b16 %v2621
        %v5041 = vunpack.c.l.b16 %v2622
        %v5042 = vunpack.c.h.b16 %v2622
        %v5043 = vunpack.c.l.b16 %v2623
        %v5044 = vunpack.c.h.b16 %v2623
        %v5045 = vunpack.c.l.b16 %v2624
        %v5046 = vunpack.c.h.b16 %v2624
        %v5047 = vunpack.c.l.b16 %v2625
        %v5048 = vunpack.c.h.b16 %v2625
        %v5049 = vunpack.c.l.b16 %v2626
        %v5050 = vunpack.c.h.b16 %v2626
        %v5051 = vunpack.c.l.b16 %v2627
        %v5052 = vunpack.c.h.b16 %v2627
        %v5053 = vunpack.c.l.b16 %v2628
        %v5054 = vunpack.c.h.b16 %v2628
        %v5055 = vunpack.c.l.b16 %v2629
        %v5056 = vunpack.c.h.b16 %v2629
        %v5057 = vunpack.c.l.b16 %v2630
        %v5058 = vunpack.c.h.b16 %v2630
        %v5059 = vunpack.c.l.b16 %v2631
        %v5060 = vunpack.c.h.b16 %v2631
        %v5061 = vunpack.c.l.b16 %v2632
        %v5062 = vunpack.c.h.b16 %v2632
        %v5063 = vunpack.c.l.b16 %v2633
        %v5064 = vunpack.c.h.b16 %v2633
        %v5065 = vunpack.c.l.b16 %v2634
        %v5066 = vunpack.c.h.b16 %v2634
        %v5067 = vunpack.c.l.b16 %v2635
        %v5068 = vunpack.c.h.b16 %v2635
        %v5069 = vunpack.c.l.b16 %v2636
        %v5070 = vunpack.c.h.b16 %v2636
        %v5071 = vunpack.c.l.b16 %v2637
        %v5072 = vunpack.c.h.b16 %v2637
        %v5073 = vunpack.c.l.b16 %v2638
        %v5074 = vunpack.c.h.b16 %v2638
        %v5075 = vunpack.c.l.b16 %v2639
        %v5076 = vunpack.c.h.b16 %v2639
        %v5077 = vunpack.c.l.b16 %v2640
        %v5078 = vunpack.c.h.b16 %v2640
        %v5079 = vunpack.c.l.b16 %v2641
        %v5080 = vunpack.c.h.b16 %v2641
        %v5081 = vunpack.c.l.b16 %v2642
        %v5082 = vunpack.c.h.b16 %v2642
        %v5083 = vunpack.c.l.b16 %v2643
        %v5084 = vunpack.c.h.b16 %v2643
        %v5085 = vunpack.c.l.b16 %v2644
        %v5086 = vunpack.c.h.b16 %v2644
        %v5087 = vunpack.c.l.b16 %v2645
        %v5088 = vunpack.c.h.b16 %v2645
        %v5089 = vunpack.c.l.b16 %v2646
        %v5090 = vunpack.c.h.b16 %v2646
        %v5091 = vunpack.c.l.b16 %v2647
        %v5092 = vunpack.c.h.b16 %v2647
        %v5093 = vunpack.c.l.b16 %v2648
        %v5094 = vunpack.c.h.b16 %v2648
        %v5095 = vunpack.c.l.b16 %v2649
        %v5096 = vunpack.c.h.b16 %v2649
        %v5097 = vunpack.c.l.b16 %v2650
        %v5098 = vunpack.c.h.b16 %v2650
        %v5099 = vunpack.c.l.b16 %v2651
        %v5100 = vunpack.c.h.b16 %v2651
        %v5101 = vunpack.c.l.b16 %v2652
        %v5102 = vunpack.c.h.b16 %v2652
        %v5103 = vunpack.c.l.b16 %v2653
        %v5104 = vunpack.c.h.b16 %v2653
        %v5105 = vunpack.c.l.b16 %v2654
        %v5106 = vunpack.c.h.b16 %v2654
        %v5107 = vunpack.c.l.b16 %v2655
        %v5108 = vunpack.c.h.b16 %v2655
        %v5109 = vunpack.c.l.b16 %v2656
        %v5110 = vunpack.c.h.b16 %v2656
        %v5111 = vunpack.c.l.b16 %v2657
        %v5112 = vunpack.c.h.b16 %v2657
        %v5113 = vunpack.c.l.b16 %v2658
        %v5114 = vunpack.c.h.b16 %v2658
        %v5115 = vunpack.c.l.b16 %v2659
        %v5116 = vunpack.c.h.b16 %v2659
        %v5117 = vunpack.c.l.b16 %v2660
        %v5118 = vunpack.c.h.b16 %v2660
        %v5119 = vunpack.c.l.b16 %v2661
        %v5120 = vunpack.c.h.b16 %v2661
        %v5121 = vunpack.c.l.b16 %v2662
        %v5122 = vunpack.c.h.b16 %v2662
        %v5123 = vunpack.c.l.b16 %v2663
        %v5124 = vunpack.c.h.b16 %v2663
        %v5125 = vunpack.c.l.b16 %v2664
        %v5126 = vunpack.c.h.b16 %v2664
        %v5127 = vunpack.c.l.b16 %v2665
        %v5128 = vunpack.c.h.b16 %v2665
        %v5129 = vunpack.c.l.b16 %v2666
        %v5130 = vunpack.c.h.b16 %v2666
        %v5131 = vunpack.c.l.b16 %v2667
        %v5132 = vunpack.c.h.b16 %v2667
        %v5133 = vunpack.c.l.b16 %v2668
        %v5134 = vunpack.c.h.b16 %v2668
        %v5135 = vunpack.c.l.b16 %v2669
        %v5136 = vunpack.c.h.b16 %v2669
        %v5137 = vunpack.c.l.b16 %v2670
        %v5138 = vunpack.c.h.b16 %v2670
        %v5139 = vunpack.c.l.b16 %v2671
        %v5140 = vunpack.c.h.b16 %v2671
        %v5141 = vunpack.c.l.b16 %v2672
        %v5142 = vunpack.c.h.b16 %v2672
        %v5143 = vunpack.c.l.b16 %v2673
        %v5144 = vunpack.c.h.b16 %v2673
        %v5145 = vunpack.c.l.b16 %v2674
        %v5146 = vunpack.c.h.b16 %v2674
        %v5147 = vunpack.c.l.b16 %v2675
        %v5148 = vunpack.c.h.b16 %v2675
        %v5149 = vunpack.c.l.b16 %v2676
        %v5150 = vunpack.c.h.b16 %v2676
        %v5151 = vunpack.c.l.b16 %v2677
        %v5152 = vunpack.c.h.b16 %v2677
        %v5153 = vunpack.c.l.b16 %v2678
        %v5154 = vunpack.c.h.b16 %v2678
        %v5155 = vunpack.c.l.b16 %v2679
        %v5156 = vunpack.c.h.b16 %v2679
        %v5157 = vunpack.c.l.b16 %v2680
        %v5158 = vunpack.c.h.b16 %v2680
        %v5159 = vunpack.c.l.b16 %v2681
        %v5160 = vunpack.c.h.b16 %v2681
        %v5161 = vunpack.c.l.b16 %v2682
        %v5162 = vunpack.c.h.b16 %v2682
        %v5163 = vunpack.c.l.b16 %v2683
        %v5164 = vunpack.c.h.b16 %v2683
        %v5165 = vunpack.c.l.b16 %v2684
        %v5166 = vunpack.c.h.b16 %v2684
        %v5167 = vunpack.c.l.b16 %v2685
        %v5168 = vunpack.c.h.b16 %v2685
        %v5169 = vunpack.c.l.b16 %v2686
        %v5170 = vunpack.c.h.b16 %v2686
        %v5171 = vunpack.c.l.b16 %v2687
        %v5172 = vunpack.c.h.b16 %v2687
        %v5173 = vunpack.c.l.b16 %v2688
        %v5174 = vunpack.c.h.b16 %v2688
        %v5175 = vunpack.c.l.b16 %v2689
        %v5176 = vunpack.c.h.b16 %v2689
        %v5177 = vunpack.c.l.b16 %v2690
        %v5178 = vunpack.c.h.b16 %v2690
        %v5179 = vunpack.c.l.b16 %v2691
        %v5180 = vunpack.c.h.b16 %v2691
        %v5181 = vunpack.c.l.b16 %v2692
        %v5182 = vunpack.c.h.b16 %v2692
        %v5183 = vunpack.c.l.b16 %v2693
        %v5184 = vunpack.c.h.b16 %v2693
        %v5185 = vunpack.c.l.b16 %v2694
        %v5186 = vunpack.c.h.b16 %v2694
        %v5187 = vunpack.c.l.b16 %v2695
        %v5188 = vunpack.c.h.b16 %v2695
        %v5189 = vunpack.c.l.b16 %v2696
        %v5190 = vunpack.c.h.b16 %v2696
        %v5191 = vunpack.c.l.b16 %v2697
        %v5192 = vunpack.c.h.b16 %v2697
        %v5193 = vunpack.c.l.b16 %v2698
        %v5194 = vunpack.c.h.b16 %v2698
        %v5195 = vunpack.c.l.b16 %v2699
        %v5196 = vunpack.c.h.b16 %v2699
        %v5197 = vunpack.c.l.b16 %v2700
        %v5198 = vunpack.c.h.b16 %v2700
        %v5199 = vunpack.c.l.b16 %v2701
        %v5200 = vunpack.c.h.b16 %v2701
        %v5201 = vunpack.c.l.b16 %v2702
        %v5202 = vunpack.c.h.b16 %v2702
        %v5203 = vunpack.c.l.b16 %v2703
        %v5204 = vunpack.c.h.b16 %v2703
        %v5205 = vunpack.c.l.b16 %v2704
        %v5206 = vunpack.c.h.b16 %v2704
        %v5207 = vunpack.c.l.b16 %v2705
        %v5208 = vunpack.c.h.b16 %v2705
        %v5209 = vunpack.c.l.b16 %v2706
        %v5210 = vunpack.c.h.b16 %v2706
        %v5211 = vunpack.c.l.b16 %v2707
        %v5212 = vunpack.c.h.b16 %v2707
        %v5213 = vunpack.c.l.b16 %v2708
        %v5214 = vunpack.c.h.b16 %v2708
        %v5215 = vunpack.c.l.b16 %v2709
        %v5216 = vunpack.c.h.b16 %v2709
        %v5217 = vunpack.c.l.b16 %v2710
        %v5218 = vunpack.c.h.b16 %v2710
        %v5219 = vunpack.c.l.b16 %v2711
        %v5220 = vunpack.c.h.b16 %v2711
        %v5221 = vunpack.c.l.b16 %v2712
        %v5222 = vunpack.c.h.b16 %v2712
        %v5223 = vunpack.c.l.b16 %v2713
        %v5224 = vunpack.c.h.b16 %v2713
        %v5225 = vunpack.c.l.b16 %v2714
        %v5226 = vunpack.c.h.b16 %v2714
        %v5227 = vunpack.c.l.b16 %v2715
        %v5228 = vunpack.c.h.b16 %v2715
        %v5229 = vunpack.c.l.b16 %v2716
        %v5230 = vunpack.c.h.b16 %v2716
        %v5231 = vunpack.c.l.b16 %v2717
        %v5232 = vunpack.c.h.b16 %v2717
        %v5233 = vunpack.c.l.b16 %v2718
        %v5234 = vunpack.c.h.b16 %v2718
        %v5235 = vunpack.c.l.b16 %v2719
        %v5236 = vunpack.c.h.b16 %v2719
        %v5237 = vunpack.c.l.b16 %v2720
        %v5238 = vunpack.c.h.b16 %v2720
        %v5239 = vunpack.c.l.b16 %v2721
        %v5240 = vunpack.c.h.b16 %v2721
        %v5241 = vunpack.c.l.b16 %v2722
        %v5242 = vunpack.c.h.b16 %v2722
        %v5243 = vunpack.c.l.b16 %v2723
        %v5244 = vunpack.c.h.b16 %v2723
        %v5245 = vunpack.c.l.b16 %v2724
        %v5246 = vunpack.c.h.b16 %v2724
        %v5247 = vunpack.c.l.b16 %v2725
        %v5248 = vunpack.c.h.b16 %v2725
        %v5249 = vunpack.c.l.b16 %v2726
        %v5250 = vunpack.c.h.b16 %v2726
        %v5251 = vunpack.c.l.b16 %v2727
        %v5252 = vunpack.c.h.b16 %v2727
        %v5253 = vunpack.c.l.b16 %v2728
        %v5254 = vunpack.c.h.b16 %v2728
        %v5255 = vunpack.c.l.b16 %v2729
        %v5256 = vunpack.c.h.b16 %v2729
        %v5257 = vunpack.c.l.b16 %v2730
        %v5258 = vunpack.c.h.b16 %v2730
        %v5259 = vunpack.c.l.b16 %v2731
        %v5260 = vunpack.c.h.b16 %v2731
        %v5261 = vunpack.c.l.b16 %v2732
        %v5262 = vunpack.c.h.b16 %v2732
        %v5263 = vunpack.c.l.b16 %v2733
        %v5264 = vunpack.c.h.b16 %v2733
        %v5265 = vunpack.c.l.b16 %v2734
        %v5266 = vunpack.c.h.b16 %v2734
        %v5267 = vunpack.c.l.b16 %v2735
        %v5268 = vunpack.c.h.b16 %v2735
        %v5269 = vunpack.c.l.b16 %v2736
        %v5270 = vunpack.c.h.b16 %v2736
        %v5271 = vunpack.c.l.b16 %v2737
        %v5272 = vunpack.c.h.b16 %v2737
        %v5273 = vunpack.c.l.b16 %v2738
        %v5274 = vunpack.c.h.b16 %v2738
        %v5275 = vunpack.c.l.b16 %v2739
        %v5276 = vunpack.c.h.b16 %v2739
        %v5277 = vunpack.c.l.b16 %v2740
        %v5278 = vunpack.c.h.b16 %v2740
        %v5279 = vunpack.c.l.b16 %v2741
        %v5280 = vunpack.c.h.b16 %v2741
        %v5281 = vunpack.c.l.b16 %v2742
        %v5282 = vunpack.c.h.b16 %v2742
        %v5283 = vunpack.c.l.b16 %v2743
        %v5284 = vunpack.c.h.b16 %v2743
        %v5285 = vunpack.c.l.b16 %v2744
        %v5286 = vunpack.c.h.b16 %v2744
        %v5287 = vunpack.c.l.b16 %v2745
        %v5288 = vunpack.c.h.b16 %v2745
        %v5289 = vunpack.c.l.b16 %v2746
        %v5290 = vunpack.c.h.b16 %v2746
        %v5291 = vunpack.c.l.b16 %v2747
        %v5292 = vunpack.c.h.b16 %v2747
        %v5293 = vunpack.c.l.b16 %v2748
        %v5294 = vunpack.c.h.b16 %v2748
        %v5295 = vunpack.c.l.b16 %v2749
        %v5296 = vunpack.c.h.b16 %v2749
        %v5297 = vunpack.c.l.b16 %v2750
        %v5298 = vunpack.c.h.b16 %v2750
        %v5299 = vunpack.c.l.b16 %v2751
        %v5300 = vunpack.c.h.b16 %v2751
        %v5301 = vunpack.c.l.b16 %v2752
        %v5302 = vunpack.c.h.b16 %v2752
        %v5303 = vunpack.c.l.b16 %v2753
        %v5304 = vunpack.c.h.b16 %v2753
        %v5305 = vunpack.c.l.b16 %v2754
        %v5306 = vunpack.c.h.b16 %v2754
        %v5307 = vunpack.c.l.b16 %v2755
        %v5308 = vunpack.c.h.b16 %v2755
        %v5309 = vunpack.c.l.b16 %v2756
        %v5310 = vunpack.c.h.b16 %v2756
        %v5311 = vunpack.c.l.b16 %v2757
        %v5312 = vunpack.c.h.b16 %v2757
        %v5313 = vunpack.c.l.b16 %v2758
        %v5314 = vunpack.c.h.b16 %v2758
        %v5315 = vunpack.c.l.b16 %v2759
        %v5316 = vunpack.c.h.b16 %v2759
        %v5317 = vunpack.c.l.b16 %v2760
        %v5318 = vunpack.c.h.b16 %v2760
        %v5319 = vunpack.c.l.b16 %v2761
        %v5320 = vunpack.c.h.b16 %v2761
        %v5321 = vunpack.c.l.b16 %v2762
        %v5322 = vunpack.c.h.b16 %v2762
        %v5323 = vunpack.c.l.b16 %v2763
        %v5324 = vunpack.c.h.b16 %v2763
        %v5325 = vunpack.c.l.b16 %v2764
        %v5326 = vunpack.c.h.b16 %v2764
        %v5327 = vunpack.c.l.b16 %v2765
        %v5328 = vunpack.c.h.b16 %v2765
        %v5329 = vunpack.c.l.b16 %v2766
        %v5330 = vunpack.c.h.b16 %v2766
        %v5331 = vunpack.c.l.b16 %v2767
        %v5332 = vunpack.c.h.b16 %v2767
        %v5333 = vunpack.c.l.b16 %v2768
        %v5334 = vunpack.c.h.b16 %v2768
        %v5335 = vunpack.c.l.b16 %v2769
        %v5336 = vunpack.c.h.b16 %v2769
        %v5337 = vunpack.c.l.b16 %v2770
        %v5338 = vunpack.c.h.b16 %v2770
        %v5339 = vunpack.c.l.b16 %v2771
        %v5340 = vunpack.c.h.b16 %v2771
        %v5341 = vunpack.c.l.b16 %v2772
        %v5342 = vunpack.c.h.b16 %v2772
        %v5343 = vunpack.c.l.b16 %v2773
        %v5344 = vunpack.c.h.b16 %v2773
        %v5345 = vunpack.c.l.b16 %v2774
        %v5346 = vunpack.c.h.b16 %v2774
        %v5347 = vunpack.c.l.b16 %v2775
        %v5348 = vunpack.c.h.b16 %v2775
        %v5349 = vunpack.c.l.b16 %v2776
        %v5350 = vunpack.c.h.b16 %v2776
        %v5351 = vunpack.c.l.b16 %v2777
        %v5352 = vunpack.c.h.b16 %v2777
        %v5353 = vunpack.c.l.b16 %v2778
        %v5354 = vunpack.c.h.b16 %v2778
        %v5355 = vunpack.c.l.b16 %v2779
        %v5356 = vunpack.c.h.b16 %v2779
        %v5357 = vunpack.c.l.b16 %v2780
        %v5358 = vunpack.c.h.b16 %v2780
        %v5359 = vunpack.c.l.b16 %v2781
        %v5360 = vunpack.c.h.b16 %v2781
        %v5361 = vunpack.c.l.b16 %v2782
        %v5362 = vunpack.c.h.b16 %v2782
        %v5363 = vunpack.c.l.b16 %v2783
        %v5364 = vunpack.c.h.b16 %v2783
        %v5365 = vunpack.c.l.b16 %v2784
        %v5366 = vunpack.c.h.b16 %v2784
        %v5367 = vunpack.c.l.b16 %v2785
        %v5368 = vunpack.c.h.b16 %v2785
        %v5369 = vunpack.c.l.b16 %v2786
        %v5370 = vunpack.c.h.b16 %v2786
        %v5371 = vunpack.c.l.b16 %v2787
        %v5372 = vunpack.c.h.b16 %v2787
        %v5373 = vunpack.c.l.b16 %v2788
        %v5374 = vunpack.c.h.b16 %v2788
        %v5375 = vunpack.c.l.b16 %v2789
        %v5376 = vunpack.c.h.b16 %v2789
        %v5377 = vunpack.c.l.b16 %v2790
        %v5378 = vunpack.c.h.b16 %v2790
        %v5379 = vunpack.c.l.b16 %v2791
        %v5380 = vunpack.c.h.b16 %v2791
        %v5381 = vunpack.c.l.b16 %v2792
        %v5382 = vunpack.c.h.b16 %v2792
        %v5383 = vunpack.c.l.b16 %v2793
        %v5384 = vunpack.c.h.b16 %v2793
        %v5385 = vunpack.c.l.b16 %v2794
        %v5386 = vunpack.c.h.b16 %v2794
        %v5387 = vunpack.c.l.b16 %v2795
        %v5388 = vunpack.c.h.b16 %v2795
        %v5389 = vunpack.c.l.b16 %v2796
        %v5390 = vunpack.c.h.b16 %v2796
        %v5391 = vunpack.c.l.b16 %v2797
        %v5392 = vunpack.c.h.b16 %v2797
        %v5393 = vunpack.c.l.b16 %v2798
        %v5394 = vunpack.c.h.b16 %v2798
        %v5395 = vunpack.c.l.b16 %v2799
        %v5396 = vunpack.c.h.b16 %v2799
        %v5397 = vunpack.c.l.b16 %v2800
        %v5398 = vunpack.c.h.b16 %v2800
        %v5399 = vunpack.c.l.b16 %v2801
        %v5400 = vunpack.c.h.b16 %v2801
        %v5401 = vunpack.c.l.b16 %v2802
        %v5402 = vunpack.c.h.b16 %v2802
        %v5403 = vunpack.c.l.b16 %v2803
        %v5404 = vunpack.c.h.b16 %v2803
        %v5405 = vunpack.c.l.b16 %v2804
        %v5406 = vunpack.c.h.b16 %v2804
        %v5407 = vunpack.c.l.b16 %v2805
        %v5408 = vunpack.c.h.b16 %v2805
        %v5409 = vunpack.c.l.b16 %v2806
        %v5410 = vunpack.c.h.b16 %v2806
        %v5411 = vunpack.c.l.b16 %v2807
        %v5412 = vunpack.c.h.b16 %v2807
        %v5413 = vunpack.c.l.b16 %v2808
        %v5414 = vunpack.c.h.b16 %v2808
        %v5415 = vunpack.c.l.b16 %v2809
        %v5416 = vunpack.c.h.b16 %v2809
        %v5417 = vunpack.c.l.b16 %v2810
        %v5418 = vunpack.c.h.b16 %v2810
        %v5419 = vunpack.c.l.b16 %v2811
        %v5420 = vunpack.c.h.b16 %v2811
        %v5421 = vunpack.c.l.b16 %v2812
        %v5422 = vunpack.c.h.b16 %v2812
        %v5423 = vunpack.c.l.b16 %v2813
        %v5424 = vunpack.c.h.b16 %v2813
        %v5425 = vunpack.c.l.b16 %v2814
        %v5426 = vunpack.c.h.b16 %v2814
        %v5427 = vunpack.c.l.b16 %v2815
        %v5428 = vunpack.c.h.b16 %v2815
        %v5429 = vunpack.c.l.b16 %v2816
        %v5430 = vunpack.c.h.b16 %v2816
        %v5431 = vunpack.c.l.b16 %v2817
        %v5432 = vunpack.c.h.b16 %v2817
        %v5433 = vunpack.c.l.b16 %v2818
        %v5434 = vunpack.c.h.b16 %v2818
        %v5435 = vunpack.c.l.b16 %v2819
        %v5436 = vunpack.c.h.b16 %v2819
        %v5437 = vunpack.c.l.b16 %v2820
        %v5438 = vunpack.c.h.b16 %v2820
        %v5439 = vunpack.c.l.b16 %v2821
        %v5440 = vunpack.c.h.b16 %v2821
        %v5441 = vunpack.c.l.b16 %v2822
        %v5442 = vunpack.c.h.b16 %v2822
        %v5443 = vunpack.c.l.b16 %v2823
        %v5444 = vunpack.c.h.b16 %v2823
        %v5445 = vunpack.c.l.b16 %v2824
        %v5446 = vunpack.c.h.b16 %v2824
        %v5447 = vunpack.c.l.b16 %v2825
        %v5448 = vunpack.c.h.b16 %v2825
        %v5449 = vunpack.c.l.b16 %v2826
        %v5450 = vunpack.c.h.b16 %v2826
        %v5451 = vunpack.c.l.b16 %v2827
        %v5452 = vunpack.c.h.b16 %v2827
        %v5453 = vunpack.c.l.b16 %v2828
        %v5454 = vunpack.c.h.b16 %v2828
        %v5455 = vunpack.c.l.b16 %v2829
        %v5456 = vunpack.c.h.b16 %v2829
        %v5457 = vunpack.c.l.b16 %v2830
        %v5458 = vunpack.c.h.b16 %v2830
        %v5459 = vunpack.c.l.b16 %v2831
        %v5460 = vunpack.c.h.b16 %v2831
        %v5461 = vunpack.c.l.b16 %v2832
        %v5462 = vunpack.c.h.b16 %v2832
        %v5463 = vunpack.c.l.b16 %v2833
        %v5464 = vunpack.c.h.b16 %v2833
        %v5465 = vunpack.c.l.b16 %v2834
        %v5466 = vunpack.c.h.b16 %v2834
        %v5467 = vunpack.c.l.b16 %v2835
        %v5468 = vunpack.c.h.b16 %v2835
        %v5469 = vunpack.c.l.b16 %v2836
        %v5470 = vunpack.c.h.b16 %v2836
        %v5471 = vunpack.c.l.b16 %v2837
        %v5472 = vunpack.c.h.b16 %v2837
        %v5473 = vunpack.c.l.b16 %v2838
        %v5474 = vunpack.c.h.b16 %v2838
        %v5475 = vunpack.c.l.b16 %v2839
        %v5476 = vunpack.c.h.b16 %v2839
        %v5477 = vunpack.c.l.b16 %v2840
        %v5478 = vunpack.c.h.b16 %v2840
        %v5479 = vunpack.c.l.b16 %v2841
        %v5480 = vunpack.c.h.b16 %v2841
        %v5481 = vunpack.c.l.b16 %v2842
        %v5482 = vunpack.c.h.b16 %v2842
        %v5483 = vunpack.c.l.b16 %v2843
        %v5484 = vunpack.c.h.b16 %v2843
        %v5485 = vunpack.c.l.b16 %v2844
        %v5486 = vunpack.c.h.b16 %v2844
        %v5487 = vunpack.c.l.b16 %v2845
        %v5488 = vunpack.c.h.b16 %v2845
        %v5489 = vunpack.c.l.b16 %v2846
        %v5490 = vunpack.c.h.b16 %v2846
        %v5491 = vunpack.c.l.b16 %v2847
        %v5492 = vunpack.c.h.b16 %v2847
        %v5493 = vunpack.c.l.b16 %v2848
        %v5494 = vunpack.c.h.b16 %v2848
        %v5495 = vunpack.c.l.b16 %v2849
        %v5496 = vunpack.c.h.b16 %v2849
        %v5497 = vunpack.c.l.b16 %v2850
        %v5498 = vunpack.c.h.b16 %v2850
        %v5499 = vunpack.c.l.b16 %v2851
        %v5500 = vunpack.c.h.b16 %v2851
        %v5501 = vunpack.c.l.b16 %v2852
        %v5502 = vunpack.c.h.b16 %v2852
        %v5503 = vunpack.c.l.b16 %v2853
        %v5504 = vunpack.c.h.b16 %v2853
        %v5505 = vunpack.c.l.b16 %v2854
        %v5506 = vunpack.c.h.b16 %v2854
        %v5507 = vunpack.c.l.b16 %v2855
        %v5508 = vunpack.c.h.b16 %v2855
        %v5509 = vunpack.c.l.b16 %v2856
        %v5510 = vunpack.c.h.b16 %v2856
        %v5511 = vunpack.c.l.b16 %v2857
        %v5512 = vunpack.c.h.b16 %v2857
        %v5513 = vunpack.c.l.b16 %v2858
        %v5514 = vunpack.c.h.b16 %v2858
        %v5515 = vunpack.c.l.b16 %v2859
        %v5516 = vunpack.c.h.b16 %v2859
        %v5517 = vunpack.c.l.b16 %v2860
        %v5518 = vunpack.c.h.b16 %v2860
        %v5519 = vunpack.c.l.b16 %v2861
        %v5520 = vunpack.c.h.b16 %v2861
        %v5521 = vunpack.c.l.b16 %v2862
        %v5522 = vunpack.c.h.b16 %v2862
        %v5523 = vunpack.c.l.b16 %v2863
        %v5524 = vunpack.c.h.b16 %v2863
        %v5525 = vunpack.c.l.b16 %v2864
        %v5526 = vunpack.c.h.b16 %v2864
        %v5527 = vunpack.c.l.b16 %v2865
        %v5528 = vunpack.c.h.b16 %v2865
        %v5529 = vunpack.c.l.b16 %v2866
        %v5530 = vunpack.c.h.b16 %v2866
        %v5531 = vunpack.c.l.b16 %v2867
        %v5532 = vunpack.c.h.b16 %v2867
        %v5533 = vunpack.c.l.b16 %v2868
        %v5534 = vunpack.c.h.b16 %v2868
        %v5535 = vunpack.c.l.b16 %v2869
        %v5536 = vunpack.c.h.b16 %v2869
        %v5537 = vunpack.c.l.b16 %v2870
        %v5538 = vunpack.c.h.b16 %v2870
        %v5539 = vunpack.c.l.b16 %v2871
        %v5540 = vunpack.c.h.b16 %v2871
        %v5541 = vunpack.c.l.b16 %v2872
        %v5542 = vunpack.c.h.b16 %v2872
        %v5543 = vunpack.c.l.b16 %v2873
        %v5544 = vunpack.c.h.b16 %v2873
        %v5545 = vunpack.c.l.b16 %v2874
        %v5546 = vunpack.c.h.b16 %v2874
        %v5547 = vunpack.c.l.b16 %v2875
        %v5548 = vunpack.c.h.b16 %v2875
        %v5549 = vunpack.c.l.b16 %v2876
        %v5550 = vunpack.c.h.b16 %v2876
        %v5551 = vunpack.c.l.b16 %v2877
        %v5552 = vunpack.c.h.b16 %v2877
        %v5553 = vunpack.c.l.b16 %v2878
        %v5554 = vunpack.c.h.b16 %v2878
        %v5555 = vunpack.c.l.b16 %v2879
        %v5556 = vunpack.c.h.b16 %v2879
        %v5557 = vunpack.c.l.b16 %v2880
        %v5558 = vunpack.c.h.b16 %v2880
        %v5559 = vunpack.c.l.b16 %v2881
        %v5560 = vunpack.c.h.b16 %v2881
        %v5561 = vunpack.c.l.b16 %v2882
        %v5562 = vunpack.c.h.b16 %v2882
        %v5563 = vunpack.c.l.b16 %v2883
        %v5564 = vunpack.c.h.b16 %v2883
        %v5565 = vunpack.c.l.b16 %v2884
        %v5566 = vunpack.c.h.b16 %v2884
        %v5567 = vunpack.c.l.b16 %v2885
        %v5568 = vunpack.c.h.b16 %v2885
        %v5569 = vunpack.c.l.b16 %v2886
        %v5570 = vunpack.c.h.b16 %v2886
        %v5571 = vunpack.c.l.b16 %v2887
        %v5572 = vunpack.c.h.b16 %v2887
        %v5573 = vunpack.c.l.b16 %v2888
        %v5574 = vunpack.c.h.b16 %v2888
        %v5575 = vunpack.c.l.b16 %v2889
        %v5576 = vunpack.c.h.b16 %v2889
        %v5577 = vunpack.c.l.b16 %v2890
        %v5578 = vunpack.c.h.b16 %v2890
        %v5579 = vunpack.c.l.b16 %v2891
        %v5580 = vunpack.c.h.b16 %v2891
        %v5581 = vunpack.c.l.b16 %v2892
        %v5582 = vunpack.c.h.b16 %v2892
        %v5583 = vunpack.c.l.b16 %v2893
        %v5584 = vunpack.c.h.b16 %v2893
        %v5585 = vunpack.c.l.b16 %v2894
        %v5586 = vunpack.c.h.b16 %v2894
        %v5587 = vunpack.c.l.b16 %v2895
        %v5588 = vunpack.c.h.b16 %v2895
        %v5589 = vunpack.c.l.b16 %v2896
        %v5590 = vunpack.c.h.b16 %v2896
        %v5591 = vunpack.c.l.b16 %v2897
        %v5592 = vunpack.c.h.b16 %v2897
        %v5593 = vunpack.c.l.b16 %v2898
        %v5594 = vunpack.c.h.b16 %v2898
        %v5595 = vunpack.c.l.b16 %v2899
        %v5596 = vunpack.c.h.b16 %v2899
        %v5597 = vunpack.c.l.b16 %v2900
        %v5598 = vunpack.c.h.b16 %v2900
        %v5599 = vunpack.c.l.b16 %v2901
        %v5600 = vunpack.c.h.b16 %v2901
        %v5601 = vunpack.c.l.b16 %v2902
        %v5602 = vunpack.c.h.b16 %v2902
        %v5603 = vunpack.c.l.b16 %v2903
        %v5604 = vunpack.c.h.b16 %v2903
        %v5605 = vunpack.c.l.b16 %v2904
        %v5606 = vunpack.c.h.b16 %v2904
        %v5607 = vunpack.c.l.b16 %v2905
        %v5608 = vunpack.c.h.b16 %v2905
        %v5609 = vunpack.c.l.b16 %v2906
        %v5610 = vunpack.c.h.b16 %v2906
        %v5611 = vunpack.c.l.b16 %v2907
        %v5612 = vunpack.c.h.b16 %v2907
        %v5613 = vunpack.c.l.b16 %v2908
        %v5614 = vunpack.c.h.b16 %v2908
        %v5615 = vunpack.c.l.b16 %v2909
        %v5616 = vunpack.c.h.b16 %v2909
        %v5617 = vunpack.c.l.b16 %v2910
        %v5618 = vunpack.c.h.b16 %v2910
        %v5619 = vunpack.c.l.b16 %v2911
        %v5620 = vunpack.c.h.b16 %v2911
        %v5621 = vunpack.c.l.b16 %v2912
        %v5622 = vunpack.c.h.b16 %v2912
        %v5623 = vunpack.c.l.b16 %v2913
        %v5624 = vunpack.c.h.b16 %v2913
        %v5625 = vunpack.c.l.b16 %v2914
        %v5626 = vunpack.c.h.b16 %v2914
        %v5627 = vunpack.c.l.b16 %v2915
        %v5628 = vunpack.c.h.b16 %v2915
        %v5629 = vunpack.c.l.b16 %v2916
        %v5630 = vunpack.c.h.b16 %v2916
        %v5631 = vunpack.c.l.b16 %v2917
        %v5632 = vunpack.c.h.b16 %v2917
        %v5633 = vunpack.c.l.b16 %v2918
        %v5634 = vunpack.c.h.b16 %v2918
        %v5635 = vunpack.c.l.b16 %v2919
        %v5636 = vunpack.c.h.b16 %v2919
        %v5637 = vunpack.c.l.b16 %v2920
        %v5638 = vunpack.c.h.b16 %v2920
        %v5639 = vunpack.c.l.b16 %v2921
        %v5640 = vunpack.c.h.b16 %v2921
        %v5641 = vunpack.c.l.b16 %v2922
        %v5642 = vunpack.c.h.b16 %v2922
        %v5643 = vunpack.c.l.b16 %v2923
        %v5644 = vunpack.c.h.b16 %v2923
        %v5645 = vunpack.c.l.b16 %v2924
        %v5646 = vunpack.c.h.b16 %v2924
        %v5647 = vunpack.c.l.b16 %v2925
        %v5648 = vunpack.c.h.b16 %v2925
        %v5649 = vunpack.c.l.b16 %v2926
        %v5650 = vunpack.c.h.b16 %v2926
        %v5651 = vunpack.c.l.b16 %v2927
        %v5652 = vunpack.c.h.b16 %v2927
        %v5653 = vunpack.c.l.b16 %v2928
        %v5654 = vunpack.c.h.b16 %v2928
        %v5655 = vunpack.c.l.b16 %v2929
        %v5656 = vunpack.c.h.b16 %v2929
        %v5657 = vunpack.c.l.b16 %v2930
        %v5658 = vunpack.c.h.b16 %v2930
        %v5659 = vunpack.c.l.b16 %v2931
        %v5660 = vunpack.c.h.b16 %v2931
        %v5661 = vunpack.c.l.b16 %v2932
        %v5662 = vunpack.c.h.b16 %v2932
        %v5663 = vunpack.c.l.b16 %v2933
        %v5664 = vunpack.c.h.b16 %v2933
        %v5665 = vunpack.c.l.b16 %v2934
        %v5666 = vunpack.c.h.b16 %v2934
        %v5667 = vunpack.c.l.b16 %v2935
        %v5668 = vunpack.c.h.b16 %v2935
        %v5669 = vunpack.c.l.b16 %v2936
        %v5670 = vunpack.c.h.b16 %v2936
        %v5671 = vunpack.c.l.b16 %v2937
        %v5672 = vunpack.c.h.b16 %v2937
        %v5673 = vunpack.c.l.b16 %v2938
        %v5674 = vunpack.c.h.b16 %v2938
        %v5675 = vunpack.c.l.b16 %v2939
        %v5676 = vunpack.c.h.b16 %v2939
        %v5677 = vunpack.c.l.b16 %v2940
        %v5678 = vunpack.c.h.b16 %v2940
        %v5679 = vunpack.c.l.b16 %v2941
        %v5680 = vunpack.c.h.b16 %v2941
        %v5681 = vunpack.c.l.b16 %v2942
        %v5682 = vunpack.c.h.b16 %v2942
        %v5683 = vunpack.c.l.b16 %v2943
        %v5684 = vunpack.c.h.b16 %v2943
        %v5685 = vunpack.c.l.b16 %v2944
        %v5686 = vunpack.c.h.b16 %v2944
        %v5687 = vunpack.c.l.b16 %v2945
        %v5688 = vunpack.c.h.b16 %v2945
        %v5689 = vunpack.c.l.b16 %v2946
        %v5690 = vunpack.c.h.b16 %v2946
        %v5691 = vunpack.c.l.b16 %v2947
        %v5692 = vunpack.c.h.b16 %v2947
        %v5693 = vunpack.c.l.b16 %v2948
        %v5694 = vunpack.c.h.b16 %v2948
        %v5695 = vunpack.c.l.b16 %v2949
        %v5696 = vunpack.c.h.b16 %v2949
        %v5697 = vunpack.c.l.b16 %v2950
        %v5698 = vunpack.c.h.b16 %v2950
        %v5699 = vunpack.c.l.b16 %v2951
        %v5700 = vunpack.c.h.b16 %v2951
        %v5701 = vunpack.c.l.b16 %v2952
        %v5702 = vunpack.c.h.b16 %v2952
        %v5703 = vunpack.c.l.b16 %v2953
        %v5704 = vunpack.c.h.b16 %v2953
        %v5705 = vunpack.c.l.b16 %v2954
        %v5706 = vunpack.c.h.b16 %v2954
        %v5707 = vunpack.c.l.b16 %v2955
        %v5708 = vunpack.c.h.b16 %v2955
        %v5709 = vunpack.c.l.b16 %v2956
        %v5710 = vunpack.c.h.b16 %v2956
        %v5711 = vunpack.c.l.b16 %v2957
        %v5712 = vunpack.c.h.b16 %v2957
        %v5713 = vunpack.c.l.b16 %v2958
        %v5714 = vunpack.c.h.b16 %v2958
        %v5715 = vunpack.c.l.b16 %v2959
        %v5716 = vunpack.c.h.b16 %v2959
        %v5717 = vunpack.c.l.b16 %v2960
        %v5718 = vunpack.c.h.b16 %v2960
        %v5719 = vunpack.c.l.b16 %v2961
        %v5720 = vunpack.c.h.b16 %v2961
        %v5721 = vunpack.c.l.b16 %v2962
        %v5722 = vunpack.c.h.b16 %v2962
        %v5723 = vunpack.c.l.b16 %v2963
        %v5724 = vunpack.c.h.b16 %v2963
        %v5725 = vunpack.c.l.b16 %v2964
        %v5726 = vunpack.c.h.b16 %v2964
        %v5727 = vunpack.c.l.b16 %v2965
        %v5728 = vunpack.c.h.b16 %v2965
        %v5729 = vunpack.c.l.b16 %v2966
        %v5730 = vunpack.c.h.b16 %v2966
        %v5731 = vunpack.c.l.b16 %v2967
        %v5732 = vunpack.c.h.b16 %v2967
        %v5733 = vunpack.c.l.b16 %v2968
        %v5734 = vunpack.c.h.b16 %v2968
        %v5735 = vunpack.c.l.b16 %v2969
        %v5736 = vunpack.c.h.b16 %v2969
        %v5737 = vunpack.c.l.b16 %v2970
        %v5738 = vunpack.c.h.b16 %v2970
        %v5739 = vunpack.c.l.b16 %v2971
        %v5740 = vunpack.c.h.b16 %v2971
        %v5741 = vunpack.c.l.b16 %v2972
        %v5742 = vunpack.c.h.b16 %v2972
        %v5743 = vunpack.c.l.b16 %v2973
        %v5744 = vunpack.c.h.b16 %v2973
        %v5745 = vunpack.c.l.b16 %v2974
        %v5746 = vunpack.c.h.b16 %v2974
        %v5747 = vunpack.c.l.b16 %v2975
        %v5748 = vunpack.c.h.b16 %v2975
        %v5749 = vunpack.c.l.b16 %v2976
        %v5750 = vunpack.c.h.b16 %v2976
        %v5751 = vunpack.c.l.b16 %v2977
        %v5752 = vunpack.c.h.b16 %v2977
        %v5753 = vunpack.c.l.b16 %v2978
        %v5754 = vunpack.c.h.b16 %v2978
        %v5755 = vunpack.c.l.b16 %v2979
        %v5756 = vunpack.c.h.b16 %v2979
        %v5757 = vunpack.c.l.b16 %v2980
        %v5758 = vunpack.c.h.b16 %v2980
        %v5759 = vunpack.c.l.b16 %v2981
        %v5760 = vunpack.c.h.b16 %v2981
        %v5761 = vunpack.c.l.b16 %v2982
        %v5762 = vunpack.c.h.b16 %v2982
        %v5763 = vunpack.c.l.b16 %v2983
        %v5764 = vunpack.c.h.b16 %v2983
        %v5765 = vunpack.c.l.b16 %v2984
        %v5766 = vunpack.c.h.b16 %v2984
        %v5767 = vunpack.c.l.b16 %v2985
        %v5768 = vunpack.c.h.b16 %v2985
        %v5769 = vunpack.c.l.b16 %v2986
        %v5770 = vunpack.c.h.b16 %v2986
        %v5771 = vunpack.c.l.b16 %v2987
        %v5772 = vunpack.c.h.b16 %v2987
        %v5773 = vunpack.c.l.b16 %v2988
        %v5774 = vunpack.c.h.b16 %v2988
        %v5775 = vunpack.c.l.b16 %v2989
        %v5776 = vunpack.c.h.b16 %v2989
        %v5777 = vunpack.c.l.b16 %v2990
        %v5778 = vunpack.c.h.b16 %v2990
        %v5779 = vunpack.c.l.b16 %v2991
        %v5780 = vunpack.c.h.b16 %v2991
        %v5781 = vunpack.c.l.b16 %v2992
        %v5782 = vunpack.c.h.b16 %v2992
        %v5783 = vunpack.c.l.b16 %v2993
        %v5784 = vunpack.c.h.b16 %v2993
        %v5785 = vunpack.c.l.b16 %v2994
        %v5786 = vunpack.c.h.b16 %v2994
        %v5787 = vunpack.c.l.b16 %v2995
        %v5788 = vunpack.c.h.b16 %v2995
        %v5789 = vunpack.c.l.b16 %v2996
        %v5790 = vunpack.c.h.b16 %v2996
        %v5791 = vunpack.c.l.b16 %v2997
        %v5792 = vunpack.c.h.b16 %v2997
        %v5793 = vunpack.c.l.b16 %v2998
        %v5794 = vunpack.c.h.b16 %v2998
        %v5795 = vunpack.c.l.b16 %v2999
        %v5796 = vunpack.c.h.b16 %v2999
        %v5797 = vunpack.c.l.b16 %v3000
        %v5798 = vunpack.c.h.b16 %v3000
        %v5799 = vunpack.c.l.b16 %v3001
        %v5800 = vunpack.c.h.b16 %v3001
        %v5801 = vunpack.c.l.b16 %v3002
        %v5802 = vunpack.c.h.b16 %v3002
        %v5803 = vunpack.c.l.b16 %v3003
        %v5804 = vunpack.c.h.b16 %v3003
        %v5805 = vunpack.c.l.b16 %v3004
        %v5806 = vunpack.c.h.b16 %v3004
        %v5807 = vunpack.c.l.b16 %v3005
        %v5808 = vunpack.c.h.b16 %v3005
        %v5809 = vunpack.c.l.b16 %v3006
        %v5810 = vunpack.c.h.b16 %v3006
        %v5811 = vunpack.c.l.b16 %v3007
        %v5812 = vunpack.c.h.b16 %v3007
        %v5813 = vunpack.c.l.b16 %v3008
        %v5814 = vunpack.c.h.b16 %v3008
        %v5815 = vunpack.c.l.b16 %v3009
        %v5816 = vunpack.c.h.b16 %v3009
        %v5817 = vunpack.c.l.b16 %v3010
        %v5818 = vunpack.c.h.b16 %v3010
        %v5819 = vunpack.c.l.b16 %v3011
        %v5820 = vunpack.c.h.b16 %v3011
        %v5821 = vunpack.c.l.b16 %v3012
        %v5822 = vunpack.c.h.b16 %v3012
        %v5823 = vunpack.c.l.b16 %v3013
        %v5824 = vunpack.c.h.b16 %v3013
        %v5825 = vunpack.c.l.b16 %v3014
        %v5826 = vunpack.c.h.b16 %v3014
        %v5827 = vunpack.c.l.b16 %v3015
        %v5828 = vunpack.c.h.b16 %v3015
        %v5829 = vunpack.c.l.b16 %v3016
        %v5830 = vunpack.c.h.b16 %v3016
        %v5831 = vunpack.c.l.b16 %v3017
        %v5832 = vunpack.c.h.b16 %v3017
        %v5833 = vunpack.c.l.b16 %v3018
        %v5834 = vunpack.c.h.b16 %v3018
        %v5835 = vunpack.c.l.b16 %v3019
        %v5836 = vunpack.c.h.b16 %v3019
        %v5837 = vunpack.c.l.b16 %v3020
        %v5838 = vunpack.c.h.b16 %v3020
        %v5839 = vunpack.c.l.b16 %v3021
        %v5840 = vunpack.c.h.b16 %v3021
        %v5841 = vunpack.c.l.b16 %v3022
        %v5842 = vunpack.c.h.b16 %v3022
        %v5843 = vunpack.c.l.b16 %v3023
        %v5844 = vunpack.c.h.b16 %v3023
        %v5845 = vunpack.c.l.b16 %v3024
        %v5846 = vunpack.c.h.b16 %v3024
        %v5847 = vunpack.c.l.b16 %v3025
        %v5848 = vunpack.c.h.b16 %v3025
        %v5849 = vunpack.c.l.b16 %v3026
        %v5850 = vunpack.c.h.b16 %v3026
        %v5851 = vunpack.c.l.b16 %v3027
        %v5852 = vunpack.c.h.b16 %v3027
        %v5853 = vunpack.c.l.b16 %v3028
        %v5854 = vunpack.c.h.b16 %v3028
        %v5855 = vunpack.c.l.b16 %v3029
        %v5856 = vunpack.c.h.b16 %v3029
        %v5857 = vunpack.c.l.b16 %v3030
        %v5858 = vunpack.c.h.b16 %v3030
        %v5859 = vunpack.c.l.b16 %v3031
        %v5860 = vunpack.c.h.b16 %v3031
        %v5861 = vunpack.c.l.b16 %v3032
        %v5862 = vunpack.c.h.b16 %v3032
        %v5863 = vunpack.c.l.b16 %v3033
        %v5864 = vunpack.c.h.b16 %v3033
        %v5865 = vunpack.c.l.b16 %v3034
        %v5866 = vunpack.c.h.b16 %v3034
        %v5867 = vunpack.c.l.b16 %v3035
        %v5868 = vunpack.c.h.b16 %v3035
        %v5869 = vunpack.c.l.b16 %v3036
        %v5870 = vunpack.c.h.b16 %v3036
        %v5871 = vunpack.c.l.b16 %v3037
        %v5872 = vunpack.c.h.b16 %v3037
        %v5873 = vunpack.c.l.b16 %v3038
        %v5874 = vunpack.c.h.b16 %v3038
        %v5875 = vunpack.c.l.b16 %v3039
        %v5876 = vunpack.c.h.b16 %v3039
        %v5877 = vunpack.c.l.b16 %v3040
        %v5878 = vunpack.c.h.b16 %v3040
        %v5879 = vunpack.c.l.b16 %v3041
        %v5880 = vunpack.c.h.b16 %v3041
        %v5881 = vunpack.c.l.b16 %v3042
        %v5882 = vunpack.c.h.b16 %v3042
        %v5883 = vunpack.c.l.b16 %v3043
        %v5884 = vunpack.c.h.b16 %v3043
        %v5885 = vunpack.c.l.b16 %v3044
        %v5886 = vunpack.c.h.b16 %v3044
        %v5887 = vunpack.c.l.b16 %v3045
        %v5888 = vunpack.c.h.b16 %v3045
        %v5889 = vunpack.c.l.b16 %v3046
        %v5890 = vunpack.c.h.b16 %v3046
        %v5891 = vunpack.c.l.b16 %v3047
        %v5892 = vunpack.c.h.b16 %v3047
        %v5893 = vunpack.c.l.b16 %v3048
        %v5894 = vunpack.c.h.b16 %v3048
        %v5895 = vunpack.c.l.b16 %v3049
        %v5896 = vunpack.c.h.b16 %v3049
        %v5897 = vunpack.c.l.b16 %v3050
        %v5898 = vunpack.c.h.b16 %v3050
        %v5899 = vunpack.c.l.b16 %v3051
        %v5900 = vunpack.c.h.b16 %v3051
        %v5901 = vunpack.c.l.b16 %v3052
        %v5902 = vunpack.c.h.b16 %v3052
        %v5903 = vunpack.c.l.b16 %v3053
        %v5904 = vunpack.c.h.b16 %v3053
        %v5905 = vunpack.c.l.b16 %v3054
        %v5906 = vunpack.c.h.b16 %v3054
        %v5907 = vunpack.c.l.b16 %v3055
        %v5908 = vunpack.c.h.b16 %v3055
        %v5909 = vunpack.c.l.b16 %v3056
        %v5910 = vunpack.c.h.b16 %v3056
        %v5911 = vunpack.c.l.b16 %v3057
        %v5912 = vunpack.c.h.b16 %v3057
        %v5913 = vunpack.c.l.b16 %v3058
        %v5914 = vunpack.c.h.b16 %v3058
        %v5915 = vunpack.c.l.b16 %v3059
        %v5916 = vunpack.c.h.b16 %v3059
        %v5917 = vunpack.c.l.b16 %v3060
        %v5918 = vunpack.c.h.b16 %v3060
        %v5919 = vunpack.c.l.b16 %v3061
        %v5920 = vunpack.c.h.b16 %v3061
        %v5921 = vunpack.c.l.b16 %v3062
        %v5922 = vunpack.c.h.b16 %v3062
        %v5923 = vunpack.c.l.b16 %v3063
        %v5924 = vunpack.c.h.b16 %v3063
        %v5925 = vunpack.c.l.b16 %v3064
        %v5926 = vunpack.c.h.b16 %v3064
        %v5927 = vunpack.c.l.b16 %v3065
        %v5928 = vunpack.c.h.b16 %v3065
        %v5929 = vunpack.c.l.b16 %v3066
        %v5930 = vunpack.c.h.b16 %v3066
        %v5931 = vunpack.c.l.b16 %v3067
        %v5932 = vunpack.c.h.b16 %v3067
        %v5933 = vunpack.c.l.b16 %v3068
        %v5934 = vunpack.c.h.b16 %v3068
        %v5935 = vunpack.c.l.b16 %v3069
        %v5936 = vunpack.c.h.b16 %v3069
        %v5937 = vunpack.c.l.b16 %v3070
        %v5938 = vunpack.c.h.b16 %v3070
        %v5939 = vunpack.c.l.b16 %v3071
        %v5940 = vunpack.c.h.b16 %v3071
        %v5941 = vunpack.c.l.b16 %v3072
        %v5942 = vunpack.c.h.b16 %v3072
        %v5943 = vunpack.c.l.b16 %v3073
        %v5944 = vunpack.c.h.b16 %v3073
        %v5945 = vunpack.c.l.b16 %v3074
        %v5946 = vunpack.c.h.b16 %v3074
        %v5947 = vunpack.c.l.b16 %v3075
        %v5948 = vunpack.c.h.b16 %v3075
        %v5949 = vunpack.c.l.b16 %v3076
        %v5950 = vunpack.c.h.b16 %v3076
        %v5951 = vunpack.c.l.b16 %v3077
        %v5952 = vunpack.c.h.b16 %v3077
        %v5953 = vunpack.c.l.b16 %v3078
        %v5954 = vunpack.c.h.b16 %v3078
        %v5955 = vunpack.c.l.b16 %v3079
        %v5956 = vunpack.c.h.b16 %v3079
        %v5957 = vunpack.c.l.b16 %v3080
        %v5958 = vunpack.c.h.b16 %v3080
        %v5959 = vunpack.c.l.b16 %v3081
        %v5960 = vunpack.c.h.b16 %v3081
        %v5961 = vunpack.c.l.b16 %v3082
        %v5962 = vunpack.c.h.b16 %v3082
        %v5963 = vunpack.c.l.b16 %v3083
        %v5964 = vunpack.c.h.b16 %v3083
        %v5965 = vunpack.c.l.b16 %v3084
        %v5966 = vunpack.c.h.b16 %v3084
        %v5967 = vunpack.c.l.b16 %v3085
        %v5968 = vunpack.c.h.b16 %v3085
        %v5969 = vunpack.c.l.b16 %v3086
        %v5970 = vunpack.c.h.b16 %v3086
        %v5971 = vunpack.c.l.b16 %v3087
        %v5972 = vunpack.c.h.b16 %v3087
        %v5973 = vunpack.c.l.b16 %v3088
        %v5974 = vunpack.c.h.b16 %v3088
        %v5975 = vunpack.c.l.b16 %v3089
        %v5976 = vunpack.c.h.b16 %v3089
        %v5977 = vunpack.c.l.b16 %v3090
        %v5978 = vunpack.c.h.b16 %v3090
        %v5979 = vunpack.c.l.b16 %v3091
        %v5980 = vunpack.c.h.b16 %v3091
        %v5981 = vunpack.c.l.b16 %v3092
        %v5982 = vunpack.c.h.b16 %v3092
        %v5983 = vunpack.c.l.b16 %v3093
        %v5984 = vunpack.c.h.b16 %v3093
        %v5985 = vunpack.c.l.b16 %v3094
        %v5986 = vunpack.c.h.b16 %v3094
        %v5987 = vunpack.c.l.b16 %v3095
        %v5988 = vunpack.c.h.b16 %v3095
        %v5989 = vunpack.c.l.b16 %v3096
        %v5990 = vunpack.c.h.b16 %v3096
        %v5991 = vunpack.c.l.b16 %v3097
        %v5992 = vunpack.c.h.b16 %v3097
        %v5993 = vunpack.c.l.b16 %v3098
        %v5994 = vunpack.c.h.b16 %v3098
        %v5995 = vunpack.c.l.b16 %v3099
        %v5996 = vunpack.c.h.b16 %v3099
        %v5997 = vunpack.c.l.b16 %v3100
        %v5998 = vunpack.c.h.b16 %v3100
        %v5999 = vunpack.c.l.b16 %v3101
        %v6000 = vunpack.c.h.b16 %v3101
        %v6001 = vunpack.c.l.b16 %v3102
        %v6002 = vunpack.c.h.b16 %v3102
        %v6003 = vunpack.c.l.b16 %v3103
        %v6004 = vunpack.c.h.b16 %v3103
        %v6005 = vunpack.c.l.b16 %v3104
        %v6006 = vunpack.c.h.b16 %v3104
        %v6007 = vunpack.c.l.b16 %v3105
        %v6008 = vunpack.c.h.b16 %v3105
        %v6009 = vunpack.c.l.b16 %v3106
        %v6010 = vunpack.c.h.b16 %v3106
        %v6011 = vunpack.c.l.b16 %v3107
        %v6012 = vunpack.c.h.b16 %v3107
        %v6013 = vunpack.c.l.b16 %v3108
        %v6014 = vunpack.c.h.b16 %v3108
        %v6015 = vunpack.c.l.b16 %v3109
        %v6016 = vunpack.c.h.b16 %v3109
        %v6017 = vunpack.c.l.b16 %v3110
        %v6018 = vunpack.c.h.b16 %v3110
        %v6019 = vunpack.c.l.b16 %v3111
        %v6020 = vunpack.c.h.b16 %v3111
        %v6021 = vunpack.c.l.b16 %v3112
        %v6022 = vunpack.c.h.b16 %v3112
        %v6023 = vunpack.c.l.b16 %v3113
        %v6024 = vunpack.c.h.b16 %v3113
        %v6025 = vunpack.c.l.b16 %v3114
        %v6026 = vunpack.c.h.b16 %v3114
        %v6027 = vunpack.c.l.b16 %v3115
        %v6028 = vunpack.c.h.b16 %v3115
        %v6029 = vunpack.c.l.b16 %v3116
        %v6030 = vunpack.c.h.b16 %v3116
        %v6031 = vunpack.c.l.b16 %v3117
        %v6032 = vunpack.c.h.b16 %v3117
        %v6033 = vunpack.c.l.b16 %v3118
        %v6034 = vunpack.c.h.b16 %v3118
        %v6035 = vunpack.c.l.b16 %v3119
        %v6036 = vunpack.c.h.b16 %v3119
        %v6037 = vunpack.c.l.b16 %v3120
        %v6038 = vunpack.c.h.b16 %v3120
        %v6039 = vunpack.c.l.b16 %v3121
        %v6040 = vunpack.c.h.b16 %v3121
        %v6041 = vunpack.c.l.b16 %v3122
        %v6042 = vunpack.c.h.b16 %v3122
        %v6043 = vunpack.c.l.b16 %v3123
        %v6044 = vunpack.c.h.b16 %v3123
        %v6045 = vunpack.c.l.b16 %v3124
        %v6046 = vunpack.c.h.b16 %v3124
        %v6047 = vunpack.c.l.b16 %v3125
        %v6048 = vunpack.c.h.b16 %v3125
        %v6049 = vunpack.c.l.b16 %v3126
        %v6050 = vunpack.c.h.b16 %v3126
        %v6051 = vunpack.c.l.b16 %v3127
        %v6052 = vunpack.c.h.b16 %v3127
        %v6053 = vunpack.c.l.b16 %v3128
        %v6054 = vunpack.c.h.b16 %v3128
        %v6055 = vunpack.c.l.b16 %v3129
        %v6056 = vunpack.c.h.b16 %v3129
        %v6057 = vunpack.c.l.b16 %v3130
        %v6058 = vunpack.c.h.b16 %v3130
        %v6059 = vunpack.c.l.b16 %v3131
        %v6060 = vunpack.c.h.b16 %v3131
        %v6061 = vunpack.c.l.b16 %v3132
        %v6062 = vunpack.c.h.b16 %v3132
        %v6063 = vunpack.c.l.b16 %v3133
        %v6064 = vunpack.c.h.b16 %v3133
        %v6065 = vunpack.c.l.b16 %v3134
        %v6066 = vunpack.c.h.b16 %v3134
        %v6067 = vunpack.c.l.b16 %v3135
        %v6068 = vunpack.c.h.b16 %v3135
        %v6069 = vunpack.c.l.b16 %v3136
        %v6070 = vunpack.c.h.b16 %v3136
        %v6071 = vunpack.c.l.b16 %v3137
        %v6072 = vunpack.c.h.b16 %v3137
        %v6073 = vunpack.c.l.b16 %v3138
        %v6074 = vunpack.c.h.b16 %v3138
        %v6075 = vunpack.c.l.b16 %v3139
        %v6076 = vunpack.c.h.b16 %v3139
        %v6077 = vunpack.c.l.b16 %v3140
        %v6078 = vunpack.c.h.b16 %v3140
        %v6079 = vunpack.c.l.b16 %v3141
        %v6080 = vunpack.c.h.b16 %v3141
        %v6081 = vunpack.c.l.b16 %v3142
        %v6082 = vunpack.c.h.b16 %v3142
        %v6083 = vunpack.c.l.b16 %v3143
        %v6084 = vunpack.c.h.b16 %v3143
        %v6085 = vunpack.c.l.b16 %v3144
        %v6086 = vunpack.c.h.b16 %v3144
        %v6087 = vunpack.c.l.b16 %v3145
        %v6088 = vunpack.c.h.b16 %v3145
        %v6089 = vunpack.c.l.b16 %v3146
        %v6090 = vunpack.c.h.b16 %v3146
        %v6091 = vunpack.c.l.b16 %v3147
        %v6092 = vunpack.c.h.b16 %v3147
        %v6093 = vunpack.c.l.b16 %v3148
        %v6094 = vunpack.c.h.b16 %v3148
        %v6095 = vunpack.c.l.b16 %v3149
        %v6096 = vunpack.c.h.b16 %v3149
        %v6097 = vunpack.c.l.b16 %v3150
        %v6098 = vunpack.c.h.b16 %v3150
        %v6099 = vunpack.c.l.b16 %v3151
        %v6100 = vunpack.c.h.b16 %v3151
        %v6101 = vunpack.c.l.b16 %v3152
        %v6102 = vunpack.c.h.b16 %v3152
        %v6103 = vunpack.c.l.b16 %v3153
        %v6104 = vunpack.c.h.b16 %v3153
        %v6105 = vunpack.c.l.b16 %v3154
        %v6106 = vunpack.c.h.b16 %v3154
        %v6107 = vunpack.c.l.b16 %v3155
        %v6108 = vunpack.c.h.b16 %v3155
        %v6109 = vunpack.c.l.b16 %v3156
        %v6110 = vunpack.c.h.b16 %v3156
        %v6111 = vunpack.c.l.b16 %v3157
        %v6112 = vunpack.c.h.b16 %v3157
        %v6113 = vunpack.c.l.b16 %v3158
        %v6114 = vunpack.c.h.b16 %v3158
        %v6115 = vunpack.c.l.b16 %v3159
        %v6116 = vunpack.c.h.b16 %v3159
        %v6117 = vunpack.c.l.b16 %v3160
        %v6118 = vunpack.c.h.b16 %v3160
        %v6119 = vunpack.c.l.b16 %v3161
        %v6120 = vunpack.c.h.b16 %v3161
        %v6121 = vunpack.c.l.b16 %v3162
        %v6122 = vunpack.c.h.b16 %v3162
        %v6123 = vunpack.c.l.b16 %v3163
        %v6124 = vunpack.c.h.b16 %v3163
        %v6125 = vunpack.c.l.b16 %v3164
        %v6126 = vunpack.c.h.b16 %v3164
        %v6127 = vunpack.c.l.b16 %v3165
        %v6128 = vunpack.c.h.b16 %v3165
        %v6129 = vunpack.c.l.b16 %v3166
        %v6130 = vunpack.c.h.b16 %v3166
        %v6131 = vunpack.c.l.b16 %v3167
        %v6132 = vunpack.c.h.b16 %v3167
        %v6133 = vunpack.c.l.b16 %v3168
        %v6134 = vunpack.c.h.b16 %v3168
        %v6135 = vunpack.c.l.b16 %v3169
        %v6136 = vunpack.c.h.b16 %v3169
        %v6137 = vunpack.c.l.b16 %v3170
        %v6138 = vunpack.c.h.b16 %v3170
        %v6139 = vunpack.c.l.b16 %v3171
        %v6140 = vunpack.c.h.b16 %v3171
        %v6141 = vunpack.c.l.b16 %v3172
        %v6142 = vunpack.c.h.b16 %v3172
        %v6143 = vunpack.c.l.b16 %v3173
        %v6144 = vunpack.c.h.b16 %v3173
        %v6145 = vunpack.c.l.b16 %v3174
        %v6146 = vunpack.c.h.b16 %v3174
        %v6147 = vunpack.c.l.b16 %v3175
        %v6148 = vunpack.c.h.b16 %v3175
        %v6149 = vunpack.c.l.b16 %v3176
        %v6150 = vunpack.c.h.b16 %v3176
        %v6151 = vunpack.c.l.b16 %v3177
        %v6152 = vunpack.c.h.b16 %v3177
        %v6153 = vunpack.c.l.b16 %v3178
        %v6154 = vunpack.c.h.b16 %v3178
        %v6155 = vunpack.c.l.b16 %v3179
        %v6156 = vunpack.c.h.b16 %v3179
        %v6157 = vunpack.c.l.b16 %v3180
        %v6158 = vunpack.c.h.b16 %v3180
        %v6159 = vunpack.c.l.b16 %v3181
        %v6160 = vunpack.c.h.b16 %v3181
        %v6161 = vunpack.c.l.b16 %v3182
        %v6162 = vunpack.c.h.b16 %v3182
        %v6163 = vunpack.c.l.b16 %v3183
        %v6164 = vunpack.c.h.b16 %v3183
        %v6165 = vunpack.c.l.b16 %v3184
        %v6166 = vunpack.c.h.b16 %v3184
        %v6167 = vunpack.c.l.b16 %v3185
        %v6168 = vunpack.c.h.b16 %v3185
        %v6169 = vunpack.c.l.b16 %v3186
        %v6170 = vunpack.c.h.b16 %v3186
        %v6171 = vunpack.c.l.b16 %v3187
        %v6172 = vunpack.c.h.b16 %v3187
        %v6173 = vunpack.c.l.b16 %v3188
        %v6174 = vunpack.c.h.b16 %v3188
        %v6175 = vunpack.c.l.b16 %v3189
        %v6176 = vunpack.c.h.b16 %v3189
        %v6177 = vunpack.c.l.b16 %v3190
        %v6178 = vunpack.c.h.b16 %v3190
        %v6179 = vunpack.c.l.b16 %v3191
        %v6180 = vunpack.c.h.b16 %v3191
        %v6181 = vunpack.c.l.b16 %v3192
        %v6182 = vunpack.c.h.b16 %v3192
        %v6183 = vunpack.c.l.b16 %v3193
        %v6184 = vunpack.c.h.b16 %v3193
        %v6185 = vunpack.c.l.b16 %v3194
        %v6186 = vunpack.c.h.b16 %v3194
        %v6187 = vunpack.c.l.b16 %v3195
        %v6188 = vunpack.c.h.b16 %v3195
        %v6189 = vunpack.c.l.b16 %v3196
        %v6190 = vunpack.c.h.b16 %v3196
        %v6191 = vunpack.c.l.b16 %v3197
        %v6192 = vunpack.c.h.b16 %v3197
        %v6193 = vunpack.c.l.b16 %v3198
        %v6194 = vunpack.c.h.b16 %v3198
        %v6195 = vunpack.c.l.b16 %v3199
        %v6196 = vunpack.c.h.b16 %v3199
        %v6197 = vunpack.c.l.b16 %v3200
        %v6198 = vunpack.c.h.b16 %v3200
        %v6199 = vunpack.c.l.b16 %v3201
        %v6200 = vunpack.c.h.b16 %v3201
        %v6201 = vunpack.c.l.b16 %v3202
        %v6202 = vunpack.c.h.b16 %v3202
        %v6203 = vunpack.c.l.b16 %v3203
        %v6204 = vunpack.c.h.b16 %v3203
        %v6205 = vunpack.c.l.b16 %v3204
        %v6206 = vunpack.c.h.b16 %v3204
        %v6207 = vunpack.c.l.b16 %v3205
        %v6208 = vunpack.c.h.b16 %v3205
        %v6209 = vunpack.c.l.b16 %v3206
        %v6210 = vunpack.c.h.b16 %v3206
        %v6211 = vunpack.c.l.b16 %v3207
        %v6212 = vunpack.c.h.b16 %v3207
        %v6213 = vunpack.c.l.b16 %v3208
        %v6214 = vunpack.c.h.b16 %v3208
        %v6215 = vunpack.c.l.b16 %v3209
        %v6216 = vunpack.c.h.b16 %v3209
        %v6217 = vunpack.c.l.b16 %v3210
        %v6218 = vunpack.c.h.b16 %v3210
        %v6219 = vunpack.c.l.b16 %v3211
        %v6220 = vunpack.c.h.b16 %v3211
        %v6221 = vunpack.c.l.b16 %v3212
        %v6222 = vunpack.c.h.b16 %v3212
        %v6223 = vunpack.c.l.b16 %v3213
        %v6224 = vunpack.c.h.b16 %v3213
        %v6225 = vunpack.c.l.b16 %v3214
        %v6226 = vunpack.c.h.b16 %v3214
        %v6227 = vunpack.c.l.b16 %v3215
        %v6228 = vunpack.c.h.b16 %v3215
        %v6229 = vunpack.c.l.b16 %v3216
        %v6230 = vunpack.c.h.b16 %v3216
        %v6231 = vunpack.c.l.b16 %v3217
        %v6232 = vunpack.c.h.b16 %v3217
        %v6233 = vunpack.c.l.b16 %v3218
        %v6234 = vunpack.c.h.b16 %v3218
        %v6235 = vunpack.c.l.b16 %v3219
        %v6236 = vunpack.c.h.b16 %v3219
        %v6237 = vunpack.c.l.b16 %v3220
        %v6238 = vunpack.c.h.b16 %v3220
        %v6239 = vunpack.c.l.b16 %v3221
        %v6240 = vunpack.c.h.b16 %v3221
        %v6241 = vunpack.c.l.b16 %v3222
        %v6242 = vunpack.c.h.b16 %v3222
        %v6243 = vunpack.c.l.b16 %v3223
        %v6244 = vunpack.c.h.b16 %v3223
        %v6245 = vunpack.c.l.b16 %v3224
        %v6246 = vunpack.c.h.b16 %v3224
        %v6247 = vunpack.c.l.b16 %v3225
        %v6248 = vunpack.c.h.b16 %v3225
        %v6249 = vunpack.c.l.b16 %v3226
        %v6250 = vunpack.c.h.b16 %v3226
        %v6251 = vunpack.c.l.b16 %v3227
        %v6252 = vunpack.c.h.b16 %v3227
        %v6253 = vunpack.c.l.b16 %v3228
        %v6254 = vunpack.c.h.b16 %v3228
        %v6255 = vunpack.c.l.b16 %v3229
        %v6256 = vunpack.c.h.b16 %v3229
        %v6257 = vunpack.c.l.b16 %v3230
        %v6258 = vunpack.c.h.b16 %v3230
        %v6259 = vunpack.c.l.b16 %v3231
        %v6260 = vunpack.c.h.b16 %v3231
        %v6261 = vunpack.c.l.b16 %v3232
        %v6262 = vunpack.c.h.b16 %v3232
        %v6263 = vunpack.c.l.b16 %v3233
        %v6264 = vunpack.c.h.b16 %v3233
        %v6265 = vunpack.c.l.b16 %v3234
        %v6266 = vunpack.c.h.b16 %v3234
        %v6267 = vunpack.c.l.b16 %v3235
        %v6268 = vunpack.c.h.b16 %v3235
        %v6269 = vunpack.c.l.b16 %v3236
        %v6270 = vunpack.c.h.b16 %v3236
        %v6271 = vunpack.c.l.b16 %v3237
        %v6272 = vunpack.c.h.b16 %v3237
        %v6273 = vunpack.c.l.b16 %v3238
        %v6274 = vunpack.c.h.b16 %v3238
        %v6275 = vunpack.c.l.b16 %v3239
        %v6276 = vunpack.c.h.b16 %v3239
        %v6277 = vunpack.c.l.b16 %v3240
        %v6278 = vunpack.c.h.b16 %v3240
        %v6279 = vunpack.c.l.b16 %v3241
        %v6280 = vunpack.c.h.b16 %v3241
        %v6281 = vunpack.c.l.b16 %v3242
        %v6282 = vunpack.c.h.b16 %v3242
        %v6283 = vunpack.c.l.b16 %v3243
        %v6284 = vunpack.c.h.b16 %v3243
        %v6285 = vunpack.c.l.b16 %v3244
        %v6286 = vunpack.c.h.b16 %v3244
        %v6287 = vunpack.c.l.b16 %v3245
        %v6288 = vunpack.c.h.b16 %v3245
        %v6289 = vunpack.c.l.b16 %v3246
        %v6290 = vunpack.c.h.b16 %v3246
        %v6291 = vunpack.c.l.b16 %v3247
        %v6292 = vunpack.c.h.b16 %v3247
        %v6293 = vunpack.c.l.b16 %v3248
        %v6294 = vunpack.c.h.b16 %v3248
        %v6295 = vunpack.c.l.b16 %v3249
        %v6296 = vunpack.c.h.b16 %v3249
        %v6297 = vunpack.c.l.b16 %v3250
        %v6298 = vunpack.c.h.b16 %v3250
        %v6299 = vunpack.c.l.b16 %v3251
        %v6300 = vunpack.c.h.b16 %v3251
        %v6301 = vunpack.c.l.b16 %v3252
        %v6302 = vunpack.c.h.b16 %v3252
        %v6303 = vunpack.c.l.b16 %v3253
        %v6304 = vunpack.c.h.b16 %v3253
        %v6305 = vunpack.c.l.b16 %v3254
        %v6306 = vunpack.c.h.b16 %v3254
        %v6307 = vunpack.c.l.b16 %v3255
        %v6308 = vunpack.c.h.b16 %v3255
        %v6309 = vunpack.c.l.b16 %v3256
        %v6310 = vunpack.c.h.b16 %v3256
        %v6311 = vunpack.c.l.b16 %v3257
        %v6312 = vunpack.c.h.b16 %v3257
        %v6313 = vunpack.c.l.b16 %v3258
        %v6314 = vunpack.c.h.b16 %v3258
        %v6315 = vunpack.c.l.b16 %v3259
        %v6316 = vunpack.c.h.b16 %v3259
        %v6317 = vunpack.c.l.b16 %v3260
        %v6318 = vunpack.c.h.b16 %v3260
        %v6319 = vunpack.c.l.b16 %v3261
        %v6320 = vunpack.c.h.b16 %v3261
        %v6321 = vunpack.c.l.b16 %v3262
        %v6322 = vunpack.c.h.b16 %v3262
        %v6323 = vunpack.c.l.b16 %v3263
        %v6324 = vunpack.c.h.b16 %v3263
        %v6325 = vunpack.c.l.b16 %v3264
        %v6326 = vunpack.c.h.b16 %v3264
        %v6327 = vunpack.c.l.b16 %v3265
        %v6328 = vunpack.c.h.b16 %v3265
        %v6329 = vunpack.c.l.b16 %v3266
        %v6330 = vunpack.c.h.b16 %v3266
        %v6331 = vunpack.c.l.b16 %v3267
        %v6332 = vunpack.c.h.b16 %v3267
        %v6333 = vunpack.c.l.b16 %v3268
        %v6334 = vunpack.c.h.b16 %v3268
        %v6335 = vunpack.c.l.b16 %v3269
        %v6336 = vunpack.c.h.b16 %v3269
        %v6337 = vunpack.c.l.b16 %v3270
        %v6338 = vunpack.c.h.b16 %v3270
        %v6339 = vunpack.c.l.b16 %v3271
        %v6340 = vunpack.c.h.b16 %v3271
        %v6341 = vunpack.c.l.b16 %v3272
        %v6342 = vunpack.c.h.b16 %v3272
        %v6343 = vunpack.c.l.b16 %v3273
        %v6344 = vunpack.c.h.b16 %v3273
        %v6345 = vunpack.c.l.b16 %v3274
        %v6346 = vunpack.c.h.b16 %v3274
        %v6347 = vunpack.c.l.b16 %v3275
        %v6348 = vunpack.c.h.b16 %v3275
        %v6349 = vunpack.c.l.b16 %v3276
        %v6350 = vunpack.c.h.b16 %v3276
        %v6351 = vunpack.c.l.b16 %v3277
        %v6352 = vunpack.c.h.b16 %v3277
        %v6353 = vunpack.c.l.b16 %v3278
        %v6354 = vunpack.c.h.b16 %v3278
        %v6355 = vunpack.c.l.b16 %v3279
        %v6356 = vunpack.c.h.b16 %v3279
        %v6357 = vunpack.c.l.b16 %v3280
        %v6358 = vunpack.c.h.b16 %v3280
        %v6359 = vunpack.c.l.b16 %v3281
        %v6360 = vunpack.c.h.b16 %v3281
        %v6361 = vunpack.c.l.b16 %v3282
        %v6362 = vunpack.c.h.b16 %v3282
        %v6363 = vunpack.c.l.b16 %v3283
        %v6364 = vunpack.c.h.b16 %v3283
        %v6365 = vunpack.c.l.b16 %v3284
        %v6366 = vunpack.c.h.b16 %v3284
        %v6367 = vunpack.c.l.b16 %v3285
        %v6368 = vunpack.c.h.b16 %v3285
        %v6369 = vunpack.c.l.b16 %v3286
        %v6370 = vunpack.c.h.b16 %v3286
        %v6371 = vunpack.c.l.b16 %v3287
        %v6372 = vunpack.c.h.b16 %v3287
        %v6373 = vunpack.c.l.b16 %v3288
        %v6374 = vunpack.c.h.b16 %v3288
        %v6375 = vunpack.c.l.b16 %v3289
        %v6376 = vunpack.c.h.b16 %v3289
        %v6377 = vunpack.c.l.b16 %v3290
        %v6378 = vunpack.c.h.b16 %v3290
        %v6379 = vunpack.c.l.b16 %v3291
        %v6380 = vunpack.c.h.b16 %v3291
        %v6381 = vunpack.c.l.b16 %v3292
        %v6382 = vunpack.c.h.b16 %v3292
        %v6383 = vunpack.c.l.b16 %v3293
        %v6384 = vunpack.c.h.b16 %v3293
        %v6385 = vunpack.c.l.b16 %v3294
        %v6386 = vunpack.c.h.b16 %v3294
        %v6387 = vunpack.c.l.b16 %v3295
        %v6388 = vunpack.c.h.b16 %v3295
        %v6389 = vunpack.c.l.b16 %v3296
        %v6390 = vunpack.c.h.b16 %v3296
        %v6391 = vunpack.c.l.b16 %v3297
        %v6392 = vunpack.c.h.b16 %v3297
        %v6393 = vunpack.c.l.b16 %v3298
        %v6394 = vunpack.c.h.b16 %v3298
        %v6395 = vunpack.c.l.b16 %v3299
        %v6396 = vunpack.c.h.b16 %v3299
        %v6397 = vunpack.c.l.b16 %v3300
        %v6398 = vunpack.c.h.b16 %v3300
        %v6399 = vunpack.c.l.b16 %v3301
        %v6400 = vunpack.c.h.b16 %v3301
        %v6401 = vunpack.c.l.b16 %v3302
        %v6402 = vunpack.c.h.b16 %v3302
        %v6403 = vunpack.c.l.b16 %v3303
        %v6404 = vunpack.c.h.b16 %v3303
        %v6405 = vunpack.c.l.b16 %v3304
        %v6406 = vunpack.c.h.b16 %v3304
        %v6407 = vunpack.c.l.b16 %v3305
        %v6408 = vunpack.c.h.b16 %v3305
        %v6409 = vunpack.c.l.b16 %v3306
        %v6410 = vunpack.c.h.b16 %v3306
        %v6411 = vunpack.c.l.b16 %v3307
        %v6412 = vunpack.c.h.b16 %v3307
        %v6413 = vunpack.c.l.b16 %v3308
        %v6414 = vunpack.c.h.b16 %v3308
        %v6415 = vunpack.c.l.b16 %v3309
        %v6416 = vunpack.c.h.b16 %v3309
        %v6417 = vunpack.c.l.b16 %v3310
        %v6418 = vunpack.c.h.b16 %v3310
        %v6419 = vunpack.c.l.b16 %v3311
        %v6420 = vunpack.c.h.b16 %v3311
        %v6421 = vunpack.c.l.b16 %v3312
        %v6422 = vunpack.c.h.b16 %v3312
        %v6423 = vunpack.c.l.b16 %v3313
        %v6424 = vunpack.c.h.b16 %v3313
        %v6425 = vunpack.c.l.b16 %v3314
        %v6426 = vunpack.c.h.b16 %v3314
        %v6427 = vunpack.c.l.b16 %v3315
        %v6428 = vunpack.c.h.b16 %v3315
        %v6429 = vunpack.c.l.b16 %v3316
        %v6430 = vunpack.c.h.b16 %v3316
        %v6431 = vunpack.c.l.b16 %v3317
        %v6432 = vunpack.c.h.b16 %v3317
        %v6433 = vunpack.c.l.b16 %v3318
        %v6434 = vunpack.c.h.b16 %v3318
        %v6435 = vunpack.c.l.b16 %v3319
        %v6436 = vunpack.c.h.b16 %v3319
        %v6437 = vunpack.c.l.b16 %v3320
        %v6438 = vunpack.c.h.b16 %v3320
        %v6439 = vunpack.c.l.b16 %v3321
        %v6440 = vunpack.c.h.b16 %v3321
        %v6441 = vunpack.c.l.b16 %v3322
        %v6442 = vunpack.c.h.b16 %v3322
        %v6443 = vunpack.c.l.b16 %v3323
        %v6444 = vunpack.c.h.b16 %v3323
        %v6445 = vunpack.c.l.b16 %v3324
        %v6446 = vunpack.c.h.b16 %v3324
        %v6447 = vunpack.c.l.b16 %v3325
        %v6448 = vunpack.c.h.b16 %v3325
        %v6449 = vunpack.c.l.b16 %v3326
        %v6450 = vunpack.c.h.b16 %v3326
        %v6451 = vunpack.c.l.b16 %v3327
        %v6452 = vunpack.c.h.b16 %v3327
        %v6453 = vunpack.c.l.b16 %v3328
        %v6454 = vunpack.c.h.b16 %v3328
        %v6455 = vunpack.c.l.b16 %v3329
        %v6456 = vunpack.c.h.b16 %v3329
        %v6457 = vunpack.c.l.b16 %v3330
        %v6458 = vunpack.c.h.b16 %v3330
        %v6459 = vunpack.c.l.b16 %v3331
        %v6460 = vunpack.c.h.b16 %v3331
        %v6461 = vunpack.c.l.b16 %v3332
        %v6462 = vunpack.c.h.b16 %v3332
        %v6463 = vunpack.c.l.b16 %v3333
        %v6464 = vunpack.c.h.b16 %v3333
        %v6465 = vunpack.c.l.b16 %v3334
        %v6466 = vunpack.c.h.b16 %v3334
        %v6467 = vunpack.c.l.b16 %v3335
        %v6468 = vunpack.c.h.b16 %v3335
        %v6469 = vunpack.c.l.b16 %v3336
        %v6470 = vunpack.c.h.b16 %v3336
        %v6471 = vunpack.c.l.b16 %v3337
        %v6472 = vunpack.c.h.b16 %v3337
        %v6473 = vunpack.c.l.b16 %v3338
        %v6474 = vunpack.c.h.b16 %v3338
        %v6475 = vunpack.c.l.b16 %v3339
        %v6476 = vunpack.c.h.b16 %v3339
        %v6477 = vunpack.c.l.b16 %v3340
        %v6478 = vunpack.c.h.b16 %v3340
        %v6479 = vunpack.c.l.b16 %v3341
        %v6480 = vunpack.c.h.b16 %v3341
        %v6481 = vunpack.c.l.b16 %v3342
        %v6482 = vunpack.c.h.b16 %v3342
        %v6483 = vunpack.c.l.b16 %v3343
        %v6484 = vunpack.c.h.b16 %v3343
        %v6485 = vunpack.c.l.b16 %v3344
        %v6486 = vunpack.c.h.b16 %v3344
        %v6487 = vunpack.c.l.b16 %v3345
        %v6488 = vunpack.c.h.b16 %v3345
        %v6489 = vunpack.c.l.b16 %v3346
        %v6490 = vunpack.c.h.b16 %v3346
        %v6491 = vunpack.c.l.b16 %v3347
        %v6492 = vunpack.c.h.b16 %v3347
        %v6493 = vunpack.c.l.b16 %v3348
        %v6494 = vunpack.c.h.b16 %v3348
        %v6495 = vunpack.c.l.b16 %v3349
        %v6496 = vunpack.c.h.b16 %v3349
        %v6497 = vunpack.c.l.b16 %v3350
        %v6498 = vunpack.c.h.b16 %v3350
        %v6499 = vunpack.c.l.b16 %v3351
        %v6500 = vunpack.c.h.b16 %v3351
        %v6501 = vunpack.c.l.b16 %v3352
        %v6502 = vunpack.c.h.b16 %v3352
        %v6503 = vunpack.c.l.b16 %v3353
        %v6504 = vunpack.c.h.b16 %v3353
        %v6505 = vunpack.c.l.b16 %v3354
        %v6506 = vunpack.c.h.b16 %v3354
        %v6507 = vunpack.c.l.b16 %v3355
        %v6508 = vunpack.c.h.b16 %v3355
        %v6509 = vunpack.c.l.b16 %v3356
        %v6510 = vunpack.c.h.b16 %v3356
        %v6511 = vunpack.c.l.b16 %v3357
        %v6512 = vunpack.c.h.b16 %v3357
        %v6513 = vunpack.c.l.b16 %v3358
        %v6514 = vunpack.c.h.b16 %v3358
        %v6515 = vunpack.c.l.b16 %v3359
        %v6516 = vunpack.c.h.b16 %v3359
        %v6517 = vunpack.c.l.b16 %v3360
        %v6518 = vunpack.c.h.b16 %v3360
        %v6519 = vunpack.c.l.b16 %v3361
        %v6520 = vunpack.c.h.b16 %v3361
        %v6521 = vunpack.c.l.b16 %v3362
        %v6522 = vunpack.c.h.b16 %v3362
        %v6523 = vunpack.c.l.b16 %v3363
        %v6524 = vunpack.c.h.b16 %v3363
        %v6525 = vunpack.c.l.b16 %v3364
        %v6526 = vunpack.c.h.b16 %v3364
        %v6527 = vunpack.c.l.b16 %v3365
        %v6528 = vunpack.c.h.b16 %v3365
        %v6529 = vunpack.c.l.b16 %v3366
        %v6530 = vunpack.c.h.b16 %v3366
        %v6531 = vunpack.c.l.b16 %v3367
        %v6532 = vunpack.c.h.b16 %v3367
        %v6533 = vunpack.c.l.b16 %v3368
        %v6534 = vunpack.c.h.b16 %v3368
        %v6535 = vunpack.c.l.b16 %v3369
        %v6536 = vunpack.c.h.b16 %v3369
        %v6537 = vunpack.c.l.b16 %v3370
        %v6538 = vunpack.c.h.b16 %v3370
        %v6539 = vunpack.c.l.b16 %v3371
        %v6540 = vunpack.c.h.b16 %v3371
        %v6541 = vunpack.c.l.b16 %v3372
        %v6542 = vunpack.c.h.b16 %v3372
        %v6543 = vunpack.c.l.b16 %v3373
        %v6544 = vunpack.c.h.b16 %v3373
        %v6545 = vunpack.c.l.b16 %v3374
        %v6546 = vunpack.c.h.b16 %v3374
        %v6547 = vunpack.c.l.b16 %v3375
        %v6548 = vunpack.c.h.b16 %v3375
        %v6549 = vunpack.c.l.b16 %v3376
        %v6550 = vunpack.c.h.b16 %v3376
        %v6551 = vunpack.c.l.b16 %v3377
        %v6552 = vunpack.c.h.b16 %v3377
        %v6553 = vunpack.c.l.b16 %v3378
        %v6554 = vunpack.c.h.b16 %v3378
        %v6555 = vunpack.c.l.b16 %v3379
        %v6556 = vunpack.c.h.b16 %v3379
        %v6557 = vunpack.c.l.b16 %v3380
        %v6558 = vunpack.c.h.b16 %v3380
        %v6559 = vunpack.c.l.b16 %v3381
        %v6560 = vunpack.c.h.b16 %v3381
        %v6561 = vunpack.c.l.b16 %v3382
        %v6562 = vunpack.c.h.b16 %v3382
        %v6563 = vunpack.c.l.b16 %v3383
        %v6564 = vunpack.c.h.b16 %v3383
        %v6565 = vunpack.c.l.b16 %v3384
        %v6566 = vunpack.c.h.b16 %v3384
        %v6567 = vunpack.c.l.b16 %v3385
        %v6568 = vunpack.c.h.b16 %v3385
        %v6569 = vunpack.c.l.b16 %v3386
        %v6570 = vunpack.c.h.b16 %v3386
        %v6571 = vunpack.c.l.b16 %v3387
        %v6572 = vunpack.c.h.b16 %v3387
        %v6573 = vunpack.c.l.b16 %v3388
        %v6574 = vunpack.c.h.b16 %v3388
        %v6575 = vunpack.c.l.b16 %v3389
        %v6576 = vunpack.c.h.b16 %v3389
        %v6577 = vunpack.c.l.b16 %v3390
        %v6578 = vunpack.c.h.b16 %v3390
        %v6579 = vunpack.c.l.b16 %v3391
        %v6580 = vunpack.c.h.b16 %v3391
        %v6581 = vunpack.c.l.b16 %v3392
        %v6582 = vunpack.c.h.b16 %v3392
        %v6583 = vunpack.c.l.b16 %v3393
        %v6584 = vunpack.c.h.b16 %v3393
        %v6585 = vunpack.c.l.b16 %v3394
        %v6586 = vunpack.c.h.b16 %v3394
        %v6587 = vunpack.c.l.b16 %v3395
        %v6588 = vunpack.c.h.b16 %v3395
        %v6589 = vunpack.c.l.b16 %v3396
        %v6590 = vunpack.c.h.b16 %v3396
        %v6591 = vunpack.c.l.b16 %v3397
        %v6592 = vunpack.c.h.b16 %v3397
        %v6593 = vunpack.c.l.b16 %v3398
        %v6594 = vunpack.c.h.b16 %v3398
        %v6595 = vunpack.c.l.b16 %v3399
        %v6596 = vunpack.c.h.b16 %v3399
        %v6597 = vunpack.c.l.b16 %v3400
        %v6598 = vunpack.c.h.b16 %v3400
        %v6599 = vunpack.c.l.b16 %v3401
        %v6600 = vunpack.c.h.b16 %v3401
        %v6601 = vunpack.c.l.b16 %v3402
        %v6602 = vunpack.c.h.b16 %v3402
        %v6603 = vunpack.c.l.b16 %v3403
        %v6604 = vunpack.c.h.b16 %v3403
        %v6605 = vunpack.c.l.b16 %v3404
        %v6606 = vunpack.c.h.b16 %v3404
        %v6607 = vunpack.c.l.b16 %v3405
        %v6608 = vunpack.c.h.b16 %v3405
        %v6609 = vunpack.c.l.b16 %v3406
        %v6610 = vunpack.c.h.b16 %v3406
        %v6611 = vunpack.c.l.b16 %v3407
        %v6612 = vunpack.c.h.b16 %v3407
        %v6613 = vunpack.c.l.b16 %v3408
        %v6614 = vunpack.c.h.b16 %v3408
        %v6615 = vunpack.c.l.b16 %v3409
        %v6616 = vunpack.c.h.b16 %v3409
        %v6617 = vunpack.c.l.b16 %v3410
        %v6618 = vunpack.c.h.b16 %v3410
        %v6619 = vunpack.c.l.b16 %v3411
        %v6620 = vunpack.c.h.b16 %v3411
        %v6621 = vunpack.c.l.b16 %v3412
        %v6622 = vunpack.c.h.b16 %v3412
        %v6623 = vunpack.c.l.b16 %v3413
        %v6624 = vunpack.c.h.b16 %v3413
        %v6625 = vunpack.c.l.b16 %v3414
        %v6626 = vunpack.c.h.b16 %v3414
        %v6627 = vunpack.c.l.b16 %v3415
        %v6628 = vunpack.c.h.b16 %v3415
        %v6629 = vunpack.c.l.b16 %v3416
        %v6630 = vunpack.c.h.b16 %v3416
        %v6631 = vunpack.c.l.b16 %v3417
        %v6632 = vunpack.c.h.b16 %v3417
        %v6633 = vunpack.c.l.b16 %v3418
        %v6634 = vunpack.c.h.b16 %v3418
        %v6635 = vunpack.c.l.b16 %v3419
        %v6636 = vunpack.c.h.b16 %v3419
        %v6637 = vunpack.c.l.b16 %v3420
        %v6638 = vunpack.c.h.b16 %v3420
        %v6639 = vunpack.c.l.b16 %v3421
        %v6640 = vunpack.c.h.b16 %v3421
        %v6641 = vunpack.c.l.b16 %v3422
        %v6642 = vunpack.c.h.b16 %v3422
        %v6643 = vunpack.c.l.b16 %v3423
        %v6644 = vunpack.c.h.b16 %v3423
        %v6645 = vunpack.c.l.b16 %v3424
        %v6646 = vunpack.c.h.b16 %v3424
        %v6647 = vunpack.c.l.b16 %v3425
        %v6648 = vunpack.c.h.b16 %v3425
        %v6649 = vunpack.c.l.b16 %v3426
        %v6650 = vunpack.c.h.b16 %v3426
        %v6651 = vunpack.c.l.b16 %v3427
        %v6652 = vunpack.c.h.b16 %v3427
        %v6653 = vunpack.c.l.b16 %v3428
        %v6654 = vunpack.c.h.b16 %v3428
        %v6655 = vunpack.c.l.b16 %v3429
        %v6656 = vunpack.c.h.b16 %v3429
        %v6657 = vunpack.c.l.b16 %v3430
        %v6658 = vunpack.c.h.b16 %v3430
        %v6659 = vunpack.c.l.b16 %v3431
        %v6660 = vunpack.c.h.b16 %v3431
        %v6661 = vunpack.c.l.b16 %v3432
        %v6662 = vunpack.c.h.b16 %v3432
        %v6663 = vunpack.c.l.b16 %v3433
        %v6664 = vunpack.c.h.b16 %v3433
        %v6665 = vunpack.c.l.b16 %v3434
        %v6666 = vunpack.c.h.b16 %v3434
        %v6667 = vunpack.c.l.b16 %v3435
        %v6668 = vunpack.c.h.b16 %v3435
        %v6669 = vunpack.c.l.b16 %v3436
        %v6670 = vunpack.c.h.b16 %v3436
        %v6671 = vunpack.c.l.b16 %v3437
        %v6672 = vunpack.c.h.b16 %v3437
        %v6673 = vunpack.c.l.b16 %v3438
        %v6674 = vunpack.c.h.b16 %v3438
        %v6675 = vunpack.c.l.b16 %v3439
        %v6676 = vunpack.c.h.b16 %v3439
        %v6677 = vunpack.c.l.b16 %v3440
        %v6678 = vunpack.c.h.b16 %v3440
        %v6679 = vunpack.c.l.b16 %v3441
        %v6680 = vunpack.c.h.b16 %v3441
        %v6681 = vunpack.c.l.b16 %v3442
        %v6682 = vunpack.c.h.b16 %v3442
        %v6683 = vunpack.c.l.b16 %v3443
        %v6684 = vunpack.c.h.b16 %v3443
        %v6685 = vunpack.c.l.b16 %v3444
        %v6686 = vunpack.c.h.b16 %v3444
        %v6687 = vunpack.c.l.b16 %v3445
        %v6688 = vunpack.c.h.b16 %v3445
        %v6689 = vunpack.c.l.b16 %v3446
        %v6690 = vunpack.c.h.b16 %v3446
        %v6691 = vunpack.c.l.b16 %v3447
        %v6692 = vunpack.c.h.b16 %v3447
        %v6693 = vunpack.c.l.b16 %v3448
        %v6694 = vunpack.c.h.b16 %v3448
        %v6695 = vunpack.c.l.b16 %v3449
        %v6696 = vunpack.c.h.b16 %v3449
        %v6697 = vunpack.c.l.b16 %v3450
        %v6698 = vunpack.c.h.b16 %v3450
        %v6699 = vunpack.c.l.b16 %v3451
        %v6700 = vunpack.c.h.b16 %v3451
        %v6701 = vunpack.c.l.b16 %v3452
        %v6702 = vunpack.c.h.b16 %v3452
        %v6703 = vunpack.c.l.b16 %v3453
        %v6704 = vunpack.c.h.b16 %v3453
        %v6705 = vunpack.c.l.b16 %v3454
        %v6706 = vunpack.c.h.b16 %v3454
        %v6707 = vunpack.c.l.b16 %v3455
        %v6708 = vunpack.c.h.b16 %v3455
        %v6709 = vunpack.c.l.b16 %v3456
        %v6710 = vunpack.c.h.b16 %v3456
        %v6711 = vunpack.c.l.b16 %v3457
        %v6712 = vunpack.c.h.b16 %v3457
        %v6713 = vunpack.c.l.b16 %v3458
        %v6714 = vunpack.c.h.b16 %v3458
        %v6715 = vunpack.c.l.b16 %v3459
        %v6716 = vunpack.c.h.b16 %v3459
        %v6717 = vunpack.c.l.b16 %v3460
        %v6718 = vunpack.c.h.b16 %v3460
        %v6719 = vunpack.c.l.b16 %v3461
        %v6720 = vunpack.c.h.b16 %v3461
        %v6721 = vunpack.c.l.b16 %v3462
        %v6722 = vunpack.c.h.b16 %v3462
        %v6723 = vunpack.c.l.b16 %v3463
        %v6724 = vunpack.c.h.b16 %v3463
        %v6725 = vunpack.c.l.b16 %v3464
        %v6726 = vunpack.c.h.b16 %v3464
        %v6727 = vunpack.c.l.b16 %v3465
        %v6728 = vunpack.c.h.b16 %v3465
        %v6729 = vunpack.c.l.b16 %v3466
        %v6730 = vunpack.c.h.b16 %v3466
        %v6731 = vunpack.c.l.b16 %v3467
        %v6732 = vunpack.c.h.b16 %v3467
        %v6733 = vunpack.c.l.b16 %v3468
        %v6734 = vunpack.c.h.b16 %v3468
        %v6735 = vunpack.c.l.b16 %v3469
        %v6736 = vunpack.c.h.b16 %v3469
        %v6737 = vunpack.c.l.b16 %v3470
        %v6738 = vunpack.c.h.b16 %v3470
        %v6739 = vunpack.c.l.b16 %v3471
        %v6740 = vunpack.c.h.b16 %v3471
        %v6741 = vunpack.c.l.b16 %v3472
        %v6742 = vunpack.c.h.b16 %v3472
        %v6743 = vunpack.c.l.b16 %v3473
        %v6744 = vunpack.c.h.b16 %v3473
        %v6745 = vunpack.c.l.b16 %v3474
        %v6746 = vunpack.c.h.b16 %v3474
        %v6747 = vunpack.c.l.b16 %v3475
        %v6748 = vunpack.c.h.b16 %v3475
        %v6749 = vunpack.c.l.b16 %v3476
        %v6750 = vunpack.c.h.b16 %v3476
        %v6751 = vunpack.c.l.b16 %v3477
        %v6752 = vunpack.c.h.b16 %v3477
        %v6753 = vunpack.c.l.b16 %v3478
        %v6754 = vunpack.c.h.b16 %v3478
        %v6755 = vunpack.c.l.b16 %v3479
        %v6756 = vunpack.c.h.b16 %v3479
        %v6757 = vunpack.c.l.b16 %v3480
        %v6758 = vunpack.c.h.b16 %v3480
        %v6759 = vunpack.c.l.b16 %v3481
        %v6760 = vunpack.c.h.b16 %v3481
        %v6761 = vunpack.c.l.b16 %v3482
        %v6762 = vunpack.c.h.b16 %v3482
        %v6763 = vunpack.c.l.b16 %v3483
        %v6764 = vunpack.c.h.b16 %v3483
        %v6765 = vunpack.c.l.b16 %v3484
        %v6766 = vunpack.c.h.b16 %v3484
        %v6767 = vunpack.c.l.b16 %v3485
        %v6768 = vunpack.c.h.b16 %v3485
        %v6769 = vunpack.c.l.b16 %v3486
        %v6770 = vunpack.c.h.b16 %v3486
        %v6771 = vunpack.c.l.b16 %v3487
        %v6772 = vunpack.c.h.b16 %v3487
        %v6773 = vunpack.c.l.b16 %v3488
        %v6774 = vunpack.c.h.b16 %v3488
        %v6775 = vunpack.c.l.b16 %v3489
        %v6776 = vunpack.c.h.b16 %v3489
        %v6777 = vunpack.c.l.b16 %v3490
        %v6778 = vunpack.c.h.b16 %v3490
        %v6779 = vunpack.c.l.b16 %v3491
        %v6780 = vunpack.c.h.b16 %v3491
        %v6781 = vunpack.c.l.b16 %v3492
        %v6782 = vunpack.c.h.b16 %v3492
        %v6783 = vunpack.c.l.b16 %v3493
        %v6784 = vunpack.c.h.b16 %v3493
        %v6785 = vunpack.c.l.b16 %v3494
        %v6786 = vunpack.c.h.b16 %v3494
        %v6787 = vunpack.c.l.b16 %v3495
        %v6788 = vunpack.c.h.b16 %v3495
        %v6789 = vunpack.c.l.b16 %v3496
        %v6790 = vunpack.c.h.b16 %v3496
        %v6791 = vunpack.c.l.b16 %v3497
        %v6792 = vunpack.c.h.b16 %v3497
        %v6793 = vunpack.c.l.b16 %v3498
        %v6794 = vunpack.c.h.b16 %v3498
        %v6795 = vunpack.c.l.b16 %v3499
        %v6796 = vunpack.c.h.b16 %v3499
        %v6797 = vunpack.c.l.b16 %v3500
        %v6798 = vunpack.c.h.b16 %v3500
        %v6799 = vunpack.c.l.b16 %v3501
        %v6800 = vunpack.c.h.b16 %v3501
        %v6801 = vunpack.c.l.b16 %v3502
        %v6802 = vunpack.c.h.b16 %v3502
        %v6803 = vunpack.c.l.b16 %v3503
        %v6804 = vunpack.c.h.b16 %v3503
        %v6805 = vunpack.c.l.b16 %v3504
        %v6806 = vunpack.c.h.b16 %v3504
        %v6807 = vunpack.c.l.b16 %v3505
        %v6808 = vunpack.c.h.b16 %v3505
        %v6809 = vunpack.c.l.b16 %v3506
        %v6810 = vunpack.c.h.b16 %v3506
        %v6811 = vunpack.c.l.b16 %v3507
        %v6812 = vunpack.c.h.b16 %v3507
        %v6813 = vunpack.c.l.b16 %v3508
        %v6814 = vunpack.c.h.b16 %v3508
        %v6815 = vunpack.c.l.b16 %v3509
        %v6816 = vunpack.c.h.b16 %v3509
        %v6817 = vunpack.c.l.b16 %v3510
        %v6818 = vunpack.c.h.b16 %v3510
        %v6819 = vunpack.c.l.b16 %v3511
        %v6820 = vunpack.c.h.b16 %v3511
        %v6821 = vunpack.c.l.b16 %v3512
        %v6822 = vunpack.c.h.b16 %v3512
        %v6823 = vunpack.c.l.b16 %v3513
        %v6824 = vunpack.c.h.b16 %v3513
        %v6825 = vunpack.c.l.b16 %v3514
        %v6826 = vunpack.c.h.b16 %v3514
        %v6827 = vunpack.c.l.b16 %v3515
        %v6828 = vunpack.c.h.b16 %v3515
        %v6829 = vunpack.c.l.b16 %v3516
        %v6830 = vunpack.c.h.b16 %v3516
        %v6831 = vunpack.c.l.b16 %v3517
        %v6832 = vunpack.c.h.b16 %v3517
        %v6833 = vunpack.c.l.b16 %v3518
        %v6834 = vunpack.c.h.b16 %v3518
        %v6835 = vunpack.c.l.b16 %v3519
        %v6836 = vunpack.c.h.b16 %v3519
        %v6837 = vunpack.c.l.b16 %v3520
        %v6838 = vunpack.c.h.b16 %v3520
        %v6839 = vunpack.c.l.b16 %v3521
        %v6840 = vunpack.c.h.b16 %v3521
        %v6841 = vunpack.c.l.b16 %v3522
        %v6842 = vunpack.c.h.b16 %v3522
        %v6843 = vunpack.c.l.b16 %v3523
        %v6844 = vunpack.c.h.b16 %v3523
        %v6845 = vunpack.c.l.b16 %v3524
        %v6846 = vunpack.c.h.b16 %v3524
        %v6847 = vunpack.c.l.b16 %v3525
        %v6848 = vunpack.c.h.b16 %v3525
        %v6849 = vunpack.c.l.b16 %v3526
        %v6850 = vunpack.c.h.b16 %v3526
        %v6851 = vunpack.c.l.b16 %v3527
        %v6852 = vunpack.c.h.b16 %v3527
        %v6853 = vunpack.c.l.b16 %v3528
        %v6854 = vunpack.c.h.b16 %v3528
        %v6855 = vunpack.c.l.b16 %v3529
        %v6856 = vunpack.c.h.b16 %v3529
        %v6857 = vunpack.c.l.b16 %v3530
        %v6858 = vunpack.c.h.b16 %v3530
        %v6859 = vunpack.c.l.b16 %v3531
        %v6860 = vunpack.c.h.b16 %v3531
        %v6861 = vunpack.c.l.b16 %v3532
        %v6862 = vunpack.c.h.b16 %v3532
        %v6863 = vunpack.c.l.b16 %v3533
        %v6864 = vunpack.c.h.b16 %v3533
        %v6865 = vunpack.c.l.b16 %v3534
        %v6866 = vunpack.c.h.b16 %v3534
        %v6867 = vunpack.c.l.b16 %v3535
        %v6868 = vunpack.c.h.b16 %v3535
        %v6869 = vunpack.c.l.b16 %v3536
        %v6870 = vunpack.c.h.b16 %v3536
        %v6871 = vunpack.c.l.b16 %v3537
        %v6872 = vunpack.c.h.b16 %v3537
        %v6873 = vunpack.c.l.b16 %v3538
        %v6874 = vunpack.c.h.b16 %v3538
        %v6875 = vunpack.c.l.b16 %v3539
        %v6876 = vunpack.c.h.b16 %v3539
        %v6877 = vunpack.c.l.b16 %v3540
        %v6878 = vunpack.c.h.b16 %v3540
        %v6879 = vunpack.c.l.b16 %v3541
        %v6880 = vunpack.c.h.b16 %v3541
        %v6881 = vunpack.c.l.b16 %v3542
        %v6882 = vunpack.c.h.b16 %v3542
        %v6883 = vunpack.c.l.b16 %v3543
        %v6884 = vunpack.c.h.b16 %v3543
        %v6885 = vunpack.c.l.b16 %v3544
        %v6886 = vunpack.c.h.b16 %v3544
        %v6887 = vunpack.c.l.b16 %v3545
        %v6888 = vunpack.c.h.b16 %v3545
        %v6889 = vunpack.c.l.b16 %v3546
        %v6890 = vunpack.c.h.b16 %v3546
        %v6891 = vunpack.c.l.b16 %v3547
        %v6892 = vunpack.c.h.b16 %v3547
        %v6893 = vunpack.c.l.b16 %v3548
        %v6894 = vunpack.c.h.b16 %v3548
        %v6895 = vunpack.c.l.b16 %v3549
        %v6896 = vunpack.c.h.b16 %v3549
        %v6897 = vunpack.c.l.b16 %v3550
        %v6898 = vunpack.c.h.b16 %v3550
        %v6899 = vunpack.c.l.b16 %v3551
        %v6900 = vunpack.c.h.b16 %v3551
        %v6901 = vunpack.c.l.b16 %v3552
        %v6902 = vunpack.c.h.b16 %v3552
        %v6903 = vunpack.c.l.b16 %v3553
        %v6904 = vunpack.c.h.b16 %v3553
        %v6905 = vunpack.c.l.b16 %v3554
        %v6906 = vunpack.c.h.b16 %v3554
        %v6907 = vunpack.c.l.b16 %v3555
        %v6908 = vunpack.c.h.b16 %v3555
        %v6909 = vunpack.c.l.b16 %v3556
        %v6910 = vunpack.c.h.b16 %v3556
        %v6911 = vunpack.c.l.b16 %v3557
        %v6912 = vunpack.c.h.b16 %v3557
        %v6913 = vunpack.c.l.b16 %v3558
        %v6914 = vunpack.c.h.b16 %v3558
        %v6915 = vunpack.c.l.b16 %v3559
        %v6916 = vunpack.c.h.b16 %v3559
        %v6917 = vunpack.c.l.b16 %v3560
        %v6918 = vunpack.c.h.b16 %v3560
        %v6919 = vunpack.c.l.b16 %v3561
        %v6920 = vunpack.c.h.b16 %v3561
        %v6921 = vunpack.c.l.b16 %v3562
        %v6922 = vunpack.c.h.b16 %v3562
        %v6923 = vunpack.c.l.b16 %v3563
        %v6924 = vunpack.c.h.b16 %v3563
        %v6925 = vunpack.c.l.b16 %v3564
        %v6926 = vunpack.c.h.b16 %v3564
        %v6927 = vunpack.c.l.b16 %v3565
        %v6928 = vunpack.c.h.b16 %v3565
        %v6929 = vunpack.c.l.b16 %v3566
        %v6930 = vunpack.c.h.b16 %v3566
        %v6931 = vunpack.c.l.b16 %v3567
        %v6932 = vunpack.c.h.b16 %v3567
        %v6933 = vunpack.c.l.b16 %v3568
        %v6934 = vunpack.c.h.b16 %v3568
        %v6935 = vunpack.c.l.b16 %v3569
        %v6936 = vunpack.c.h.b16 %v3569
        %v6937 = vunpack.c.l.b16 %v3570
        %v6938 = vunpack.c.h.b16 %v3570
        %v6939 = vunpack.c.l.b16 %v3571
        %v6940 = vunpack.c.h.b16 %v3571
        %v6941 = vunpack.c.l.b16 %v3572
        %v6942 = vunpack.c.h.b16 %v3572
        %v6943 = vunpack.c.l.b16 %v3573
        %v6944 = vunpack.c.h.b16 %v3573
        %v6945 = vunpack.c.l.b16 %v3574
        %v6946 = vunpack.c.h.b16 %v3574
        %v6947 = vunpack.c.l.b16 %v3575
        %v6948 = vunpack.c.h.b16 %v3575
        %v6949 = vunpack.c.l.b16 %v3576
        %v6950 = vunpack.c.h.b16 %v3576
        %v6951 = vunpack.c.l.b16 %v3577
        %v6952 = vunpack.c.h.b16 %v3577
        %v6953 = vunpack.c.l.b16 %v3578
        %v6954 = vunpack.c.h.b16 %v3578
        %v6955 = vunpack.c.l.b16 %v3579
        %v6956 = vunpack.c.h.b16 %v3579
        %v6957 = vunpack.c.l.b16 %v3580
        %v6958 = vunpack.c.h.b16 %v3580
        %v6959 = vunpack.c.l.b16 %v3581
        %v6960 = vunpack.c.h.b16 %v3581
        %v6961 = vunpack.c.l.b16 %v3582
        %v6962 = vunpack.c.h.b16 %v3582
        %v6963 = vunpack.c.l.b16 %v3583
        %v6964 = vunpack.c.h.b16 %v3583
        %v6965 = vunpack.c.l.b16 %v3584
        %v6966 = vunpack.c.h.b16 %v3584
        %v6967 = vunpack.c.l.b16 %v3585
        %v6968 = vunpack.c.h.b16 %v3585
        %v6969 = vunpack.c.l.b16 %v3586
        %v6970 = vunpack.c.h.b16 %v3586
        %v6971 = vunpack.c.l.b16 %v3587
        %v6972 = vunpack.c.h.b16 %v3587
        %v6973 = vunpack.c.l.b16 %v3588
        %v6974 = vunpack.c.h.b16 %v3588
        %v6975 = vunpack.c.l.b16 %v3589
        %v6976 = vunpack.c.h.b16 %v3589
        %v6977 = vunpack.c.l.b16 %v3590
        %v6978 = vunpack.c.h.b16 %v3590
        %v6979 = vunpack.c.l.b16 %v3591
        %v6980 = vunpack.c.h.b16 %v3591
        %v6981 = vunpack.c.l.b16 %v3592
        %v6982 = vunpack.c.h.b16 %v3592
        %v6983 = vunpack.c.l.b16 %v3593
        %v6984 = vunpack.c.h.b16 %v3593
        %v6985 = vunpack.c.l.b16 %v3594
        %v6986 = vunpack.c.h.b16 %v3594
        %v6987 = vunpack.c.l.b16 %v3595
        %v6988 = vunpack.c.h.b16 %v3595
        %v6989 = vunpack.c.l.b16 %v3596
        %v6990 = vunpack.c.h.b16 %v3596
        %v6991 = vunpack.c.l.b16 %v3597
        %v6992 = vunpack.c.h.b16 %v3597
        %v6993 = vunpack.c.l.b16 %v3598
        %v6994 = vunpack.c.h.b16 %v3598
        %v6995 = vunpack.c.l.b16 %v3599
        %v6996 = vunpack.c.h.b16 %v3599
        %v6997 = vunpack.c.l.b16 %v3600
        %v6998 = vunpack.c.h.b16 %v3600
        %v6999 = vunpack.c.l.b16 %v3601
        %v7000 = vunpack.c.h.b16 %v3601
        %v7001 = vunpack.c.l.b16 %v3602
        %v7002 = vunpack.c.h.b16 %v3602
        %v7003 = vunpack.c.l.b16 %v3603
        %v7004 = vunpack.c.h.b16 %v3603
        %v7005 = vunpack.c.l.b16 %v3604
        %v7006 = vunpack.c.h.b16 %v3604
        %v7007 = vunpack.c.l.b16 %v3605
        %v7008 = vunpack.c.h.b16 %v3605
        %v7009 = vunpack.c.l.b16 %v3606
        %v7010 = vunpack.c.h.b16 %v3606
        %v7011 = vunpack.c.l.b16 %v3607
        %v7012 = vunpack.c.h.b16 %v3607
        %v7013 = vunpack.c.l.b16 %v3608
        %v7014 = vunpack.c.h.b16 %v3608
        %v7015 = vunpack.c.l.b16 %v3609
        %v7016 = vunpack.c.h.b16 %v3609
        %v7017 = vunpack.c.l.b16 %v3610
        %v7018 = vunpack.c.h.b16 %v3610
        %v7019 = vunpack.c.l.b16 %v3611
        %v7020 = vunpack.c.h.b16 %v3611
        %v7021 = vunpack.c.l.b16 %v3612
        %v7022 = vunpack.c.h.b16 %v3612
        %v7023 = vunpack.c.l.b16 %v3613
        %v7024 = vunpack.c.h.b16 %v3613
        %v7025 = vunpack.c.l.b16 %v3614
        %v7026 = vunpack.c.h.b16 %v3614
        %v7027 = vunpack.c.l.b16 %v3615
        %v7028 = vunpack.c.h.b16 %v3615
        %v7029 = vunpack.c.l.b16 %v3616
        %v7030 = vunpack.c.h.b16 %v3616
        %v7031 = vunpack.c.l.b16 %v3617
        %v7032 = vunpack.c.h.b16 %v3617
        %v7033 = vunpack.c.l.b16 %v3618
        %v7034 = vunpack.c.h.b16 %v3618
        %v7035 = vunpack.c.l.b16 %v3619
        %v7036 = vunpack.c.h.b16 %v3619
        %v7037 = vunpack.c.l.b16 %v3620
        %v7038 = vunpack.c.h.b16 %v3620
        %v7039 = vunpack.c.l.b16 %v3621
        %v7040 = vunpack.c.h.b16 %v3621
        %v7041 = vunpack.c.l.b16 %v3622
        %v7042 = vunpack.c.h.b16 %v3622
        %v7043 = vunpack.c.l.b16 %v3623
        %v7044 = vunpack.c.h.b16 %v3623
        %v7045 = vunpack.c.l.b16 %v3624
        %v7046 = vunpack.c.h.b16 %v3624
        %v7047 = vunpack.c.l.b16 %v3625
        %v7048 = vunpack.c.h.b16 %v3625
        %v7049 = vunpack.c.l.b16 %v3626
        %v7050 = vunpack.c.h.b16 %v3626
        %v7051 = vunpack.c.l.b16 %v3627
        %v7052 = vunpack.c.h.b16 %v3627
        %v7053 = vunpack.c.l.b16 %v3628
        %v7054 = vunpack.c.h.b16 %v3628
        %v7055 = vunpack.c.l.b16 %v3629
        %v7056 = vunpack.c.h.b16 %v3629
        %v7057 = vunpack.c.l.b16 %v3630
        %v7058 = vunpack.c.h.b16 %v3630
        %v7059 = vunpack.c.l.b16 %v3631
        %v7060 = vunpack.c.h.b16 %v3631
        %v7061 = vunpack.c.l.b16 %v3632
        %v7062 = vunpack.c.h.b16 %v3632
        %v7063 = vunpack.c.l.b16 %v3633
        %v7064 = vunpack.c.h.b16 %v3633
        %v7065 = vunpack.c.l.b16 %v3634
        %v7066 = vunpack.c.h.b16 %v3634
        %v7067 = vunpack.c.l.b16 %v3635
        %v7068 = vunpack.c.h.b16 %v3635
        %v7069 = vunpack.c.l.b16 %v3636
        %v7070 = vunpack.c.h.b16 %v3636
        %v7071 = vunpack.c.l.b16 %v3637
        %v7072 = vunpack.c.h.b16 %v3637
        %v7073 = vunpack.c.l.b16 %v3638
        %v7074 = vunpack.c.h.b16 %v3638
        %v7075 = vunpack.c.l.b16 %v3639
        %v7076 = vunpack.c.h.b16 %v3639
        %v7077 = vunpack.c.l.b16 %v3640
        %v7078 = vunpack.c.h.b16 %v3640
        %v7079 = vunpack.c.l.b16 %v3641
        %v7080 = vunpack.c.h.b16 %v3641
        %v7081 = vunpack.c.l.b16 %v3642
        %v7082 = vunpack.c.h.b16 %v3642
        %v7083 = vunpack.c.l.b16 %v3643
        %v7084 = vunpack.c.h.b16 %v3643
        %v7085 = vunpack.c.l.b16 %v3644
        %v7086 = vunpack.c.h.b16 %v3644
        %v7087 = vunpack.c.l.b16 %v3645
        %v7088 = vunpack.c.h.b16 %v3645
        %v7089 = vunpack.c.l.b16 %v3646
        %v7090 = vunpack.c.h.b16 %v3646
        %v7091 = vunpack.c.l.b16 %v3647
        %v7092 = vunpack.c.h.b16 %v3647
        %v7093 = vunpack.c.l.b16 %v3648
        %v7094 = vunpack.c.h.b16 %v3648
        %v7095 = vunpack.c.l.b16 %v3649
        %v7096 = vunpack.c.h.b16 %v3649
        %v7097 = vunpack.c.l.b16 %v3650
        %v7098 = vunpack.c.h.b16 %v3650
        %v7099 = vunpack.c.l.b16 %v3651
        %v7100 = vunpack.c.h.b16 %v3651
        %v7101 = vunpack.c.l.b16 %v3652
        %v7102 = vunpack.c.h.b16 %v3652
        %v7103 = vunpack.c.l.b16 %v3653
        %v7104 = vunpack.c.h.b16 %v3653
        %v7105 = vunpack.c.l.b16 %v3654
        %v7106 = vunpack.c.h.b16 %v3654
        %v7107 = vunpack.c.l.b16 %v3655
        %v7108 = vunpack.c.h.b16 %v3655
        %v7109 = vunpack.c.l.b16 %v3656
        %v7110 = vunpack.c.h.b16 %v3656
        %v7111 = vunpack.c.l.b16 %v3657
        %v7112 = vunpack.c.h.b16 %v3657
        %v7113 = vunpack.c.l.b16 %v3658
        %v7114 = vunpack.c.h.b16 %v3658
        %v7115 = vpack.c.b16 %v4815, %v4811
        %v7116 = vpack.c.b16 %v4816, %v4812
        %v7117 = vpack.c.b16 %v4817, %v4813
        %v7118 = vpack.c.b16 %v4818, %v4814
        %v7119 = vpack.c.b16 %v4823, %v4819
        %v7120 = vpack.c.b16 %v4824, %v4820
        %v7121 = vpack.c.b16 %v4825, %v4821
        %v7122 = vpack.c.b16 %v4826, %v4822
        %v7123 = vpack.c.b16 %v4831, %v4827
        %v7124 = vpack.c.b16 %v4832, %v4828
        %v7125 = vpack.c.b16 %v4833, %v4829
        %v7126 = vpack.c.b16 %v4834, %v4830
        %v7127 = vpack.c.b16 %v4839, %v4835
        %v7128 = vpack.c.b16 %v4840, %v4836
        %v7129 = vpack.c.b16 %v4841, %v4837
        %v7130 = vpack.c.b16 %v4842, %v4838
        %v7131 = vpack.c.b16 %v4847, %v4843
        %v7132 = vpack.c.b16 %v4848, %v4844
        %v7133 = vpack.c.b16 %v4849, %v4845
        %v7134 = vpack.c.b16 %v4850, %v4846
        %v7135 = vpack.c.b16 %v4855, %v4851
        %v7136 = vpack.c.b16 %v4856, %v4852
        %v7137 = vpack.c.b16 %v4857, %v4853
        %v7138 = vpack.c.b16 %v4858, %v4854
        %v7139 = vpack.c.b16 %v4863, %v4859
        %v7140 = vpack.c.b16 %v4864, %v4860
        %v7141 = vpack.c.b16 %v4865, %v4861
        %v7142 = vpack.c.b16 %v4866, %v4862
        %v7143 = vpack.c.b16 %v4871, %v4867
        %v7144 = vpack.c.b16 %v4872, %v4868
        %v7145 = vpack.c.b16 %v4873, %v4869
        %v7146 = vpack.c.b16 %v4874, %v4870
        %v7147 = vpack.c.b16 %v4879, %v4875
        %v7148 = vpack.c.b16 %v4880, %v4876
        %v7149 = vpack.c.b16 %v4881, %v4877
        %v7150 = vpack.c.b16 %v4882, %v4878
        %v7151 = vpack.c.b16 %v4887, %v4883
        %v7152 = vpack.c.b16 %v4888, %v4884
        %v7153 = vpack.c.b16 %v4889, %v4885
        %v7154 = vpack.c.b16 %v4890, %v4886
        %v7155 = vpack.c.b16 %v4895, %v4891
        %v7156 = vpack.c.b16 %v4896, %v4892
        %v7157 = vpack.c.b16 %v4897, %v4893
        %v7158 = vpack.c.b16 %v4898, %v4894
        %v7159 = vpack.c.b16 %v4903, %v4899
        %v7160 = vpack.c.b16 %v4904, %v4900
        %v7161 = vpack.c.b16 %v4905, %v4901
        %v7162 = vpack.c.b16 %v4906, %v4902
        %v7163 = vpack.c.b16 %v4911, %v4907
        %v7164 = vpack.c.b16 %v4912, %v4908
        %v7165 = vpack.c.b16 %v4913, %v4909
        %v7166 = vpack.c.b16 %v4914, %v4910
        %v7167 = vpack.c.b16 %v4919, %v4915
        %v7168 = vpack.c.b16 %v4920, %v4916
        %v7169 = vpack.c.b16 %v4921, %v4917
        %v7170 = vpack.c.b16 %v4922, %v4918
        %v7171 = vpack.c.b16 %v4927, %v4923
        %v7172 = vpack.c.b16 %v4928, %v4924
        %v7173 = vpack.c.b16 %v4929, %v4925
        %v7174 = vpack.c.b16 %v4930, %v4926
        %v7175 = vpack.c.b16 %v4935, %v4931
        %v7176 = vpack.c.b16 %v4936, %v4932
        %v7177 = vpack.c.b16 %v4937, %v4933
        %v7178 = vpack.c.b16 %v4938, %v4934
        %v7179 = vpack.c.b16 %v4943, %v4939
        %v7180 = vpack.c.b16 %v4944, %v4940
        %v7181 = vpack.c.b16 %v4945, %v4941
        %v7182 = vpack.c.b16 %v4946, %v4942
        %v7183 = vpack.c.b16 %v4951, %v4947
        %v7184 = vpack.c.b16 %v4952, %v4948
        %v7185 = vpack.c.b16 %v4953, %v4949
        %v7186 = vpack.c.b16 %v4954, %v4950
        %v7187 = vpack.c.b16 %v4959, %v4955
        %v7188 = vpack.c.b16 %v4960, %v4956
        %v7189 = vpack.c.b16 %v4961, %v4957
        %v7190 = vpack.c.b16 %v4962, %v4958
        %v7191 = vpack.c.b16 %v4967, %v4963
        %v7192 = vpack.c.b16 %v4968, %v4964
        %v7193 = vpack.c.b16 %v4969, %v4965
        %v7194 = vpack.c.b16 %v4970, %v4966
        %v7195 = vpack.c.b16 %v4975, %v4971
        %v7196 = vpack.c.b16 %v4976, %v4972
        %v7197 = vpack.c.b16 %v4977, %v4973
        %v7198 = vpack.c.b16 %v4978, %v4974
        %v7199 = vpack.c.b16 %v4983, %v4979
        %v7200 = vpack.c.b16 %v4984, %v4980
        %v7201 = vpack.c.b16 %v4985, %v4981
        %v7202 = vpack.c.b16 %v4986, %v4982
        %v7203 = vpack.c.b16 %v4991, %v4987
        %v7204 = vpack.c.b16 %v4992, %v4988
        %v7205 = vpack.c.b16 %v4993, %v4989
        %v7206 = vpack.c.b16 %v4994, %v4990
        %v7207 = vpack.c.b16 %v4999, %v4995
        %v7208 = vpack.c.b16 %v5000, %v4996
        %v7209 = vpack.c.b16 %v5001, %v4997
        %v7210 = vpack.c.b16 %v5002, %v4998
        %v7211 = vpack.c.b16 %v5007, %v5003
        %v7212 = vpack.c.b16 %v5008, %v5004
        %v7213 = vpack.c.b16 %v5009, %v5005
        %v7214 = vpack.c.b16 %v5010, %v5006
        %v7215 = vpack.c.b16 %v5015, %v5011
        %v7216 = vpack.c.b16 %v5016, %v5012
        %v7217 = vpack.c.b16 %v5017, %v5013
        %v7218 = vpack.c.b16 %v5018, %v5014
        %v7219 = vpack.c.b16 %v5023, %v5019
        %v7220 = vpack.c.b16 %v5024, %v5020
        %v7221 = vpack.c.b16 %v5025, %v5021
        %v7222 = vpack.c.b16 %v5026, %v5022
        %v7223 = vpack.c.b16 %v5031, %v5027
        %v7224 = vpack.c.b16 %v5032, %v5028
        %v7225 = vpack.c.b16 %v5033, %v5029
        %v7226 = vpack.c.b16 %v5034, %v5030
        %v7227 = vpack.c.b16 %v5039, %v5035
        %v7228 = vpack.c.b16 %v5040, %v5036
        %v7229 = vpack.c.b16 %v5041, %v5037
        %v7230 = vpack.c.b16 %v5042, %v5038
        %v7231 = vpack.c.b16 %v5047, %v5043
        %v7232 = vpack.c.b16 %v5048, %v5044
        %v7233 = vpack.c.b16 %v5049, %v5045
        %v7234 = vpack.c.b16 %v5050, %v5046
        %v7235 = vpack.c.b16 %v5055, %v5051
        %v7236 = vpack.c.b16 %v5056, %v5052
        %v7237 = vpack.c.b16 %v5057, %v5053
        %v7238 = vpack.c.b16 %v5058, %v5054
        %v7239 = vpack.c.b16 %v5063, %v5059
        %v7240 = vpack.c.b16 %v5064, %v5060
        %v7241 = vpack.c.b16 %v5065, %v5061
        %v7242 = vpack.c.b16 %v5066, %v5062
        %v7243 = vpack.c.b16 %v5071, %v5067
        %v7244 = vpack.c.b16 %v5072, %v5068
        %v7245 = vpack.c.b16 %v5073, %v5069
        %v7246 = vpack.c.b16 %v5074, %v5070
        %v7247 = vpack.c.b16 %v5079, %v5075
        %v7248 = vpack.c.b16 %v5080, %v5076
        %v7249 = vpack.c.b16 %v5081, %v5077
        %v7250 = vpack.c.b16 %v5082, %v5078
        %v7251 = vpack.c.b16 %v5087, %v5083
        %v7252 = vpack.c.b16 %v5088, %v5084
        %v7253 = vpack.c.b16 %v5089, %v5085
        %v7254 = vpack.c.b16 %v5090, %v5086
        %v7255 = vpack.c.b16 %v5095, %v5091
        %v7256 = vpack.c.b16 %v5096, %v5092
        %v7257 = vpack.c.b16 %v5097, %v5093
        %v7258 = vpack.c.b16 %v5098, %v5094
        %v7259 = vpack.c.b16 %v5103, %v5099
        %v7260 = vpack.c.b16 %v5104, %v5100
        %v7261 = vpack.c.b16 %v5105, %v5101
        %v7262 = vpack.c.b16 %v5106, %v5102
        %v7263 = vpack.c.b16 %v5111, %v5107
        %v7264 = vpack.c.b16 %v5112, %v5108
        %v7265 = vpack.c.b16 %v5113, %v5109
        %v7266 = vpack.c.b16 %v5114, %v5110
        %v7267 = vpack.c.b16 %v5119, %v5115
        %v7268 = vpack.c.b16 %v5120, %v5116
        %v7269 = vpack.c.b16 %v5121, %v5117
        %v7270 = vpack.c.b16 %v5122, %v5118
        %v7271 = vpack.c.b16 %v5127, %v5123
        %v7272 = vpack.c.b16 %v5128, %v5124
        %v7273 = vpack.c.b16 %v5129, %v5125
        %v7274 = vpack.c.b16 %v5130, %v5126
        %v7275 = vpack.c.b16 %v5135, %v5131
        %v7276 = vpack.c.b16 %v5136, %v5132
        %v7277 = vpack.c.b16 %v5137, %v5133
        %v7278 = vpack.c.b16 %v5138, %v5134
        %v7279 = vpack.c.b16 %v5143, %v5139
        %v7280 = vpack.c.b16 %v5144, %v5140
        %v7281 = vpack.c.b16 %v5145, %v5141
        %v7282 = vpack.c.b16 %v5146, %v5142
        %v7283 = vpack.c.b16 %v5151, %v5147
        %v7284 = vpack.c.b16 %v5152, %v5148
        %v7285 = vpack.c.b16 %v5153, %v5149
        %v7286 = vpack.c.b16 %v5154, %v5150
        %v7287 = vpack.c.b16 %v5159, %v5155
        %v7288 = vpack.c.b16 %v5160, %v5156
        %v7289 = vpack.c.b16 %v5161, %v5157
        %v7290 = vpack.c.b16 %v5162, %v5158
        %v7291 = vpack.c.b16 %v5167, %v5163
        %v7292 = vpack.c.b16 %v5168, %v5164
        %v7293 = vpack.c.b16 %v5169, %v5165
        %v7294 = vpack.c.b16 %v5170, %v5166
        %v7295 = vpack.c.b16 %v5175, %v5171
        %v7296 = vpack.c.b16 %v5176, %v5172
        %v7297 = vpack.c.b16 %v5177, %v5173
        %v7298 = vpack.c.b16 %v5178, %v5174
        %v7299 = vpack.c.b16 %v5183, %v5179
        %v7300 = vpack.c.b16 %v5184, %v5180
        %v7301 = vpack.c.b16 %v5185, %v5181
        %v7302 = vpack.c.b16 %v5186, %v5182
        %v7303 = vpack.c.b16 %v5191, %v5187
        %v7304 = vpack.c.b16 %v5192, %v5188
        %v7305 = vpack.c.b16 %v5193, %v5189
        %v7306 = vpack.c.b16 %v5194, %v5190
        %v7307 = vpack.c.b16 %v5199, %v5195
        %v7308 = vpack.c.b16 %v5200, %v5196
        %v7309 = vpack.c.b16 %v5201, %v5197
        %v7310 = vpack.c.b16 %v5202, %v5198
        %v7311 = vpack.c.b16 %v5207, %v5203
        %v7312 = vpack.c.b16 %v5208, %v5204
        %v7313 = vpack.c.b16 %v5209, %v5205
        %v7314 = vpack.c.b16 %v5210, %v5206
        %v7315 = vpack.c.b16 %v5215, %v5211
        %v7316 = vpack.c.b16 %v5216, %v5212
        %v7317 = vpack.c.b16 %v5217, %v5213
        %v7318 = vpack.c.b16 %v5218, %v5214
        %v7319 = vpack.c.b16 %v5223, %v5219
        %v7320 = vpack.c.b16 %v5224, %v5220
        %v7321 = vpack.c.b16 %v5225, %v5221
        %v7322 = vpack.c.b16 %v5226, %v5222
        %v7323 = vpack.c.b16 %v5231, %v5227
        %v7324 = vpack.c.b16 %v5232, %v5228
        %v7325 = vpack.c.b16 %v5233, %v5229
        %v7326 = vpack.c.b16 %v5234, %v5230
        %v7327 = vpack.c.b16 %v5239, %v5235
        %v7328 = vpack.c.b16 %v5240, %v5236
        %v7329 = vpack.c.b16 %v5241, %v5237
        %v7330 = vpack.c.b16 %v5242, %v5238
        %v7331 = vpack.c.b16 %v5247, %v5243
        %v7332 = vpack.c.b16 %v5248, %v5244
        %v7333 = vpack.c.b16 %v5249, %v5245
        %v7334 = vpack.c.b16 %v5250, %v5246
        %v7335 = vpack.c.b16 %v5255, %v5251
        %v7336 = vpack.c.b16 %v5256, %v5252
        %v7337 = vpack.c.b16 %v5257, %v5253
        %v7338 = vpack.c.b16 %v5258, %v5254
        %v7339 = vpack.c.b16 %v5263, %v5259
        %v7340 = vpack.c.b16 %v5264, %v5260
        %v7341 = vpack.c.b16 %v5265, %v5261
        %v7342 = vpack.c.b16 %v5266, %v5262
        %v7343 = vpack.c.b16 %v5271, %v5267
        %v7344 = vpack.c.b16 %v5272, %v5268
        %v7345 = vpack.c.b16 %v5273, %v5269
        %v7346 = vpack.c.b16 %v5274, %v5270
        %v7347 = vpack.c.b16 %v5279, %v5275
        %v7348 = vpack.c.b16 %v5280, %v5276
        %v7349 = vpack.c.b16 %v5281, %v5277
        %v7350 = vpack.c.b16 %v5282, %v5278
        %v7351 = vpack.c.b16 %v5287, %v5283
        %v7352 = vpack.c.b16 %v5288, %v5284
        %v7353 = vpack.c.b16 %v5289, %v5285
        %v7354 = vpack.c.b16 %v5290, %v5286
        %v7355 = vpack.c.b16 %v5295, %v5291
        %v7356 = vpack.c.b16 %v5296, %v5292
        %v7357 = vpack.c.b16 %v5297, %v5293
        %v7358 = vpack.c.b16 %v5298, %v5294
        %v7359 = vpack.c.b16 %v5303, %v5299
        %v7360 = vpack.c.b16 %v5304, %v5300
        %v7361 = vpack.c.b16 %v5305, %v5301
        %v7362 = vpack.c.b16 %v5306, %v5302
        %v7363 = vpack.c.b16 %v5311, %v5307
        %v7364 = vpack.c.b16 %v5312, %v5308
        %v7365 = vpack.c.b16 %v5313, %v5309
        %v7366 = vpack.c.b16 %v5314, %v5310
        %v7367 = vpack.c.b16 %v5319, %v5315
        %v7368 = vpack.c.b16 %v5320, %v5316
        %v7369 = vpack.c.b16 %v5321, %v5317
        %v7370 = vpack.c.b16 %v5322, %v5318
        %v7371 = vpack.c.b16 %v5327, %v5323
        %v7372 = vpack.c.b16 %v5328, %v5324
        %v7373 = vpack.c.b16 %v5329, %v5325
        %v7374 = vpack.c.b16 %v5330, %v5326
        %v7375 = vpack.c.b16 %v5335, %v5331
        %v7376 = vpack.c.b16 %v5336, %v5332
        %v7377 = vpack.c.b16 %v5337, %v5333
        %v7378 = vpack.c.b16 %v5338, %v5334
        %v7379 = vpack.c.b16 %v5343, %v5339
        %v7380 = vpack.c.b16 %v5344, %v5340
        %v7381 = vpack.c.b16 %v5345, %v5341
        %v7382 = vpack.c.b16 %v5346, %v5342
        %v7383 = vpack.c.b16 %v5351, %v5347
        %v7384 = vpack.c.b16 %v5352, %v5348
        %v7385 = vpack.c.b16 %v5353, %v5349
        %v7386 = vpack.c.b16 %v5354, %v5350
        %v7387 = vpack.c.b16 %v5359, %v5355
        %v7388 = vpack.c.b16 %v5360, %v5356
        %v7389 = vpack.c.b16 %v5361, %v5357
        %v7390 = vpack.c.b16 %v5362, %v5358
        %v7391 = vpack.c.b16 %v5367, %v5363
        %v7392 = vpack.c.b16 %v5368, %v5364
        %v7393 = vpack.c.b16 %v5369, %v5365
        %v7394 = vpack.c.b16 %v5370, %v5366
        %v7395 = vpack.c.b16 %v5375, %v5371
        %v7396 = vpack.c.b16 %v5376, %v5372
        %v7397 = vpack.c.b16 %v5377, %v5373
        %v7398 = vpack.c.b16 %v5378, %v5374
        %v7399 = vpack.c.b16 %v5383, %v5379
        %v7400 = vpack.c.b16 %v5384, %v5380
        %v7401 = vpack.c.b16 %v5385, %v5381
        %v7402 = vpack.c.b16 %v5386, %v5382
        %v7403 = vpack.c.b16 %v5391, %v5387
        %v7404 = vpack.c.b16 %v5392, %v5388
        %v7405 = vpack.c.b16 %v5393, %v5389
        %v7406 = vpack.c.b16 %v5394, %v5390
        %v7407 = vpack.c.b16 %v5399, %v5395
        %v7408 = vpack.c.b16 %v5400, %v5396
        %v7409 = vpack.c.b16 %v5401, %v5397
        %v7410 = vpack.c.b16 %v5402, %v5398
        %v7411 = vpack.c.b16 %v5407, %v5403
        %v7412 = vpack.c.b16 %v5408, %v5404
        %v7413 = vpack.c.b16 %v5409, %v5405
        %v7414 = vpack.c.b16 %v5410, %v5406
        %v7415 = vpack.c.b16 %v5415, %v5411
        %v7416 = vpack.c.b16 %v5416, %v5412
        %v7417 = vpack.c.b16 %v5417, %v5413
        %v7418 = vpack.c.b16 %v5418, %v5414
        %v7419 = vpack.c.b16 %v5423, %v5419
        %v7420 = vpack.c.b16 %v5424, %v5420
        %v7421 = vpack.c.b16 %v5425, %v5421
        %v7422 = vpack.c.b16 %v5426, %v5422
        %v7423 = vpack.c.b16 %v5431, %v5427
        %v7424 = vpack.c.b16 %v5432, %v5428
        %v7425 = vpack.c.b16 %v5433, %v5429
        %v7426 = vpack.c.b16 %v5434, %v5430
        %v7427 = vpack.c.b16 %v5439, %v5435
        %v7428 = vpack.c.b16 %v5440, %v5436
        %v7429 = vpack.c.b16 %v5441, %v5437
        %v7430 = vpack.c.b16 %v5442, %v5438
        %v7431 = vpack.c.b16 %v5447, %v5443
        %v7432 = vpack.c.b16 %v5448, %v5444
        %v7433 = vpack.c.b16 %v5449, %v5445
        %v7434 = vpack.c.b16 %v5450, %v5446
        %v7435 = vpack.c.b16 %v5455, %v5451
        %v7436 = vpack.c.b16 %v5456, %v5452
        %v7437 = vpack.c.b16 %v5457, %v5453
        %v7438 = vpack.c.b16 %v5458, %v5454
        %v7439 = vpack.c.b16 %v5463, %v5459
        %v7440 = vpack.c.b16 %v5464, %v5460
        %v7441 = vpack.c.b16 %v5465, %v5461
        %v7442 = vpack.c.b16 %v5466, %v5462
        %v7443 = vpack.c.b16 %v5471, %v5467
        %v7444 = vpack.c.b16 %v5472, %v5468
        %v7445 = vpack.c.b16 %v5473, %v5469
        %v7446 = vpack.c.b16 %v5474, %v5470
        %v7447 = vpack.c.b16 %v5479, %v5475
        %v7448 = vpack.c.b16 %v5480, %v5476
        %v7449 = vpack.c.b16 %v5481, %v5477
        %v7450 = vpack.c.b16 %v5482, %v5478
        %v7451 = vpack.c.b16 %v5487, %v5483
        %v7452 = vpack.c.b16 %v5488, %v5484
        %v7453 = vpack.c.b16 %v5489, %v5485
        %v7454 = vpack.c.b16 %v5490, %v5486
        %v7455 = vpack.c.b16 %v5495, %v5491
        %v7456 = vpack.c.b16 %v5496, %v5492
        %v7457 = vpack.c.b16 %v5497, %v5493
        %v7458 = vpack.c.b16 %v5498, %v5494
        %v7459 = vpack.c.b16 %v5503, %v5499
        %v7460 = vpack.c.b16 %v5504, %v5500
        %v7461 = vpack.c.b16 %v5505, %v5501
        %v7462 = vpack.c.b16 %v5506, %v5502
        %v7463 = vpack.c.b16 %v5511, %v5507
        %v7464 = vpack.c.b16 %v5512, %v5508
        %v7465 = vpack.c.b16 %v5513, %v5509
        %v7466 = vpack.c.b16 %v5514, %v5510
        %v7467 = vpack.c.b16 %v5519, %v5515
        %v7468 = vpack.c.b16 %v5520, %v5516
        %v7469 = vpack.c.b16 %v5521, %v5517
        %v7470 = vpack.c.b16 %v5522, %v5518
        %v7471 = vpack.c.b16 %v5527, %v5523
        %v7472 = vpack.c.b16 %v5528, %v5524
        %v7473 = vpack.c.b16 %v5529, %v5525
        %v7474 = vpack.c.b16 %v5530, %v5526
        %v7475 = vpack.c.b16 %v5535, %v5531
        %v7476 = vpack.c.b16 %v5536, %v5532
        %v7477 = vpack.c.b16 %v5537, %v5533
        %v7478 = vpack.c.b16 %v5538, %v5534
        %v7479 = vpack.c.b16 %v5543, %v5539
        %v7480 = vpack.c.b16 %v5544, %v5540
        %v7481 = vpack.c.b16 %v5545, %v5541
        %v7482 = vpack.c.b16 %v5546, %v5542
        %v7483 = vpack.c.b16 %v5551, %v5547
        %v7484 = vpack.c.b16 %v5552, %v5548
        %v7485 = vpack.c.b16 %v5553, %v5549
        %v7486 = vpack.c.b16 %v5554, %v5550
        %v7487 = vpack.c.b16 %v5559, %v5555
        %v7488 = vpack.c.b16 %v5560, %v5556
        %v7489 = vpack.c.b16 %v5561, %v5557
        %v7490 = vpack.c.b16 %v5562, %v5558
        %v7491 = vpack.c.b16 %v5567, %v5563
        %v7492 = vpack.c.b16 %v5568, %v5564
        %v7493 = vpack.c.b16 %v5569, %v5565
        %v7494 = vpack.c.b16 %v5570, %v5566
        %v7495 = vpack.c.b16 %v5575, %v5571
        %v7496 = vpack.c.b16 %v5576, %v5572
        %v7497 = vpack.c.b16 %v5577, %v5573
        %v7498 = vpack.c.b16 %v5578, %v5574
        %v7499 = vpack.c.b16 %v5583, %v5579
        %v7500 = vpack.c.b16 %v5584, %v5580
        %v7501 = vpack.c.b16 %v5585, %v5581
        %v7502 = vpack.c.b16 %v5586, %v5582
        %v7503 = vpack.c.b16 %v5591, %v5587
        %v7504 = vpack.c.b16 %v5592, %v5588
        %v7505 = vpack.c.b16 %v5593, %v5589
        %v7506 = vpack.c.b16 %v5594, %v5590
        %v7507 = vpack.c.b16 %v5599, %v5595
        %v7508 = vpack.c.b16 %v5600, %v5596
        %v7509 = vpack.c.b16 %v5601, %v5597
        %v7510 = vpack.c.b16 %v5602, %v5598
        %v7511 = vpack.c.b16 %v5607, %v5603
        %v7512 = vpack.c.b16 %v5608, %v5604
        %v7513 = vpack.c.b16 %v5609, %v5605
        %v7514 = vpack.c.b16 %v5610, %v5606
        %v7515 = vpack.c.b16 %v5615, %v5611
        %v7516 = vpack.c.b16 %v5616, %v5612
        %v7517 = vpack.c.b16 %v5617, %v5613
        %v7518 = vpack.c.b16 %v5618, %v5614
        %v7519 = vpack.c.b16 %v5623, %v5619
        %v7520 = vpack.c.b16 %v5624, %v5620
        %v7521 = vpack.c.b16 %v5625, %v5621
        %v7522 = vpack.c.b16 %v5626, %v5622
        %v7523 = vpack.c.b16 %v5631, %v5627
        %v7524 = vpack.c.b16 %v5632, %v5628
        %v7525 = vpack.c.b16 %v5633, %v5629
        %v7526 = vpack.c.b16 %v5634, %v5630
        %v7527 = vpack.c.b16 %v5639, %v5635
        %v7528 = vpack.c.b16 %v5640, %v5636
        %v7529 = vpack.c.b16 %v5641, %v5637
        %v7530 = vpack.c.b16 %v5642, %v5638
        %v7531 = vpack.c.b16 %v5647, %v5643
        %v7532 = vpack.c.b16 %v5648, %v5644
        %v7533 = vpack.c.b16 %v5649, %v5645
        %v7534 = vpack.c.b16 %v5650, %v5646
        %v7535 = vpack.c.b16 %v5655, %v5651
        %v7536 = vpack.c.b16 %v5656, %v5652
        %v7537 = vpack.c.b16 %v5657, %v5653
        %v7538 = vpack.c.b16 %v5658, %v5654
        %v7539 = vpack.c.b16 %v5663, %v5659
        %v7540 = vpack.c.b16 %v5664, %v5660
        %v7541 = vpack.c.b16 %v5665, %v5661
        %v7542 = vpack.c.b16 %v5666, %v5662
        %v7543 = vpack.c.b16 %v5671, %v5667
        %v7544 = vpack.c.b16 %v5672, %v5668
        %v7545 = vpack.c.b16 %v5673, %v5669
        %v7546 = vpack.c.b16 %v5674, %v5670
        %v7547 = vpack.c.b16 %v5679, %v5675
        %v7548 = vpack.c.b16 %v5680, %v5676
        %v7549 = vpack.c.b16 %v5681, %v5677
        %v7550 = vpack.c.b16 %v5682, %v5678
        %v7551 = vpack.c.b16 %v5687, %v5683
        %v7552 = vpack.c.b16 %v5688, %v5684
        %v7553 = vpack.c.b16 %v5689, %v5685
        %v7554 = vpack.c.b16 %v5690, %v5686
        %v7555 = vpack.c.b16 %v5695, %v5691
        %v7556 = vpack.c.b16 %v5696, %v5692
        %v7557 = vpack.c.b16 %v5697, %v5693
        %v7558 = vpack.c.b16 %v5698, %v5694
        %v7559 = vpack.c.b16 %v5703, %v5699
        %v7560 = vpack.c.b16 %v5704, %v5700
        %v7561 = vpack.c.b16 %v5705, %v5701
        %v7562 = vpack.c.b16 %v5706, %v5702
        %v7563 = vpack.c.b16 %v5711, %v5707
        %v7564 = vpack.c.b16 %v5712, %v5708
        %v7565 = vpack.c.b16 %v5713, %v5709
        %v7566 = vpack.c.b16 %v5714, %v5710
        %v7567 = vpack.c.b16 %v5719, %v5715
        %v7568 = vpack.c.b16 %v5720, %v5716
        %v7569 = vpack.c.b16 %v5721, %v5717
        %v7570 = vpack.c.b16 %v5722, %v5718
        %v7571 = vpack.c.b16 %v5727, %v5723
        %v7572 = vpack.c.b16 %v5728, %v5724
        %v7573 = vpack.c.b16 %v5729, %v5725
        %v7574 = vpack.c.b16 %v5730, %v5726
        %v7575 = vpack.c.b16 %v5735, %v5731
        %v7576 = vpack.c.b16 %v5736, %v5732
        %v7577 = vpack.c.b16 %v5737, %v5733
        %v7578 = vpack.c.b16 %v5738, %v5734
        %v7579 = vpack.c.b16 %v5743, %v5739
        %v7580 = vpack.c.b16 %v5744, %v5740
        %v7581 = vpack.c.b16 %v5745, %v5741
        %v7582 = vpack.c.b16 %v5746, %v5742
        %v7583 = vpack.c.b16 %v5751, %v5747
        %v7584 = vpack.c.b16 %v5752, %v5748
        %v7585 = vpack.c.b16 %v5753, %v5749
        %v7586 = vpack.c.b16 %v5754, %v5750
        %v7587 = vpack.c.b16 %v5759, %v5755
        %v7588 = vpack.c.b16 %v5760, %v5756
        %v7589 = vpack.c.b16 %v5761, %v5757
        %v7590 = vpack.c.b16 %v5762, %v5758
        %v7591 = vpack.c.b16 %v5767, %v5763
        %v7592 = vpack.c.b16 %v5768, %v5764
        %v7593 = vpack.c.b16 %v5769, %v5765
        %v7594 = vpack.c.b16 %v5770, %v5766
        %v7595 = vpack.c.b16 %v5775, %v5771
        %v7596 = vpack.c.b16 %v5776, %v5772
        %v7597 = vpack.c.b16 %v5777, %v5773
        %v7598 = vpack.c.b16 %v5778, %v5774
        %v7599 = vpack.c.b16 %v5783, %v5779
        %v7600 = vpack.c.b16 %v5784, %v5780
        %v7601 = vpack.c.b16 %v5785, %v5781
        %v7602 = vpack.c.b16 %v5786, %v5782
        %v7603 = vpack.c.b16 %v5791, %v5787
        %v7604 = vpack.c.b16 %v5792, %v5788
        %v7605 = vpack.c.b16 %v5793, %v5789
        %v7606 = vpack.c.b16 %v5794, %v5790
        %v7607 = vpack.c.b16 %v5799, %v5795
        %v7608 = vpack.c.b16 %v5800, %v5796
        %v7609 = vpack.c.b16 %v5801, %v5797
        %v7610 = vpack.c.b16 %v5802, %v5798
        %v7611 = vpack.c.b16 %v5807, %v5803
        %v7612 = vpack.c.b16 %v5808, %v5804
        %v7613 = vpack.c.b16 %v5809, %v5805
        %v7614 = vpack.c.b16 %v5810, %v5806
        %v7615 = vpack.c.b16 %v5815, %v5811
        %v7616 = vpack.c.b16 %v5816, %v5812
        %v7617 = vpack.c.b16 %v5817, %v5813
        %v7618 = vpack.c.b16 %v5818, %v5814
        %v7619 = vpack.c.b16 %v5823, %v5819
        %v7620 = vpack.c.b16 %v5824, %v5820
        %v7621 = vpack.c.b16 %v5825, %v5821
        %v7622 = vpack.c.b16 %v5826, %v5822
        %v7623 = vpack.c.b16 %v5831, %v5827
        %v7624 = vpack.c.b16 %v5832, %v5828
        %v7625 = vpack.c.b16 %v5833, %v5829
        %v7626 = vpack.c.b16 %v5834, %v5830
        %v7627 = vpack.c.b16 %v5839, %v5835
        %v7628 = vpack.c.b16 %v5840, %v5836
        %v7629 = vpack.c.b16 %v5841, %v5837
        %v7630 = vpack.c.b16 %v5842, %v5838
        %v7631 = vpack.c.b16 %v5847, %v5843
        %v7632 = vpack.c.b16 %v5848, %v5844
        %v7633 = vpack.c.b16 %v5849, %v5845
        %v7634 = vpack.c.b16 %v5850, %v5846
        %v7635 = vpack.c.b16 %v5855, %v5851
        %v7636 = vpack.c.b16 %v5856, %v5852
        %v7637 = vpack.c.b16 %v5857, %v5853
        %v7638 = vpack.c.b16 %v5858, %v5854
        %v7639 = vpack.c.b16 %v5863, %v5859
        %v7640 = vpack.c.b16 %v5864, %v5860
        %v7641 = vpack.c.b16 %v5865, %v5861
        %v7642 = vpack.c.b16 %v5866, %v5862
        %v7643 = vpack.c.b16 %v5871, %v5867
        %v7644 = vpack.c.b16 %v5872, %v5868
        %v7645 = vpack.c.b16 %v5873, %v5869
        %v7646 = vpack.c.b16 %v5874, %v5870
        %v7647 = vpack.c.b16 %v5879, %v5875
        %v7648 = vpack.c.b16 %v5880, %v5876
        %v7649 = vpack.c.b16 %v5881, %v5877
        %v7650 = vpack.c.b16 %v5882, %v5878
        %v7651 = vpack.c.b16 %v5887, %v5883
        %v7652 = vpack.c.b16 %v5888, %v5884
        %v7653 = vpack.c.b16 %v5889, %v5885
        %v7654 = vpack.c.b16 %v5890, %v5886
        %v7655 = vpack.c.b16 %v5895, %v5891
        %v7656 = vpack.c.b16 %v5896, %v5892
        %v7657 = vpack.c.b16 %v5897, %v5893
        %v7658 = vpack.c.b16 %v5898, %v5894
        %v7659 = vpack.c.b16 %v5903, %v5899
        %v7660 = vpack.c.b16 %v5904, %v5900
        %v7661 = vpack.c.b16 %v5905, %v5901
        %v7662 = vpack.c.b16 %v5906, %v5902
        %v7663 = vpack.c.b16 %v5911, %v5907
        %v7664 = vpack.c.b16 %v5912, %v5908
        %v7665 = vpack.c.b16 %v5913, %v5909
        %v7666 = vpack.c.b16 %v5914, %v5910
        %v7667 = vpack.c.b16 %v5919, %v5915
        %v7668 = vpack.c.b16 %v5920, %v5916
        %v7669 = vpack.c.b16 %v5921, %v5917
        %v7670 = vpack.c.b16 %v5922, %v5918
        %v7671 = vpack.c.b16 %v5927, %v5923
        %v7672 = vpack.c.b16 %v5928, %v5924
        %v7673 = vpack.c.b16 %v5929, %v5925
        %v7674 = vpack.c.b16 %v5930, %v5926
        %v7675 = vpack.c.b16 %v5935, %v5931
        %v7676 = vpack.c.b16 %v5936, %v5932
        %v7677 = vpack.c.b16 %v5937, %v5933
        %v7678 = vpack.c.b16 %v5938, %v5934
        %v7679 = vpack.c.b16 %v5943, %v5939
        %v7680 = vpack.c.b16 %v5944, %v5940
        %v7681 = vpack.c.b16 %v5945, %v5941
        %v7682 = vpack.c.b16 %v5946, %v5942
        %v7683 = vpack.c.b16 %v5951, %v5947
        %v7684 = vpack.c.b16 %v5952, %v5948
        %v7685 = vpack.c.b16 %v5953, %v5949
        %v7686 = vpack.c.b16 %v5954, %v5950
        %v7687 = vpack.c.b16 %v5959, %v5955
        %v7688 = vpack.c.b16 %v5960, %v5956
        %v7689 = vpack.c.b16 %v5961, %v5957
        %v7690 = vpack.c.b16 %v5962, %v5958
        %v7691 = vpack.c.b16 %v5967, %v5963
        %v7692 = vpack.c.b16 %v5968, %v5964
        %v7693 = vpack.c.b16 %v5969, %v5965
        %v7694 = vpack.c.b16 %v5970, %v5966
        %v7695 = vpack.c.b16 %v5975, %v5971
        %v7696 = vpack.c.b16 %v5976, %v5972
        %v7697 = vpack.c.b16 %v5977, %v5973
        %v7698 = vpack.c.b16 %v5978, %v5974
        %v7699 = vpack.c.b16 %v5983, %v5979
        %v7700 = vpack.c.b16 %v5984, %v5980
        %v7701 = vpack.c.b16 %v5985, %v5981
        %v7702 = vpack.c.b16 %v5986, %v5982
        %v7703 = vpack.c.b16 %v5991, %v5987
        %v7704 = vpack.c.b16 %v5992, %v5988
        %v7705 = vpack.c.b16 %v5993, %v5989
        %v7706 = vpack.c.b16 %v5994, %v5990
        %v7707 = vpack.c.b16 %v5999, %v5995
        %v7708 = vpack.c.b16 %v6000, %v5996
        %v7709 = vpack.c.b16 %v6001, %v5997
        %v7710 = vpack.c.b16 %v6002, %v5998
        %v7711 = vpack.c.b16 %v6007, %v6003
        %v7712 = vpack.c.b16 %v6008, %v6004
        %v7713 = vpack.c.b16 %v6009, %v6005
        %v7714 = vpack.c.b16 %v6010, %v6006
        %v7715 = vpack.c.b16 %v6015, %v6011
        %v7716 = vpack.c.b16 %v6016, %v6012
        %v7717 = vpack.c.b16 %v6017, %v6013
        %v7718 = vpack.c.b16 %v6018, %v6014
        %v7719 = vpack.c.b16 %v6023, %v6019
        %v7720 = vpack.c.b16 %v6024, %v6020
        %v7721 = vpack.c.b16 %v6025, %v6021
        %v7722 = vpack.c.b16 %v6026, %v6022
        %v7723 = vpack.c.b16 %v6031, %v6027
        %v7724 = vpack.c.b16 %v6032, %v6028
        %v7725 = vpack.c.b16 %v6033, %v6029
        %v7726 = vpack.c.b16 %v6034, %v6030
        %v7727 = vpack.c.b16 %v6039, %v6035
        %v7728 = vpack.c.b16 %v6040, %v6036
        %v7729 = vpack.c.b16 %v6041, %v6037
        %v7730 = vpack.c.b16 %v6042, %v6038
        %v7731 = vpack.c.b16 %v6047, %v6043
        %v7732 = vpack.c.b16 %v6048, %v6044
        %v7733 = vpack.c.b16 %v6049, %v6045
        %v7734 = vpack.c.b16 %v6050, %v6046
        %v7735 = vpack.c.b16 %v6055, %v6051
        %v7736 = vpack.c.b16 %v6056, %v6052
        %v7737 = vpack.c.b16 %v6057, %v6053
        %v7738 = vpack.c.b16 %v6058, %v6054
        %v7739 = vpack.c.b16 %v6063, %v6059
        %v7740 = vpack.c.b16 %v6064, %v6060
        %v7741 = vpack.c.b16 %v6065, %v6061
        %v7742 = vpack.c.b16 %v6066, %v6062
        %v7743 = vpack.c.b16 %v6071, %v6067
        %v7744 = vpack.c.b16 %v6072, %v6068
        %v7745 = vpack.c.b16 %v6073, %v6069
        %v7746 = vpack.c.b16 %v6074, %v6070
        %v7747 = vpack.c.b16 %v6079, %v6075
        %v7748 = vpack.c.b16 %v6080, %v6076
        %v7749 = vpack.c.b16 %v6081, %v6077
        %v7750 = vpack.c.b16 %v6082, %v6078
        %v7751 = vpack.c.b16 %v6087, %v6083
        %v7752 = vpack.c.b16 %v6088, %v6084
        %v7753 = vpack.c.b16 %v6089, %v6085
        %v7754 = vpack.c.b16 %v6090, %v6086
        %v7755 = vpack.c.b16 %v6095, %v6091
        %v7756 = vpack.c.b16 %v6096, %v6092
        %v7757 = vpack.c.b16 %v6097, %v6093
        %v7758 = vpack.c.b16 %v6098, %v6094
        %v7759 = vpack.c.b16 %v6103, %v6099
        %v7760 = vpack.c.b16 %v6104, %v6100
        %v7761 = vpack.c.b16 %v6105, %v6101
        %v7762 = vpack.c.b16 %v6106, %v6102
        %v7763 = vpack.c.b16 %v6111, %v6107
        %v7764 = vpack.c.b16 %v6112, %v6108
        %v7765 = vpack.c.b16 %v6113, %v6109
        %v7766 = vpack.c.b16 %v6114, %v6110
        %v7767 = vpack.c.b16 %v6119, %v6115
        %v7768 = vpack.c.b16 %v6120, %v6116
        %v7769 = vpack.c.b16 %v6121, %v6117
        %v7770 = vpack.c.b16 %v6122, %v6118
        %v7771 = vpack.c.b16 %v6127, %v6123
        %v7772 = vpack.c.b16 %v6128, %v6124
        %v7773 = vpack.c.b16 %v6129, %v6125
        %v7774 = vpack.c.b16 %v6130, %v6126
        %v7775 = vpack.c.b16 %v6135, %v6131
        %v7776 = vpack.c.b16 %v6136, %v6132
        %v7777 = vpack.c.b16 %v6137, %v6133
        %v7778 = vpack.c.b16 %v6138, %v6134
        %v7779 = vpack.c.b16 %v6143, %v6139
        %v7780 = vpack.c.b16 %v6144, %v6140
        %v7781 = vpack.c.b16 %v6145, %v6141
        %v7782 = vpack.c.b16 %v6146, %v6142
        %v7783 = vpack.c.b16 %v6151, %v6147
        %v7784 = vpack.c.b16 %v6152, %v6148
        %v7785 = vpack.c.b16 %v6153, %v6149
        %v7786 = vpack.c.b16 %v6154, %v6150
        %v7787 = vpack.c.b16 %v6159, %v6155
        %v7788 = vpack.c.b16 %v6160, %v6156
        %v7789 = vpack.c.b16 %v6161, %v6157
        %v7790 = vpack.c.b16 %v6162, %v6158
        %v7791 = vpack.c.b16 %v6167, %v6163
        %v7792 = vpack.c.b16 %v6168, %v6164
        %v7793 = vpack.c.b16 %v6169, %v6165
        %v7794 = vpack.c.b16 %v6170, %v6166
        %v7795 = vpack.c.b16 %v6175, %v6171
        %v7796 = vpack.c.b16 %v6176, %v6172
        %v7797 = vpack.c.b16 %v6177, %v6173
        %v7798 = vpack.c.b16 %v6178, %v6174
        %v7799 = vpack.c.b16 %v6183, %v6179
        %v7800 = vpack.c.b16 %v6184, %v6180
        %v7801 = vpack.c.b16 %v6185, %v6181
        %v7802 = vpack.c.b16 %v6186, %v6182
        %v7803 = vpack.c.b16 %v6191, %v6187
        %v7804 = vpack.c.b16 %v6192, %v6188
        %v7805 = vpack.c.b16 %v6193, %v6189
        %v7806 = vpack.c.b16 %v6194, %v6190
        %v7807 = vpack.c.b16 %v6199, %v6195
        %v7808 = vpack.c.b16 %v6200, %v6196
        %v7809 = vpack.c.b16 %v6201, %v6197
        %v7810 = vpack.c.b16 %v6202, %v6198
        %v7811 = vpack.c.b16 %v6207, %v6203
        %v7812 = vpack.c.b16 %v6208, %v6204
        %v7813 = vpack.c.b16 %v6209, %v6205
        %v7814 = vpack.c.b16 %v6210, %v6206
        %v7815 = vpack.c.b16 %v6215, %v6211
        %v7816 = vpack.c.b16 %v6216, %v6212
        %v7817 = vpack.c.b16 %v6217, %v6213
        %v7818 = vpack.c.b16 %v6218, %v6214
        %v7819 = vpack.c.b16 %v6223, %v6219
        %v7820 = vpack.c.b16 %v6224, %v6220
        %v7821 = vpack.c.b16 %v6225, %v6221
        %v7822 = vpack.c.b16 %v6226, %v6222
        %v7823 = vpack.c.b16 %v6231, %v6227
        %v7824 = vpack.c.b16 %v6232, %v6228
        %v7825 = vpack.c.b16 %v6233, %v6229
        %v7826 = vpack.c.b16 %v6234, %v6230
        %v7827 = vpack.c.b16 %v6239, %v6235
        %v7828 = vpack.c.b16 %v6240, %v6236
        %v7829 = vpack.c.b16 %v6241, %v6237
        %v7830 = vpack.c.b16 %v6242, %v6238
        %v7831 = vpack.c.b16 %v6247, %v6243
        %v7832 = vpack.c.b16 %v6248, %v6244
        %v7833 = vpack.c.b16 %v6249, %v6245
        %v7834 = vpack.c.b16 %v6250, %v6246
        %v7835 = vpack.c.b16 %v6255, %v6251
        %v7836 = vpack.c.b16 %v6256, %v6252
        %v7837 = vpack.c.b16 %v6257, %v6253
        %v7838 = vpack.c.b16 %v6258, %v6254
        %v7839 = vpack.c.b16 %v6263, %v6259
        %v7840 = vpack.c.b16 %v6264, %v6260
        %v7841 = vpack.c.b16 %v6265, %v6261
        %v7842 = vpack.c.b16 %v6266, %v6262
        %v7843 = vpack.c.b16 %v6271, %v6267
        %v7844 = vpack.c.b16 %v6272, %v6268
        %v7845 = vpack.c.b16 %v6273, %v6269
        %v7846 = vpack.c.b16 %v6274, %v6270
        %v7847 = vpack.c.b16 %v6279, %v6275
        %v7848 = vpack.c.b16 %v6280, %v6276
        %v7849 = vpack.c.b16 %v6281, %v6277
        %v7850 = vpack.c.b16 %v6282, %v6278
        %v7851 = vpack.c.b16 %v6287, %v6283
        %v7852 = vpack.c.b16 %v6288, %v6284
        %v7853 = vpack.c.b16 %v6289, %v6285
        %v7854 = vpack.c.b16 %v6290, %v6286
        %v7855 = vpack.c.b16 %v6295, %v6291
        %v7856 = vpack.c.b16 %v6296, %v6292
        %v7857 = vpack.c.b16 %v6297, %v6293
        %v7858 = vpack.c.b16 %v6298, %v6294
        %v7859 = vpack.c.b16 %v6303, %v6299
        %v7860 = vpack.c.b16 %v6304, %v6300
        %v7861 = vpack.c.b16 %v6305, %v6301
        %v7862 = vpack.c.b16 %v6306, %v6302
        %v7863 = vpack.c.b16 %v6311, %v6307
        %v7864 = vpack.c.b16 %v6312, %v6308
        %v7865 = vpack.c.b16 %v6313, %v6309
        %v7866 = vpack.c.b16 %v6314, %v6310
        %v7867 = vpack.c.b16 %v6319, %v6315
        %v7868 = vpack.c.b16 %v6320, %v6316
        %v7869 = vpack.c.b16 %v6321, %v6317
        %v7870 = vpack.c.b16 %v6322, %v6318
        %v7871 = vpack.c.b16 %v6327, %v6323
        %v7872 = vpack.c.b16 %v6328, %v6324
        %v7873 = vpack.c.b16 %v6329, %v6325
        %v7874 = vpack.c.b16 %v6330, %v6326
        %v7875 = vpack.c.b16 %v6335, %v6331
        %v7876 = vpack.c.b16 %v6336, %v6332
        %v7877 = vpack.c.b16 %v6337, %v6333
        %v7878 = vpack.c.b16 %v6338, %v6334
        %v7879 = vpack.c.b16 %v6343, %v6339
        %v7880 = vpack.c.b16 %v6344, %v6340
        %v7881 = vpack.c.b16 %v6345, %v6341
        %v7882 = vpack.c.b16 %v6346, %v6342
        %v7883 = vpack.c.b16 %v6351, %v6347
        %v7884 = vpack.c.b16 %v6352, %v6348
        %v7885 = vpack.c.b16 %v6353, %v6349
        %v7886 = vpack.c.b16 %v6354, %v6350
        %v7887 = vpack.c.b16 %v6359, %v6355
        %v7888 = vpack.c.b16 %v6360, %v6356
        %v7889 = vpack.c.b16 %v6361, %v6357
        %v7890 = vpack.c.b16 %v6362, %v6358
        %v7891 = vpack.c.b16 %v6367, %v6363
        %v7892 = vpack.c.b16 %v6368, %v6364
        %v7893 = vpack.c.b16 %v6369, %v6365
        %v7894 = vpack.c.b16 %v6370, %v6366
        %v7895 = vpack.c.b16 %v6375, %v6371
        %v7896 = vpack.c.b16 %v6376, %v6372
        %v7897 = vpack.c.b16 %v6377, %v6373
        %v7898 = vpack.c.b16 %v6378, %v6374
        %v7899 = vpack.c.b16 %v6383, %v6379
        %v7900 = vpack.c.b16 %v6384, %v6380
        %v7901 = vpack.c.b16 %v6385, %v6381
        %v7902 = vpack.c.b16 %v6386, %v6382
        %v7903 = vpack.c.b16 %v6391, %v6387
        %v7904 = vpack.c.b16 %v6392, %v6388
        %v7905 = vpack.c.b16 %v6393, %v6389
        %v7906 = vpack.c.b16 %v6394, %v6390
        %v7907 = vpack.c.b16 %v6399, %v6395
        %v7908 = vpack.c.b16 %v6400, %v6396
        %v7909 = vpack.c.b16 %v6401, %v6397
        %v7910 = vpack.c.b16 %v6402, %v6398
        %v7911 = vpack.c.b16 %v6407, %v6403
        %v7912 = vpack.c.b16 %v6408, %v6404
        %v7913 = vpack.c.b16 %v6409, %v6405
        %v7914 = vpack.c.b16 %v6410, %v6406
        %v7915 = vpack.c.b16 %v6415, %v6411
        %v7916 = vpack.c.b16 %v6416, %v6412
        %v7917 = vpack.c.b16 %v6417, %v6413
        %v7918 = vpack.c.b16 %v6418, %v6414
        %v7919 = vpack.c.b16 %v6423, %v6419
        %v7920 = vpack.c.b16 %v6424, %v6420
        %v7921 = vpack.c.b16 %v6425, %v6421
        %v7922 = vpack.c.b16 %v6426, %v6422
        %v7923 = vpack.c.b16 %v6431, %v6427
        %v7924 = vpack.c.b16 %v6432, %v6428
        %v7925 = vpack.c.b16 %v6433, %v6429
        %v7926 = vpack.c.b16 %v6434, %v6430
        %v7927 = vpack.c.b16 %v6439, %v6435
        %v7928 = vpack.c.b16 %v6440, %v6436
        %v7929 = vpack.c.b16 %v6441, %v6437
        %v7930 = vpack.c.b16 %v6442, %v6438
        %v7931 = vpack.c.b16 %v6447, %v6443
        %v7932 = vpack.c.b16 %v6448, %v6444
        %v7933 = vpack.c.b16 %v6449, %v6445
        %v7934 = vpack.c.b16 %v6450, %v6446
        %v7935 = vpack.c.b16 %v6455, %v6451
        %v7936 = vpack.c.b16 %v6456, %v6452
        %v7937 = vpack.c.b16 %v6457, %v6453
        %v7938 = vpack.c.b16 %v6458, %v6454
        %v7939 = vpack.c.b16 %v6463, %v6459
        %v7940 = vpack.c.b16 %v6464, %v6460
        %v7941 = vpack.c.b16 %v6465, %v6461
        %v7942 = vpack.c.b16 %v6466, %v6462
        %v7943 = vpack.c.b16 %v6471, %v6467
        %v7944 = vpack.c.b16 %v6472, %v6468
        %v7945 = vpack.c.b16 %v6473, %v6469
        %v7946 = vpack.c.b16 %v6474, %v6470
        %v7947 = vpack.c.b16 %v6479, %v6475
        %v7948 = vpack.c.b16 %v6480, %v6476
        %v7949 = vpack.c.b16 %v6481, %v6477
        %v7950 = vpack.c.b16 %v6482, %v6478
        %v7951 = vpack.c.b16 %v6487, %v6483
        %v7952 = vpack.c.b16 %v6488, %v6484
        %v7953 = vpack.c.b16 %v6489, %v6485
        %v7954 = vpack.c.b16 %v6490, %v6486
        %v7955 = vpack.c.b16 %v6495, %v6491
        %v7956 = vpack.c.b16 %v6496, %v6492
        %v7957 = vpack.c.b16 %v6497, %v6493
        %v7958 = vpack.c.b16 %v6498, %v6494
        %v7959 = vpack.c.b16 %v6503, %v6499
        %v7960 = vpack.c.b16 %v6504, %v6500
        %v7961 = vpack.c.b16 %v6505, %v6501
        %v7962 = vpack.c.b16 %v6506, %v6502
        %v7963 = vpack.c.b16 %v6511, %v6507
        %v7964 = vpack.c.b16 %v6512, %v6508
        %v7965 = vpack.c.b16 %v6513, %v6509
        %v7966 = vpack.c.b16 %v6514, %v6510
        %v7967 = vpack.c.b16 %v6519, %v6515
        %v7968 = vpack.c.b16 %v6520, %v6516
        %v7969 = vpack.c.b16 %v6521, %v6517
        %v7970 = vpack.c.b16 %v6522, %v6518
        %v7971 = vpack.c.b16 %v6527, %v6523
        %v7972 = vpack.c.b16 %v6528, %v6524
        %v7973 = vpack.c.b16 %v6529, %v6525
        %v7974 = vpack.c.b16 %v6530, %v6526
        %v7975 = vpack.c.b16 %v6535, %v6531
        %v7976 = vpack.c.b16 %v6536, %v6532
        %v7977 = vpack.c.b16 %v6537, %v6533
        %v7978 = vpack.c.b16 %v6538, %v6534
        %v7979 = vpack.c.b16 %v6543, %v6539
        %v7980 = vpack.c.b16 %v6544, %v6540
        %v7981 = vpack.c.b16 %v6545, %v6541
        %v7982 = vpack.c.b16 %v6546, %v6542
        %v7983 = vpack.c.b16 %v6551, %v6547
        %v7984 = vpack.c.b16 %v6552, %v6548
        %v7985 = vpack.c.b16 %v6553, %v6549
        %v7986 = vpack.c.b16 %v6554, %v6550
        %v7987 = vpack.c.b16 %v6559, %v6555
        %v7988 = vpack.c.b16 %v6560, %v6556
        %v7989 = vpack.c.b16 %v6561, %v6557
        %v7990 = vpack.c.b16 %v6562, %v6558
        %v7991 = vpack.c.b16 %v6567, %v6563
        %v7992 = vpack.c.b16 %v6568, %v6564
        %v7993 = vpack.c.b16 %v6569, %v6565
        %v7994 = vpack.c.b16 %v6570, %v6566
        %v7995 = vpack.c.b16 %v6575, %v6571
        %v7996 = vpack.c.b16 %v6576, %v6572
        %v7997 = vpack.c.b16 %v6577, %v6573
        %v7998 = vpack.c.b16 %v6578, %v6574
        %v7999 = vpack.c.b16 %v6583, %v6579
        %v8000 = vpack.c.b16 %v6584, %v6580
        %v8001 = vpack.c.b16 %v6585, %v6581
        %v8002 = vpack.c.b16 %v6586, %v6582
        %v8003 = vpack.c.b16 %v6591, %v6587
        %v8004 = vpack.c.b16 %v6592, %v6588
        %v8005 = vpack.c.b16 %v6593, %v6589
        %v8006 = vpack.c.b16 %v6594, %v6590
        %v8007 = vpack.c.b16 %v6599, %v6595
        %v8008 = vpack.c.b16 %v6600, %v6596
        %v8009 = vpack.c.b16 %v6601, %v6597
        %v8010 = vpack.c.b16 %v6602, %v6598
        %v8011 = vpack.c.b16 %v6607, %v6603
        %v8012 = vpack.c.b16 %v6608, %v6604
        %v8013 = vpack.c.b16 %v6609, %v6605
        %v8014 = vpack.c.b16 %v6610, %v6606
        %v8015 = vpack.c.b16 %v6615, %v6611
        %v8016 = vpack.c.b16 %v6616, %v6612
        %v8017 = vpack.c.b16 %v6617, %v6613
        %v8018 = vpack.c.b16 %v6618, %v6614
        %v8019 = vpack.c.b16 %v6623, %v6619
        %v8020 = vpack.c.b16 %v6624, %v6620
        %v8021 = vpack.c.b16 %v6625, %v6621
        %v8022 = vpack.c.b16 %v6626, %v6622
        %v8023 = vpack.c.b16 %v6631, %v6627
        %v8024 = vpack.c.b16 %v6632, %v6628
        %v8025 = vpack.c.b16 %v6633, %v6629
        %v8026 = vpack.c.b16 %v6634, %v6630
        %v8027 = vpack.c.b16 %v6639, %v6635
        %v8028 = vpack.c.b16 %v6640, %v6636
        %v8029 = vpack.c.b16 %v6641, %v6637
        %v8030 = vpack.c.b16 %v6642, %v6638
        %v8031 = vpack.c.b16 %v6647, %v6643
        %v8032 = vpack.c.b16 %v6648, %v6644
        %v8033 = vpack.c.b16 %v6649, %v6645
        %v8034 = vpack.c.b16 %v6650, %v6646
        %v8035 = vpack.c.b16 %v6655, %v6651
        %v8036 = vpack.c.b16 %v6656, %v6652
        %v8037 = vpack.c.b16 %v6657, %v6653
        %v8038 = vpack.c.b16 %v6658, %v6654
        %v8039 = vpack.c.b16 %v6663, %v6659
        %v8040 = vpack.c.b16 %v6664, %v6660
        %v8041 = vpack.c.b16 %v6665, %v6661
        %v8042 = vpack.c.b16 %v6666, %v6662
        %v8043 = vpack.c.b16 %v6671, %v6667
        %v8044 = vpack.c.b16 %v6672, %v6668
        %v8045 = vpack.c.b16 %v6673, %v6669
        %v8046 = vpack.c.b16 %v6674, %v6670
        %v8047 = vpack.c.b16 %v6679, %v6675
        %v8048 = vpack.c.b16 %v6680, %v6676
        %v8049 = vpack.c.b16 %v6681, %v6677
        %v8050 = vpack.c.b16 %v6682, %v6678
        %v8051 = vpack.c.b16 %v6687, %v6683
        %v8052 = vpack.c.b16 %v6688, %v6684
        %v8053 = vpack.c.b16 %v6689, %v6685
        %v8054 = vpack.c.b16 %v6690, %v6686
        %v8055 = vpack.c.b16 %v6695, %v6691
        %v8056 = vpack.c.b16 %v6696, %v6692
        %v8057 = vpack.c.b16 %v6697, %v6693
        %v8058 = vpack.c.b16 %v6698, %v6694
        %v8059 = vpack.c.b16 %v6703, %v6699
        %v8060 = vpack.c.b16 %v6704, %v6700
        %v8061 = vpack.c.b16 %v6705, %v6701
        %v8062 = vpack.c.b16 %v6706, %v6702
        %v8063 = vpack.c.b16 %v6711, %v6707
        %v8064 = vpack.c.b16 %v6712, %v6708
        %v8065 = vpack.c.b16 %v6713, %v6709
        %v8066 = vpack.c.b16 %v6714, %v6710
        %v8067 = vpack.c.b16 %v6719, %v6715
        %v8068 = vpack.c.b16 %v6720, %v6716
        %v8069 = vpack.c.b16 %v6721, %v6717
        %v8070 = vpack.c.b16 %v6722, %v6718
        %v8071 = vpack.c.b16 %v6727, %v6723
        %v8072 = vpack.c.b16 %v6728, %v6724
        %v8073 = vpack.c.b16 %v6729, %v6725
        %v8074 = vpack.c.b16 %v6730, %v6726
        %v8075 = vpack.c.b16 %v6735, %v6731
        %v8076 = vpack.c.b16 %v6736, %v6732
        %v8077 = vpack.c.b16 %v6737, %v6733
        %v8078 = vpack.c.b16 %v6738, %v6734
        %v8079 = vpack.c.b16 %v6743, %v6739
        %v8080 = vpack.c.b16 %v6744, %v6740
        %v8081 = vpack.c.b16 %v6745, %v6741
        %v8082 = vpack.c.b16 %v6746, %v6742
        %v8083 = vpack.c.b16 %v6751, %v6747
        %v8084 = vpack.c.b16 %v6752, %v6748
        %v8085 = vpack.c.b16 %v6753, %v6749
        %v8086 = vpack.c.b16 %v6754, %v6750
        %v8087 = vpack.c.b16 %v6759, %v6755
        %v8088 = vpack.c.b16 %v6760, %v6756
        %v8089 = vpack.c.b16 %v6761, %v6757
        %v8090 = vpack.c.b16 %v6762, %v6758
        %v8091 = vpack.c.b16 %v6767, %v6763
        %v8092 = vpack.c.b16 %v6768, %v6764
        %v8093 = vpack.c.b16 %v6769, %v6765
        %v8094 = vpack.c.b16 %v6770, %v6766
        %v8095 = vpack.c.b16 %v6775, %v6771
        %v8096 = vpack.c.b16 %v6776, %v6772
        %v8097 = vpack.c.b16 %v6777, %v6773
        %v8098 = vpack.c.b16 %v6778, %v6774
        %v8099 = vpack.c.b16 %v6783, %v6779
        %v8100 = vpack.c.b16 %v6784, %v6780
        %v8101 = vpack.c.b16 %v6785, %v6781
        %v8102 = vpack.c.b16 %v6786, %v6782
        %v8103 = vpack.c.b16 %v6791, %v6787
        %v8104 = vpack.c.b16 %v6792, %v6788
        %v8105 = vpack.c.b16 %v6793, %v6789
        %v8106 = vpack.c.b16 %v6794, %v6790
        %v8107 = vpack.c.b16 %v6799, %v6795
        %v8108 = vpack.c.b16 %v6800, %v6796
        %v8109 = vpack.c.b16 %v6801, %v6797
        %v8110 = vpack.c.b16 %v6802, %v6798
        %v8111 = vpack.c.b16 %v6807, %v6803
        %v8112 = vpack.c.b16 %v6808, %v6804
        %v8113 = vpack.c.b16 %v6809, %v6805
        %v8114 = vpack.c.b16 %v6810, %v6806
        %v8115 = vpack.c.b16 %v6815, %v6811
        %v8116 = vpack.c.b16 %v6816, %v6812
        %v8117 = vpack.c.b16 %v6817, %v6813
        %v8118 = vpack.c.b16 %v6818, %v6814
        %v8119 = vpack.c.b16 %v6823, %v6819
        %v8120 = vpack.c.b16 %v6824, %v6820
        %v8121 = vpack.c.b16 %v6825, %v6821
        %v8122 = vpack.c.b16 %v6826, %v6822
        %v8123 = vpack.c.b16 %v6831, %v6827
        %v8124 = vpack.c.b16 %v6832, %v6828
        %v8125 = vpack.c.b16 %v6833, %v6829
        %v8126 = vpack.c.b16 %v6834, %v6830
        %v8127 = vpack.c.b16 %v6839, %v6835
        %v8128 = vpack.c.b16 %v6840, %v6836
        %v8129 = vpack.c.b16 %v6841, %v6837
        %v8130 = vpack.c.b16 %v6842, %v6838
        %v8131 = vpack.c.b16 %v6847, %v6843
        %v8132 = vpack.c.b16 %v6848, %v6844
        %v8133 = vpack.c.b16 %v6849, %v6845
        %v8134 = vpack.c.b16 %v6850, %v6846
        %v8135 = vpack.c.b16 %v6855, %v6851
        %v8136 = vpack.c.b16 %v6856, %v6852
        %v8137 = vpack.c.b16 %v6857, %v6853
        %v8138 = vpack.c.b16 %v6858, %v6854
        %v8139 = vpack.c.b16 %v6863, %v6859
        %v8140 = vpack.c.b16 %v6864, %v6860
        %v8141 = vpack.c.b16 %v6865, %v6861
        %v8142 = vpack.c.b16 %v6866, %v6862
        %v8143 = vpack.c.b16 %v6871, %v6867
        %v8144 = vpack.c.b16 %v6872, %v6868
        %v8145 = vpack.c.b16 %v6873, %v6869
        %v8146 = vpack.c.b16 %v6874, %v6870
        %v8147 = vpack.c.b16 %v6879, %v6875
        %v8148 = vpack.c.b16 %v6880, %v6876
        %v8149 = vpack.c.b16 %v6881, %v6877
        %v8150 = vpack.c.b16 %v6882, %v6878
        %v8151 = vpack.c.b16 %v6887, %v6883
        %v8152 = vpack.c.b16 %v6888, %v6884
        %v8153 = vpack.c.b16 %v6889, %v6885
        %v8154 = vpack.c.b16 %v6890, %v6886
        %v8155 = vpack.c.b16 %v6895, %v6891
        %v8156 = vpack.c.b16 %v6896, %v6892
        %v8157 = vpack.c.b16 %v6897, %v6893
        %v8158 = vpack.c.b16 %v6898, %v6894
        %v8159 = vpack.c.b16 %v6903, %v6899
        %v8160 = vpack.c.b16 %v6904, %v6900
        %v8161 = vpack.c.b16 %v6905, %v6901
        %v8162 = vpack.c.b16 %v6906, %v6902
        %v8163 = vpack.c.b16 %v6911, %v6907
        %v8164 = vpack.c.b16 %v6912, %v6908
        %v8165 = vpack.c.b16 %v6913, %v6909
        %v8166 = vpack.c.b16 %v6914, %v6910
        %v8167 = vpack.c.b16 %v6919, %v6915
        %v8168 = vpack.c.b16 %v6920, %v6916
        %v8169 = vpack.c.b16 %v6921, %v6917
        %v8170 = vpack.c.b16 %v6922, %v6918
        %v8171 = vpack.c.b16 %v6927, %v6923
        %v8172 = vpack.c.b16 %v6928, %v6924
        %v8173 = vpack.c.b16 %v6929, %v6925
        %v8174 = vpack.c.b16 %v6930, %v6926
        %v8175 = vpack.c.b16 %v6935, %v6931
        %v8176 = vpack.c.b16 %v6936, %v6932
        %v8177 = vpack.c.b16 %v6937, %v6933
        %v8178 = vpack.c.b16 %v6938, %v6934
        %v8179 = vpack.c.b16 %v6943, %v6939
        %v8180 = vpack.c.b16 %v6944, %v6940
        %v8181 = vpack.c.b16 %v6945, %v6941
        %v8182 = vpack.c.b16 %v6946, %v6942
        %v8183 = vpack.c.b16 %v6951, %v6947
        %v8184 = vpack.c.b16 %v6952, %v6948
        %v8185 = vpack.c.b16 %v6953, %v6949
        %v8186 = vpack.c.b16 %v6954, %v6950
        %v8187 = vpack.c.b16 %v6959, %v6955
        %v8188 = vpack.c.b16 %v6960, %v6956
        %v8189 = vpack.c.b16 %v6961, %v6957
        %v8190 = vpack.c.b16 %v6962, %v6958
        %v8191 = vpack.c.b16 %v6967, %v6963
        %v8192 = vpack.c.b16 %v6968, %v6964
        %v8193 = vpack.c.b16 %v6969, %v6965
        %v8194 = vpack.c.b16 %v6970, %v6966
        %v8195 = vpack.c.b16 %v6975, %v6971
        %v8196 = vpack.c.b16 %v6976, %v6972
        %v8197 = vpack.c.b16 %v6977, %v6973
        %v8198 = vpack.c.b16 %v6978, %v6974
        %v8199 = vpack.c.b16 %v6983, %v6979
        %v8200 = vpack.c.b16 %v6984, %v6980
        %v8201 = vpack.c.b16 %v6985, %v6981
        %v8202 = vpack.c.b16 %v6986, %v6982
        %v8203 = vpack.c.b16 %v6991, %v6987
        %v8204 = vpack.c.b16 %v6992, %v6988
        %v8205 = vpack.c.b16 %v6993, %v6989
        %v8206 = vpack.c.b16 %v6994, %v6990
        %v8207 = vpack.c.b16 %v6999, %v6995
        %v8208 = vpack.c.b16 %v7000, %v6996
        %v8209 = vpack.c.b16 %v7001, %v6997
        %v8210 = vpack.c.b16 %v7002, %v6998
        %v8211 = vpack.c.b16 %v7007, %v7003
        %v8212 = vpack.c.b16 %v7008, %v7004
        %v8213 = vpack.c.b16 %v7009, %v7005
        %v8214 = vpack.c.b16 %v7010, %v7006
        %v8215 = vpack.c.b16 %v7015, %v7011
        %v8216 = vpack.c.b16 %v7016, %v7012
        %v8217 = vpack.c.b16 %v7017, %v7013
        %v8218 = vpack.c.b16 %v7018, %v7014
        %v8219 = vpack.c.b16 %v7023, %v7019
        %v8220 = vpack.c.b16 %v7024, %v7020
        %v8221 = vpack.c.b16 %v7025, %v7021
        %v8222 = vpack.c.b16 %v7026, %v7022
        %v8223 = vpack.c.b16 %v7031, %v7027
        %v8224 = vpack.c.b16 %v7032, %v7028
        %v8225 = vpack.c.b16 %v7033, %v7029
        %v8226 = vpack.c.b16 %v7034, %v7030
        %v8227 = vpack.c.b16 %v7039, %v7035
        %v8228 = vpack.c.b16 %v7040, %v7036
        %v8229 = vpack.c.b16 %v7041, %v7037
        %v8230 = vpack.c.b16 %v7042, %v7038
        %v8231 = vpack.c.b16 %v7047, %v7043
        %v8232 = vpack.c.b16 %v7048, %v7044
        %v8233 = vpack.c.b16 %v7049, %v7045
        %v8234 = vpack.c.b16 %v7050, %v7046
        %v8235 = vpack.c.b16 %v7055, %v7051
        %v8236 = vpack.c.b16 %v7056, %v7052
        %v8237 = vpack.c.b16 %v7057, %v7053
        %v8238 = vpack.c.b16 %v7058, %v7054
        %v8239 = vpack.c.b16 %v7063, %v7059
        %v8240 = vpack.c.b16 %v7064, %v7060
        %v8241 = vpack.c.b16 %v7065, %v7061
        %v8242 = vpack.c.b16 %v7066, %v7062
        %v8243 = vpack.c.b16 %v7071, %v7067
        %v8244 = vpack.c.b16 %v7072, %v7068
        %v8245 = vpack.c.b16 %v7073, %v7069
        %v8246 = vpack.c.b16 %v7074, %v7070
        %v8247 = vpack.c.b16 %v7079, %v7075
        %v8248 = vpack.c.b16 %v7080, %v7076
        %v8249 = vpack.c.b16 %v7081, %v7077
        %v8250 = vpack.c.b16 %v7082, %v7078
        %v8251 = vpack.c.b16 %v7087, %v7083
        %v8252 = vpack.c.b16 %v7088, %v7084
        %v8253 = vpack.c.b16 %v7089, %v7085
        %v8254 = vpack.c.b16 %v7090, %v7086
        %v8255 = vpack.c.b16 %v7095, %v7091
        %v8256 = vpack.c.b16 %v7096, %v7092
        %v8257 = vpack.c.b16 %v7097, %v7093
        %v8258 = vpack.c.b16 %v7098, %v7094
        %v8259 = vpack.c.b16 %v7103, %v7099
        %v8260 = vpack.c.b16 %v7104, %v7100
        %v8261 = vpack.c.b16 %v7105, %v7101
        %v8262 = vpack.c.b16 %v7106, %v7102
        %v8263 = vpack.c.b16 %v7111, %v7107
        %v8264 = vpack.c.b16 %v7112, %v7108
        %v8265 = vpack.c.b16 %v7113, %v7109
        %v8266 = vpack.c.b16 %v7114, %v7110
        %9419 = vmatprep.subr.bf16.mxu0 %v7116
        %9420 = vmatpush1.bf16.msra.mxu0 %v7115
        %9421 = vmatprep.subr.bf16.mxu0 %v7120
        %9422 = vmatpush1.bf16.msra.mxu0 %v7119
        %9423 = vmatprep.subr.bf16.mxu0 %v7124
        %9424 = vmatpush1.bf16.msra.mxu0 %v7123
        %9425 = vmatprep.subr.bf16.mxu0 %v7128
        %9426 = vmatpush1.bf16.msra.mxu0 %v7127
        %9427 = vmatprep.subr.bf16.mxu0 %v7132
        %9428 = vmatpush1.bf16.msra.mxu0 %v7131
        %9429 = vmatprep.subr.bf16.mxu0 %v7136
        %9430 = vmatpush1.bf16.msra.mxu0 %v7135
        %9431 = vmatprep.subr.bf16.mxu0 %v7140
        %9432 = vmatpush1.bf16.msra.mxu0 %v7139
        %9433 = vmatprep.subr.bf16.mxu0 %v7144
        %9434 = vmatpush1.bf16.msra.mxu0 %v7143
        %9435 = vmatprep.subr.bf16.mxu0 %v7148
        %9436 = vmatpush1.bf16.msra.mxu0 %v7147
        %9437 = vmatprep.subr.bf16.mxu0 %v7152
        %9438 = vmatpush1.bf16.msra.mxu0 %v7151
        %9439 = vmatprep.subr.bf16.mxu0 %v7156
        %9440 = vmatpush1.bf16.msra.mxu0 %v7155
        %9441 = vmatprep.subr.bf16.mxu0 %v7160
        %9442 = vmatpush1.bf16.msra.mxu0 %v7159
        %9443 = vmatprep.subr.bf16.mxu0 %v7164
        %9444 = vmatpush1.bf16.msra.mxu0 %v7163
        %9445 = vmatprep.subr.bf16.mxu0 %v7168
        %9446 = vmatpush1.bf16.msra.mxu0 %v7167
        %9447 = vmatprep.subr.bf16.mxu0 %v7172
        %9448 = vmatpush1.bf16.msra.mxu0 %v7171
        %9449 = vmatprep.subr.bf16.mxu0 %v7176
        %9450 = vmatpush1.bf16.msra.mxu0 %v7175
        %9451 = vmatprep.mubr.bf16.mxu0 %v2472
        %9452 = vmatmul.mubr.bf16.gmra.mrb[0].mxu0 %v2471
        %v9453 = vpop.f32.mrb[0].mxu0
        %v9454 = vadd.f32 0.0, %v9453
        %v9455 = vpop.f32.mrb[0].mxu0
        %v9456 = vadd.f32 0.0, %v9455
        %v9457 = vpop.f32.mrb[0].mxu0
        %v9458 = vpop.f32.mrb[0].mxu0
        %9459 = vdwg.mxu0
        %9460 = vmatprep.subr.bf16.mxu0 %v7180
        %9461 = vmatpush1.bf16.msra.mxu0 %v7179
        %9462 = vmatprep.subr.bf16.mxu0 %v7184
        %9463 = vmatpush1.bf16.msra.mxu0 %v7183
        %9464 = vmatprep.subr.bf16.mxu0 %v7188
        %9465 = vmatpush1.bf16.msra.mxu0 %v7187
        %9466 = vmatprep.subr.bf16.mxu0 %v7192
        %9467 = vmatpush1.bf16.msra.mxu0 %v7191
        %9468 = vmatprep.subr.bf16.mxu0 %v7196
        %9469 = vmatpush1.bf16.msra.mxu0 %v7195
        %9470 = vmatprep.subr.bf16.mxu0 %v7200
        %9471 = vmatpush1.bf16.msra.mxu0 %v7199
        %9472 = vmatprep.subr.bf16.mxu0 %v7204
        %9473 = vmatpush1.bf16.msra.mxu0 %v7203
        %9474 = vmatprep.subr.bf16.mxu0 %v7208
        %9475 = vmatpush1.bf16.msra.mxu0 %v7207
        %9476 = vmatprep.subr.bf16.mxu0 %v7212
        %9477 = vmatpush1.bf16.msra.mxu0 %v7211
        %9478 = vmatprep.subr.bf16.mxu0 %v7216
        %9479 = vmatpush1.bf16.msra.mxu0 %v7215
        %9480 = vmatprep.subr.bf16.mxu0 %v7220
        %9481 = vmatpush1.bf16.msra.mxu0 %v7219
        %9482 = vmatprep.subr.bf16.mxu0 %v7224
        %9483 = vmatpush1.bf16.msra.mxu0 %v7223
        %9484 = vmatprep.subr.bf16.mxu0 %v7228
        %9485 = vmatpush1.bf16.msra.mxu0 %v7227
        %9486 = vmatprep.subr.bf16.mxu0 %v7232
        %9487 = vmatpush1.bf16.msra.mxu0 %v7231
        %9488 = vmatprep.subr.bf16.mxu0 %v7236
        %9489 = vmatpush1.bf16.msra.mxu0 %v7235
        %9490 = vmatprep.subr.bf16.mxu0 %v7240
        %9491 = vmatpush1.bf16.msra.mxu0 %v7239
        %9492 = vmatprep.mubr.bf16.mxu0 %v2474
        %9493 = vmatmul.mubr.bf16.gmra.mrb[0].mxu0 %v2473
        %v9494 = vpop.f32.mrb[0].mxu0
        %v9495 = vadd.f32 %v9454, %v9494
        %v9496 = vpop.f32.mrb[0].mxu0
        %v9497 = vadd.f32 %v9456, %v9496
        %v9498 = vpop.f32.mrb[0].mxu0
        %v9499 = vpop.f32.mrb[0].mxu0
        %9500 = vdwg.mxu0
        %9501 = vmatprep.subr.bf16.mxu0 %v7244
        %9502 = vmatpush1.bf16.msra.mxu0 %v7243
        %9503 = vmatprep.subr.bf16.mxu0 %v7248
        %9504 = vmatpush1.bf16.msra.mxu0 %v7247
        %9505 = vmatprep.subr.bf16.mxu0 %v7252
        %9506 = vmatpush1.bf16.msra.mxu0 %v7251
        %9507 = vmatprep.subr.bf16.mxu0 %v7256
        %9508 = vmatpush1.bf16.msra.mxu0 %v7255
        %9509 = vmatprep.subr.bf16.mxu0 %v7260
        %9510 = vmatpush1.bf16.msra.mxu0 %v7259
        %9511 = vmatprep.subr.bf16.mxu0 %v7264
        %9512 = vmatpush1.bf16.msra.mxu0 %v7263
        %9513 = vmatprep.subr.bf16.mxu0 %v7268
        %9514 = vmatpush1.bf16.msra.mxu0 %v7267
        %9515 = vmatprep.subr.bf16.mxu0 %v7272
        %9516 = vmatpush1.bf16.msra.mxu0 %v7271
        %9517 = vmatprep.subr.bf16.mxu0 %v7276
        %9518 = vmatpush1.bf16.msra.mxu0 %v7275
        %9519 = vmatprep.subr.bf16.mxu0 %v7280
        %9520 = vmatpush1.bf16.msra.mxu0 %v7279
        %9521 = vmatprep.subr.bf16.mxu0 %v7284
        %9522 = vmatpush1.bf16.msra.mxu0 %v7283
        %9523 = vmatprep.subr.bf16.mxu0 %v7288
        %9524 = vmatpush1.bf16.msra.mxu0 %v7287
        %9525 = vmatprep.subr.bf16.mxu0 %v7292
        %9526 = vmatpush1.bf16.msra.mxu0 %v7291
        %9527 = vmatprep.subr.bf16.mxu0 %v7296
        %9528 = vmatpush1.bf16.msra.mxu0 %v7295
        %9529 = vmatprep.subr.bf16.mxu0 %v7300
        %9530 = vmatpush1.bf16.msra.mxu0 %v7299
        %9531 = vmatprep.subr.bf16.mxu0 %v7304
        %9532 = vmatpush1.bf16.msra.mxu0 %v7303
        %9533 = vmatprep.mubr.bf16.mxu0 %v2476
        %9534 = vmatmul.mubr.bf16.gmra.mrb[0].mxu0 %v2475
        %v9535 = vpop.f32.mrb[0].mxu0
        %v9536 = vadd.f32 %v9495, %v9535
        %v9537 = vpop.f32.mrb[0].mxu0
        %v9538 = vadd.f32 %v9497, %v9537
        %v9539 = vpop.f32.mrb[0].mxu0
        %v9540 = vpop.f32.mrb[0].mxu0
        %9541 = vdwg.mxu0
        %9542 = vmatprep.subr.bf16.mxu0 %v7308
        %9543 = vmatpush1.bf16.msra.mxu0 %v7307
        %9544 = vmatprep.subr.bf16.mxu0 %v7312
        %9545 = vmatpush1.bf16.msra.mxu0 %v7311
        %9546 = vmatprep.subr.bf16.mxu0 %v7316
        %9547 = vmatpush1.bf16.msra.mxu0 %v7315
        %9548 = vmatprep.subr.bf16.mxu0 %v7320
        %9549 = vmatpush1.bf16.msra.mxu0 %v7319
        %9550 = vmatprep.subr.bf16.mxu0 %v7324
        %9551 = vmatpush1.bf16.msra.mxu0 %v7323
        %9552 = vmatprep.subr.bf16.mxu0 %v7328
        %9553 = vmatpush1.bf16.msra.mxu0 %v7327
        %9554 = vmatprep.subr.bf16.mxu0 %v7332
        %9555 = vmatpush1.bf16.msra.mxu0 %v7331
        %9556 = vmatprep.subr.bf16.mxu0 %v7336
        %9557 = vmatpush1.bf16.msra.mxu0 %v7335
        %9558 = vmatprep.subr.bf16.mxu0 %v7340
        %9559 = vmatpush1.bf16.msra.mxu0 %v7339
        %9560 = vmatprep.subr.bf16.mxu0 %v7344
        %9561 = vmatpush1.bf16.msra.mxu0 %v7343
        %9562 = vmatprep.subr.bf16.mxu0 %v7348
        %9563 = vmatpush1.bf16.msra.mxu0 %v7347
        %9564 = vmatprep.subr.bf16.mxu0 %v7352
        %9565 = vmatpush1.bf16.msra.mxu0 %v7351
        %9566 = vmatprep.subr.bf16.mxu0 %v7356
        %9567 = vmatpush1.bf16.msra.mxu0 %v7355
        %9568 = vmatprep.subr.bf16.mxu0 %v7360
        %9569 = vmatpush1.bf16.msra.mxu0 %v7359
        %9570 = vmatprep.subr.bf16.mxu0 %v7364
        %9571 = vmatpush1.bf16.msra.mxu0 %v7363
        %9572 = vmatprep.subr.bf16.mxu0 %v7368
        %9573 = vmatpush1.bf16.msra.mxu0 %v7367
        %9574 = vmatprep.mubr.bf16.mxu0 %v2478
        %9575 = vmatmul.mubr.bf16.gmra.mrb[0].mxu0 %v2477
        %v9576 = vpop.f32.mrb[0].mxu0
        %v9577 = vadd.f32 %v9536, %v9576
        %v9578 = vpop.f32.mrb[0].mxu0
        %v9579 = vadd.f32 %v9538, %v9578
        %v9580 = vpop.f32.mrb[0].mxu0
        %v9581 = vpop.f32.mrb[0].mxu0
        %9582 = vdwg.mxu0
        %9583 = vmatprep.subr.bf16.mxu0 %v7372
        %9584 = vmatpush1.bf16.msra.mxu0 %v7371
        %9585 = vmatprep.subr.bf16.mxu0 %v7376
        %9586 = vmatpush1.bf16.msra.mxu0 %v7375
        %9587 = vmatprep.subr.bf16.mxu0 %v7380
        %9588 = vmatpush1.bf16.msra.mxu0 %v7379
        %9589 = vmatprep.subr.bf16.mxu0 %v7384
        %9590 = vmatpush1.bf16.msra.mxu0 %v7383
        %9591 = vmatprep.subr.bf16.mxu0 %v7388
        %9592 = vmatpush1.bf16.msra.mxu0 %v7387
        %9593 = vmatprep.subr.bf16.mxu0 %v7392
        %9594 = vmatpush1.bf16.msra.mxu0 %v7391
        %9595 = vmatprep.subr.bf16.mxu0 %v7396
        %9596 = vmatpush1.bf16.msra.mxu0 %v7395
        %9597 = vmatprep.subr.bf16.mxu0 %v7400
        %9598 = vmatpush1.bf16.msra.mxu0 %v7399
        %9599 = vmatprep.subr.bf16.mxu0 %v7404
        %9600 = vmatpush1.bf16.msra.mxu0 %v7403
        %9601 = vmatprep.subr.bf16.mxu0 %v7408
        %9602 = vmatpush1.bf16.msra.mxu0 %v7407
        %9603 = vmatprep.subr.bf16.mxu0 %v7412
        %9604 = vmatpush1.bf16.msra.mxu0 %v7411
        %9605 = vmatprep.subr.bf16.mxu0 %v7416
        %9606 = vmatpush1.bf16.msra.mxu0 %v7415
        %9607 = vmatprep.subr.bf16.mxu0 %v7420
        %9608 = vmatpush1.bf16.msra.mxu0 %v7419
        %9609 = vmatprep.subr.bf16.mxu0 %v7424
        %9610 = vmatpush1.bf16.msra.mxu0 %v7423
        %9611 = vmatprep.subr.bf16.mxu0 %v7428
        %9612 = vmatpush1.bf16.msra.mxu0 %v7427
        %9613 = vmatprep.subr.bf16.mxu0 %v7432
        %9614 = vmatpush1.bf16.msra.mxu0 %v7431
        %9615 = vmatprep.mubr.bf16.mxu0 %v2480
        %9616 = vmatmul.mubr.bf16.gmra.mrb[0].mxu0 %v2479
        %v9617 = vpop.f32.mrb[0].mxu0
        %v9618 = vadd.f32 %v9577, %v9617
        %v9619 = vpop.f32.mrb[0].mxu0
        %v9620 = vadd.f32 %v9579, %v9619
        %v9621 = vpop.f32.mrb[0].mxu0
        %v9622 = vpop.f32.mrb[0].mxu0
        %9623 = vdwg.mxu0
        %9624 = vmatprep.subr.bf16.mxu0 %v7436
        %9625 = vmatpush1.bf16.msra.mxu0 %v7435
        %9626 = vmatprep.subr.bf16.mxu0 %v7440
        %9627 = vmatpush1.bf16.msra.mxu0 %v7439
        %9628 = vmatprep.subr.bf16.mxu0 %v7444
        %9629 = vmatpush1.bf16.msra.mxu0 %v7443
        %9630 = vmatprep.subr.bf16.mxu0 %v7448
        %9631 = vmatpush1.bf16.msra.mxu0 %v7447
        %9632 = vmatprep.subr.bf16.mxu0 %v7452
        %9633 = vmatpush1.bf16.msra.mxu0 %v7451
        %9634 = vmatprep.subr.bf16.mxu0 %v7456
        %9635 = vmatpush1.bf16.msra.mxu0 %v7455
        %9636 = vmatprep.subr.bf16.mxu0 %v7460
        %9637 = vmatpush1.bf16.msra.mxu0 %v7459
        %9638 = vmatprep.subr.bf16.mxu0 %v7464
        %9639 = vmatpush1.bf16.msra.mxu0 %v7463
        %9640 = vmatprep.subr.bf16.mxu0 %v7468
        %9641 = vmatpush1.bf16.msra.mxu0 %v7467
        %9642 = vmatprep.subr.bf16.mxu0 %v7472
        %9643 = vmatpush1.bf16.msra.mxu0 %v7471
        %9644 = vmatprep.subr.bf16.mxu0 %v7476
        %9645 = vmatpush1.bf16.msra.mxu0 %v7475
        %9646 = vmatprep.subr.bf16.mxu0 %v7480
        %9647 = vmatpush1.bf16.msra.mxu0 %v7479
        %9648 = vmatprep.subr.bf16.mxu0 %v7484
        %9649 = vmatpush1.bf16.msra.mxu0 %v7483
        %9650 = vmatprep.subr.bf16.mxu0 %v7488
        %9651 = vmatpush1.bf16.msra.mxu0 %v7487
        %9652 = vmatprep.subr.bf16.mxu0 %v7492
        %9653 = vmatpush1.bf16.msra.mxu0 %v7491
        %9654 = vmatprep.subr.bf16.mxu0 %v7496
        %9655 = vmatpush1.bf16.msra.mxu0 %v7495
        %9656 = vmatprep.mubr.bf16.mxu0 %v2482
        %9657 = vmatmul.mubr.bf16.gmra.mrb[0].mxu0 %v2481
        %v9658 = vpop.f32.mrb[0].mxu0
        %v9659 = vadd.f32 %v9618, %v9658
        %v9660 = vpop.f32.mrb[0].mxu0
        %v9661 = vadd.f32 %v9620, %v9660
        %v9662 = vpop.f32.mrb[0].mxu0
        %v9663 = vpop.f32.mrb[0].mxu0
        %9664 = vdwg.mxu0
        %9665 = vmatprep.subr.bf16.mxu0 %v7500
        %9666 = vmatpush1.bf16.msra.mxu0 %v7499
        %9667 = vmatprep.subr.bf16.mxu0 %v7504
        %9668 = vmatpush1.bf16.msra.mxu0 %v7503
        %9669 = vmatprep.subr.bf16.mxu0 %v7508
        %9670 = vmatpush1.bf16.msra.mxu0 %v7507
        %9671 = vmatprep.subr.bf16.mxu0 %v7512
        %9672 = vmatpush1.bf16.msra.mxu0 %v7511
        %9673 = vmatprep.subr.bf16.mxu0 %v7516
        %9674 = vmatpush1.bf16.msra.mxu0 %v7515
        %9675 = vmatprep.subr.bf16.mxu0 %v7520
        %9676 = vmatpush1.bf16.msra.mxu0 %v7519
        %9677 = vmatprep.subr.bf16.mxu0 %v7524
        %9678 = vmatpush1.bf16.msra.mxu0 %v7523
        %9679 = vmatprep.subr.bf16.mxu0 %v7528
        %9680 = vmatpush1.bf16.msra.mxu0 %v7527
        %9681 = vmatprep.subr.bf16.mxu0 %v7532
        %9682 = vmatpush1.bf16.msra.mxu0 %v7531
        %9683 = vmatprep.subr.bf16.mxu0 %v7536
        %9684 = vmatpush1.bf16.msra.mxu0 %v7535
        %9685 = vmatprep.subr.bf16.mxu0 %v7540
        %9686 = vmatpush1.bf16.msra.mxu0 %v7539
        %9687 = vmatprep.subr.bf16.mxu0 %v7544
        %9688 = vmatpush1.bf16.msra.mxu0 %v7543
        %9689 = vmatprep.subr.bf16.mxu0 %v7548
        %9690 = vmatpush1.bf16.msra.mxu0 %v7547
        %9691 = vmatprep.subr.bf16.mxu0 %v7552
        %9692 = vmatpush1.bf16.msra.mxu0 %v7551
        %9693 = vmatprep.subr.bf16.mxu0 %v7556
        %9694 = vmatpush1.bf16.msra.mxu0 %v7555
        %9695 = vmatprep.subr.bf16.mxu0 %v7560
        %9696 = vmatpush1.bf16.msra.mxu0 %v7559
        %9697 = vmatprep.mubr.bf16.mxu0 %v2484
        %9698 = vmatmul.mubr.bf16.gmra.mrb[0].mxu0 %v2483
        %v9699 = vpop.f32.mrb[0].mxu0
        %v9700 = vadd.f32 %v9659, %v9699
        %v9701 = vpop.f32.mrb[0].mxu0
        %v9702 = vadd.f32 %v9661, %v9701
        %v9703 = vpop.f32.mrb[0].mxu0
        %v9704 = vpop.f32.mrb[0].mxu0
        %9705 = vdwg.mxu0
        %9706 = vmatprep.subr.bf16.mxu0 %v7564
        %9707 = vmatpush1.bf16.msra.mxu0 %v7563
        %9708 = vmatprep.subr.bf16.mxu0 %v7568
        %9709 = vmatpush1.bf16.msra.mxu0 %v7567
        %9710 = vmatprep.subr.bf16.mxu0 %v7572
        %9711 = vmatpush1.bf16.msra.mxu0 %v7571
        %9712 = vmatprep.subr.bf16.mxu0 %v7576
        %9713 = vmatpush1.bf16.msra.mxu0 %v7575
        %9714 = vmatprep.subr.bf16.mxu0 %v7580
        %9715 = vmatpush1.bf16.msra.mxu0 %v7579
        %9716 = vmatprep.subr.bf16.mxu0 %v7584
        %9717 = vmatpush1.bf16.msra.mxu0 %v7583
        %9718 = vmatprep.subr.bf16.mxu0 %v7588
        %9719 = vmatpush1.bf16.msra.mxu0 %v7587
        %9720 = vmatprep.subr.bf16.mxu0 %v7592
        %9721 = vmatpush1.bf16.msra.mxu0 %v7591
        %9722 = vmatprep.subr.bf16.mxu0 %v7596
        %9723 = vmatpush1.bf16.msra.mxu0 %v7595
        %9724 = vmatprep.subr.bf16.mxu0 %v7600
        %9725 = vmatpush1.bf16.msra.mxu0 %v7599
        %9726 = vmatprep.subr.bf16.mxu0 %v7604
        %9727 = vmatpush1.bf16.msra.mxu0 %v7603
        %9728 = vmatprep.subr.bf16.mxu0 %v7608
        %9729 = vmatpush1.bf16.msra.mxu0 %v7607
        %9730 = vmatprep.subr.bf16.mxu0 %v7612
        %9731 = vmatpush1.bf16.msra.mxu0 %v7611
        %9732 = vmatprep.subr.bf16.mxu0 %v7616
        %9733 = vmatpush1.bf16.msra.mxu0 %v7615
        %9734 = vmatprep.subr.bf16.mxu0 %v7620
        %9735 = vmatpush1.bf16.msra.mxu0 %v7619
        %9736 = vmatprep.subr.bf16.mxu0 %v7624
        %9737 = vmatpush1.bf16.msra.mxu0 %v7623
        %9738 = vmatprep.mubr.bf16.mxu0 %v2486
        %9739 = vmatmul.mubr.bf16.gmra.mrb[0].mxu0 %v2485
        %v9740 = vpop.f32.mrb[0].mxu0
        %v9741 = vadd.f32 %v9700, %v9740
        %v9742 = vpop.f32.mrb[0].mxu0
        %v9743 = vadd.f32 %v9702, %v9742
        %v9744 = vpop.f32.mrb[0].mxu0
        %v9745 = vpop.f32.mrb[0].mxu0
        %9746 = vdwg.mxu0
        %9747 = vmatprep.subr.bf16.mxu0 %v7628
        %9748 = vmatpush1.bf16.msra.mxu0 %v7627
        %9749 = vmatprep.subr.bf16.mxu0 %v7632
        %9750 = vmatpush1.bf16.msra.mxu0 %v7631
        %9751 = vmatprep.subr.bf16.mxu0 %v7636
        %9752 = vmatpush1.bf16.msra.mxu0 %v7635
        %9753 = vmatprep.subr.bf16.mxu0 %v7640
        %9754 = vmatpush1.bf16.msra.mxu0 %v7639
        %9755 = vmatprep.subr.bf16.mxu0 %v7644
        %9756 = vmatpush1.bf16.msra.mxu0 %v7643
        %9757 = vmatprep.subr.bf16.mxu0 %v7648
        %9758 = vmatpush1.bf16.msra.mxu0 %v7647
        %9759 = vmatprep.subr.bf16.mxu0 %v7652
        %9760 = vmatpush1.bf16.msra.mxu0 %v7651
        %9761 = vmatprep.subr.bf16.mxu0 %v7656
        %9762 = vmatpush1.bf16.msra.mxu0 %v7655
        %9763 = vmatprep.subr.bf16.mxu0 %v7660
        %9764 = vmatpush1.bf16.msra.mxu0 %v7659
        %9765 = vmatprep.subr.bf16.mxu0 %v7664
        %9766 = vmatpush1.bf16.msra.mxu0 %v7663
        %9767 = vmatprep.subr.bf16.mxu0 %v7668
        %9768 = vmatpush1.bf16.msra.mxu0 %v7667
        %9769 = vmatprep.subr.bf16.mxu0 %v7672
        %9770 = vmatpush1.bf16.msra.mxu0 %v7671
        %9771 = vmatprep.subr.bf16.mxu0 %v7676
        %9772 = vmatpush1.bf16.msra.mxu0 %v7675
        %9773 = vmatprep.subr.bf16.mxu0 %v7680
        %9774 = vmatpush1.bf16.msra.mxu0 %v7679
        %9775 = vmatprep.subr.bf16.mxu0 %v7684
        %9776 = vmatpush1.bf16.msra.mxu0 %v7683
        %9777 = vmatprep.subr.bf16.mxu0 %v7688
        %9778 = vmatpush1.bf16.msra.mxu0 %v7687
        %9779 = vmatprep.mubr.bf16.mxu0 %v2488
        %9780 = vmatmul.mubr.bf16.gmra.mrb[0].mxu0 %v2487
        %v9781 = vpop.f32.mrb[0].mxu0
        %v9782 = vadd.f32 %v9741, %v9781
        %v9783 = vpop.f32.mrb[0].mxu0
        %v9784 = vadd.f32 %v9743, %v9783
        %v9785 = vpop.f32.mrb[0].mxu0
        %v9786 = vpop.f32.mrb[0].mxu0
        %9787 = vdwg.mxu0
        %9788 = vmatprep.subr.bf16.mxu0 %v7692
        %9789 = vmatpush1.bf16.msra.mxu0 %v7691
        %9790 = vmatprep.subr.bf16.mxu0 %v7696
        %9791 = vmatpush1.bf16.msra.mxu0 %v7695
        %9792 = vmatprep.subr.bf16.mxu0 %v7700
        %9793 = vmatpush1.bf16.msra.mxu0 %v7699
        %9794 = vmatprep.subr.bf16.mxu0 %v7704
        %9795 = vmatpush1.bf16.msra.mxu0 %v7703
        %9796 = vmatprep.subr.bf16.mxu0 %v7708
        %9797 = vmatpush1.bf16.msra.mxu0 %v7707
        %9798 = vmatprep.subr.bf16.mxu0 %v7712
        %9799 = vmatpush1.bf16.msra.mxu0 %v7711
        %9800 = vmatprep.subr.bf16.mxu0 %v7716
        %9801 = vmatpush1.bf16.msra.mxu0 %v7715
        %9802 = vmatprep.subr.bf16.mxu0 %v7720
        %9803 = vmatpush1.bf16.msra.mxu0 %v7719
        %9804 = vmatprep.subr.bf16.mxu0 %v7724
        %9805 = vmatpush1.bf16.msra.mxu0 %v7723
        %9806 = vmatprep.subr.bf16.mxu0 %v7728
        %9807 = vmatpush1.bf16.msra.mxu0 %v7727
        %9808 = vmatprep.subr.bf16.mxu0 %v7732
        %9809 = vmatpush1.bf16.msra.mxu0 %v7731
        %9810 = vmatprep.subr.bf16.mxu0 %v7736
        %9811 = vmatpush1.bf16.msra.mxu0 %v7735
        %9812 = vmatprep.subr.bf16.mxu0 %v7740
        %9813 = vmatpush1.bf16.msra.mxu0 %v7739
        %9814 = vmatprep.subr.bf16.mxu0 %v7744
        %9815 = vmatpush1.bf16.msra.mxu0 %v7743
        %9816 = vmatprep.subr.bf16.mxu0 %v7748
        %9817 = vmatpush1.bf16.msra.mxu0 %v7747
        %9818 = vmatprep.subr.bf16.mxu0 %v7752
        %9819 = vmatpush1.bf16.msra.mxu0 %v7751
        %9820 = vmatprep.mubr.bf16.mxu0 %v2490
        %9821 = vmatmul.mubr.bf16.gmra.mrb[0].mxu0 %v2489
        %v9822 = vpop.f32.mrb[0].mxu0
        %v9823 = vadd.f32 %v9782, %v9822
        %v9824 = vpop.f32.mrb[0].mxu0
        %v9825 = vadd.f32 %v9784, %v9824
        %v9826 = vpop.f32.mrb[0].mxu0
        %v9827 = vpop.f32.mrb[0].mxu0
        %9828 = vdwg.mxu0
        %9829 = vmatprep.subr.bf16.mxu0 %v7756
        %9830 = vmatpush1.bf16.msra.mxu0 %v7755
        %9831 = vmatprep.subr.bf16.mxu0 %v7760
        %9832 = vmatpush1.bf16.msra.mxu0 %v7759
        %9833 = vmatprep.subr.bf16.mxu0 %v7764
        %9834 = vmatpush1.bf16.msra.mxu0 %v7763
        %9835 = vmatprep.subr.bf16.mxu0 %v7768
        %9836 = vmatpush1.bf16.msra.mxu0 %v7767
        %9837 = vmatprep.subr.bf16.mxu0 %v7772
        %9838 = vmatpush1.bf16.msra.mxu0 %v7771
        %9839 = vmatprep.subr.bf16.mxu0 %v7776
        %9840 = vmatpush1.bf16.msra.mxu0 %v7775
        %9841 = vmatprep.subr.bf16.mxu0 %v7780
        %9842 = vmatpush1.bf16.msra.mxu0 %v7779
        %9843 = vmatprep.subr.bf16.mxu0 %v7784
        %9844 = vmatpush1.bf16.msra.mxu0 %v7783
        %9845 = vmatprep.subr.bf16.mxu0 %v7788
        %9846 = vmatpush1.bf16.msra.mxu0 %v7787
        %9847 = vmatprep.subr.bf16.mxu0 %v7792
        %9848 = vmatpush1.bf16.msra.mxu0 %v7791
        %9849 = vmatprep.subr.bf16.mxu0 %v7796
        %9850 = vmatpush1.bf16.msra.mxu0 %v7795
        %9851 = vmatprep.subr.bf16.mxu0 %v7800
        %9852 = vmatpush1.bf16.msra.mxu0 %v7799
        %9853 = vmatprep.subr.bf16.mxu0 %v7804
        %9854 = vmatpush1.bf16.msra.mxu0 %v7803
        %9855 = vmatprep.subr.bf16.mxu0 %v7808
        %9856 = vmatpush1.bf16.msra.mxu0 %v7807
        %9857 = vmatprep.subr.bf16.mxu0 %v7812
        %9858 = vmatpush1.bf16.msra.mxu0 %v7811
        %9859 = vmatprep.subr.bf16.mxu0 %v7816
        %9860 = vmatpush1.bf16.msra.mxu0 %v7815
        %9861 = vmatprep.mubr.bf16.mxu0 %v2492
        %9862 = vmatmul.mubr.bf16.gmra.mrb[0].mxu0 %v2491
        %v9863 = vpop.f32.mrb[0].mxu0
        %v9864 = vadd.f32 %v9823, %v9863
        %v9865 = vpop.f32.mrb[0].mxu0
        %v9866 = vadd.f32 %v9825, %v9865
        %v9867 = vpop.f32.mrb[0].mxu0
        %v9868 = vpop.f32.mrb[0].mxu0
        %9869 = vdwg.mxu0
        %9870 = vmatprep.subr.bf16.mxu0 %v7820
        %9871 = vmatpush1.bf16.msra.mxu0 %v7819
        %9872 = vmatprep.subr.bf16.mxu0 %v7824
        %9873 = vmatpush1.bf16.msra.mxu0 %v7823
        %9874 = vmatprep.subr.bf16.mxu0 %v7828
        %9875 = vmatpush1.bf16.msra.mxu0 %v7827
        %9876 = vmatprep.subr.bf16.mxu0 %v7832
        %9877 = vmatpush1.bf16.msra.mxu0 %v7831
        %9878 = vmatprep.subr.bf16.mxu0 %v7836
        %9879 = vmatpush1.bf16.msra.mxu0 %v7835
        %9880 = vmatprep.subr.bf16.mxu0 %v7840
        %9881 = vmatpush1.bf16.msra.mxu0 %v7839
        %9882 = vmatprep.subr.bf16.mxu0 %v7844
        %9883 = vmatpush1.bf16.msra.mxu0 %v7843
        %9884 = vmatprep.subr.bf16.mxu0 %v7848
        %9885 = vmatpush1.bf16.msra.mxu0 %v7847
        %9886 = vmatprep.subr.bf16.mxu0 %v7852
        %9887 = vmatpush1.bf16.msra.mxu0 %v7851
        %9888 = vmatprep.subr.bf16.mxu0 %v7856
        %9889 = vmatpush1.bf16.msra.mxu0 %v7855
        %9890 = vmatprep.subr.bf16.mxu0 %v7860
        %9891 = vmatpush1.bf16.msra.mxu0 %v7859
        %9892 = vmatprep.subr.bf16.mxu0 %v7864
        %9893 = vmatpush1.bf16.msra.mxu0 %v7863
        %9894 = vmatprep.subr.bf16.mxu0 %v7868
        %9895 = vmatpush1.bf16.msra.mxu0 %v7867
        %9896 = vmatprep.subr.bf16.mxu0 %v7872
        %9897 = vmatpush1.bf16.msra.mxu0 %v7871
        %9898 = vmatprep.subr.bf16.mxu0 %v7876
        %9899 = vmatpush1.bf16.msra.mxu0 %v7875
        %9900 = vmatprep.subr.bf16.mxu0 %v7880
        %9901 = vmatpush1.bf16.msra.mxu0 %v7879
        %9902 = vmatprep.mubr.bf16.mxu0 %v2494
        %9903 = vmatmul.mubr.bf16.gmra.mrb[0].mxu0 %v2493
        %v9904 = vpop.f32.mrb[0].mxu0
        %v9905 = vadd.f32 %v9864, %v9904
        %v9906 = vpop.f32.mrb[0].mxu0
        %v9907 = vadd.f32 %v9866, %v9906
        %v9908 = vpop.f32.mrb[0].mxu0
        %v9909 = vpop.f32.mrb[0].mxu0
        %9910 = vdwg.mxu0
        %9911 = vmatprep.subr.bf16.mxu0 %v7884
        %9912 = vmatpush1.bf16.msra.mxu0 %v7883
        %9913 = vmatprep.subr.bf16.mxu0 %v7888
        %9914 = vmatpush1.bf16.msra.mxu0 %v7887
        %9915 = vmatprep.subr.bf16.mxu0 %v7892
        %9916 = vmatpush1.bf16.msra.mxu0 %v7891
        %9917 = vmatprep.subr.bf16.mxu0 %v7896
        %9918 = vmatpush1.bf16.msra.mxu0 %v7895
        %9919 = vmatprep.subr.bf16.mxu0 %v7900
        %9920 = vmatpush1.bf16.msra.mxu0 %v7899
        %9921 = vmatprep.subr.bf16.mxu0 %v7904
        %9922 = vmatpush1.bf16.msra.mxu0 %v7903
        %9923 = vmatprep.subr.bf16.mxu0 %v7908
        %9924 = vmatpush1.bf16.msra.mxu0 %v7907
        %9925 = vmatprep.subr.bf16.mxu0 %v7912
        %9926 = vmatpush1.bf16.msra.mxu0 %v7911
        %9927 = vmatprep.subr.bf16.mxu0 %v7916
        %9928 = vmatpush1.bf16.msra.mxu0 %v7915
        %9929 = vmatprep.subr.bf16.mxu0 %v7920
        %9930 = vmatpush1.bf16.msra.mxu0 %v7919
        %9931 = vmatprep.subr.bf16.mxu0 %v7924
        %9932 = vmatpush1.bf16.msra.mxu0 %v7923
        %9933 = vmatprep.subr.bf16.mxu0 %v7928
        %9934 = vmatpush1.bf16.msra.mxu0 %v7927
        %9935 = vmatprep.subr.bf16.mxu0 %v7932
        %9936 = vmatpush1.bf16.msra.mxu0 %v7931
        %9937 = vmatprep.subr.bf16.mxu0 %v7936
        %9938 = vmatpush1.bf16.msra.mxu0 %v7935
        %9939 = vmatprep.subr.bf16.mxu0 %v7940
        %9940 = vmatpush1.bf16.msra.mxu0 %v7939
        %9941 = vmatprep.subr.bf16.mxu0 %v7944
        %9942 = vmatpush1.bf16.msra.mxu0 %v7943
        %9943 = vmatprep.mubr.bf16.mxu0 %v2496
        %9944 = vmatmul.mubr.bf16.gmra.mrb[0].mxu0 %v2495
        %v9945 = vpop.f32.mrb[0].mxu0
        %v9946 = vadd.f32 %v9905, %v9945
        %v9947 = vpop.f32.mrb[0].mxu0
        %v9948 = vadd.f32 %v9907, %v9947
        %v9949 = vpop.f32.mrb[0].mxu0
        %v9950 = vpop.f32.mrb[0].mxu0
        %9951 = vdwg.mxu0
        %9952 = vmatprep.subr.bf16.mxu0 %v7948
        %9953 = vmatpush1.bf16.msra.mxu0 %v7947
        %9954 = vmatprep.subr.bf16.mxu0 %v7952
        %9955 = vmatpush1.bf16.msra.mxu0 %v7951
        %9956 = vmatprep.subr.bf16.mxu0 %v7956
        %9957 = vmatpush1.bf16.msra.mxu0 %v7955
        %9958 = vmatprep.subr.bf16.mxu0 %v7960
        %9959 = vmatpush1.bf16.msra.mxu0 %v7959
        %9960 = vmatprep.subr.bf16.mxu0 %v7964
        %9961 = vmatpush1.bf16.msra.mxu0 %v7963
        %9962 = vmatprep.subr.bf16.mxu0 %v7968
        %9963 = vmatpush1.bf16.msra.mxu0 %v7967
        %9964 = vmatprep.subr.bf16.mxu0 %v7972
        %9965 = vmatpush1.bf16.msra.mxu0 %v7971
        %9966 = vmatprep.subr.bf16.mxu0 %v7976
        %9967 = vmatpush1.bf16.msra.mxu0 %v7975
        %9968 = vmatprep.subr.bf16.mxu0 %v7980
        %9969 = vmatpush1.bf16.msra.mxu0 %v7979
        %9970 = vmatprep.subr.bf16.mxu0 %v7984
        %9971 = vmatpush1.bf16.msra.mxu0 %v7983
        %9972 = vmatprep.subr.bf16.mxu0 %v7988
        %9973 = vmatpush1.bf16.msra.mxu0 %v7987
        %9974 = vmatprep.subr.bf16.mxu0 %v7992
        %9975 = vmatpush1.bf16.msra.mxu0 %v7991
        %9976 = vmatprep.subr.bf16.mxu0 %v7996
        %9977 = vmatpush1.bf16.msra.mxu0 %v7995
        %9978 = vmatprep.subr.bf16.mxu0 %v8000
        %9979 = vmatpush1.bf16.msra.mxu0 %v7999
        %9980 = vmatprep.subr.bf16.mxu0 %v8004
        %9981 = vmatpush1.bf16.msra.mxu0 %v8003
        %9982 = vmatprep.subr.bf16.mxu0 %v8008
        %9983 = vmatpush1.bf16.msra.mxu0 %v8007
        %9984 = vmatprep.mubr.bf16.mxu0 %v2498
        %9985 = vmatmul.mubr.bf16.gmra.mrb[0].mxu0 %v2497
        %v9986 = vpop.f32.mrb[0].mxu0
        %v9987 = vadd.f32 %v9946, %v9986
        %v9988 = vpop.f32.mrb[0].mxu0
        %v9989 = vadd.f32 %v9948, %v9988
        %v9990 = vpop.f32.mrb[0].mxu0
        %v9991 = vpop.f32.mrb[0].mxu0
        %9992 = vdwg.mxu0
        %9993 = vmatprep.subr.bf16.mxu0 %v8012
        %9994 = vmatpush1.bf16.msra.mxu0 %v8011
        %9995 = vmatprep.subr.bf16.mxu0 %v8016
        %9996 = vmatpush1.bf16.msra.mxu0 %v8015
        %9997 = vmatprep.subr.bf16.mxu0 %v8020
        %9998 = vmatpush1.bf16.msra.mxu0 %v8019
        %9999 = vmatprep.subr.bf16.mxu0 %v8024
        %10000 = vmatpush1.bf16.msra.mxu0 %v8023
        %10001 = vmatprep.subr.bf16.mxu0 %v8028
        %10002 = vmatpush1.bf16.msra.mxu0 %v8027
        %10003 = vmatprep.subr.bf16.mxu0 %v8032
        %10004 = vmatpush1.bf16.msra.mxu0 %v8031
        %10005 = vmatprep.subr.bf16.mxu0 %v8036
        %10006 = vmatpush1.bf16.msra.mxu0 %v8035
        %10007 = vmatprep.subr.bf16.mxu0 %v8040
        %10008 = vmatpush1.bf16.msra.mxu0 %v8039
        %10009 = vmatprep.subr.bf16.mxu0 %v8044
        %10010 = vmatpush1.bf16.msra.mxu0 %v8043
        %10011 = vmatprep.subr.bf16.mxu0 %v8048
        %10012 = vmatpush1.bf16.msra.mxu0 %v8047
        %10013 = vmatprep.subr.bf16.mxu0 %v8052
        %10014 = vmatpush1.bf16.msra.mxu0 %v8051
        %10015 = vmatprep.subr.bf16.mxu0 %v8056
        %10016 = vmatpush1.bf16.msra.mxu0 %v8055
        %10017 = vmatprep.subr.bf16.mxu0 %v8060
        %10018 = vmatpush1.bf16.msra.mxu0 %v8059
        %10019 = vmatprep.subr.bf16.mxu0 %v8064
        %10020 = vmatpush1.bf16.msra.mxu0 %v8063
        %10021 = vmatprep.subr.bf16.mxu0 %v8068
        %10022 = vmatpush1.bf16.msra.mxu0 %v8067
        %10023 = vmatprep.subr.bf16.mxu0 %v8072
        %10024 = vmatpush1.bf16.msra.mxu0 %v8071
        %10025 = vmatprep.mubr.bf16.mxu0 %v2500
        %10026 = vmatmul.mubr.bf16.gmra.mrb[0].mxu0 %v2499
        %v10027 = vpop.f32.mrb[0].mxu0
        %v10028 = vadd.f32 %v9987, %v10027
        %v10029 = vpop.f32.mrb[0].mxu0
        %v10030 = vadd.f32 %v9989, %v10029
        %v10031 = vpop.f32.mrb[0].mxu0
        %v10032 = vpop.f32.mrb[0].mxu0
        %10033 = vdwg.mxu0
        %10034 = vmatprep.subr.bf16.mxu0 %v8076
        %10035 = vmatpush1.bf16.msra.mxu0 %v8075
        %10036 = vmatprep.subr.bf16.mxu0 %v8080
        %10037 = vmatpush1.bf16.msra.mxu0 %v8079
        %10038 = vmatprep.subr.bf16.mxu0 %v8084
        %10039 = vmatpush1.bf16.msra.mxu0 %v8083
        %10040 = vmatprep.subr.bf16.mxu0 %v8088
        %10041 = vmatpush1.bf16.msra.mxu0 %v8087
        %10042 = vmatprep.subr.bf16.mxu0 %v8092
        %10043 = vmatpush1.bf16.msra.mxu0 %v8091
        %10044 = vmatprep.subr.bf16.mxu0 %v8096
        %10045 = vmatpush1.bf16.msra.mxu0 %v8095
        %10046 = vmatprep.subr.bf16.mxu0 %v8100
        %10047 = vmatpush1.bf16.msra.mxu0 %v8099
        %10048 = vmatprep.subr.bf16.mxu0 %v8104
        %10049 = vmatpush1.bf16.msra.mxu0 %v8103
        %10050 = vmatprep.subr.bf16.mxu0 %v8108
        %10051 = vmatpush1.bf16.msra.mxu0 %v8107
        %10052 = vmatprep.subr.bf16.mxu0 %v8112
        %10053 = vmatpush1.bf16.msra.mxu0 %v8111
        %10054 = vmatprep.subr.bf16.mxu0 %v8116
        %10055 = vmatpush1.bf16.msra.mxu0 %v8115
        %10056 = vmatprep.subr.bf16.mxu0 %v8120
        %10057 = vmatpush1.bf16.msra.mxu0 %v8119
        %10058 = vmatprep.subr.bf16.mxu0 %v8124
        %10059 = vmatpush1.bf16.msra.mxu0 %v8123
        %10060 = vmatprep.subr.bf16.mxu0 %v8128
        %10061 = vmatpush1.bf16.msra.mxu0 %v8127
        %10062 = vmatprep.subr.bf16.mxu0 %v8132
        %10063 = vmatpush1.bf16.msra.mxu0 %v8131
        %10064 = vmatprep.subr.bf16.mxu0 %v8136
        %10065 = vmatpush1.bf16.msra.mxu0 %v8135
        %10066 = vmatprep.mubr.bf16.mxu0 %v2502
        %10067 = vmatmul.mubr.bf16.gmra.mrb[0].mxu0 %v2501
        %v10068 = vpop.f32.mrb[0].mxu0
        %v10069 = vadd.f32 %v10028, %v10068
        %v10070 = vpop.f32.mrb[0].mxu0
        %v10071 = vadd.f32 %v10030, %v10070
        %v10072 = vpop.f32.mrb[0].mxu0
        %v10073 = vpop.f32.mrb[0].mxu0
        %10074 = vdwg.mxu0
        %10075 = vmatprep.subr.bf16.mxu0 %v8140
        %10076 = vmatpush1.bf16.msra.mxu0 %v8139
        %10077 = vmatprep.subr.bf16.mxu0 %v8144
        %10078 = vmatpush1.bf16.msra.mxu0 %v8143
        %10079 = vmatprep.subr.bf16.mxu0 %v8148
        %10080 = vmatpush1.bf16.msra.mxu0 %v8147
        %10081 = vmatprep.subr.bf16.mxu0 %v8152
        %10082 = vmatpush1.bf16.msra.mxu0 %v8151
        %10083 = vmatprep.subr.bf16.mxu0 %v8156
        %10084 = vmatpush1.bf16.msra.mxu0 %v8155
        %10085 = vmatprep.subr.bf16.mxu0 %v8160
        %10086 = vmatpush1.bf16.msra.mxu0 %v8159
        %10087 = vmatprep.subr.bf16.mxu0 %v8164
        %10088 = vmatpush1.bf16.msra.mxu0 %v8163
        %10089 = vmatprep.subr.bf16.mxu0 %v8168
        %10090 = vmatpush1.bf16.msra.mxu0 %v8167
        %10091 = vmatprep.subr.bf16.mxu0 %v8172
        %10092 = vmatpush1.bf16.msra.mxu0 %v8171
        %10093 = vmatprep.subr.bf16.mxu0 %v8176
        %10094 = vmatpush1.bf16.msra.mxu0 %v8175
        %10095 = vmatprep.subr.bf16.mxu0 %v8180
        %10096 = vmatpush1.bf16.msra.mxu0 %v8179
        %10097 = vmatprep.subr.bf16.mxu0 %v8184
        %10098 = vmatpush1.bf16.msra.mxu0 %v8183
        %10099 = vmatprep.subr.bf16.mxu0 %v8188
        %10100 = vmatpush1.bf16.msra.mxu0 %v8187
        %10101 = vmatprep.subr.bf16.mxu0 %v8192
        %10102 = vmatpush1.bf16.msra.mxu0 %v8191
        %10103 = vmatprep.subr.bf16.mxu0 %v8196
        %10104 = vmatpush1.bf16.msra.mxu0 %v8195
        %10105 = vmatprep.subr.bf16.mxu0 %v8200
        %10106 = vmatpush1.bf16.msra.mxu0 %v8199
        %10107 = vmatprep.mubr.bf16.mxu0 %v2504
        %10108 = vmatmul.mubr.bf16.gmra.mrb[0].mxu0 %v2503
        %v10109 = vpop.f32.mrb[0].mxu0
        %v10110 = vadd.f32 %v10069, %v10109
        %v10111 = vpop.f32.mrb[0].mxu0
        %v10112 = vadd.f32 %v10071, %v10111
        %v10113 = vpop.f32.mrb[0].mxu0
        %v10114 = vpop.f32.mrb[0].mxu0
        %10115 = vdwg.mxu0
        %10116 = vmatprep.subr.bf16.mxu0 %v8204
        %10117 = vmatpush1.bf16.msra.mxu0 %v8203
        %10118 = vmatprep.subr.bf16.mxu0 %v8208
        %10119 = vmatpush1.bf16.msra.mxu0 %v8207
        %10120 = vmatprep.subr.bf16.mxu0 %v8212
        %10121 = vmatpush1.bf16.msra.mxu0 %v8211
        %10122 = vmatprep.subr.bf16.mxu0 %v8216
        %10123 = vmatpush1.bf16.msra.mxu0 %v8215
        %10124 = vmatprep.subr.bf16.mxu0 %v8220
        %10125 = vmatpush1.bf16.msra.mxu0 %v8219
        %10126 = vmatprep.subr.bf16.mxu0 %v8224
        %10127 = vmatpush1.bf16.msra.mxu0 %v8223
        %10128 = vmatprep.subr.bf16.mxu0 %v8228
        %10129 = vmatpush1.bf16.msra.mxu0 %v8227
        %10130 = vmatprep.subr.bf16.mxu0 %v8232
        %10131 = vmatpush1.bf16.msra.mxu0 %v8231
        %10132 = vmatprep.subr.bf16.mxu0 %v8236
        %10133 = vmatpush1.bf16.msra.mxu0 %v8235
        %10134 = vmatprep.subr.bf16.mxu0 %v8240
        %10135 = vmatpush1.bf16.msra.mxu0 %v8239
        %10136 = vmatprep.subr.bf16.mxu0 %v8244
        %10137 = vmatpush1.bf16.msra.mxu0 %v8243
        %10138 = vmatprep.subr.bf16.mxu0 %v8248
        %10139 = vmatpush1.bf16.msra.mxu0 %v8247
        %10140 = vmatprep.subr.bf16.mxu0 %v8252
        %10141 = vmatpush1.bf16.msra.mxu0 %v8251
        %10142 = vmatprep.subr.bf16.mxu0 %v8256
        %10143 = vmatpush1.bf16.msra.mxu0 %v8255
        %10144 = vmatprep.subr.bf16.mxu0 %v8260
        %10145 = vmatpush1.bf16.msra.mxu0 %v8259
        %10146 = vmatprep.subr.bf16.mxu0 %v8264
        %10147 = vmatpush1.bf16.msra.mxu0 %v8263
        %10148 = vmatprep.mubr.bf16.mxu0 %v2506
        %10149 = vmatmul.mubr.bf16.gmra.mrb[0].mxu0 %v2505
        %v10150 = vpop.f32.mrb[0].mxu0
        %v10151 = vadd.f32 %v10110, %v10150
        %v10152 = vpop.f32.mrb[0].mxu0
        %v10153 = vadd.f32 %v10112, %v10152
        %v10154 = vpop.f32.mrb[0].mxu0
        %v10155 = vpop.f32.mrb[0].mxu0
        %10156 = vdwg.mxu0
        %10157 = vmatprep.subr.bf16.mxu0 %v7118
        %10158 = vmatpush1.bf16.msra.mxu0 %v7117
        %10159 = vmatprep.subr.bf16.mxu0 %v7122
        %10160 = vmatpush1.bf16.msra.mxu0 %v7121
        %10161 = vmatprep.subr.bf16.mxu0 %v7126
        %10162 = vmatpush1.bf16.msra.mxu0 %v7125
        %10163 = vmatprep.subr.bf16.mxu0 %v7130
        %10164 = vmatpush1.bf16.msra.mxu0 %v7129
        %10165 = vmatprep.subr.bf16.mxu0 %v7134
        %10166 = vmatpush1.bf16.msra.mxu0 %v7133
        %10167 = vmatprep.subr.bf16.mxu0 %v7138
        %10168 = vmatpush1.bf16.msra.mxu0 %v7137
        %10169 = vmatprep.subr.bf16.mxu0 %v7142
        %10170 = vmatpush1.bf16.msra.mxu0 %v7141
        %10171 = vmatprep.subr.bf16.mxu0 %v7146
        %10172 = vmatpush1.bf16.msra.mxu0 %v7145
        %10173 = vmatprep.subr.bf16.mxu0 %v7150
        %10174 = vmatpush1.bf16.msra.mxu0 %v7149
        %10175 = vmatprep.subr.bf16.mxu0 %v7154
        %10176 = vmatpush1.bf16.msra.mxu0 %v7153
        %10177 = vmatprep.subr.bf16.mxu0 %v7158
        %10178 = vmatpush1.bf16.msra.mxu0 %v7157
        %10179 = vmatprep.subr.bf16.mxu0 %v7162
        %10180 = vmatpush1.bf16.msra.mxu0 %v7161
        %10181 = vmatprep.subr.bf16.mxu0 %v7166
        %10182 = vmatpush1.bf16.msra.mxu0 %v7165
        %10183 = vmatprep.subr.bf16.mxu0 %v7170
        %10184 = vmatpush1.bf16.msra.mxu0 %v7169
        %10185 = vmatprep.subr.bf16.mxu0 %v7174
        %10186 = vmatpush1.bf16.msra.mxu0 %v7173
        %10187 = vmatprep.subr.bf16.mxu0 %v7178
        %10188 = vmatpush1.bf16.msra.mxu0 %v7177
        %10189 = vmatprep.mubr.bf16.mxu0 %v2472
        %10190 = vmatmul.mubr.bf16.gmra.mrb[0].mxu0 %v2471
        %v10191 = vpop.f32.mrb[0].mxu0
        %v10192 = vadd.f32 0.0, %v10191
        %v10193 = vpop.f32.mrb[0].mxu0
        %v10194 = vadd.f32 0.0, %v10193
        %v10195 = vpop.f32.mrb[0].mxu0
        %v10196 = vpop.f32.mrb[0].mxu0
        %10197 = vdwg.mxu0
        %10198 = vmatprep.subr.bf16.mxu0 %v7182
        %10199 = vmatpush1.bf16.msra.mxu0 %v7181
        %10200 = vmatprep.subr.bf16.mxu0 %v7186
        %10201 = vmatpush1.bf16.msra.mxu0 %v7185
        %10202 = vmatprep.subr.bf16.mxu0 %v7190
        %10203 = vmatpush1.bf16.msra.mxu0 %v7189
        %10204 = vmatprep.subr.bf16.mxu0 %v7194
        %10205 = vmatpush1.bf16.msra.mxu0 %v7193
        %10206 = vmatprep.subr.bf16.mxu0 %v7198
        %10207 = vmatpush1.bf16.msra.mxu0 %v7197
        %10208 = vmatprep.subr.bf16.mxu0 %v7202
        %10209 = vmatpush1.bf16.msra.mxu0 %v7201
        %10210 = vmatprep.subr.bf16.mxu0 %v7206
        %10211 = vmatpush1.bf16.msra.mxu0 %v7205
        %10212 = vmatprep.subr.bf16.mxu0 %v7210
        %10213 = vmatpush1.bf16.msra.mxu0 %v7209
        %10214 = vmatprep.subr.bf16.mxu0 %v7214
        %10215 = vmatpush1.bf16.msra.mxu0 %v7213
        %10216 = vmatprep.subr.bf16.mxu0 %v7218
        %10217 = vmatpush1.bf16.msra.mxu0 %v7217
        %10218 = vmatprep.subr.bf16.mxu0 %v7222
        %10219 = vmatpush1.bf16.msra.mxu0 %v7221
        %10220 = vmatprep.subr.bf16.mxu0 %v7226
        %10221 = vmatpush1.bf16.msra.mxu0 %v7225
        %10222 = vmatprep.subr.bf16.mxu0 %v7230
        %10223 = vmatpush1.bf16.msra.mxu0 %v7229
        %10224 = vmatprep.subr.bf16.mxu0 %v7234
        %10225 = vmatpush1.bf16.msra.mxu0 %v7233
        %10226 = vmatprep.subr.bf16.mxu0 %v7238
        %10227 = vmatpush1.bf16.msra.mxu0 %v7237
        %10228 = vmatprep.subr.bf16.mxu0 %v7242
        %10229 = vmatpush1.bf16.msra.mxu0 %v7241
        %10230 = vmatprep.mubr.bf16.mxu0 %v2474
        %10231 = vmatmul.mubr.bf16.gmra.mrb[0].mxu0 %v2473
        %v10232 = vpop.f32.mrb[0].mxu0
        %v10233 = vadd.f32 %v10192, %v10232
        %v10234 = vpop.f32.mrb[0].mxu0
        %v10235 = vadd.f32 %v10194, %v10234
        %v10236 = vpop.f32.mrb[0].mxu0
        %v10237 = vpop.f32.mrb[0].mxu0
        %10238 = vdwg.mxu0
        %10239 = vmatprep.subr.bf16.mxu0 %v7246
        %10240 = vmatpush1.bf16.msra.mxu0 %v7245
        %10241 = vmatprep.subr.bf16.mxu0 %v7250
        %10242 = vmatpush1.bf16.msra.mxu0 %v7249
        %10243 = vmatprep.subr.bf16.mxu0 %v7254
        %10244 = vmatpush1.bf16.msra.mxu0 %v7253
        %10245 = vmatprep.subr.bf16.mxu0 %v7258
        %10246 = vmatpush1.bf16.msra.mxu0 %v7257
        %10247 = vmatprep.subr.bf16.mxu0 %v7262
        %10248 = vmatpush1.bf16.msra.mxu0 %v7261
        %10249 = vmatprep.subr.bf16.mxu0 %v7266
        %10250 = vmatpush1.bf16.msra.mxu0 %v7265
        %10251 = vmatprep.subr.bf16.mxu0 %v7270
        %10252 = vmatpush1.bf16.msra.mxu0 %v7269
        %10253 = vmatprep.subr.bf16.mxu0 %v7274
        %10254 = vmatpush1.bf16.msra.mxu0 %v7273
        %10255 = vmatprep.subr.bf16.mxu0 %v7278
        %10256 = vmatpush1.bf16.msra.mxu0 %v7277
        %10257 = vmatprep.subr.bf16.mxu0 %v7282
        %10258 = vmatpush1.bf16.msra.mxu0 %v7281
        %10259 = vmatprep.subr.bf16.mxu0 %v7286
        %10260 = vmatpush1.bf16.msra.mxu0 %v7285
        %10261 = vmatprep.subr.bf16.mxu0 %v7290
        %10262 = vmatpush1.bf16.msra.mxu0 %v7289
        %10263 = vmatprep.subr.bf16.mxu0 %v7294
        %10264 = vmatpush1.bf16.msra.mxu0 %v7293
        %10265 = vmatprep.subr.bf16.mxu0 %v7298
        %10266 = vmatpush1.bf16.msra.mxu0 %v7297
        %10267 = vmatprep.subr.bf16.mxu0 %v7302
        %10268 = vmatpush1.bf16.msra.mxu0 %v7301
        %10269 = vmatprep.subr.bf16.mxu0 %v7306
        %10270 = vmatpush1.bf16.msra.mxu0 %v7305
        %10271 = vmatprep.mubr.bf16.mxu0 %v2476
        %10272 = vmatmul.mubr.bf16.gmra.mrb[0].mxu0 %v2475
        %v10273 = vpop.f32.mrb[0].mxu0
        %v10274 = vadd.f32 %v10233, %v10273
        %v10275 = vpop.f32.mrb[0].mxu0
        %v10276 = vadd.f32 %v10235, %v10275
        %v10277 = vpop.f32.mrb[0].mxu0
        %v10278 = vpop.f32.mrb[0].mxu0
        %10279 = vdwg.mxu0
        %10280 = vmatprep.subr.bf16.mxu0 %v7310
        %10281 = vmatpush1.bf16.msra.mxu0 %v7309
        %10282 = vmatprep.subr.bf16.mxu0 %v7314
        %10283 = vmatpush1.bf16.msra.mxu0 %v7313
        %10284 = vmatprep.subr.bf16.mxu0 %v7318
        %10285 = vmatpush1.bf16.msra.mxu0 %v7317
        %10286 = vmatprep.subr.bf16.mxu0 %v7322
        %10287 = vmatpush1.bf16.msra.mxu0 %v7321
        %10288 = vmatprep.subr.bf16.mxu0 %v7326
        %10289 = vmatpush1.bf16.msra.mxu0 %v7325
        %10290 = vmatprep.subr.bf16.mxu0 %v7330
        %10291 = vmatpush1.bf16.msra.mxu0 %v7329
        %10292 = vmatprep.subr.bf16.mxu0 %v7334
        %10293 = vmatpush1.bf16.msra.mxu0 %v7333
        %10294 = vmatprep.subr.bf16.mxu0 %v7338
        %10295 = vmatpush1.bf16.msra.mxu0 %v7337
        %10296 = vmatprep.subr.bf16.mxu0 %v7342
        %10297 = vmatpush1.bf16.msra.mxu0 %v7341
        %10298 = vmatprep.subr.bf16.mxu0 %v7346
        %10299 = vmatpush1.bf16.msra.mxu0 %v7345
        %10300 = vmatprep.subr.bf16.mxu0 %v7350
        %10301 = vmatpush1.bf16.msra.mxu0 %v7349
        %10302 = vmatprep.subr.bf16.mxu0 %v7354
        %10303 = vmatpush1.bf16.msra.mxu0 %v7353
        %10304 = vmatprep.subr.bf16.mxu0 %v7358
        %10305 = vmatpush1.bf16.msra.mxu0 %v7357
        %10306 = vmatprep.subr.bf16.mxu0 %v7362
        %10307 = vmatpush1.bf16.msra.mxu0 %v7361
        %10308 = vmatprep.subr.bf16.mxu0 %v7366
        %10309 = vmatpush1.bf16.msra.mxu0 %v7365
        %10310 = vmatprep.subr.bf16.mxu0 %v7370
        %10311 = vmatpush1.bf16.msra.mxu0 %v7369
        %10312 = vmatprep.mubr.bf16.mxu0 %v2478
        %10313 = vmatmul.mubr.bf16.gmra.mrb[0].mxu0 %v2477
        %v10314 = vpop.f32.mrb[0].mxu0
        %v10315 = vadd.f32 %v10274, %v10314
        %v10316 = vpop.f32.mrb[0].mxu0
        %v10317 = vadd.f32 %v10276, %v10316
        %v10318 = vpop.f32.mrb[0].mxu0
        %v10319 = vpop.f32.mrb[0].mxu0
        %10320 = vdwg.mxu0
        %10321 = vmatprep.subr.bf16.mxu0 %v7374
        %10322 = vmatpush1.bf16.msra.mxu0 %v7373
        %10323 = vmatprep.subr.bf16.mxu0 %v7378
        %10324 = vmatpush1.bf16.msra.mxu0 %v7377
        %10325 = vmatprep.subr.bf16.mxu0 %v7382
        %10326 = vmatpush1.bf16.msra.mxu0 %v7381
        %10327 = vmatprep.subr.bf16.mxu0 %v7386
        %10328 = vmatpush1.bf16.msra.mxu0 %v7385
        %10329 = vmatprep.subr.bf16.mxu0 %v7390
        %10330 = vmatpush1.bf16.msra.mxu0 %v7389
        %10331 = vmatprep.subr.bf16.mxu0 %v7394
        %10332 = vmatpush1.bf16.msra.mxu0 %v7393
        %10333 = vmatprep.subr.bf16.mxu0 %v7398
        %10334 = vmatpush1.bf16.msra.mxu0 %v7397
        %10335 = vmatprep.subr.bf16.mxu0 %v7402
        %10336 = vmatpush1.bf16.msra.mxu0 %v7401
        %10337 = vmatprep.subr.bf16.mxu0 %v7406
        %10338 = vmatpush1.bf16.msra.mxu0 %v7405
        %10339 = vmatprep.subr.bf16.mxu0 %v7410
        %10340 = vmatpush1.bf16.msra.mxu0 %v7409
        %10341 = vmatprep.subr.bf16.mxu0 %v7414
        %10342 = vmatpush1.bf16.msra.mxu0 %v7413
        %10343 = vmatprep.subr.bf16.mxu0 %v7418
        %10344 = vmatpush1.bf16.msra.mxu0 %v7417
        %10345 = vmatprep.subr.bf16.mxu0 %v7422
        %10346 = vmatpush1.bf16.msra.mxu0 %v7421
        %10347 = vmatprep.subr.bf16.mxu0 %v7426
        %10348 = vmatpush1.bf16.msra.mxu0 %v7425
        %10349 = vmatprep.subr.bf16.mxu0 %v7430
        %10350 = vmatpush1.bf16.msra.mxu0 %v7429
        %10351 = vmatprep.subr.bf16.mxu0 %v7434
        %10352 = vmatpush1.bf16.msra.mxu0 %v7433
        %10353 = vmatprep.mubr.bf16.mxu0 %v2480
        %10354 = vmatmul.mubr.bf16.gmra.mrb[0].mxu0 %v2479
        %v10355 = vpop.f32.mrb[0].mxu0
        %v10356 = vadd.f32 %v10315, %v10355
        %v10357 = vpop.f32.mrb[0].mxu0
        %v10358 = vadd.f32 %v10317, %v10357
        %v10359 = vpop.f32.mrb[0].mxu0
        %v10360 = vpop.f32.mrb[0].mxu0
        %10361 = vdwg.mxu0
        %10362 = vmatprep.subr.bf16.mxu0 %v7438
        %10363 = vmatpush1.bf16.msra.mxu0 %v7437
        %10364 = vmatprep.subr.bf16.mxu0 %v7442
        %10365 = vmatpush1.bf16.msra.mxu0 %v7441
        %10366 = vmatprep.subr.bf16.mxu0 %v7446
        %10367 = vmatpush1.bf16.msra.mxu0 %v7445
        %10368 = vmatprep.subr.bf16.mxu0 %v7450
        %10369 = vmatpush1.bf16.msra.mxu0 %v7449
        %10370 = vmatprep.subr.bf16.mxu0 %v7454
        %10371 = vmatpush1.bf16.msra.mxu0 %v7453
        %10372 = vmatprep.subr.bf16.mxu0 %v7458
        %10373 = vmatpush1.bf16.msra.mxu0 %v7457
        %10374 = vmatprep.subr.bf16.mxu0 %v7462
        %10375 = vmatpush1.bf16.msra.mxu0 %v7461
        %10376 = vmatprep.subr.bf16.mxu0 %v7466
        %10377 = vmatpush1.bf16.msra.mxu0 %v7465
        %10378 = vmatprep.subr.bf16.mxu0 %v7470
        %10379 = vmatpush1.bf16.msra.mxu0 %v7469
        %10380 = vmatprep.subr.bf16.mxu0 %v7474
        %10381 = vmatpush1.bf16.msra.mxu0 %v7473
        %10382 = vmatprep.subr.bf16.mxu0 %v7478
        %10383 = vmatpush1.bf16.msra.mxu0 %v7477
        %10384 = vmatprep.subr.bf16.mxu0 %v7482
        %10385 = vmatpush1.bf16.msra.mxu0 %v7481
        %10386 = vmatprep.subr.bf16.mxu0 %v7486
        %10387 = vmatpush1.bf16.msra.mxu0 %v7485
        %10388 = vmatprep.subr.bf16.mxu0 %v7490
        %10389 = vmatpush1.bf16.msra.mxu0 %v7489
        %10390 = vmatprep.subr.bf16.mxu0 %v7494
        %10391 = vmatpush1.bf16.msra.mxu0 %v7493
        %10392 = vmatprep.subr.bf16.mxu0 %v7498
        %10393 = vmatpush1.bf16.msra.mxu0 %v7497
        %10394 = vmatprep.mubr.bf16.mxu0 %v2482
        %10395 = vmatmul.mubr.bf16.gmra.mrb[0].mxu0 %v2481
        %v10396 = vpop.f32.mrb[0].mxu0
        %v10397 = vadd.f32 %v10356, %v10396
        %v10398 = vpop.f32.mrb[0].mxu0
        %v10399 = vadd.f32 %v10358, %v10398
        %v10400 = vpop.f32.mrb[0].mxu0
        %v10401 = vpop.f32.mrb[0].mxu0
        %10402 = vdwg.mxu0
        %10403 = vmatprep.subr.bf16.mxu0 %v7502
        %10404 = vmatpush1.bf16.msra.mxu0 %v7501
        %10405 = vmatprep.subr.bf16.mxu0 %v7506
        %10406 = vmatpush1.bf16.msra.mxu0 %v7505
        %10407 = vmatprep.subr.bf16.mxu0 %v7510
        %10408 = vmatpush1.bf16.msra.mxu0 %v7509
        %10409 = vmatprep.subr.bf16.mxu0 %v7514
        %10410 = vmatpush1.bf16.msra.mxu0 %v7513
        %10411 = vmatprep.subr.bf16.mxu0 %v7518
        %10412 = vmatpush1.bf16.msra.mxu0 %v7517
        %10413 = vmatprep.subr.bf16.mxu0 %v7522
        %10414 = vmatpush1.bf16.msra.mxu0 %v7521
        %10415 = vmatprep.subr.bf16.mxu0 %v7526
        %10416 = vmatpush1.bf16.msra.mxu0 %v7525
        %10417 = vmatprep.subr.bf16.mxu0 %v7530
        %10418 = vmatpush1.bf16.msra.mxu0 %v7529
        %10419 = vmatprep.subr.bf16.mxu0 %v7534
        %10420 = vmatpush1.bf16.msra.mxu0 %v7533
        %10421 = vmatprep.subr.bf16.mxu0 %v7538
        %10422 = vmatpush1.bf16.msra.mxu0 %v7537
        %10423 = vmatprep.subr.bf16.mxu0 %v7542
        %10424 = vmatpush1.bf16.msra.mxu0 %v7541
        %10425 = vmatprep.subr.bf16.mxu0 %v7546
        %10426 = vmatpush1.bf16.msra.mxu0 %v7545
        %10427 = vmatprep.subr.bf16.mxu0 %v7550
        %10428 = vmatpush1.bf16.msra.mxu0 %v7549
        %10429 = vmatprep.subr.bf16.mxu0 %v7554
        %10430 = vmatpush1.bf16.msra.mxu0 %v7553
        %10431 = vmatprep.subr.bf16.mxu0 %v7558
        %10432 = vmatpush1.bf16.msra.mxu0 %v7557
        %10433 = vmatprep.subr.bf16.mxu0 %v7562
        %10434 = vmatpush1.bf16.msra.mxu0 %v7561
        %10435 = vmatprep.mubr.bf16.mxu0 %v2484
        %10436 = vmatmul.mubr.bf16.gmra.mrb[0].mxu0 %v2483
        %v10437 = vpop.f32.mrb[0].mxu0
        %v10438 = vadd.f32 %v10397, %v10437
        %v10439 = vpop.f32.mrb[0].mxu0
        %v10440 = vadd.f32 %v10399, %v10439
        %v10441 = vpop.f32.mrb[0].mxu0
        %v10442 = vpop.f32.mrb[0].mxu0
        %10443 = vdwg.mxu0
        %10444 = vmatprep.subr.bf16.mxu0 %v7566
        %10445 = vmatpush1.bf16.msra.mxu0 %v7565
        %10446 = vmatprep.subr.bf16.mxu0 %v7570
        %10447 = vmatpush1.bf16.msra.mxu0 %v7569
        %10448 = vmatprep.subr.bf16.mxu0 %v7574
        %10449 = vmatpush1.bf16.msra.mxu0 %v7573
        %10450 = vmatprep.subr.bf16.mxu0 %v7578
        %10451 = vmatpush1.bf16.msra.mxu0 %v7577
        %10452 = vmatprep.subr.bf16.mxu0 %v7582
        %10453 = vmatpush1.bf16.msra.mxu0 %v7581
        %10454 = vmatprep.subr.bf16.mxu0 %v7586
        %10455 = vmatpush1.bf16.msra.mxu0 %v7585
        %10456 = vmatprep.subr.bf16.mxu0 %v7590
        %10457 = vmatpush1.bf16.msra.mxu0 %v7589
        %10458 = vmatprep.subr.bf16.mxu0 %v7594
        %10459 = vmatpush1.bf16.msra.mxu0 %v7593
        %10460 = vmatprep.subr.bf16.mxu0 %v7598
        %10461 = vmatpush1.bf16.msra.mxu0 %v7597
        %10462 = vmatprep.subr.bf16.mxu0 %v7602
        %10463 = vmatpush1.bf16.msra.mxu0 %v7601
        %10464 = vmatprep.subr.bf16.mxu0 %v7606
        %10465 = vmatpush1.bf16.msra.mxu0 %v7605
        %10466 = vmatprep.subr.bf16.mxu0 %v7610
        %10467 = vmatpush1.bf16.msra.mxu0 %v7609
        %10468 = vmatprep.subr.bf16.mxu0 %v7614
        %10469 = vmatpush1.bf16.msra.mxu0 %v7613
        %10470 = vmatprep.subr.bf16.mxu0 %v7618
        %10471 = vmatpush1.bf16.msra.mxu0 %v7617
        %10472 = vmatprep.subr.bf16.mxu0 %v7622
        %10473 = vmatpush1.bf16.msra.mxu0 %v7621
        %10474 = vmatprep.subr.bf16.mxu0 %v7626
        %10475 = vmatpush1.bf16.msra.mxu0 %v7625
        %10476 = vmatprep.mubr.bf16.mxu0 %v2486
        %10477 = vmatmul.mubr.bf16.gmra.mrb[0].mxu0 %v2485
        %v10478 = vpop.f32.mrb[0].mxu0
        %v10479 = vadd.f32 %v10438, %v10478
        %v10480 = vpop.f32.mrb[0].mxu0
        %v10481 = vadd.f32 %v10440, %v10480
        %v10482 = vpop.f32.mrb[0].mxu0
        %v10483 = vpop.f32.mrb[0].mxu0
        %10484 = vdwg.mxu0
        %10485 = vmatprep.subr.bf16.mxu0 %v7630
        %10486 = vmatpush1.bf16.msra.mxu0 %v7629
        %10487 = vmatprep.subr.bf16.mxu0 %v7634
        %10488 = vmatpush1.bf16.msra.mxu0 %v7633
        %10489 = vmatprep.subr.bf16.mxu0 %v7638
        %10490 = vmatpush1.bf16.msra.mxu0 %v7637
        %10491 = vmatprep.subr.bf16.mxu0 %v7642
        %10492 = vmatpush1.bf16.msra.mxu0 %v7641
        %10493 = vmatprep.subr.bf16.mxu0 %v7646
        %10494 = vmatpush1.bf16.msra.mxu0 %v7645
        %10495 = vmatprep.subr.bf16.mxu0 %v7650
        %10496 = vmatpush1.bf16.msra.mxu0 %v7649
        %10497 = vmatprep.subr.bf16.mxu0 %v7654
        %10498 = vmatpush1.bf16.msra.mxu0 %v7653
        %10499 = vmatprep.subr.bf16.mxu0 %v7658
        %10500 = vmatpush1.bf16.msra.mxu0 %v7657
        %10501 = vmatprep.subr.bf16.mxu0 %v7662
        %10502 = vmatpush1.bf16.msra.mxu0 %v7661
        %10503 = vmatprep.subr.bf16.mxu0 %v7666
        %10504 = vmatpush1.bf16.msra.mxu0 %v7665
        %10505 = vmatprep.subr.bf16.mxu0 %v7670
        %10506 = vmatpush1.bf16.msra.mxu0 %v7669
        %10507 = vmatprep.subr.bf16.mxu0 %v7674
        %10508 = vmatpush1.bf16.msra.mxu0 %v7673
        %10509 = vmatprep.subr.bf16.mxu0 %v7678
        %10510 = vmatpush1.bf16.msra.mxu0 %v7677
        %10511 = vmatprep.subr.bf16.mxu0 %v7682
        %10512 = vmatpush1.bf16.msra.mxu0 %v7681
        %10513 = vmatprep.subr.bf16.mxu0 %v7686
        %10514 = vmatpush1.bf16.msra.mxu0 %v7685
        %10515 = vmatprep.subr.bf16.mxu0 %v7690
        %10516 = vmatpush1.bf16.msra.mxu0 %v7689
        %10517 = vmatprep.mubr.bf16.mxu0 %v2488
        %10518 = vmatmul.mubr.bf16.gmra.mrb[0].mxu0 %v2487
        %v10519 = vpop.f32.mrb[0].mxu0
        %v10520 = vadd.f32 %v10479, %v10519
        %v10521 = vpop.f32.mrb[0].mxu0
        %v10522 = vadd.f32 %v10481, %v10521
        %v10523 = vpop.f32.mrb[0].mxu0
        %v10524 = vpop.f32.mrb[0].mxu0
        %10525 = vdwg.mxu0
        %10526 = vmatprep.subr.bf16.mxu0 %v7694
        %10527 = vmatpush1.bf16.msra.mxu0 %v7693
        %10528 = vmatprep.subr.bf16.mxu0 %v7698
        %10529 = vmatpush1.bf16.msra.mxu0 %v7697
        %10530 = vmatprep.subr.bf16.mxu0 %v7702
        %10531 = vmatpush1.bf16.msra.mxu0 %v7701
        %10532 = vmatprep.subr.bf16.mxu0 %v7706
        %10533 = vmatpush1.bf16.msra.mxu0 %v7705
        %10534 = vmatprep.subr.bf16.mxu0 %v7710
        %10535 = vmatpush1.bf16.msra.mxu0 %v7709
        %10536 = vmatprep.subr.bf16.mxu0 %v7714
        %10537 = vmatpush1.bf16.msra.mxu0 %v7713
        %10538 = vmatprep.subr.bf16.mxu0 %v7718
        %10539 = vmatpush1.bf16.msra.mxu0 %v7717
        %10540 = vmatprep.subr.bf16.mxu0 %v7722
        %10541 = vmatpush1.bf16.msra.mxu0 %v7721
        %10542 = vmatprep.subr.bf16.mxu0 %v7726
        %10543 = vmatpush1.bf16.msra.mxu0 %v7725
        %10544 = vmatprep.subr.bf16.mxu0 %v7730
        %10545 = vmatpush1.bf16.msra.mxu0 %v7729
        %10546 = vmatprep.subr.bf16.mxu0 %v7734
        %10547 = vmatpush1.bf16.msra.mxu0 %v7733
        %10548 = vmatprep.subr.bf16.mxu0 %v7738
        %10549 = vmatpush1.bf16.msra.mxu0 %v7737
        %10550 = vmatprep.subr.bf16.mxu0 %v7742
        %10551 = vmatpush1.bf16.msra.mxu0 %v7741
        %10552 = vmatprep.subr.bf16.mxu0 %v7746
        %10553 = vmatpush1.bf16.msra.mxu0 %v7745
        %10554 = vmatprep.subr.bf16.mxu0 %v7750
        %10555 = vmatpush1.bf16.msra.mxu0 %v7749
        %10556 = vmatprep.subr.bf16.mxu0 %v7754
        %10557 = vmatpush1.bf16.msra.mxu0 %v7753
        %10558 = vmatprep.mubr.bf16.mxu0 %v2490
        %10559 = vmatmul.mubr.bf16.gmra.mrb[0].mxu0 %v2489
        %v10560 = vpop.f32.mrb[0].mxu0
        %v10561 = vadd.f32 %v10520, %v10560
        %v10562 = vpop.f32.mrb[0].mxu0
        %v10563 = vadd.f32 %v10522, %v10562
        %v10564 = vpop.f32.mrb[0].mxu0
        %v10565 = vpop.f32.mrb[0].mxu0
        %10566 = vdwg.mxu0
        %10567 = vmatprep.subr.bf16.mxu0 %v7758
        %10568 = vmatpush1.bf16.msra.mxu0 %v7757
        %10569 = vmatprep.subr.bf16.mxu0 %v7762
        %10570 = vmatpush1.bf16.msra.mxu0 %v7761
        %10571 = vmatprep.subr.bf16.mxu0 %v7766
        %10572 = vmatpush1.bf16.msra.mxu0 %v7765
        %10573 = vmatprep.subr.bf16.mxu0 %v7770
        %10574 = vmatpush1.bf16.msra.mxu0 %v7769
        %10575 = vmatprep.subr.bf16.mxu0 %v7774
        %10576 = vmatpush1.bf16.msra.mxu0 %v7773
        %10577 = vmatprep.subr.bf16.mxu0 %v7778
        %10578 = vmatpush1.bf16.msra.mxu0 %v7777
        %10579 = vmatprep.subr.bf16.mxu0 %v7782
        %10580 = vmatpush1.bf16.msra.mxu0 %v7781
        %10581 = vmatprep.subr.bf16.mxu0 %v7786
        %10582 = vmatpush1.bf16.msra.mxu0 %v7785
        %10583 = vmatprep.subr.bf16.mxu0 %v7790
        %10584 = vmatpush1.bf16.msra.mxu0 %v7789
        %10585 = vmatprep.subr.bf16.mxu0 %v7794
        %10586 = vmatpush1.bf16.msra.mxu0 %v7793
        %10587 = vmatprep.subr.bf16.mxu0 %v7798
        %10588 = vmatpush1.bf16.msra.mxu0 %v7797
        %10589 = vmatprep.subr.bf16.mxu0 %v7802
        %10590 = vmatpush1.bf16.msra.mxu0 %v7801
        %10591 = vmatprep.subr.bf16.mxu0 %v7806
        %10592 = vmatpush1.bf16.msra.mxu0 %v7805
        %10593 = vmatprep.subr.bf16.mxu0 %v7810
        %10594 = vmatpush1.bf16.msra.mxu0 %v7809
        %10595 = vmatprep.subr.bf16.mxu0 %v7814
        %10596 = vmatpush1.bf16.msra.mxu0 %v7813
        %10597 = vmatprep.subr.bf16.mxu0 %v7818
        %10598 = vmatpush1.bf16.msra.mxu0 %v7817
        %10599 = vmatprep.mubr.bf16.mxu0 %v2492
        %10600 = vmatmul.mubr.bf16.gmra.mrb[0].mxu0 %v2491
        %v10601 = vpop.f32.mrb[0].mxu0
        %v10602 = vadd.f32 %v10561, %v10601
        %v10603 = vpop.f32.mrb[0].mxu0
        %v10604 = vadd.f32 %v10563, %v10603
        %v10605 = vpop.f32.mrb[0].mxu0
        %v10606 = vpop.f32.mrb[0].mxu0
        %10607 = vdwg.mxu0
        %10608 = vmatprep.subr.bf16.mxu0 %v7822
        %10609 = vmatpush1.bf16.msra.mxu0 %v7821
        %10610 = vmatprep.subr.bf16.mxu0 %v7826
        %10611 = vmatpush1.bf16.msra.mxu0 %v7825
        %10612 = vmatprep.subr.bf16.mxu0 %v7830
        %10613 = vmatpush1.bf16.msra.mxu0 %v7829
        %10614 = vmatprep.subr.bf16.mxu0 %v7834
        %10615 = vmatpush1.bf16.msra.mxu0 %v7833
        %10616 = vmatprep.subr.bf16.mxu0 %v7838
        %10617 = vmatpush1.bf16.msra.mxu0 %v7837
        %10618 = vmatprep.subr.bf16.mxu0 %v7842
        %10619 = vmatpush1.bf16.msra.mxu0 %v7841
        %10620 = vmatprep.subr.bf16.mxu0 %v7846
        %10621 = vmatpush1.bf16.msra.mxu0 %v7845
        %10622 = vmatprep.subr.bf16.mxu0 %v7850
        %10623 = vmatpush1.bf16.msra.mxu0 %v7849
        %10624 = vmatprep.subr.bf16.mxu0 %v7854
        %10625 = vmatpush1.bf16.msra.mxu0 %v7853
        %10626 = vmatprep.subr.bf16.mxu0 %v7858
        %10627 = vmatpush1.bf16.msra.mxu0 %v7857
        %10628 = vmatprep.subr.bf16.mxu0 %v7862
        %10629 = vmatpush1.bf16.msra.mxu0 %v7861
        %10630 = vmatprep.subr.bf16.mxu0 %v7866
        %10631 = vmatpush1.bf16.msra.mxu0 %v7865
        %10632 = vmatprep.subr.bf16.mxu0 %v7870
        %10633 = vmatpush1.bf16.msra.mxu0 %v7869
        %10634 = vmatprep.subr.bf16.mxu0 %v7874
        %10635 = vmatpush1.bf16.msra.mxu0 %v7873
        %10636 = vmatprep.subr.bf16.mxu0 %v7878
        %10637 = vmatpush1.bf16.msra.mxu0 %v7877
        %10638 = vmatprep.subr.bf16.mxu0 %v7882
        %10639 = vmatpush1.bf16.msra.mxu0 %v7881
        %10640 = vmatprep.mubr.bf16.mxu0 %v2494
        %10641 = vmatmul.mubr.bf16.gmra.mrb[0].mxu0 %v2493
        %v10642 = vpop.f32.mrb[0].mxu0
        %v10643 = vadd.f32 %v10602, %v10642
        %v10644 = vpop.f32.mrb[0].mxu0
        %v10645 = vadd.f32 %v10604, %v10644
        %v10646 = vpop.f32.mrb[0].mxu0
        %v10647 = vpop.f32.mrb[0].mxu0
        %10648 = vdwg.mxu0
        %10649 = vmatprep.subr.bf16.mxu0 %v7886
        %10650 = vmatpush1.bf16.msra.mxu0 %v7885
        %10651 = vmatprep.subr.bf16.mxu0 %v7890
        %10652 = vmatpush1.bf16.msra.mxu0 %v7889
        %10653 = vmatprep.subr.bf16.mxu0 %v7894
        %10654 = vmatpush1.bf16.msra.mxu0 %v7893
        %10655 = vmatprep.subr.bf16.mxu0 %v7898
        %10656 = vmatpush1.bf16.msra.mxu0 %v7897
        %10657 = vmatprep.subr.bf16.mxu0 %v7902
        %10658 = vmatpush1.bf16.msra.mxu0 %v7901
        %10659 = vmatprep.subr.bf16.mxu0 %v7906
        %10660 = vmatpush1.bf16.msra.mxu0 %v7905
        %10661 = vmatprep.subr.bf16.mxu0 %v7910
        %10662 = vmatpush1.bf16.msra.mxu0 %v7909
        %10663 = vmatprep.subr.bf16.mxu0 %v7914
        %10664 = vmatpush1.bf16.msra.mxu0 %v7913
        %10665 = vmatprep.subr.bf16.mxu0 %v7918
        %10666 = vmatpush1.bf16.msra.mxu0 %v7917
        %10667 = vmatprep.subr.bf16.mxu0 %v7922
        %10668 = vmatpush1.bf16.msra.mxu0 %v7921
        %10669 = vmatprep.subr.bf16.mxu0 %v7926
        %10670 = vmatpush1.bf16.msra.mxu0 %v7925
        %10671 = vmatprep.subr.bf16.mxu0 %v7930
        %10672 = vmatpush1.bf16.msra.mxu0 %v7929
        %10673 = vmatprep.subr.bf16.mxu0 %v7934
        %10674 = vmatpush1.bf16.msra.mxu0 %v7933
        %10675 = vmatprep.subr.bf16.mxu0 %v7938
        %10676 = vmatpush1.bf16.msra.mxu0 %v7937
        %10677 = vmatprep.subr.bf16.mxu0 %v7942
        %10678 = vmatpush1.bf16.msra.mxu0 %v7941
        %10679 = vmatprep.subr.bf16.mxu0 %v7946
        %10680 = vmatpush1.bf16.msra.mxu0 %v7945
        %10681 = vmatprep.mubr.bf16.mxu0 %v2496
        %10682 = vmatmul.mubr.bf16.gmra.mrb[0].mxu0 %v2495
        %v10683 = vpop.f32.mrb[0].mxu0
        %v10684 = vadd.f32 %v10643, %v10683
        %v10685 = vpop.f32.mrb[0].mxu0
        %v10686 = vadd.f32 %v10645, %v10685
        %v10687 = vpop.f32.mrb[0].mxu0
        %v10688 = vpop.f32.mrb[0].mxu0
        %10689 = vdwg.mxu0
        %10690 = vmatprep.subr.bf16.mxu0 %v7950
        %10691 = vmatpush1.bf16.msra.mxu0 %v7949
        %10692 = vmatprep.subr.bf16.mxu0 %v7954
        %10693 = vmatpush1.bf16.msra.mxu0 %v7953
        %10694 = vmatprep.subr.bf16.mxu0 %v7958
        %10695 = vmatpush1.bf16.msra.mxu0 %v7957
        %10696 = vmatprep.subr.bf16.mxu0 %v7962
        %10697 = vmatpush1.bf16.msra.mxu0 %v7961
        %10698 = vmatprep.subr.bf16.mxu0 %v7966
        %10699 = vmatpush1.bf16.msra.mxu0 %v7965
        %10700 = vmatprep.subr.bf16.mxu0 %v7970
        %10701 = vmatpush1.bf16.msra.mxu0 %v7969
        %10702 = vmatprep.subr.bf16.mxu0 %v7974
        %10703 = vmatpush1.bf16.msra.mxu0 %v7973
        %10704 = vmatprep.subr.bf16.mxu0 %v7978
        %10705 = vmatpush1.bf16.msra.mxu0 %v7977
        %10706 = vmatprep.subr.bf16.mxu0 %v7982
        %10707 = vmatpush1.bf16.msra.mxu0 %v7981
        %10708 = vmatprep.subr.bf16.mxu0 %v7986
        %10709 = vmatpush1.bf16.msra.mxu0 %v7985
        %10710 = vmatprep.subr.bf16.mxu0 %v7990
        %10711 = vmatpush1.bf16.msra.mxu0 %v7989
        %10712 = vmatprep.subr.bf16.mxu0 %v7994
        %10713 = vmatpush1.bf16.msra.mxu0 %v7993
        %10714 = vmatprep.subr.bf16.mxu0 %v7998
        %10715 = vmatpush1.bf16.msra.mxu0 %v7997
        %10716 = vmatprep.subr.bf16.mxu0 %v8002
        %10717 = vmatpush1.bf16.msra.mxu0 %v8001
        %10718 = vmatprep.subr.bf16.mxu0 %v8006
        %10719 = vmatpush1.bf16.msra.mxu0 %v8005
        %10720 = vmatprep.subr.bf16.mxu0 %v8010
        %10721 = vmatpush1.bf16.msra.mxu0 %v8009
        %10722 = vmatprep.mubr.bf16.mxu0 %v2498
        %10723 = vmatmul.mubr.bf16.gmra.mrb[0].mxu0 %v2497
        %v10724 = vpop.f32.mrb[0].mxu0
        %v10725 = vadd.f32 %v10684, %v10724
        %v10726 = vpop.f32.mrb[0].mxu0
        %v10727 = vadd.f32 %v10686, %v10726
        %v10728 = vpop.f32.mrb[0].mxu0
        %v10729 = vpop.f32.mrb[0].mxu0
        %10730 = vdwg.mxu0
        %10731 = vmatprep.subr.bf16.mxu0 %v8014
        %10732 = vmatpush1.bf16.msra.mxu0 %v8013
        %10733 = vmatprep.subr.bf16.mxu0 %v8018
        %10734 = vmatpush1.bf16.msra.mxu0 %v8017
        %10735 = vmatprep.subr.bf16.mxu0 %v8022
        %10736 = vmatpush1.bf16.msra.mxu0 %v8021
        %10737 = vmatprep.subr.bf16.mxu0 %v8026
        %10738 = vmatpush1.bf16.msra.mxu0 %v8025
        %10739 = vmatprep.subr.bf16.mxu0 %v8030
        %10740 = vmatpush1.bf16.msra.mxu0 %v8029
        %10741 = vmatprep.subr.bf16.mxu0 %v8034
        %10742 = vmatpush1.bf16.msra.mxu0 %v8033
        %10743 = vmatprep.subr.bf16.mxu0 %v8038
        %10744 = vmatpush1.bf16.msra.mxu0 %v8037
        %10745 = vmatprep.subr.bf16.mxu0 %v8042
        %10746 = vmatpush1.bf16.msra.mxu0 %v8041
        %10747 = vmatprep.subr.bf16.mxu0 %v8046
        %10748 = vmatpush1.bf16.msra.mxu0 %v8045
        %10749 = vmatprep.subr.bf16.mxu0 %v8050
        %10750 = vmatpush1.bf16.msra.mxu0 %v8049
        %10751 = vmatprep.subr.bf16.mxu0 %v8054
        %10752 = vmatpush1.bf16.msra.mxu0 %v8053
        %10753 = vmatprep.subr.bf16.mxu0 %v8058
        %10754 = vmatpush1.bf16.msra.mxu0 %v8057
        %10755 = vmatprep.subr.bf16.mxu0 %v8062
        %10756 = vmatpush1.bf16.msra.mxu0 %v8061
        %10757 = vmatprep.subr.bf16.mxu0 %v8066
        %10758 = vmatpush1.bf16.msra.mxu0 %v8065
        %10759 = vmatprep.subr.bf16.mxu0 %v8070
        %10760 = vmatpush1.bf16.msra.mxu0 %v8069
        %10761 = vmatprep.subr.bf16.mxu0 %v8074
        %10762 = vmatpush1.bf16.msra.mxu0 %v8073
        %10763 = vmatprep.mubr.bf16.mxu0 %v2500
        %10764 = vmatmul.mubr.bf16.gmra.mrb[0].mxu0 %v2499
        %v10765 = vpop.f32.mrb[0].mxu0
        %v10766 = vadd.f32 %v10725, %v10765
        %v10767 = vpop.f32.mrb[0].mxu0
        %v10768 = vadd.f32 %v10727, %v10767
        %v10769 = vpop.f32.mrb[0].mxu0
        %v10770 = vpop.f32.mrb[0].mxu0
        %10771 = vdwg.mxu0
        %10772 = vmatprep.subr.bf16.mxu0 %v8078
        %10773 = vmatpush1.bf16.msra.mxu0 %v8077
        %10774 = vmatprep.subr.bf16.mxu0 %v8082
        %10775 = vmatpush1.bf16.msra.mxu0 %v8081
        %10776 = vmatprep.subr.bf16.mxu0 %v8086
        %10777 = vmatpush1.bf16.msra.mxu0 %v8085
        %10778 = vmatprep.subr.bf16.mxu0 %v8090
        %10779 = vmatpush1.bf16.msra.mxu0 %v8089
        %10780 = vmatprep.subr.bf16.mxu0 %v8094
        %10781 = vmatpush1.bf16.msra.mxu0 %v8093
        %10782 = vmatprep.subr.bf16.mxu0 %v8098
        %10783 = vmatpush1.bf16.msra.mxu0 %v8097
        %10784 = vmatprep.subr.bf16.mxu0 %v8102
        %10785 = vmatpush1.bf16.msra.mxu0 %v8101
        %10786 = vmatprep.subr.bf16.mxu0 %v8106
        %10787 = vmatpush1.bf16.msra.mxu0 %v8105
        %10788 = vmatprep.subr.bf16.mxu0 %v8110
        %10789 = vmatpush1.bf16.msra.mxu0 %v8109
        %10790 = vmatprep.subr.bf16.mxu0 %v8114
        %10791 = vmatpush1.bf16.msra.mxu0 %v8113
        %10792 = vmatprep.subr.bf16.mxu0 %v8118
        %10793 = vmatpush1.bf16.msra.mxu0 %v8117
        %10794 = vmatprep.subr.bf16.mxu0 %v8122
        %10795 = vmatpush1.bf16.msra.mxu0 %v8121
        %10796 = vmatprep.subr.bf16.mxu0 %v8126
        %10797 = vmatpush1.bf16.msra.mxu0 %v8125
        %10798 = vmatprep.subr.bf16.mxu0 %v8130
        %10799 = vmatpush1.bf16.msra.mxu0 %v8129
        %10800 = vmatprep.subr.bf16.mxu0 %v8134
        %10801 = vmatpush1.bf16.msra.mxu0 %v8133
        %10802 = vmatprep.subr.bf16.mxu0 %v8138
        %10803 = vmatpush1.bf16.msra.mxu0 %v8137
        %10804 = vmatprep.mubr.bf16.mxu0 %v2502
        %10805 = vmatmul.mubr.bf16.gmra.mrb[0].mxu0 %v2501
        %v10806 = vpop.f32.mrb[0].mxu0
        %v10807 = vadd.f32 %v10766, %v10806
        %v10808 = vpop.f32.mrb[0].mxu0
        %v10809 = vadd.f32 %v10768, %v10808
        %v10810 = vpop.f32.mrb[0].mxu0
        %v10811 = vpop.f32.mrb[0].mxu0
        %10812 = vdwg.mxu0
        %10813 = vmatprep.subr.bf16.mxu0 %v8142
        %10814 = vmatpush1.bf16.msra.mxu0 %v8141
        %10815 = vmatprep.subr.bf16.mxu0 %v8146
        %10816 = vmatpush1.bf16.msra.mxu0 %v8145
        %10817 = vmatprep.subr.bf16.mxu0 %v8150
        %10818 = vmatpush1.bf16.msra.mxu0 %v8149
        %10819 = vmatprep.subr.bf16.mxu0 %v8154
        %10820 = vmatpush1.bf16.msra.mxu0 %v8153
        %10821 = vmatprep.subr.bf16.mxu0 %v8158
        %10822 = vmatpush1.bf16.msra.mxu0 %v8157
        %10823 = vmatprep.subr.bf16.mxu0 %v8162
        %10824 = vmatpush1.bf16.msra.mxu0 %v8161
        %10825 = vmatprep.subr.bf16.mxu0 %v8166
        %10826 = vmatpush1.bf16.msra.mxu0 %v8165
        %10827 = vmatprep.subr.bf16.mxu0 %v8170
        %10828 = vmatpush1.bf16.msra.mxu0 %v8169
        %10829 = vmatprep.subr.bf16.mxu0 %v8174
        %10830 = vmatpush1.bf16.msra.mxu0 %v8173
        %10831 = vmatprep.subr.bf16.mxu0 %v8178
        %10832 = vmatpush1.bf16.msra.mxu0 %v8177
        %10833 = vmatprep.subr.bf16.mxu0 %v8182
        %10834 = vmatpush1.bf16.msra.mxu0 %v8181
        %10835 = vmatprep.subr.bf16.mxu0 %v8186
        %10836 = vmatpush1.bf16.msra.mxu0 %v8185
        %10837 = vmatprep.subr.bf16.mxu0 %v8190
        %10838 = vmatpush1.bf16.msra.mxu0 %v8189
        %10839 = vmatprep.subr.bf16.mxu0 %v8194
        %10840 = vmatpush1.bf16.msra.mxu0 %v8193
        %10841 = vmatprep.subr.bf16.mxu0 %v8198
        %10842 = vmatpush1.bf16.msra.mxu0 %v8197
        %10843 = vmatprep.subr.bf16.mxu0 %v8202
        %10844 = vmatpush1.bf16.msra.mxu0 %v8201
        %10845 = vmatprep.mubr.bf16.mxu0 %v2504
        %10846 = vmatmul.mubr.bf16.gmra.mrb[0].mxu0 %v2503
        %v10847 = vpop.f32.mrb[0].mxu0
        %v10848 = vadd.f32 %v10807, %v10847
        %v10849 = vpop.f32.mrb[0].mxu0
        %v10850 = vadd.f32 %v10809, %v10849
        %v10851 = vpop.f32.mrb[0].mxu0
        %v10852 = vpop.f32.mrb[0].mxu0
        %10853 = vdwg.mxu0
        %10854 = vmatprep.subr.bf16.mxu0 %v8206
        %10855 = vmatpush1.bf16.msra.mxu0 %v8205
        %10856 = vmatprep.subr.bf16.mxu0 %v8210
        %10857 = vmatpush1.bf16.msra.mxu0 %v8209
        %10858 = vmatprep.subr.bf16.mxu0 %v8214
        %10859 = vmatpush1.bf16.msra.mxu0 %v8213
        %10860 = vmatprep.subr.bf16.mxu0 %v8218
        %10861 = vmatpush1.bf16.msra.mxu0 %v8217
        %10862 = vmatprep.subr.bf16.mxu0 %v8222
        %10863 = vmatpush1.bf16.msra.mxu0 %v8221
        %10864 = vmatprep.subr.bf16.mxu0 %v8226
        %10865 = vmatpush1.bf16.msra.mxu0 %v8225
        %10866 = vmatprep.subr.bf16.mxu0 %v8230
        %10867 = vmatpush1.bf16.msra.mxu0 %v8229
        %10868 = vmatprep.subr.bf16.mxu0 %v8234
        %10869 = vmatpush1.bf16.msra.mxu0 %v8233
        %10870 = vmatprep.subr.bf16.mxu0 %v8238
        %10871 = vmatpush1.bf16.msra.mxu0 %v8237
        %10872 = vmatprep.subr.bf16.mxu0 %v8242
        %10873 = vmatpush1.bf16.msra.mxu0 %v8241
        %10874 = vmatprep.subr.bf16.mxu0 %v8246
        %10875 = vmatpush1.bf16.msra.mxu0 %v8245
        %10876 = vmatprep.subr.bf16.mxu0 %v8250
        %10877 = vmatpush1.bf16.msra.mxu0 %v8249
        %10878 = vmatprep.subr.bf16.mxu0 %v8254
        %10879 = vmatpush1.bf16.msra.mxu0 %v8253
        %10880 = vmatprep.subr.bf16.mxu0 %v8258
        %10881 = vmatpush1.bf16.msra.mxu0 %v8257
        %10882 = vmatprep.subr.bf16.mxu0 %v8262
        %10883 = vmatpush1.bf16.msra.mxu0 %v8261
        %10884 = vmatprep.subr.bf16.mxu0 %v8266
        %10885 = vmatpush1.bf16.msra.mxu0 %v8265
        %10886 = vmatprep.mubr.bf16.mxu0 %v2506
        %10887 = vmatmul.mubr.bf16.gmra.mrb[0].mxu0 %v2505
        %v10888 = vpop.f32.mrb[0].mxu0
        %v10889 = vadd.f32 %v10848, %v10888
        %v10890 = vpop.f32.mrb[0].mxu0
        %v10891 = vadd.f32 %v10850, %v10890
        %v10892 = vpop.f32.mrb[0].mxu0
        %v10893 = vpop.f32.mrb[0].mxu0
        %10894 = vdwg.mxu0
        %v10899 = vcombine.low %v10151, %v10153
        %v10900 = vcombine.low %v10889, %v10891
        %v10902 = vunpack.c.l.s4 1983009808
        %v10903 = vunpack.c.0.s8 %v10902
        %v10904 = vlaneseq
        %v10905 = vshrl.u32 %v10904, 7
        %v10906 = vsub.s32 %v10903, %v10905
        %v10907 = vrot.slane %v10899, %v10906
        %v10909 = vunpack.c.l.s4 1983009808
        %v10910 = vunpack.c.0.s8 %v10909
        %v10911 = vlaneseq
        %v10912 = vshrl.u32 %v10911, 7
        %v10913 = vsub.s32 %v10910, %v10912
        %v10914 = vrot.slane %v10900, %v10913
        %v10915 = vcombine.low %v10907, %v10914
        %v10917 = vadd.f32 %v2470, %v10915
        %10918 = vst [vmem:[#allocation2] sm:$0xff] %v10917
        %p10919 = scmp.eq.s32.totalorder %s34, 3
        // Predicated region
        $region109: #{crazyhouse_forward.1} parent=63 // pred_check
          %p10920 = pneg %p10919
        $region110: #{crazyhouse_forward.1} parent=63 // pred_check_branch
          %10922 = sbr.rel (%p10920) target = $region112
        $region111: #{crazyhouse_forward.1} parent=63 // pred_region
          %v10923 = vld [vmem:[#allocation2] sm:$0xff]
          %v10924 = vld [vmem:[#allocation11] sm:$0xf]
          %v10926 = vlaneseq
          %v10927 = vshrl.u32 %v10926, 7
          %v10928 = vsub.s32 0, %v10927
          %v10929 = vrot.slane %v10924, %v10928
          %v10930 = vlaneseq
          %v10931 = vshrl.u32 %v10930, 7
          %v10932 = vsub.s32 1, %v10931
          %v10933 = vrot.slane %v10924, %v10932
          %v10934 = vlaneseq
          %v10935 = vshrl.u32 %v10934, 7
          %v10936 = vsub.s32 2, %v10935
          %v10937 = vrot.slane %v10924, %v10936
          %v10938 = vlaneseq
          %v10939 = vshrl.u32 %v10938, 7
          %v10940 = vsub.s32 3, %v10939
          %v10941 = vrot.slane %v10924, %v10940
          %v10942 = vcombine.low %v10929, %v10933
          %v10943 = vcombine.low %v10937, %v10941
          %v10945 = vunpack.c.l.s4 1983009808
          %v10946 = vunpack.c.0.s8 %v10945
          %v10947 = vlaneseq
          %v10948 = vshrl.u32 %v10947, 7
          %v10949 = vsub.s32 %v10946, %v10948
          %v10950 = vrot.slane %v10942, %v10949
          %v10952 = vunpack.c.l.s4 1983009808
          %v10953 = vunpack.c.0.s8 %v10952
          %v10954 = vlaneseq
          %v10955 = vshrl.u32 %v10954, 7
          %v10956 = vsub.s32 %v10953, %v10955
          %v10957 = vrot.slane %v10943, %v10956
          %v10958 = vcombine.low %v10950, %v10957
          %v10960 = vadd.f32 %v10923, %v10958
          %v10961 = vld [vmem:[#allocation13] sm:$0xf]
          %v10963 = vlaneseq
          %v10964 = vshrl.u32 %v10963, 7
          %v10965 = vsub.s32 0, %v10964
          %v10966 = vrot.slane %v10961, %v10965
          %v10967 = vlaneseq
          %v10968 = vshrl.u32 %v10967, 7
          %v10969 = vsub.s32 1, %v10968
          %v10970 = vrot.slane %v10961, %v10969
          %v10971 = vlaneseq
          %v10972 = vshrl.u32 %v10971, 7
          %v10973 = vsub.s32 2, %v10972
          %v10974 = vrot.slane %v10961, %v10973
          %v10975 = vlaneseq
          %v10976 = vshrl.u32 %v10975, 7
          %v10977 = vsub.s32 3, %v10976
          %v10978 = vrot.slane %v10961, %v10977
          %v10979 = vcombine.low %v10966, %v10970
          %v10980 = vcombine.low %v10974, %v10978
          %v10982 = vunpack.c.l.s4 1983009808
          %v10983 = vunpack.c.0.s8 %v10982
          %v10984 = vlaneseq
          %v10985 = vshrl.u32 %v10984, 7
          %v10986 = vsub.s32 %v10983, %v10985
          %v10987 = vrot.slane %v10979, %v10986
          %v10989 = vunpack.c.l.s4 1983009808
          %v10990 = vunpack.c.0.s8 %v10989
          %v10991 = vlaneseq
          %v10992 = vshrl.u32 %v10991, 7
          %v10993 = vsub.s32 %v10990, %v10992
          %v10994 = vrot.slane %v10980, %v10993
          %v10995 = vcombine.low %v10987, %v10994
          %v10997 = vmul.f32 %v10960, %v10995
          %v10998 = vld [vmem:[#allocation14] sm:$0xf]
          %v11000 = vlaneseq
          %v11001 = vshrl.u32 %v11000, 7
          %v11002 = vsub.s32 0, %v11001
          %v11003 = vrot.slane %v10998, %v11002
          %v11004 = vlaneseq
          %v11005 = vshrl.u32 %v11004, 7
          %v11006 = vsub.s32 1, %v11005
          %v11007 = vrot.slane %v10998, %v11006
          %v11008 = vlaneseq
          %v11009 = vshrl.u32 %v11008, 7
          %v11010 = vsub.s32 2, %v11009
          %v11011 = vrot.slane %v10998, %v11010
          %v11012 = vlaneseq
          %v11013 = vshrl.u32 %v11012, 7
          %v11014 = vsub.s32 3, %v11013
          %v11015 = vrot.slane %v10998, %v11014
          %v11016 = vcombine.low %v11003, %v11007
          %v11017 = vcombine.low %v11011, %v11015
          %v11019 = vunpack.c.l.s4 1983009808
          %v11020 = vunpack.c.0.s8 %v11019
          %v11021 = vlaneseq
          %v11022 = vshrl.u32 %v11021, 7
          %v11023 = vsub.s32 %v11020, %v11022
          %v11024 = vrot.slane %v11016, %v11023
          %v11026 = vunpack.c.l.s4 1983009808
          %v11027 = vunpack.c.0.s8 %v11026
          %v11028 = vlaneseq
          %v11029 = vshrl.u32 %v11028, 7
          %v11030 = vsub.s32 %v11027, %v11029
          %v11031 = vrot.slane %v11017, %v11030
          %v11032 = vcombine.low %v11024, %v11031
          %v11034 = vadd.f32 %v10997, %v11032
          %v11035 = vmax.f32 %v11034, 0.0
          %v11037 = vcombine.high %v11035, %v11035
          %v11039 = vunpack.c.l.s4 1983009808
          %v11040 = vunpack.c.0.s8 %v11039
          %v11041 = vlaneseq
          %v11042 = vshrl.u32 %v11041, 7
          %v11043 = vsub.s32 %v11040, %v11042
          %v11044 = vrot.slane %v11035, %v11043
          %v11046 = vunpack.c.l.s4 1983009808
          %v11047 = vunpack.c.0.s8 %v11046
          %v11048 = vlaneseq
          %v11049 = vshrl.u32 %v11048, 7
          %v11050 = vsub.s32 %v11047, %v11049
          %v11051 = vrot.slane %v11037, %v11050
          %v11052 = vcombine.high %v11044, %v11044
          %v11053 = vcombine.high %v11051, %v11051
          %v11058 = vpack.c.bf16 %v11044, %v11044
          %v11059 = vpack.c.bf16 %v11052, %v11052
          %v11060 = vpack.c.bf16 %v11051, %v11051
          %v11061 = vpack.c.bf16 %v11053, %v11053
          %v11062 = vld [vmem:[#allocation16] sm:$0xff]
          %v11063 = vld [vmem:[#allocation16 + $0x8] sm:$0xff]
          %v11064 = vld [vmem:[#allocation16 + $0x10] sm:$0xff]
          %v11065 = vld [vmem:[#allocation16 + $0x18] sm:$0xff]
          %v11066 = vld [vmem:[#allocation16 + $0x20] sm:$0xff]
          %v11067 = vld [vmem:[#allocation16 + $0x28] sm:$0xff]
          %v11068 = vld [vmem:[#allocation16 + $0x30] sm:$0xff]
          %v11069 = vld [vmem:[#allocation16 + $0x38] sm:$0xff]
          %v11070 = vld [vmem:[#allocation16 + $0x40] sm:$0xff]
          %v11071 = vld [vmem:[#allocation16 + $0x48] sm:$0xff]
          %v11072 = vld [vmem:[#allocation16 + $0x50] sm:$0xff]
          %v11073 = vld [vmem:[#allocation16 + $0x58] sm:$0xff]
          %v11074 = vld [vmem:[#allocation16 + $0x60] sm:$0xff]
          %v11075 = vld [vmem:[#allocation16 + $0x68] sm:$0xff]
          %v11076 = vld [vmem:[#allocation16 + $0x70] sm:$0xff]
          %v11077 = vld [vmem:[#allocation16 + $0x78] sm:$0xff]
          %v11078 = vld [vmem:[#allocation16 + $0x80] sm:$0xff]
          %v11079 = vld [vmem:[#allocation16 + $0x88] sm:$0xff]
          %v11080 = vld [vmem:[#allocation16 + $0x90] sm:$0xff]
          %v11081 = vld [vmem:[#allocation16 + $0x98] sm:$0xff]
          %v11082 = vld [vmem:[#allocation16 + $0xa0] sm:$0xff]
          %v11083 = vld [vmem:[#allocation16 + $0xa8] sm:$0xff]
          %v11084 = vld [vmem:[#allocation16 + $0xb0] sm:$0xff]
          %v11085 = vld [vmem:[#allocation16 + $0xb8] sm:$0xff]
          %v11086 = vld [vmem:[#allocation16 + $0xc0] sm:$0xff]
          %v11087 = vld [vmem:[#allocation16 + $0xc8] sm:$0xff]
          %v11088 = vld [vmem:[#allocation16 + $0xd0] sm:$0xff]
          %v11089 = vld [vmem:[#allocation16 + $0xd8] sm:$0xff]
          %v11090 = vld [vmem:[#allocation16 + $0xe0] sm:$0xff]
          %v11091 = vld [vmem:[#allocation16 + $0xe8] sm:$0xff]
          %v11092 = vld [vmem:[#allocation16 + $0xf0] sm:$0xff]
          %v11093 = vld [vmem:[#allocation16 + $0xf8] sm:$0xff]
          %v11094 = vld [vmem:[#allocation16 + $0x100] sm:$0xff]
          %v11095 = vld [vmem:[#allocation16 + $0x108] sm:$0xff]
          %v11096 = vld [vmem:[#allocation16 + $0x110] sm:$0xff]
          %v11097 = vld [vmem:[#allocation16 + $0x118] sm:$0xff]
          %v11098 = vld [vmem:[#allocation16 + $0x120] sm:$0xff]
          %v11099 = vld [vmem:[#allocation16 + $0x128] sm:$0xff]
          %v11100 = vld [vmem:[#allocation16 + $0x130] sm:$0xff]
          %v11101 = vld [vmem:[#allocation16 + $0x138] sm:$0xff]
          %v11102 = vld [vmem:[#allocation16 + $0x140] sm:$0xff]
          %v11103 = vld [vmem:[#allocation16 + $0x148] sm:$0xff]
          %v11104 = vld [vmem:[#allocation16 + $0x150] sm:$0xff]
          %v11105 = vld [vmem:[#allocation16 + $0x158] sm:$0xff]
          %v11106 = vld [vmem:[#allocation16 + $0x160] sm:$0xff]
          %v11107 = vld [vmem:[#allocation16 + $0x168] sm:$0xff]
          %v11108 = vld [vmem:[#allocation16 + $0x170] sm:$0xff]
          %v11109 = vld [vmem:[#allocation16 + $0x178] sm:$0xff]
          %v11110 = vld [vmem:[#allocation16 + $0x180] sm:$0xff]
          %v11111 = vld [vmem:[#allocation16 + $0x188] sm:$0xff]
          %v11112 = vld [vmem:[#allocation16 + $0x190] sm:$0xff]
          %v11113 = vld [vmem:[#allocation16 + $0x198] sm:$0xff]
          %v11114 = vld [vmem:[#allocation16 + $0x1a0] sm:$0xff]
          %v11115 = vld [vmem:[#allocation16 + $0x1a8] sm:$0xff]
          %v11116 = vld [vmem:[#allocation16 + $0x1b0] sm:$0xff]
          %v11117 = vld [vmem:[#allocation16 + $0x1b8] sm:$0xff]
          %v11118 = vld [vmem:[#allocation16 + $0x1c0] sm:$0xff]
          %v11119 = vld [vmem:[#allocation16 + $0x1c8] sm:$0xff]
          %v11120 = vld [vmem:[#allocation16 + $0x1d0] sm:$0xff]
          %v11121 = vld [vmem:[#allocation16 + $0x1d8] sm:$0xff]
          %v11122 = vld [vmem:[#allocation16 + $0x1e0] sm:$0xff]
          %v11123 = vld [vmem:[#allocation16 + $0x1e8] sm:$0xff]
          %v11124 = vld [vmem:[#allocation16 + $0x1f0] sm:$0xff]
          %v11125 = vld [vmem:[#allocation16 + $0x1f8] sm:$0xff]
          %v11126 = vld [vmem:[#allocation17] sm:$0x3]
          %v11128 = vlaneseq
          %v11129 = vshrl.u32 %v11128, 7
          %v11130 = vsub.s32 0, %v11129
          %v11131 = vrot.slane %v11126, %v11130
          %v11132 = vlaneseq
          %v11133 = vshrl.u32 %v11132, 7
          %v11134 = vsub.s32 1, %v11133
          %v11135 = vrot.slane %v11126, %v11134
          %v11202 = vunpack.c.l.b16 %v11062
          %v11203 = vunpack.c.h.b16 %v11062
          %v11204 = vunpack.c.l.b16 %v11063
          %v11205 = vunpack.c.h.b16 %v11063
          %v11206 = vunpack.c.l.b16 %v11064
          %v11207 = vunpack.c.h.b16 %v11064
          %v11208 = vunpack.c.l.b16 %v11065
          %v11209 = vunpack.c.h.b16 %v11065
          %v11210 = vunpack.c.l.b16 %v11066
          %v11211 = vunpack.c.h.b16 %v11066
          %v11212 = vunpack.c.l.b16 %v11067
          %v11213 = vunpack.c.h.b16 %v11067
          %v11214 = vunpack.c.l.b16 %v11068
          %v11215 = vunpack.c.h.b16 %v11068
          %v11216 = vunpack.c.l.b16 %v11069
          %v11217 = vunpack.c.h.b16 %v11069
          %v11218 = vunpack.c.l.b16 %v11070
          %v11219 = vunpack.c.h.b16 %v11070
          %v11220 = vunpack.c.l.b16 %v11071
          %v11221 = vunpack.c.h.b16 %v11071
          %v11222 = vunpack.c.l.b16 %v11072
          %v11223 = vunpack.c.h.b16 %v11072
          %v11224 = vunpack.c.l.b16 %v11073
          %v11225 = vunpack.c.h.b16 %v11073
          %v11226 = vunpack.c.l.b16 %v11074
          %v11227 = vunpack.c.h.b16 %v11074
          %v11228 = vunpack.c.l.b16 %v11075
          %v11229 = vunpack.c.h.b16 %v11075
          %v11230 = vunpack.c.l.b16 %v11076
          %v11231 = vunpack.c.h.b16 %v11076
          %v11232 = vunpack.c.l.b16 %v11077
          %v11233 = vunpack.c.h.b16 %v11077
          %v11234 = vunpack.c.l.b16 %v11078
          %v11235 = vunpack.c.h.b16 %v11078
          %v11236 = vunpack.c.l.b16 %v11079
          %v11237 = vunpack.c.h.b16 %v11079
          %v11238 = vunpack.c.l.b16 %v11080
          %v11239 = vunpack.c.h.b16 %v11080
          %v11240 = vunpack.c.l.b16 %v11081
          %v11241 = vunpack.c.h.b16 %v11081
          %v11242 = vunpack.c.l.b16 %v11082
          %v11243 = vunpack.c.h.b16 %v11082
          %v11244 = vunpack.c.l.b16 %v11083
          %v11245 = vunpack.c.h.b16 %v11083
          %v11246 = vunpack.c.l.b16 %v11084
          %v11247 = vunpack.c.h.b16 %v11084
          %v11248 = vunpack.c.l.b16 %v11085
          %v11249 = vunpack.c.h.b16 %v11085
          %v11250 = vunpack.c.l.b16 %v11086
          %v11251 = vunpack.c.h.b16 %v11086
          %v11252 = vunpack.c.l.b16 %v11087
          %v11253 = vunpack.c.h.b16 %v11087
          %v11254 = vunpack.c.l.b16 %v11088
          %v11255 = vunpack.c.h.b16 %v11088
          %v11256 = vunpack.c.l.b16 %v11089
          %v11257 = vunpack.c.h.b16 %v11089
          %v11258 = vunpack.c.l.b16 %v11090
          %v11259 = vunpack.c.h.b16 %v11090
          %v11260 = vunpack.c.l.b16 %v11091
          %v11261 = vunpack.c.h.b16 %v11091
          %v11262 = vunpack.c.l.b16 %v11092
          %v11263 = vunpack.c.h.b16 %v11092
          %v11264 = vunpack.c.l.b16 %v11093
          %v11265 = vunpack.c.h.b16 %v11093
          %v11266 = vunpack.c.l.b16 %v11094
          %v11267 = vunpack.c.h.b16 %v11094
          %v11268 = vunpack.c.l.b16 %v11095
          %v11269 = vunpack.c.h.b16 %v11095
          %v11270 = vunpack.c.l.b16 %v11096
          %v11271 = vunpack.c.h.b16 %v11096
          %v11272 = vunpack.c.l.b16 %v11097
          %v11273 = vunpack.c.h.b16 %v11097
          %v11274 = vunpack.c.l.b16 %v11098
          %v11275 = vunpack.c.h.b16 %v11098
          %v11276 = vunpack.c.l.b16 %v11099
          %v11277 = vunpack.c.h.b16 %v11099
          %v11278 = vunpack.c.l.b16 %v11100
          %v11279 = vunpack.c.h.b16 %v11100
          %v11280 = vunpack.c.l.b16 %v11101
          %v11281 = vunpack.c.h.b16 %v11101
          %v11282 = vunpack.c.l.b16 %v11102
          %v11283 = vunpack.c.h.b16 %v11102
          %v11284 = vunpack.c.l.b16 %v11103
          %v11285 = vunpack.c.h.b16 %v11103
          %v11286 = vunpack.c.l.b16 %v11104
          %v11287 = vunpack.c.h.b16 %v11104
          %v11288 = vunpack.c.l.b16 %v11105
          %v11289 = vunpack.c.h.b16 %v11105
          %v11290 = vunpack.c.l.b16 %v11106
          %v11291 = vunpack.c.h.b16 %v11106
          %v11292 = vunpack.c.l.b16 %v11107
          %v11293 = vunpack.c.h.b16 %v11107
          %v11294 = vunpack.c.l.b16 %v11108
          %v11295 = vunpack.c.h.b16 %v11108
          %v11296 = vunpack.c.l.b16 %v11109
          %v11297 = vunpack.c.h.b16 %v11109
          %v11298 = vunpack.c.l.b16 %v11110
          %v11299 = vunpack.c.h.b16 %v11110
          %v11300 = vunpack.c.l.b16 %v11111
          %v11301 = vunpack.c.h.b16 %v11111
          %v11302 = vunpack.c.l.b16 %v11112
          %v11303 = vunpack.c.h.b16 %v11112
          %v11304 = vunpack.c.l.b16 %v11113
          %v11305 = vunpack.c.h.b16 %v11113
          %v11306 = vunpack.c.l.b16 %v11114
          %v11307 = vunpack.c.h.b16 %v11114
          %v11308 = vunpack.c.l.b16 %v11115
          %v11309 = vunpack.c.h.b16 %v11115
          %v11310 = vunpack.c.l.b16 %v11116
          %v11311 = vunpack.c.h.b16 %v11116
          %v11312 = vunpack.c.l.b16 %v11117
          %v11313 = vunpack.c.h.b16 %v11117
          %v11314 = vunpack.c.l.b16 %v11118
          %v11315 = vunpack.c.h.b16 %v11118
          %v11316 = vunpack.c.l.b16 %v11119
          %v11317 = vunpack.c.h.b16 %v11119
          %v11318 = vunpack.c.l.b16 %v11120
          %v11319 = vunpack.c.h.b16 %v11120
          %v11320 = vunpack.c.l.b16 %v11121
          %v11321 = vunpack.c.h.b16 %v11121
          %v11322 = vunpack.c.l.b16 %v11122
          %v11323 = vunpack.c.h.b16 %v11122
          %v11324 = vunpack.c.l.b16 %v11123
          %v11325 = vunpack.c.h.b16 %v11123
          %v11326 = vunpack.c.l.b16 %v11124
          %v11327 = vunpack.c.h.b16 %v11124
          %v11328 = vunpack.c.l.b16 %v11125
          %v11329 = vunpack.c.h.b16 %v11125
          %v11330 = vpack.c.b16 %v11204, %v11202
          %v11331 = vpack.c.b16 %v11205, %v11203
          %v11332 = vpack.c.b16 %v11208, %v11206
          %v11333 = vpack.c.b16 %v11209, %v11207
          %v11334 = vpack.c.b16 %v11212, %v11210
          %v11335 = vpack.c.b16 %v11213, %v11211
          %v11336 = vpack.c.b16 %v11216, %v11214
          %v11337 = vpack.c.b16 %v11217, %v11215
          %v11338 = vpack.c.b16 %v11220, %v11218
          %v11339 = vpack.c.b16 %v11221, %v11219
          %v11340 = vpack.c.b16 %v11224, %v11222
          %v11341 = vpack.c.b16 %v11225, %v11223
          %v11342 = vpack.c.b16 %v11228, %v11226
          %v11343 = vpack.c.b16 %v11229, %v11227
          %v11344 = vpack.c.b16 %v11232, %v11230
          %v11345 = vpack.c.b16 %v11233, %v11231
          %v11346 = vpack.c.b16 %v11236, %v11234
          %v11347 = vpack.c.b16 %v11237, %v11235
          %v11348 = vpack.c.b16 %v11240, %v11238
          %v11349 = vpack.c.b16 %v11241, %v11239
          %v11350 = vpack.c.b16 %v11244, %v11242
          %v11351 = vpack.c.b16 %v11245, %v11243
          %v11352 = vpack.c.b16 %v11248, %v11246
          %v11353 = vpack.c.b16 %v11249, %v11247
          %v11354 = vpack.c.b16 %v11252, %v11250
          %v11355 = vpack.c.b16 %v11253, %v11251
          %v11356 = vpack.c.b16 %v11256, %v11254
          %v11357 = vpack.c.b16 %v11257, %v11255
          %v11358 = vpack.c.b16 %v11260, %v11258
          %v11359 = vpack.c.b16 %v11261, %v11259
          %v11360 = vpack.c.b16 %v11264, %v11262
          %v11361 = vpack.c.b16 %v11265, %v11263
          %v11362 = vpack.c.b16 %v11268, %v11266
          %v11363 = vpack.c.b16 %v11269, %v11267
          %v11364 = vpack.c.b16 %v11272, %v11270
          %v11365 = vpack.c.b16 %v11273, %v11271
          %v11366 = vpack.c.b16 %v11276, %v11274
          %v11367 = vpack.c.b16 %v11277, %v11275
          %v11368 = vpack.c.b16 %v11280, %v11278
          %v11369 = vpack.c.b16 %v11281, %v11279
          %v11370 = vpack.c.b16 %v11284, %v11282
          %v11371 = vpack.c.b16 %v11285, %v11283
          %v11372 = vpack.c.b16 %v11288, %v11286
          %v11373 = vpack.c.b16 %v11289, %v11287
          %v11374 = vpack.c.b16 %v11292, %v11290
          %v11375 = vpack.c.b16 %v11293, %v11291
          %v11376 = vpack.c.b16 %v11296, %v11294
          %v11377 = vpack.c.b16 %v11297, %v11295
          %v11378 = vpack.c.b16 %v11300, %v11298
          %v11379 = vpack.c.b16 %v11301, %v11299
          %v11380 = vpack.c.b16 %v11304, %v11302
          %v11381 = vpack.c.b16 %v11305, %v11303
          %v11382 = vpack.c.b16 %v11308, %v11306
          %v11383 = vpack.c.b16 %v11309, %v11307
          %v11384 = vpack.c.b16 %v11312, %v11310
          %v11385 = vpack.c.b16 %v11313, %v11311
          %v11386 = vpack.c.b16 %v11316, %v11314
          %v11387 = vpack.c.b16 %v11317, %v11315
          %v11388 = vpack.c.b16 %v11320, %v11318
          %v11389 = vpack.c.b16 %v11321, %v11319
          %v11390 = vpack.c.b16 %v11324, %v11322
          %v11391 = vpack.c.b16 %v11325, %v11323
          %v11392 = vpack.c.b16 %v11328, %v11326
          %v11393 = vpack.c.b16 %v11329, %v11327
          %11458 = vmatprep.subr.bf16.mxu0 %v11331
          %11459 = vmatpush1.bf16.msra.mxu0 %v11330
          %11460 = vmatprep.subr.bf16.mxu0 %v11333
          %11461 = vmatpush1.bf16.msra.mxu0 %v11332
          %11462 = vmatprep.subr.bf16.mxu0 %v11335
          %11463 = vmatpush1.bf16.msra.mxu0 %v11334
          %11464 = vmatprep.subr.bf16.mxu0 %v11337
          %11465 = vmatpush1.bf16.msra.mxu0 %v11336
          %11466 = vmatprep.subr.bf16.mxu0 %v11339
          %11467 = vmatpush1.bf16.msra.mxu0 %v11338
          %11468 = vmatprep.subr.bf16.mxu0 %v11341
          %11469 = vmatpush1.bf16.msra.mxu0 %v11340
          %11470 = vmatprep.subr.bf16.mxu0 %v11343
          %11471 = vmatpush1.bf16.msra.mxu0 %v11342
          %11472 = vmatprep.subr.bf16.mxu0 %v11345
          %11473 = vmatpush1.bf16.msra.mxu0 %v11344
          %11474 = vmatprep.subr.bf16.mxu0 %v11347
          %11475 = vmatpush1.bf16.msra.mxu0 %v11346
          %11476 = vmatprep.subr.bf16.mxu0 %v11349
          %11477 = vmatpush1.bf16.msra.mxu0 %v11348
          %11478 = vmatprep.subr.bf16.mxu0 %v11351
          %11479 = vmatpush1.bf16.msra.mxu0 %v11350
          %11480 = vmatprep.subr.bf16.mxu0 %v11353
          %11481 = vmatpush1.bf16.msra.mxu0 %v11352
          %11482 = vmatprep.subr.bf16.mxu0 %v11355
          %11483 = vmatpush1.bf16.msra.mxu0 %v11354
          %11484 = vmatprep.subr.bf16.mxu0 %v11357
          %11485 = vmatpush1.bf16.msra.mxu0 %v11356
          %11486 = vmatprep.subr.bf16.mxu0 %v11359
          %11487 = vmatpush1.bf16.msra.mxu0 %v11358
          %11488 = vmatprep.subr.bf16.mxu0 %v11361
          %11489 = vmatpush1.bf16.msra.mxu0 %v11360
          %11490 = vmatprep.mubr.bf16.mxu0 %v11059
          %11491 = vmatmul.mubr.bf16.gmra.mrb[0].mxu0 %v11058
          %v11492 = vpop.f32.mrb[0].mxu0
          %v11493 = vadd.f32 %v11131, %v11492
          %v11494 = vpop.f32.mrb[0].mxu0
          %v11495 = vadd.f32 %v11135, %v11494
          %v11496 = vpop.f32.mrb[0].mxu0
          %v11497 = vpop.f32.mrb[0].mxu0
          %11498 = vdwg.mxu0
          %11499 = vmatprep.subr.bf16.mxu0 %v11363
          %11500 = vmatpush1.bf16.msra.mxu0 %v11362
          %11501 = vmatprep.subr.bf16.mxu0 %v11365
          %11502 = vmatpush1.bf16.msra.mxu0 %v11364
          %11503 = vmatprep.subr.bf16.mxu0 %v11367
          %11504 = vmatpush1.bf16.msra.mxu0 %v11366
          %11505 = vmatprep.subr.bf16.mxu0 %v11369
          %11506 = vmatpush1.bf16.msra.mxu0 %v11368
          %11507 = vmatprep.subr.bf16.mxu0 %v11371
          %11508 = vmatpush1.bf16.msra.mxu0 %v11370
          %11509 = vmatprep.subr.bf16.mxu0 %v11373
          %11510 = vmatpush1.bf16.msra.mxu0 %v11372
          %11511 = vmatprep.subr.bf16.mxu0 %v11375
          %11512 = vmatpush1.bf16.msra.mxu0 %v11374
          %11513 = vmatprep.subr.bf16.mxu0 %v11377
          %11514 = vmatpush1.bf16.msra.mxu0 %v11376
          %11515 = vmatprep.subr.bf16.mxu0 %v11379
          %11516 = vmatpush1.bf16.msra.mxu0 %v11378
          %11517 = vmatprep.subr.bf16.mxu0 %v11381
          %11518 = vmatpush1.bf16.msra.mxu0 %v11380
          %11519 = vmatprep.subr.bf16.mxu0 %v11383
          %11520 = vmatpush1.bf16.msra.mxu0 %v11382
          %11521 = vmatprep.subr.bf16.mxu0 %v11385
          %11522 = vmatpush1.bf16.msra.mxu0 %v11384
          %11523 = vmatprep.subr.bf16.mxu0 %v11387
          %11524 = vmatpush1.bf16.msra.mxu0 %v11386
          %11525 = vmatprep.subr.bf16.mxu0 %v11389
          %11526 = vmatpush1.bf16.msra.mxu0 %v11388
          %11527 = vmatprep.subr.bf16.mxu0 %v11391
          %11528 = vmatpush1.bf16.msra.mxu0 %v11390
          %11529 = vmatprep.subr.bf16.mxu0 %v11393
          %11530 = vmatpush1.bf16.msra.mxu0 %v11392
          %11531 = vmatprep.mubr.bf16.mxu0 %v11061
          %11532 = vmatmul.mubr.bf16.gmra.mrb[0].mxu0 %v11060
          %v11533 = vpop.f32.mrb[0].mxu0
          %v11534 = vadd.f32 %v11493, %v11533
          %v11535 = vpop.f32.mrb[0].mxu0
          %v11536 = vadd.f32 %v11495, %v11535
          %v11537 = vpop.f32.mrb[0].mxu0
          %v11538 = vpop.f32.mrb[0].mxu0
          %11539 = vdwg.mxu0
          %v11540 = vlaneseq
          %v11541 = vand.u32 %v11540, 127
          %v11542 = vadd.s32 %v11541, 128
          %vm11543 = vcmp.lt.s32.totalorder %v11541, 128
          %vm11544 = vcmp.lt.s32.totalorder %v11542, 128
          %v11545 = vsel %vm11543, %v11534, -1e+30
          %v11546 = vsel %vm11544, %v11536, -1e+30
          %vm11547 = vcmask 1041408
          %v11548 = vsel %vm11547, %v11545, -inf
          %v11549 = vsel %vm11547, %v11546, -inf
          %v11550 = vmax.f32 %v11548, %v11549
          %11551 = vmax.xlane.f32.xlu0 %v11550
          %v11552 = vpop.xlane.xlu0 %11551
          %v11553 = vsub.f32 %v11545, %v11552
          %v11554 = vsub.f32 %v11546, %v11552
          %v11555 = vmul.f32 %v11553, 1.442695
          %v11556 = vpow.pop %v11555
          %v11557 = vmul.f32 %v11554, 1.442695
          %v11558 = vpow.pop %v11557
          %v11559 = vsel %vm11547, %v11556, 0.0
          %v11560 = vsel %vm11547, %v11558, 0.0
          %v11561 = vadd.f32 %v11559, %v11560
          %11562 = vadd.xlane.f32.xlu0 %v11561
          %v11563 = vpop.xlane.xlu0 %11562
          %v11564 = vlog2.pop %v11563
          %v11565 = vmul.f32 %v11564, 0.6931472
          %v11566 = vadd.f32 %v11565, %v11552
          %v11567 = vsub.f32 %v11534, %v11566
          %v11568 = vsub.f32 %v11536, %v11566
          %v11569 = vtanh.pop %v11534
          %v11570 = vtanh.pop %v11536
          %v11571 = vsel %vm11543, %v11567, %v11569
          %v11572 = vsel %vm11544, %v11568, %v11570
          %v11575 = vcombine.low %v11571, %v11572
          %v11577 = vunpack.c.l.s4 1983009808
          %v11578 = vunpack.c.0.s8 %v11577
          %v11579 = vlaneseq
          %v11580 = vshrl.u32 %v11579, 7
          %v11581 = vsub.s32 %v11578, %v11580
          %v11582 = vrot.slane %v11575, %v11581
          %11584 = vst [vmem:[%s11] sm:$0xf] %v11582
        $region112: #{crazyhouse_forward.1} parent=63 // pred_fallthru
          _
        // Predicated region
        $region113: #{crazyhouse_forward.1} parent=63 // pred_check
          %p11585 = pneg %p303
        $region114: #{crazyhouse_forward.1} parent=63 // pred_check_branch
          %11587 = sbr.rel (%p11585) target = $region116
        $region115: #{crazyhouse_forward.1} parent=63 // pred_region
          _
        $region116: #{crazyhouse_forward.1} parent=63 // pred_fallthru
          _
        // Predicated region
        $region117: #{crazyhouse_forward.1} parent=63 // pred_check
          %p11588 = pneg %p303
        $region118: #{crazyhouse_forward.1} parent=63 // pred_check_branch
          %11590 = sbr.rel (%p11588) target = $region120
        $region119: #{crazyhouse_forward.1} parent=63 // pred_region
          _
        $region120: #{crazyhouse_forward.1} parent=63 // pred_fallthru
          _
      $region64: #{crazyhouse_forward.1} parent=5 // pred_fallthru
        _
      %p11591 = scmp.le.s32.totalorder 2, %s29
      // Predicated region
      $region121: #{crazyhouse_forward.1} parent=5 // pred_check
        %p11592 = pneg %p11591
      $region122: #{crazyhouse_forward.1} parent=5 // pred_check_branch
        %11594 = sbr.rel (%p11592) target = $region124
      $region123: #{crazyhouse_forward.1} parent=5 // pred_region
        %s11595 = ssub.s32 %s29, 2
      $region124: #{crazyhouse_forward.1} parent=5 // pred_fallthru
        _
    $region6: #{crazyhouse_forward.1} parent=1 // loop_footer
      %s33 = sadd.s32 1, %s29
    $region7: #{crazyhouse_forward.1} parent=1 // loop_footer_branch
      %28 = sbr.rel target = $region3
    $region8: #{crazyhouse_forward.1} parent=1 // loop_exit
      _
    %11596 = vsyncpa [#allocation4], 1
    %s11597 = scalar_lea.sflag [#allocation4], 1
    %11598 = vsyncpa %s11597, 1
    %11599 = vsyncpa [#allocation6], 1
    %s11600 = scalar_lea.sflag [#allocation6], 1
    %11601 = vsyncpa %s11600, 1
    %11602 = vsyncpa [#allocation9], 1
    %s11603 = scalar_lea.sflag [#allocation9], 1
    %11604 = vsyncpa %s11603, 1
    %11605 = vsyncpa [#allocation12], 1
    %11606 = vsyncpa [#allocation15], 1
    %11607 = vsyncpa [#allocation18], 1

</llo_original>
